<compile_context>
chip_gen: v5e
topology: v5e:2x2
jax: 0.10.0
libtpu: 0.0.40
codegen_flags: <defaults>
</compile_context>

<pallas_src>
import jax
import jax.numpy as jnp
from jax.experimental import pallas as pl
from jax.experimental.pallas import tpu as pltpu

HIDDEN = 10
N_HIDDEN_LAYERS = 5
LANES = 128

# Flat SMEM parameter layout (f32 scalars), row-major per original array.
OFF_W_IN = 0                                         # (1, 10)    -> 10
OFF_B_IN = OFF_W_IN + HIDDEN                         # (1, 10)    -> 10
OFF_W_H = OFF_B_IN + HIDDEN                          # (5, 10,10) -> 500   [l,i,j] (in,out)
OFF_B_H = OFF_W_H + N_HIDDEN_LAYERS * HIDDEN * HIDDEN  # (5, 10)  -> 50
OFF_W_OUT = OFF_B_H + N_HIDDEN_LAYERS * HIDDEN       # (10, 1)    -> 10
OFF_B_OUT = OFF_W_OUT + HIDDEN                       # (1, 1)     -> 1
N_PARAMS = OFF_B_OUT + 1                             # 581


def pinn_kernel(t_ref, p_ref, o_ref):
    # t_ref / o_ref: (tile_rows, 128) f32 VMEM -- batch lane-dense.
    # p_ref: (581,) f32 SMEM -- all weights/biases as scalars.
    t = t_ref[...]

    # --- layer_in: 1 -> 10.  Scalar (SMEM) * vector (VPU) FMA, then EUP tanh.
    x = [jnp.tanh(t * p_ref[OFF_W_IN + j] + p_ref[OFF_B_IN + j])
         for j in range(HIDDEN)]

    # --- 5 hidden layers: 10 -> 10.  Statically unrolled scalar-broadcast FMA chains.
    for l in range(N_HIDDEN_LAYERS):
        w_base = OFF_W_H + l * HIDDEN * HIDDEN
        b_base = OFF_B_H + l * HIDDEN
        y = []
        for j in range(HIDDEN):
            acc = x[0] * p_ref[w_base + j]
            for i in range(1, HIDDEN):
                acc = acc + x[i] * p_ref[w_base + i * HIDDEN + j]
            y.append(jnp.tanh(acc + p_ref[b_base + j]))
        x = y

    # --- layer_out: 10 -> 1.  Lane-dense result, unmasked full-width stores.
    out = x[0] * p_ref[OFF_W_OUT + 0]
    for i in range(1, HIDDEN):
        out = out + x[i] * p_ref[OFF_W_OUT + i]
    o_ref[...] = (out + p_ref[OFF_B_OUT]).astype(o_ref.dtype)


def flatten_params(params):
    w_in, b_in, w_h, b_h, w_out, b_out = params
    flat = jnp.concatenate([
        w_in.reshape(-1), b_in.reshape(-1),
        w_h.reshape(-1), b_h.reshape(-1),
        w_out.reshape(-1), b_out.reshape(-1),
    ]).astype(jnp.float32)
    return flat


def logistic_pinn_forward(t, params, *, target_tile_rows=256):
    """t: (N, 1) float32.  Returns (N, 1) float32."""
    w_flat = flatten_params(params)
    assert w_flat.shape == (N_PARAMS,)

    N = t.shape[0]
    rows = pl.cdiv(N, LANES)

    # Tile selection (review): big tiles to amortize the ~0.35us per-step pipeline
    # overhead, but keep >= 2 grid steps (v7x 2-TC sharding) and cap at 512 rows so
    # live activations stay a few MiB of VMEM on all generations.
    target = max(8, (min(int(target_tile_rows), 512) // 8) * 8)
    cap = max(8, ((rows // 2) // 8) * 8)       # grid >= 2 whenever rows >= 16
    tile_rows = min(target, cap)

    rows_pad = pl.cdiv(rows, tile_rows) * tile_rows
    n_pad = rows_pad * LANES
    grid = (rows_pad // tile_rows,)

    # Lane-dense reshape: (N, 1) -> (rows_pad, 128), batch along the lane axis.
    t_lane = jnp.pad(t.reshape(-1), (0, n_pad - N)).reshape(rows_pad, LANES)

    # Explicit scoped-VMEM budget with headroom over (live activations + double-
    # buffered t/out); <= 32 MiB so it is valid on v5e/v6e (128 MiB) and v7x (64 MiB).
    vmem_limit = min(32 * 1024 * 1024,
                     max(16 * 1024 * 1024, 48 * tile_rows * LANES * 4))

    out_lane = pl.pallas_call(
        pinn_kernel,
        out_shape=jax.ShapeDtypeStruct((rows_pad, LANES), jnp.float32),
        grid_spec=pltpu.PrefetchScalarGridSpec(
            num_scalar_prefetch=0,
            grid=grid,
            in_specs=[
                pl.BlockSpec((tile_rows, LANES), lambda i: (i, 0)),    # t (lane-dense)
                pl.BlockSpec(memory_space=pltpu.MemorySpace.SMEM),     # flat weights
            ],
            out_specs=pl.BlockSpec((tile_rows, LANES), lambda i: (i, 0)),
        ),
        compiler_params=pltpu.CompilerParams(
            dimension_semantics=("parallel",),     # shards grid across 2 TCs on v7x
            vmem_limit_bytes=vmem_limit),
    )(t_lane, w_flat)

    return out_lane.reshape(n_pad, 1)[:N]


def init_params(key):
    """Deterministic init mimicking torch.nn.Linear default (U[-1/sqrt(fan_in), +])."""
    ks = jax.random.split(key, 7)

    def uniform(k, shape, fan_in):
        bound = 1.0 / jnp.sqrt(jnp.float32(fan_in))
        return jax.random.uniform(k, shape, jnp.float32, -bound, bound)

    w_in = uniform(ks[0], (1, HIDDEN), 1)                             # (in, out)
    b_in = uniform(ks[1], (1, HIDDEN), 1)
    w_h = uniform(ks[2], (N_HIDDEN_LAYERS, HIDDEN, HIDDEN), HIDDEN)   # stacked (in, out)
    b_h = uniform(ks[3], (N_HIDDEN_LAYERS, HIDDEN), HIDDEN)
    w_out = uniform(ks[4], (HIDDEN, 1), HIDDEN)
    b_out = uniform(ks[5], (1, 1), HIDDEN)
    return w_in, b_in, w_h, b_h, w_out, b_out


def reference_forward(t, params):
    """Plain-JAX reference matching the PyTorch forward semantics."""
    w_in, b_in, w_h, b_h, w_out, b_out = params
    x = jnp.tanh(t @ w_in + b_in)
    for i in range(N_HIDDEN_LAYERS):
        x = jnp.tanh(x @ w_h[i] + b_h[i][None, :])
    return x @ w_out + b_out


if __name__ == "__main__":
    key = jax.random.PRNGKey(0)
    k_param, k_t = jax.random.split(key)

    params = init_params(k_param)

    # 8192 collocation points: rows = 64 -> tile_rows capped to 32 so the grid keeps
    # 2 "parallel" steps of 4096 lane-dense samples each (both v7x TCs used).
    N = 8192
    t = jax.random.uniform(k_t, (N, 1), jnp.float32, 0.0, 1.0)

    out = jax.block_until_ready(logistic_pinn_forward(t, params))
    ref = reference_forward(t, params)
    assert out.shape == (N, 1) and out.dtype == jnp.float32
    assert jnp.allclose(out, ref, atol=1e-5, rtol=1e-5), float(
        jnp.max(jnp.abs(out - ref)))

    # Ragged batch size exercising the zero-padding / single-step path.
    N2 = 333
    t2 = jax.random.uniform(jax.random.PRNGKey(1), (N2, 1), jnp.float32, 0.0, 1.0)
    out2 = jax.block_until_ready(logistic_pinn_forward(t2, params))
    ref2 = reference_forward(t2, params)
    assert out2.shape == (N2, 1)
    assert jnp.allclose(out2, ref2, atol=1e-5, rtol=1e-5), float(
        jnp.max(jnp.abs(out2 - ref2)))

    print("KERNEL_OK")
</pallas_src>

<mosaic_0001>
module attributes {stable_mosaic.version = 11 : i64} {
  func.func @pinn_kernel(%arg0: i32, %arg1: memref<32x128xf32, #tpu.memory_space<vmem>>, %arg2: memref<581xf32, #tpu.memory_space<smem>>, %arg3: memref<32x128xf32, #tpu.memory_space<vmem>>) attributes {dimension_semantics = [#tpu.dimension_semantics<parallel>], iteration_bounds = array<i64: 2>, scalar_prefetch = 0 : i64, scratch_operands = 0 : i64, tpu.core_type = #tpu.core_type<tc>, window_params = [{transform_indices = @transform_0, window_bounds = array<i64: 32, 128>}, {transform_indices = @transform_1, window_bounds = array<i64: 581>}, {transform_indices = @transform_2, window_bounds = array<i64: 32, 128>}]} {
    %c0 = arith.constant 0 : index
    %c0_0 = arith.constant 0 : index
    %0 = vector.load %arg1[%c0, %c0_0] : memref<32x128xf32, #tpu.memory_space<vmem>>, vector<32x128xf32>
    %c0_1 = arith.constant 0 : index
    %1 = memref.load %arg2[%c0_1] : memref<581xf32, #tpu.memory_space<smem>>
    %2 = vector.broadcast %1 : f32 to vector<32x128xf32>
    %3 = arith.mulf %0, %2 : vector<32x128xf32>
    %c10 = arith.constant 10 : index
    %4 = memref.load %arg2[%c10] : memref<581xf32, #tpu.memory_space<smem>>
    %5 = vector.broadcast %4 : f32 to vector<32x128xf32>
    %6 = arith.addf %3, %5 : vector<32x128xf32>
    %7 = math.tanh %6 : vector<32x128xf32>
    %c1 = arith.constant 1 : index
    %8 = memref.load %arg2[%c1] : memref<581xf32, #tpu.memory_space<smem>>
    %9 = vector.broadcast %8 : f32 to vector<32x128xf32>
    %10 = arith.mulf %0, %9 : vector<32x128xf32>
    %c11 = arith.constant 11 : index
    %11 = memref.load %arg2[%c11] : memref<581xf32, #tpu.memory_space<smem>>
    %12 = vector.broadcast %11 : f32 to vector<32x128xf32>
    %13 = arith.addf %10, %12 : vector<32x128xf32>
    %14 = math.tanh %13 : vector<32x128xf32>
    %c2 = arith.constant 2 : index
    %15 = memref.load %arg2[%c2] : memref<581xf32, #tpu.memory_space<smem>>
    %16 = vector.broadcast %15 : f32 to vector<32x128xf32>
    %17 = arith.mulf %0, %16 : vector<32x128xf32>
    %c12 = arith.constant 12 : index
    %18 = memref.load %arg2[%c12] : memref<581xf32, #tpu.memory_space<smem>>
    %19 = vector.broadcast %18 : f32 to vector<32x128xf32>
    %20 = arith.addf %17, %19 : vector<32x128xf32>
    %21 = math.tanh %20 : vector<32x128xf32>
    %c3 = arith.constant 3 : index
    %22 = memref.load %arg2[%c3] : memref<581xf32, #tpu.memory_space<smem>>
    %23 = vector.broadcast %22 : f32 to vector<32x128xf32>
    %24 = arith.mulf %0, %23 : vector<32x128xf32>
    %c13 = arith.constant 13 : index
    %25 = memref.load %arg2[%c13] : memref<581xf32, #tpu.memory_space<smem>>
    %26 = vector.broadcast %25 : f32 to vector<32x128xf32>
    %27 = arith.addf %24, %26 : vector<32x128xf32>
    %28 = math.tanh %27 : vector<32x128xf32>
    %c4 = arith.constant 4 : index
    %29 = memref.load %arg2[%c4] : memref<581xf32, #tpu.memory_space<smem>>
    %30 = vector.broadcast %29 : f32 to vector<32x128xf32>
    %31 = arith.mulf %0, %30 : vector<32x128xf32>
    %c14 = arith.constant 14 : index
    %32 = memref.load %arg2[%c14] : memref<581xf32, #tpu.memory_space<smem>>
    %33 = vector.broadcast %32 : f32 to vector<32x128xf32>
    %34 = arith.addf %31, %33 : vector<32x128xf32>
    %35 = math.tanh %34 : vector<32x128xf32>
    %c5 = arith.constant 5 : index
    %36 = memref.load %arg2[%c5] : memref<581xf32, #tpu.memory_space<smem>>
    %37 = vector.broadcast %36 : f32 to vector<32x128xf32>
    %38 = arith.mulf %0, %37 : vector<32x128xf32>
    %c15 = arith.constant 15 : index
    %39 = memref.load %arg2[%c15] : memref<581xf32, #tpu.memory_space<smem>>
    %40 = vector.broadcast %39 : f32 to vector<32x128xf32>
    %41 = arith.addf %38, %40 : vector<32x128xf32>
    %42 = math.tanh %41 : vector<32x128xf32>
    %c6 = arith.constant 6 : index
    %43 = memref.load %arg2[%c6] : memref<581xf32, #tpu.memory_space<smem>>
    %44 = vector.broadcast %43 : f32 to vector<32x128xf32>
    %45 = arith.mulf %0, %44 : vector<32x128xf32>
    %c16 = arith.constant 16 : index
    %46 = memref.load %arg2[%c16] : memref<581xf32, #tpu.memory_space<smem>>
    %47 = vector.broadcast %46 : f32 to vector<32x128xf32>
    %48 = arith.addf %45, %47 : vector<32x128xf32>
    %49 = math.tanh %48 : vector<32x128xf32>
    %c7 = arith.constant 7 : index
    %50 = memref.load %arg2[%c7] : memref<581xf32, #tpu.memory_space<smem>>
    %51 = vector.broadcast %50 : f32 to vector<32x128xf32>
    %52 = arith.mulf %0, %51 : vector<32x128xf32>
    %c17 = arith.constant 17 : index
    %53 = memref.load %arg2[%c17] : memref<581xf32, #tpu.memory_space<smem>>
    %54 = vector.broadcast %53 : f32 to vector<32x128xf32>
    %55 = arith.addf %52, %54 : vector<32x128xf32>
    %56 = math.tanh %55 : vector<32x128xf32>
    %c8 = arith.constant 8 : index
    %57 = memref.load %arg2[%c8] : memref<581xf32, #tpu.memory_space<smem>>
    %58 = vector.broadcast %57 : f32 to vector<32x128xf32>
    %59 = arith.mulf %0, %58 : vector<32x128xf32>
    %c18 = arith.constant 18 : index
    %60 = memref.load %arg2[%c18] : memref<581xf32, #tpu.memory_space<smem>>
    %61 = vector.broadcast %60 : f32 to vector<32x128xf32>
    %62 = arith.addf %59, %61 : vector<32x128xf32>
    %63 = math.tanh %62 : vector<32x128xf32>
    %c9 = arith.constant 9 : index
    %64 = memref.load %arg2[%c9] : memref<581xf32, #tpu.memory_space<smem>>
    %65 = vector.broadcast %64 : f32 to vector<32x128xf32>
    %66 = arith.mulf %0, %65 : vector<32x128xf32>
    %c19 = arith.constant 19 : index
    %67 = memref.load %arg2[%c19] : memref<581xf32, #tpu.memory_space<smem>>
    %68 = vector.broadcast %67 : f32 to vector<32x128xf32>
    %69 = arith.addf %66, %68 : vector<32x128xf32>
    %70 = math.tanh %69 : vector<32x128xf32>
    %c20 = arith.constant 20 : index
    %71 = memref.load %arg2[%c20] : memref<581xf32, #tpu.memory_space<smem>>
    %72 = vector.broadcast %71 : f32 to vector<32x128xf32>
    %73 = arith.mulf %7, %72 : vector<32x128xf32>
    %c30 = arith.constant 30 : index
    %74 = memref.load %arg2[%c30] : memref<581xf32, #tpu.memory_space<smem>>
    %75 = vector.broadcast %74 : f32 to vector<32x128xf32>
    %76 = arith.mulf %14, %75 : vector<32x128xf32>
    %77 = arith.addf %73, %76 : vector<32x128xf32>
    %c40 = arith.constant 40 : index
    %78 = memref.load %arg2[%c40] : memref<581xf32, #tpu.memory_space<smem>>
    %79 = vector.broadcast %78 : f32 to vector<32x128xf32>
    %80 = arith.mulf %21, %79 : vector<32x128xf32>
    %81 = arith.addf %77, %80 : vector<32x128xf32>
    %c50 = arith.constant 50 : index
    %82 = memref.load %arg2[%c50] : memref<581xf32, #tpu.memory_space<smem>>
    %83 = vector.broadcast %82 : f32 to vector<32x128xf32>
    %84 = arith.mulf %28, %83 : vector<32x128xf32>
    %85 = arith.addf %81, %84 : vector<32x128xf32>
    %c60 = arith.constant 60 : index
    %86 = memref.load %arg2[%c60] : memref<581xf32, #tpu.memory_space<smem>>
    %87 = vector.broadcast %86 : f32 to vector<32x128xf32>
    %88 = arith.mulf %35, %87 : vector<32x128xf32>
    %89 = arith.addf %85, %88 : vector<32x128xf32>
    %c70 = arith.constant 70 : index
    %90 = memref.load %arg2[%c70] : memref<581xf32, #tpu.memory_space<smem>>
    %91 = vector.broadcast %90 : f32 to vector<32x128xf32>
    %92 = arith.mulf %42, %91 : vector<32x128xf32>
    %93 = arith.addf %89, %92 : vector<32x128xf32>
    %c80 = arith.constant 80 : index
    %94 = memref.load %arg2[%c80] : memref<581xf32, #tpu.memory_space<smem>>
    %95 = vector.broadcast %94 : f32 to vector<32x128xf32>
    %96 = arith.mulf %49, %95 : vector<32x128xf32>
    %97 = arith.addf %93, %96 : vector<32x128xf32>
    %c90 = arith.constant 90 : index
    %98 = memref.load %arg2[%c90] : memref<581xf32, #tpu.memory_space<smem>>
    %99 = vector.broadcast %98 : f32 to vector<32x128xf32>
    %100 = arith.mulf %56, %99 : vector<32x128xf32>
    %101 = arith.addf %97, %100 : vector<32x128xf32>
    %c100 = arith.constant 100 : index
    %102 = memref.load %arg2[%c100] : memref<581xf32, #tpu.memory_space<smem>>
    %103 = vector.broadcast %102 : f32 to vector<32x128xf32>
    %104 = arith.mulf %63, %103 : vector<32x128xf32>
    %105 = arith.addf %101, %104 : vector<32x128xf32>
    %c110 = arith.constant 110 : index
    %106 = memref.load %arg2[%c110] : memref<581xf32, #tpu.memory_space<smem>>
    %107 = vector.broadcast %106 : f32 to vector<32x128xf32>
    %108 = arith.mulf %70, %107 : vector<32x128xf32>
    %109 = arith.addf %105, %108 : vector<32x128xf32>
    %c520 = arith.constant 520 : index
    %110 = memref.load %arg2[%c520] : memref<581xf32, #tpu.memory_space<smem>>
    %111 = vector.broadcast %110 : f32 to vector<32x128xf32>
    %112 = arith.addf %109, %111 : vector<32x128xf32>
    %113 = math.tanh %112 : vector<32x128xf32>
    %c21 = arith.constant 21 : index
    %114 = memref.load %arg2[%c21] : memref<581xf32, #tpu.memory_space<smem>>
    %115 = vector.broadcast %114 : f32 to vector<32x128xf32>
    %116 = arith.mulf %7, %115 : vector<32x128xf32>
    %c31 = arith.constant 31 : index
    %117 = memref.load %arg2[%c31] : memref<581xf32, #tpu.memory_space<smem>>
    %118 = vector.broadcast %117 : f32 to vector<32x128xf32>
    %119 = arith.mulf %14, %118 : vector<32x128xf32>
    %120 = arith.addf %116, %119 : vector<32x128xf32>
    %c41 = arith.constant 41 : index
    %121 = memref.load %arg2[%c41] : memref<581xf32, #tpu.memory_space<smem>>
    %122 = vector.broadcast %121 : f32 to vector<32x128xf32>
    %123 = arith.mulf %21, %122 : vector<32x128xf32>
    %124 = arith.addf %120, %123 : vector<32x128xf32>
    %c51 = arith.constant 51 : index
    %125 = memref.load %arg2[%c51] : memref<581xf32, #tpu.memory_space<smem>>
    %126 = vector.broadcast %125 : f32 to vector<32x128xf32>
    %127 = arith.mulf %28, %126 : vector<32x128xf32>
    %128 = arith.addf %124, %127 : vector<32x128xf32>
    %c61 = arith.constant 61 : index
    %129 = memref.load %arg2[%c61] : memref<581xf32, #tpu.memory_space<smem>>
    %130 = vector.broadcast %129 : f32 to vector<32x128xf32>
    %131 = arith.mulf %35, %130 : vector<32x128xf32>
    %132 = arith.addf %128, %131 : vector<32x128xf32>
    %c71 = arith.constant 71 : index
    %133 = memref.load %arg2[%c71] : memref<581xf32, #tpu.memory_space<smem>>
    %134 = vector.broadcast %133 : f32 to vector<32x128xf32>
    %135 = arith.mulf %42, %134 : vector<32x128xf32>
    %136 = arith.addf %132, %135 : vector<32x128xf32>
    %c81 = arith.constant 81 : index
    %137 = memref.load %arg2[%c81] : memref<581xf32, #tpu.memory_space<smem>>
    %138 = vector.broadcast %137 : f32 to vector<32x128xf32>
    %139 = arith.mulf %49, %138 : vector<32x128xf32>
    %140 = arith.addf %136, %139 : vector<32x128xf32>
    %c91 = arith.constant 91 : index
    %141 = memref.load %arg2[%c91] : memref<581xf32, #tpu.memory_space<smem>>
    %142 = vector.broadcast %141 : f32 to vector<32x128xf32>
    %143 = arith.mulf %56, %142 : vector<32x128xf32>
    %144 = arith.addf %140, %143 : vector<32x128xf32>
    %c101 = arith.constant 101 : index
    %145 = memref.load %arg2[%c101] : memref<581xf32, #tpu.memory_space<smem>>
    %146 = vector.broadcast %145 : f32 to vector<32x128xf32>
    %147 = arith.mulf %63, %146 : vector<32x128xf32>
    %148 = arith.addf %144, %147 : vector<32x128xf32>
    %c111 = arith.constant 111 : index
    %149 = memref.load %arg2[%c111] : memref<581xf32, #tpu.memory_space<smem>>
    %150 = vector.broadcast %149 : f32 to vector<32x128xf32>
    %151 = arith.mulf %70, %150 : vector<32x128xf32>
    %152 = arith.addf %148, %151 : vector<32x128xf32>
    %c521 = arith.constant 521 : index
    %153 = memref.load %arg2[%c521] : memref<581xf32, #tpu.memory_space<smem>>
    %154 = vector.broadcast %153 : f32 to vector<32x128xf32>
    %155 = arith.addf %152, %154 : vector<32x128xf32>
    %156 = math.tanh %155 : vector<32x128xf32>
    %c22 = arith.constant 22 : index
    %157 = memref.load %arg2[%c22] : memref<581xf32, #tpu.memory_space<smem>>
    %158 = vector.broadcast %157 : f32 to vector<32x128xf32>
    %159 = arith.mulf %7, %158 : vector<32x128xf32>
    %c32 = arith.constant 32 : index
    %160 = memref.load %arg2[%c32] : memref<581xf32, #tpu.memory_space<smem>>
    %161 = vector.broadcast %160 : f32 to vector<32x128xf32>
    %162 = arith.mulf %14, %161 : vector<32x128xf32>
    %163 = arith.addf %159, %162 : vector<32x128xf32>
    %c42 = arith.constant 42 : index
    %164 = memref.load %arg2[%c42] : memref<581xf32, #tpu.memory_space<smem>>
    %165 = vector.broadcast %164 : f32 to vector<32x128xf32>
    %166 = arith.mulf %21, %165 : vector<32x128xf32>
    %167 = arith.addf %163, %166 : vector<32x128xf32>
    %c52 = arith.constant 52 : index
    %168 = memref.load %arg2[%c52] : memref<581xf32, #tpu.memory_space<smem>>
    %169 = vector.broadcast %168 : f32 to vector<32x128xf32>
    %170 = arith.mulf %28, %169 : vector<32x128xf32>
    %171 = arith.addf %167, %170 : vector<32x128xf32>
    %c62 = arith.constant 62 : index
    %172 = memref.load %arg2[%c62] : memref<581xf32, #tpu.memory_space<smem>>
    %173 = vector.broadcast %172 : f32 to vector<32x128xf32>
    %174 = arith.mulf %35, %173 : vector<32x128xf32>
    %175 = arith.addf %171, %174 : vector<32x128xf32>
    %c72 = arith.constant 72 : index
    %176 = memref.load %arg2[%c72] : memref<581xf32, #tpu.memory_space<smem>>
    %177 = vector.broadcast %176 : f32 to vector<32x128xf32>
    %178 = arith.mulf %42, %177 : vector<32x128xf32>
    %179 = arith.addf %175, %178 : vector<32x128xf32>
    %c82 = arith.constant 82 : index
    %180 = memref.load %arg2[%c82] : memref<581xf32, #tpu.memory_space<smem>>
    %181 = vector.broadcast %180 : f32 to vector<32x128xf32>
    %182 = arith.mulf %49, %181 : vector<32x128xf32>
    %183 = arith.addf %179, %182 : vector<32x128xf32>
    %c92 = arith.constant 92 : index
    %184 = memref.load %arg2[%c92] : memref<581xf32, #tpu.memory_space<smem>>
    %185 = vector.broadcast %184 : f32 to vector<32x128xf32>
    %186 = arith.mulf %56, %185 : vector<32x128xf32>
    %187 = arith.addf %183, %186 : vector<32x128xf32>
    %c102 = arith.constant 102 : index
    %188 = memref.load %arg2[%c102] : memref<581xf32, #tpu.memory_space<smem>>
    %189 = vector.broadcast %188 : f32 to vector<32x128xf32>
    %190 = arith.mulf %63, %189 : vector<32x128xf32>
    %191 = arith.addf %187, %190 : vector<32x128xf32>
    %c112 = arith.constant 112 : index
    %192 = memref.load %arg2[%c112] : memref<581xf32, #tpu.memory_space<smem>>
    %193 = vector.broadcast %192 : f32 to vector<32x128xf32>
    %194 = arith.mulf %70, %193 : vector<32x128xf32>
    %195 = arith.addf %191, %194 : vector<32x128xf32>
    %c522 = arith.constant 522 : index
    %196 = memref.load %arg2[%c522] : memref<581xf32, #tpu.memory_space<smem>>
    %197 = vector.broadcast %196 : f32 to vector<32x128xf32>
    %198 = arith.addf %195, %197 : vector<32x128xf32>
    %199 = math.tanh %198 : vector<32x128xf32>
    %c23 = arith.constant 23 : index
    %200 = memref.load %arg2[%c23] : memref<581xf32, #tpu.memory_space<smem>>
    %201 = vector.broadcast %200 : f32 to vector<32x128xf32>
    %202 = arith.mulf %7, %201 : vector<32x128xf32>
    %c33 = arith.constant 33 : index
    %203 = memref.load %arg2[%c33] : memref<581xf32, #tpu.memory_space<smem>>
    %204 = vector.broadcast %203 : f32 to vector<32x128xf32>
    %205 = arith.mulf %14, %204 : vector<32x128xf32>
    %206 = arith.addf %202, %205 : vector<32x128xf32>
    %c43 = arith.constant 43 : index
    %207 = memref.load %arg2[%c43] : memref<581xf32, #tpu.memory_space<smem>>
    %208 = vector.broadcast %207 : f32 to vector<32x128xf32>
    %209 = arith.mulf %21, %208 : vector<32x128xf32>
    %210 = arith.addf %206, %209 : vector<32x128xf32>
    %c53 = arith.constant 53 : index
    %211 = memref.load %arg2[%c53] : memref<581xf32, #tpu.memory_space<smem>>
    %212 = vector.broadcast %211 : f32 to vector<32x128xf32>
    %213 = arith.mulf %28, %212 : vector<32x128xf32>
    %214 = arith.addf %210, %213 : vector<32x128xf32>
    %c63 = arith.constant 63 : index
    %215 = memref.load %arg2[%c63] : memref<581xf32, #tpu.memory_space<smem>>
    %216 = vector.broadcast %215 : f32 to vector<32x128xf32>
    %217 = arith.mulf %35, %216 : vector<32x128xf32>
    %218 = arith.addf %214, %217 : vector<32x128xf32>
    %c73 = arith.constant 73 : index
    %219 = memref.load %arg2[%c73] : memref<581xf32, #tpu.memory_space<smem>>
    %220 = vector.broadcast %219 : f32 to vector<32x128xf32>
    %221 = arith.mulf %42, %220 : vector<32x128xf32>
    %222 = arith.addf %218, %221 : vector<32x128xf32>
    %c83 = arith.constant 83 : index
    %223 = memref.load %arg2[%c83] : memref<581xf32, #tpu.memory_space<smem>>
    %224 = vector.broadcast %223 : f32 to vector<32x128xf32>
    %225 = arith.mulf %49, %224 : vector<32x128xf32>
    %226 = arith.addf %222, %225 : vector<32x128xf32>
    %c93 = arith.constant 93 : index
    %227 = memref.load %arg2[%c93] : memref<581xf32, #tpu.memory_space<smem>>
    %228 = vector.broadcast %227 : f32 to vector<32x128xf32>
    %229 = arith.mulf %56, %228 : vector<32x128xf32>
    %230 = arith.addf %226, %229 : vector<32x128xf32>
    %c103 = arith.constant 103 : index
    %231 = memref.load %arg2[%c103] : memref<581xf32, #tpu.memory_space<smem>>
    %232 = vector.broadcast %231 : f32 to vector<32x128xf32>
    %233 = arith.mulf %63, %232 : vector<32x128xf32>
    %234 = arith.addf %230, %233 : vector<32x128xf32>
    %c113 = arith.constant 113 : index
    %235 = memref.load %arg2[%c113] : memref<581xf32, #tpu.memory_space<smem>>
    %236 = vector.broadcast %235 : f32 to vector<32x128xf32>
    %237 = arith.mulf %70, %236 : vector<32x128xf32>
    %238 = arith.addf %234, %237 : vector<32x128xf32>
    %c523 = arith.constant 523 : index
    %239 = memref.load %arg2[%c523] : memref<581xf32, #tpu.memory_space<smem>>
    %240 = vector.broadcast %239 : f32 to vector<32x128xf32>
    %241 = arith.addf %238, %240 : vector<32x128xf32>
    %242 = math.tanh %241 : vector<32x128xf32>
    %c24 = arith.constant 24 : index
    %243 = memref.load %arg2[%c24] : memref<581xf32, #tpu.memory_space<smem>>
    %244 = vector.broadcast %243 : f32 to vector<32x128xf32>
    %245 = arith.mulf %7, %244 : vector<32x128xf32>
    %c34 = arith.constant 34 : index
    %246 = memref.load %arg2[%c34] : memref<581xf32, #tpu.memory_space<smem>>
    %247 = vector.broadcast %246 : f32 to vector<32x128xf32>
    %248 = arith.mulf %14, %247 : vector<32x128xf32>
    %249 = arith.addf %245, %248 : vector<32x128xf32>
    %c44 = arith.constant 44 : index
    %250 = memref.load %arg2[%c44] : memref<581xf32, #tpu.memory_space<smem>>
    %251 = vector.broadcast %250 : f32 to vector<32x128xf32>
    %252 = arith.mulf %21, %251 : vector<32x128xf32>
    %253 = arith.addf %249, %252 : vector<32x128xf32>
    %c54 = arith.constant 54 : index
    %254 = memref.load %arg2[%c54] : memref<581xf32, #tpu.memory_space<smem>>
    %255 = vector.broadcast %254 : f32 to vector<32x128xf32>
    %256 = arith.mulf %28, %255 : vector<32x128xf32>
    %257 = arith.addf %253, %256 : vector<32x128xf32>
    %c64 = arith.constant 64 : index
    %258 = memref.load %arg2[%c64] : memref<581xf32, #tpu.memory_space<smem>>
    %259 = vector.broadcast %258 : f32 to vector<32x128xf32>
    %260 = arith.mulf %35, %259 : vector<32x128xf32>
    %261 = arith.addf %257, %260 : vector<32x128xf32>
    %c74 = arith.constant 74 : index
    %262 = memref.load %arg2[%c74] : memref<581xf32, #tpu.memory_space<smem>>
    %263 = vector.broadcast %262 : f32 to vector<32x128xf32>
    %264 = arith.mulf %42, %263 : vector<32x128xf32>
    %265 = arith.addf %261, %264 : vector<32x128xf32>
    %c84 = arith.constant 84 : index
    %266 = memref.load %arg2[%c84] : memref<581xf32, #tpu.memory_space<smem>>
    %267 = vector.broadcast %266 : f32 to vector<32x128xf32>
    %268 = arith.mulf %49, %267 : vector<32x128xf32>
    %269 = arith.addf %265, %268 : vector<32x128xf32>
    %c94 = arith.constant 94 : index
    %270 = memref.load %arg2[%c94] : memref<581xf32, #tpu.memory_space<smem>>
    %271 = vector.broadcast %270 : f32 to vector<32x128xf32>
    %272 = arith.mulf %56, %271 : vector<32x128xf32>
    %273 = arith.addf %269, %272 : vector<32x128xf32>
    %c104 = arith.constant 104 : index
    %274 = memref.load %arg2[%c104] : memref<581xf32, #tpu.memory_space<smem>>
    %275 = vector.broadcast %274 : f32 to vector<32x128xf32>
    %276 = arith.mulf %63, %275 : vector<32x128xf32>
    %277 = arith.addf %273, %276 : vector<32x128xf32>
    %c114 = arith.constant 114 : index
    %278 = memref.load %arg2[%c114] : memref<581xf32, #tpu.memory_space<smem>>
    %279 = vector.broadcast %278 : f32 to vector<32x128xf32>
    %280 = arith.mulf %70, %279 : vector<32x128xf32>
    %281 = arith.addf %277, %280 : vector<32x128xf32>
    %c524 = arith.constant 524 : index
    %282 = memref.load %arg2[%c524] : memref<581xf32, #tpu.memory_space<smem>>
    %283 = vector.broadcast %282 : f32 to vector<32x128xf32>
    %284 = arith.addf %281, %283 : vector<32x128xf32>
    %285 = math.tanh %284 : vector<32x128xf32>
    %c25 = arith.constant 25 : index
    %286 = memref.load %arg2[%c25] : memref<581xf32, #tpu.memory_space<smem>>
    %287 = vector.broadcast %286 : f32 to vector<32x128xf32>
    %288 = arith.mulf %7, %287 : vector<32x128xf32>
    %c35 = arith.constant 35 : index
    %289 = memref.load %arg2[%c35] : memref<581xf32, #tpu.memory_space<smem>>
    %290 = vector.broadcast %289 : f32 to vector<32x128xf32>
    %291 = arith.mulf %14, %290 : vector<32x128xf32>
    %292 = arith.addf %288, %291 : vector<32x128xf32>
    %c45 = arith.constant 45 : index
    %293 = memref.load %arg2[%c45] : memref<581xf32, #tpu.memory_space<smem>>
    %294 = vector.broadcast %293 : f32 to vector<32x128xf32>
    %295 = arith.mulf %21, %294 : vector<32x128xf32>
    %296 = arith.addf %292, %295 : vector<32x128xf32>
    %c55 = arith.constant 55 : index
    %297 = memref.load %arg2[%c55] : memref<581xf32, #tpu.memory_space<smem>>
    %298 = vector.broadcast %297 : f32 to vector<32x128xf32>
    %299 = arith.mulf %28, %298 : vector<32x128xf32>
    %300 = arith.addf %296, %299 : vector<32x128xf32>
    %c65 = arith.constant 65 : index
    %301 = memref.load %arg2[%c65] : memref<581xf32, #tpu.memory_space<smem>>
    %302 = vector.broadcast %301 : f32 to vector<32x128xf32>
    %303 = arith.mulf %35, %302 : vector<32x128xf32>
    %304 = arith.addf %300, %303 : vector<32x128xf32>
    %c75 = arith.constant 75 : index
    %305 = memref.load %arg2[%c75] : memref<581xf32, #tpu.memory_space<smem>>
    %306 = vector.broadcast %305 : f32 to vector<32x128xf32>
    %307 = arith.mulf %42, %306 : vector<32x128xf32>
    %308 = arith.addf %304, %307 : vector<32x128xf32>
    %c85 = arith.constant 85 : index
    %309 = memref.load %arg2[%c85] : memref<581xf32, #tpu.memory_space<smem>>
    %310 = vector.broadcast %309 : f32 to vector<32x128xf32>
    %311 = arith.mulf %49, %310 : vector<32x128xf32>
    %312 = arith.addf %308, %311 : vector<32x128xf32>
    %c95 = arith.constant 95 : index
    %313 = memref.load %arg2[%c95] : memref<581xf32, #tpu.memory_space<smem>>
    %314 = vector.broadcast %313 : f32 to vector<32x128xf32>
    %315 = arith.mulf %56, %314 : vector<32x128xf32>
    %316 = arith.addf %312, %315 : vector<32x128xf32>
    %c105 = arith.constant 105 : index
    %317 = memref.load %arg2[%c105] : memref<581xf32, #tpu.memory_space<smem>>
    %318 = vector.broadcast %317 : f32 to vector<32x128xf32>
    %319 = arith.mulf %63, %318 : vector<32x128xf32>
    %320 = arith.addf %316, %319 : vector<32x128xf32>
    %c115 = arith.constant 115 : index
    %321 = memref.load %arg2[%c115] : memref<581xf32, #tpu.memory_space<smem>>
    %322 = vector.broadcast %321 : f32 to vector<32x128xf32>
    %323 = arith.mulf %70, %322 : vector<32x128xf32>
    %324 = arith.addf %320, %323 : vector<32x128xf32>
    %c525 = arith.constant 525 : index
    %325 = memref.load %arg2[%c525] : memref<581xf32, #tpu.memory_space<smem>>
    %326 = vector.broadcast %325 : f32 to vector<32x128xf32>
    %327 = arith.addf %324, %326 : vector<32x128xf32>
    %328 = math.tanh %327 : vector<32x128xf32>
    %c26 = arith.constant 26 : index
    %329 = memref.load %arg2[%c26] : memref<581xf32, #tpu.memory_space<smem>>
    %330 = vector.broadcast %329 : f32 to vector<32x128xf32>
    %331 = arith.mulf %7, %330 : vector<32x128xf32>
    %c36 = arith.constant 36 : index
    %332 = memref.load %arg2[%c36] : memref<581xf32, #tpu.memory_space<smem>>
    %333 = vector.broadcast %332 : f32 to vector<32x128xf32>
    %334 = arith.mulf %14, %333 : vector<32x128xf32>
    %335 = arith.addf %331, %334 : vector<32x128xf32>
    %c46 = arith.constant 46 : index
    %336 = memref.load %arg2[%c46] : memref<581xf32, #tpu.memory_space<smem>>
    %337 = vector.broadcast %336 : f32 to vector<32x128xf32>
    %338 = arith.mulf %21, %337 : vector<32x128xf32>
    %339 = arith.addf %335, %338 : vector<32x128xf32>
    %c56 = arith.constant 56 : index
    %340 = memref.load %arg2[%c56] : memref<581xf32, #tpu.memory_space<smem>>
    %341 = vector.broadcast %340 : f32 to vector<32x128xf32>
    %342 = arith.mulf %28, %341 : vector<32x128xf32>
    %343 = arith.addf %339, %342 : vector<32x128xf32>
    %c66 = arith.constant 66 : index
    %344 = memref.load %arg2[%c66] : memref<581xf32, #tpu.memory_space<smem>>
    %345 = vector.broadcast %344 : f32 to vector<32x128xf32>
    %346 = arith.mulf %35, %345 : vector<32x128xf32>
    %347 = arith.addf %343, %346 : vector<32x128xf32>
    %c76 = arith.constant 76 : index
    %348 = memref.load %arg2[%c76] : memref<581xf32, #tpu.memory_space<smem>>
    %349 = vector.broadcast %348 : f32 to vector<32x128xf32>
    %350 = arith.mulf %42, %349 : vector<32x128xf32>
    %351 = arith.addf %347, %350 : vector<32x128xf32>
    %c86 = arith.constant 86 : index
    %352 = memref.load %arg2[%c86] : memref<581xf32, #tpu.memory_space<smem>>
    %353 = vector.broadcast %352 : f32 to vector<32x128xf32>
    %354 = arith.mulf %49, %353 : vector<32x128xf32>
    %355 = arith.addf %351, %354 : vector<32x128xf32>
    %c96 = arith.constant 96 : index
    %356 = memref.load %arg2[%c96] : memref<581xf32, #tpu.memory_space<smem>>
    %357 = vector.broadcast %356 : f32 to vector<32x128xf32>
    %358 = arith.mulf %56, %357 : vector<32x128xf32>
    %359 = arith.addf %355, %358 : vector<32x128xf32>
    %c106 = arith.constant 106 : index
    %360 = memref.load %arg2[%c106] : memref<581xf32, #tpu.memory_space<smem>>
    %361 = vector.broadcast %360 : f32 to vector<32x128xf32>
    %362 = arith.mulf %63, %361 : vector<32x128xf32>
    %363 = arith.addf %359, %362 : vector<32x128xf32>
    %c116 = arith.constant 116 : index
    %364 = memref.load %arg2[%c116] : memref<581xf32, #tpu.memory_space<smem>>
    %365 = vector.broadcast %364 : f32 to vector<32x128xf32>
    %366 = arith.mulf %70, %365 : vector<32x128xf32>
    %367 = arith.addf %363, %366 : vector<32x128xf32>
    %c526 = arith.constant 526 : index
    %368 = memref.load %arg2[%c526] : memref<581xf32, #tpu.memory_space<smem>>
    %369 = vector.broadcast %368 : f32 to vector<32x128xf32>
    %370 = arith.addf %367, %369 : vector<32x128xf32>
    %371 = math.tanh %370 : vector<32x128xf32>
    %c27 = arith.constant 27 : index
    %372 = memref.load %arg2[%c27] : memref<581xf32, #tpu.memory_space<smem>>
    %373 = vector.broadcast %372 : f32 to vector<32x128xf32>
    %374 = arith.mulf %7, %373 : vector<32x128xf32>
    %c37 = arith.constant 37 : index
    %375 = memref.load %arg2[%c37] : memref<581xf32, #tpu.memory_space<smem>>
    %376 = vector.broadcast %375 : f32 to vector<32x128xf32>
    %377 = arith.mulf %14, %376 : vector<32x128xf32>
    %378 = arith.addf %374, %377 : vector<32x128xf32>
    %c47 = arith.constant 47 : index
    %379 = memref.load %arg2[%c47] : memref<581xf32, #tpu.memory_space<smem>>
    %380 = vector.broadcast %379 : f32 to vector<32x128xf32>
    %381 = arith.mulf %21, %380 : vector<32x128xf32>
    %382 = arith.addf %378, %381 : vector<32x128xf32>
    %c57 = arith.constant 57 : index
    %383 = memref.load %arg2[%c57] : memref<581xf32, #tpu.memory_space<smem>>
    %384 = vector.broadcast %383 : f32 to vector<32x128xf32>
    %385 = arith.mulf %28, %384 : vector<32x128xf32>
    %386 = arith.addf %382, %385 : vector<32x128xf32>
    %c67 = arith.constant 67 : index
    %387 = memref.load %arg2[%c67] : memref<581xf32, #tpu.memory_space<smem>>
    %388 = vector.broadcast %387 : f32 to vector<32x128xf32>
    %389 = arith.mulf %35, %388 : vector<32x128xf32>
    %390 = arith.addf %386, %389 : vector<32x128xf32>
    %c77 = arith.constant 77 : index
    %391 = memref.load %arg2[%c77] : memref<581xf32, #tpu.memory_space<smem>>
    %392 = vector.broadcast %391 : f32 to vector<32x128xf32>
    %393 = arith.mulf %42, %392 : vector<32x128xf32>
    %394 = arith.addf %390, %393 : vector<32x128xf32>
    %c87 = arith.constant 87 : index
    %395 = memref.load %arg2[%c87] : memref<581xf32, #tpu.memory_space<smem>>
    %396 = vector.broadcast %395 : f32 to vector<32x128xf32>
    %397 = arith.mulf %49, %396 : vector<32x128xf32>
    %398 = arith.addf %394, %397 : vector<32x128xf32>
    %c97 = arith.constant 97 : index
    %399 = memref.load %arg2[%c97] : memref<581xf32, #tpu.memory_space<smem>>
    %400 = vector.broadcast %399 : f32 to vector<32x128xf32>
    %401 = arith.mulf %56, %400 : vector<32x128xf32>
    %402 = arith.addf %398, %401 : vector<32x128xf32>
    %c107 = arith.constant 107 : index
    %403 = memref.load %arg2[%c107] : memref<581xf32, #tpu.memory_space<smem>>
    %404 = vector.broadcast %403 : f32 to vector<32x128xf32>
    %405 = arith.mulf %63, %404 : vector<32x128xf32>
    %406 = arith.addf %402, %405 : vector<32x128xf32>
    %c117 = arith.constant 117 : index
    %407 = memref.load %arg2[%c117] : memref<581xf32, #tpu.memory_space<smem>>
    %408 = vector.broadcast %407 : f32 to vector<32x128xf32>
    %409 = arith.mulf %70, %408 : vector<32x128xf32>
    %410 = arith.addf %406, %409 : vector<32x128xf32>
    %c527 = arith.constant 527 : index
    %411 = memref.load %arg2[%c527] : memref<581xf32, #tpu.memory_space<smem>>
    %412 = vector.broadcast %411 : f32 to vector<32x128xf32>
    %413 = arith.addf %410, %412 : vector<32x128xf32>
    %414 = math.tanh %413 : vector<32x128xf32>
    %c28 = arith.constant 28 : index
    %415 = memref.load %arg2[%c28] : memref<581xf32, #tpu.memory_space<smem>>
    %416 = vector.broadcast %415 : f32 to vector<32x128xf32>
    %417 = arith.mulf %7, %416 : vector<32x128xf32>
    %c38 = arith.constant 38 : index
    %418 = memref.load %arg2[%c38] : memref<581xf32, #tpu.memory_space<smem>>
    %419 = vector.broadcast %418 : f32 to vector<32x128xf32>
    %420 = arith.mulf %14, %419 : vector<32x128xf32>
    %421 = arith.addf %417, %420 : vector<32x128xf32>
    %c48 = arith.constant 48 : index
    %422 = memref.load %arg2[%c48] : memref<581xf32, #tpu.memory_space<smem>>
    %423 = vector.broadcast %422 : f32 to vector<32x128xf32>
    %424 = arith.mulf %21, %423 : vector<32x128xf32>
    %425 = arith.addf %421, %424 : vector<32x128xf32>
    %c58 = arith.constant 58 : index
    %426 = memref.load %arg2[%c58] : memref<581xf32, #tpu.memory_space<smem>>
    %427 = vector.broadcast %426 : f32 to vector<32x128xf32>
    %428 = arith.mulf %28, %427 : vector<32x128xf32>
    %429 = arith.addf %425, %428 : vector<32x128xf32>
    %c68 = arith.constant 68 : index
    %430 = memref.load %arg2[%c68] : memref<581xf32, #tpu.memory_space<smem>>
    %431 = vector.broadcast %430 : f32 to vector<32x128xf32>
    %432 = arith.mulf %35, %431 : vector<32x128xf32>
    %433 = arith.addf %429, %432 : vector<32x128xf32>
    %c78 = arith.constant 78 : index
    %434 = memref.load %arg2[%c78] : memref<581xf32, #tpu.memory_space<smem>>
    %435 = vector.broadcast %434 : f32 to vector<32x128xf32>
    %436 = arith.mulf %42, %435 : vector<32x128xf32>
    %437 = arith.addf %433, %436 : vector<32x128xf32>
    %c88 = arith.constant 88 : index
    %438 = memref.load %arg2[%c88] : memref<581xf32, #tpu.memory_space<smem>>
    %439 = vector.broadcast %438 : f32 to vector<32x128xf32>
    %440 = arith.mulf %49, %439 : vector<32x128xf32>
    %441 = arith.addf %437, %440 : vector<32x128xf32>
    %c98 = arith.constant 98 : index
    %442 = memref.load %arg2[%c98] : memref<581xf32, #tpu.memory_space<smem>>
    %443 = vector.broadcast %442 : f32 to vector<32x128xf32>
    %444 = arith.mulf %56, %443 : vector<32x128xf32>
    %445 = arith.addf %441, %444 : vector<32x128xf32>
    %c108 = arith.constant 108 : index
    %446 = memref.load %arg2[%c108] : memref<581xf32, #tpu.memory_space<smem>>
    %447 = vector.broadcast %446 : f32 to vector<32x128xf32>
    %448 = arith.mulf %63, %447 : vector<32x128xf32>
    %449 = arith.addf %445, %448 : vector<32x128xf32>
    %c118 = arith.constant 118 : index
    %450 = memref.load %arg2[%c118] : memref<581xf32, #tpu.memory_space<smem>>
    %451 = vector.broadcast %450 : f32 to vector<32x128xf32>
    %452 = arith.mulf %70, %451 : vector<32x128xf32>
    %453 = arith.addf %449, %452 : vector<32x128xf32>
    %c528 = arith.constant 528 : index
    %454 = memref.load %arg2[%c528] : memref<581xf32, #tpu.memory_space<smem>>
    %455 = vector.broadcast %454 : f32 to vector<32x128xf32>
    %456 = arith.addf %453, %455 : vector<32x128xf32>
    %457 = math.tanh %456 : vector<32x128xf32>
    %c29 = arith.constant 29 : index
    %458 = memref.load %arg2[%c29] : memref<581xf32, #tpu.memory_space<smem>>
    %459 = vector.broadcast %458 : f32 to vector<32x128xf32>
    %460 = arith.mulf %7, %459 : vector<32x128xf32>
    %c39 = arith.constant 39 : index
    %461 = memref.load %arg2[%c39] : memref<581xf32, #tpu.memory_space<smem>>
    %462 = vector.broadcast %461 : f32 to vector<32x128xf32>
    %463 = arith.mulf %14, %462 : vector<32x128xf32>
    %464 = arith.addf %460, %463 : vector<32x128xf32>
    %c49 = arith.constant 49 : index
    %465 = memref.load %arg2[%c49] : memref<581xf32, #tpu.memory_space<smem>>
    %466 = vector.broadcast %465 : f32 to vector<32x128xf32>
    %467 = arith.mulf %21, %466 : vector<32x128xf32>
    %468 = arith.addf %464, %467 : vector<32x128xf32>
    %c59 = arith.constant 59 : index
    %469 = memref.load %arg2[%c59] : memref<581xf32, #tpu.memory_space<smem>>
    %470 = vector.broadcast %469 : f32 to vector<32x128xf32>
    %471 = arith.mulf %28, %470 : vector<32x128xf32>
    %472 = arith.addf %468, %471 : vector<32x128xf32>
    %c69 = arith.constant 69 : index
    %473 = memref.load %arg2[%c69] : memref<581xf32, #tpu.memory_space<smem>>
    %474 = vector.broadcast %473 : f32 to vector<32x128xf32>
    %475 = arith.mulf %35, %474 : vector<32x128xf32>
    %476 = arith.addf %472, %475 : vector<32x128xf32>
    %c79 = arith.constant 79 : index
    %477 = memref.load %arg2[%c79] : memref<581xf32, #tpu.memory_space<smem>>
    %478 = vector.broadcast %477 : f32 to vector<32x128xf32>
    %479 = arith.mulf %42, %478 : vector<32x128xf32>
    %480 = arith.addf %476, %479 : vector<32x128xf32>
    %c89 = arith.constant 89 : index
    %481 = memref.load %arg2[%c89] : memref<581xf32, #tpu.memory_space<smem>>
    %482 = vector.broadcast %481 : f32 to vector<32x128xf32>
    %483 = arith.mulf %49, %482 : vector<32x128xf32>
    %484 = arith.addf %480, %483 : vector<32x128xf32>
    %c99 = arith.constant 99 : index
    %485 = memref.load %arg2[%c99] : memref<581xf32, #tpu.memory_space<smem>>
    %486 = vector.broadcast %485 : f32 to vector<32x128xf32>
    %487 = arith.mulf %56, %486 : vector<32x128xf32>
    %488 = arith.addf %484, %487 : vector<32x128xf32>
    %c109 = arith.constant 109 : index
    %489 = memref.load %arg2[%c109] : memref<581xf32, #tpu.memory_space<smem>>
    %490 = vector.broadcast %489 : f32 to vector<32x128xf32>
    %491 = arith.mulf %63, %490 : vector<32x128xf32>
    %492 = arith.addf %488, %491 : vector<32x128xf32>
    %c119 = arith.constant 119 : index
    %493 = memref.load %arg2[%c119] : memref<581xf32, #tpu.memory_space<smem>>
    %494 = vector.broadcast %493 : f32 to vector<32x128xf32>
    %495 = arith.mulf %70, %494 : vector<32x128xf32>
    %496 = arith.addf %492, %495 : vector<32x128xf32>
    %c529 = arith.constant 529 : index
    %497 = memref.load %arg2[%c529] : memref<581xf32, #tpu.memory_space<smem>>
    %498 = vector.broadcast %497 : f32 to vector<32x128xf32>
    %499 = arith.addf %496, %498 : vector<32x128xf32>
    %500 = math.tanh %499 : vector<32x128xf32>
    %c120 = arith.constant 120 : index
    %501 = memref.load %arg2[%c120] : memref<581xf32, #tpu.memory_space<smem>>
    %502 = vector.broadcast %501 : f32 to vector<32x128xf32>
    %503 = arith.mulf %113, %502 : vector<32x128xf32>
    %c130 = arith.constant 130 : index
    %504 = memref.load %arg2[%c130] : memref<581xf32, #tpu.memory_space<smem>>
    %505 = vector.broadcast %504 : f32 to vector<32x128xf32>
    %506 = arith.mulf %156, %505 : vector<32x128xf32>
    %507 = arith.addf %503, %506 : vector<32x128xf32>
    %c140 = arith.constant 140 : index
    %508 = memref.load %arg2[%c140] : memref<581xf32, #tpu.memory_space<smem>>
    %509 = vector.broadcast %508 : f32 to vector<32x128xf32>
    %510 = arith.mulf %199, %509 : vector<32x128xf32>
    %511 = arith.addf %507, %510 : vector<32x128xf32>
    %c150 = arith.constant 150 : index
    %512 = memref.load %arg2[%c150] : memref<581xf32, #tpu.memory_space<smem>>
    %513 = vector.broadcast %512 : f32 to vector<32x128xf32>
    %514 = arith.mulf %242, %513 : vector<32x128xf32>
    %515 = arith.addf %511, %514 : vector<32x128xf32>
    %c160 = arith.constant 160 : index
    %516 = memref.load %arg2[%c160] : memref<581xf32, #tpu.memory_space<smem>>
    %517 = vector.broadcast %516 : f32 to vector<32x128xf32>
    %518 = arith.mulf %285, %517 : vector<32x128xf32>
    %519 = arith.addf %515, %518 : vector<32x128xf32>
    %c170 = arith.constant 170 : index
    %520 = memref.load %arg2[%c170] : memref<581xf32, #tpu.memory_space<smem>>
    %521 = vector.broadcast %520 : f32 to vector<32x128xf32>
    %522 = arith.mulf %328, %521 : vector<32x128xf32>
    %523 = arith.addf %519, %522 : vector<32x128xf32>
    %c180 = arith.constant 180 : index
    %524 = memref.load %arg2[%c180] : memref<581xf32, #tpu.memory_space<smem>>
    %525 = vector.broadcast %524 : f32 to vector<32x128xf32>
    %526 = arith.mulf %371, %525 : vector<32x128xf32>
    %527 = arith.addf %523, %526 : vector<32x128xf32>
    %c190 = arith.constant 190 : index
    %528 = memref.load %arg2[%c190] : memref<581xf32, #tpu.memory_space<smem>>
    %529 = vector.broadcast %528 : f32 to vector<32x128xf32>
    %530 = arith.mulf %414, %529 : vector<32x128xf32>
    %531 = arith.addf %527, %530 : vector<32x128xf32>
    %c200 = arith.constant 200 : index
    %532 = memref.load %arg2[%c200] : memref<581xf32, #tpu.memory_space<smem>>
    %533 = vector.broadcast %532 : f32 to vector<32x128xf32>
    %534 = arith.mulf %457, %533 : vector<32x128xf32>
    %535 = arith.addf %531, %534 : vector<32x128xf32>
    %c210 = arith.constant 210 : index
    %536 = memref.load %arg2[%c210] : memref<581xf32, #tpu.memory_space<smem>>
    %537 = vector.broadcast %536 : f32 to vector<32x128xf32>
    %538 = arith.mulf %500, %537 : vector<32x128xf32>
    %539 = arith.addf %535, %538 : vector<32x128xf32>
    %c530 = arith.constant 530 : index
    %540 = memref.load %arg2[%c530] : memref<581xf32, #tpu.memory_space<smem>>
    %541 = vector.broadcast %540 : f32 to vector<32x128xf32>
    %542 = arith.addf %539, %541 : vector<32x128xf32>
    %543 = math.tanh %542 : vector<32x128xf32>
    %c121 = arith.constant 121 : index
    %544 = memref.load %arg2[%c121] : memref<581xf32, #tpu.memory_space<smem>>
    %545 = vector.broadcast %544 : f32 to vector<32x128xf32>
    %546 = arith.mulf %113, %545 : vector<32x128xf32>
    %c131 = arith.constant 131 : index
    %547 = memref.load %arg2[%c131] : memref<581xf32, #tpu.memory_space<smem>>
    %548 = vector.broadcast %547 : f32 to vector<32x128xf32>
    %549 = arith.mulf %156, %548 : vector<32x128xf32>
    %550 = arith.addf %546, %549 : vector<32x128xf32>
    %c141 = arith.constant 141 : index
    %551 = memref.load %arg2[%c141] : memref<581xf32, #tpu.memory_space<smem>>
    %552 = vector.broadcast %551 : f32 to vector<32x128xf32>
    %553 = arith.mulf %199, %552 : vector<32x128xf32>
    %554 = arith.addf %550, %553 : vector<32x128xf32>
    %c151 = arith.constant 151 : index
    %555 = memref.load %arg2[%c151] : memref<581xf32, #tpu.memory_space<smem>>
    %556 = vector.broadcast %555 : f32 to vector<32x128xf32>
    %557 = arith.mulf %242, %556 : vector<32x128xf32>
    %558 = arith.addf %554, %557 : vector<32x128xf32>
    %c161 = arith.constant 161 : index
    %559 = memref.load %arg2[%c161] : memref<581xf32, #tpu.memory_space<smem>>
    %560 = vector.broadcast %559 : f32 to vector<32x128xf32>
    %561 = arith.mulf %285, %560 : vector<32x128xf32>
    %562 = arith.addf %558, %561 : vector<32x128xf32>
    %c171 = arith.constant 171 : index
    %563 = memref.load %arg2[%c171] : memref<581xf32, #tpu.memory_space<smem>>
    %564 = vector.broadcast %563 : f32 to vector<32x128xf32>
    %565 = arith.mulf %328, %564 : vector<32x128xf32>
    %566 = arith.addf %562, %565 : vector<32x128xf32>
    %c181 = arith.constant 181 : index
    %567 = memref.load %arg2[%c181] : memref<581xf32, #tpu.memory_space<smem>>
    %568 = vector.broadcast %567 : f32 to vector<32x128xf32>
    %569 = arith.mulf %371, %568 : vector<32x128xf32>
    %570 = arith.addf %566, %569 : vector<32x128xf32>
    %c191 = arith.constant 191 : index
    %571 = memref.load %arg2[%c191] : memref<581xf32, #tpu.memory_space<smem>>
    %572 = vector.broadcast %571 : f32 to vector<32x128xf32>
    %573 = arith.mulf %414, %572 : vector<32x128xf32>
    %574 = arith.addf %570, %573 : vector<32x128xf32>
    %c201 = arith.constant 201 : index
    %575 = memref.load %arg2[%c201] : memref<581xf32, #tpu.memory_space<smem>>
    %576 = vector.broadcast %575 : f32 to vector<32x128xf32>
    %577 = arith.mulf %457, %576 : vector<32x128xf32>
    %578 = arith.addf %574, %577 : vector<32x128xf32>
    %c211 = arith.constant 211 : index
    %579 = memref.load %arg2[%c211] : memref<581xf32, #tpu.memory_space<smem>>
    %580 = vector.broadcast %579 : f32 to vector<32x128xf32>
    %581 = arith.mulf %500, %580 : vector<32x128xf32>
    %582 = arith.addf %578, %581 : vector<32x128xf32>
    %c531 = arith.constant 531 : index
    %583 = memref.load %arg2[%c531] : memref<581xf32, #tpu.memory_space<smem>>
    %584 = vector.broadcast %583 : f32 to vector<32x128xf32>
    %585 = arith.addf %582, %584 : vector<32x128xf32>
    %586 = math.tanh %585 : vector<32x128xf32>
    %c122 = arith.constant 122 : index
    %587 = memref.load %arg2[%c122] : memref<581xf32, #tpu.memory_space<smem>>
    %588 = vector.broadcast %587 : f32 to vector<32x128xf32>
    %589 = arith.mulf %113, %588 : vector<32x128xf32>
    %c132 = arith.constant 132 : index
    %590 = memref.load %arg2[%c132] : memref<581xf32, #tpu.memory_space<smem>>
    %591 = vector.broadcast %590 : f32 to vector<32x128xf32>
    %592 = arith.mulf %156, %591 : vector<32x128xf32>
    %593 = arith.addf %589, %592 : vector<32x128xf32>
    %c142 = arith.constant 142 : index
    %594 = memref.load %arg2[%c142] : memref<581xf32, #tpu.memory_space<smem>>
    %595 = vector.broadcast %594 : f32 to vector<32x128xf32>
    %596 = arith.mulf %199, %595 : vector<32x128xf32>
    %597 = arith.addf %593, %596 : vector<32x128xf32>
    %c152 = arith.constant 152 : index
    %598 = memref.load %arg2[%c152] : memref<581xf32, #tpu.memory_space<smem>>
    %599 = vector.broadcast %598 : f32 to vector<32x128xf32>
    %600 = arith.mulf %242, %599 : vector<32x128xf32>
    %601 = arith.addf %597, %600 : vector<32x128xf32>
    %c162 = arith.constant 162 : index
    %602 = memref.load %arg2[%c162] : memref<581xf32, #tpu.memory_space<smem>>
    %603 = vector.broadcast %602 : f32 to vector<32x128xf32>
    %604 = arith.mulf %285, %603 : vector<32x128xf32>
    %605 = arith.addf %601, %604 : vector<32x128xf32>
    %c172 = arith.constant 172 : index
    %606 = memref.load %arg2[%c172] : memref<581xf32, #tpu.memory_space<smem>>
    %607 = vector.broadcast %606 : f32 to vector<32x128xf32>
    %608 = arith.mulf %328, %607 : vector<32x128xf32>
    %609 = arith.addf %605, %608 : vector<32x128xf32>
    %c182 = arith.constant 182 : index
    %610 = memref.load %arg2[%c182] : memref<581xf32, #tpu.memory_space<smem>>
    %611 = vector.broadcast %610 : f32 to vector<32x128xf32>
    %612 = arith.mulf %371, %611 : vector<32x128xf32>
    %613 = arith.addf %609, %612 : vector<32x128xf32>
    %c192 = arith.constant 192 : index
    %614 = memref.load %arg2[%c192] : memref<581xf32, #tpu.memory_space<smem>>
    %615 = vector.broadcast %614 : f32 to vector<32x128xf32>
    %616 = arith.mulf %414, %615 : vector<32x128xf32>
    %617 = arith.addf %613, %616 : vector<32x128xf32>
    %c202 = arith.constant 202 : index
    %618 = memref.load %arg2[%c202] : memref<581xf32, #tpu.memory_space<smem>>
    %619 = vector.broadcast %618 : f32 to vector<32x128xf32>
    %620 = arith.mulf %457, %619 : vector<32x128xf32>
    %621 = arith.addf %617, %620 : vector<32x128xf32>
    %c212 = arith.constant 212 : index
    %622 = memref.load %arg2[%c212] : memref<581xf32, #tpu.memory_space<smem>>
    %623 = vector.broadcast %622 : f32 to vector<32x128xf32>
    %624 = arith.mulf %500, %623 : vector<32x128xf32>
    %625 = arith.addf %621, %624 : vector<32x128xf32>
    %c532 = arith.constant 532 : index
    %626 = memref.load %arg2[%c532] : memref<581xf32, #tpu.memory_space<smem>>
    %627 = vector.broadcast %626 : f32 to vector<32x128xf32>
    %628 = arith.addf %625, %627 : vector<32x128xf32>
    %629 = math.tanh %628 : vector<32x128xf32>
    %c123 = arith.constant 123 : index
    %630 = memref.load %arg2[%c123] : memref<581xf32, #tpu.memory_space<smem>>
    %631 = vector.broadcast %630 : f32 to vector<32x128xf32>
    %632 = arith.mulf %113, %631 : vector<32x128xf32>
    %c133 = arith.constant 133 : index
    %633 = memref.load %arg2[%c133] : memref<581xf32, #tpu.memory_space<smem>>
    %634 = vector.broadcast %633 : f32 to vector<32x128xf32>
    %635 = arith.mulf %156, %634 : vector<32x128xf32>
    %636 = arith.addf %632, %635 : vector<32x128xf32>
    %c143 = arith.constant 143 : index
    %637 = memref.load %arg2[%c143] : memref<581xf32, #tpu.memory_space<smem>>
    %638 = vector.broadcast %637 : f32 to vector<32x128xf32>
    %639 = arith.mulf %199, %638 : vector<32x128xf32>
    %640 = arith.addf %636, %639 : vector<32x128xf32>
    %c153 = arith.constant 153 : index
    %641 = memref.load %arg2[%c153] : memref<581xf32, #tpu.memory_space<smem>>
    %642 = vector.broadcast %641 : f32 to vector<32x128xf32>
    %643 = arith.mulf %242, %642 : vector<32x128xf32>
    %644 = arith.addf %640, %643 : vector<32x128xf32>
    %c163 = arith.constant 163 : index
    %645 = memref.load %arg2[%c163] : memref<581xf32, #tpu.memory_space<smem>>
    %646 = vector.broadcast %645 : f32 to vector<32x128xf32>
    %647 = arith.mulf %285, %646 : vector<32x128xf32>
    %648 = arith.addf %644, %647 : vector<32x128xf32>
    %c173 = arith.constant 173 : index
    %649 = memref.load %arg2[%c173] : memref<581xf32, #tpu.memory_space<smem>>
    %650 = vector.broadcast %649 : f32 to vector<32x128xf32>
    %651 = arith.mulf %328, %650 : vector<32x128xf32>
    %652 = arith.addf %648, %651 : vector<32x128xf32>
    %c183 = arith.constant 183 : index
    %653 = memref.load %arg2[%c183] : memref<581xf32, #tpu.memory_space<smem>>
    %654 = vector.broadcast %653 : f32 to vector<32x128xf32>
    %655 = arith.mulf %371, %654 : vector<32x128xf32>
    %656 = arith.addf %652, %655 : vector<32x128xf32>
    %c193 = arith.constant 193 : index
    %657 = memref.load %arg2[%c193] : memref<581xf32, #tpu.memory_space<smem>>
    %658 = vector.broadcast %657 : f32 to vector<32x128xf32>
    %659 = arith.mulf %414, %658 : vector<32x128xf32>
    %660 = arith.addf %656, %659 : vector<32x128xf32>
    %c203 = arith.constant 203 : index
    %661 = memref.load %arg2[%c203] : memref<581xf32, #tpu.memory_space<smem>>
    %662 = vector.broadcast %661 : f32 to vector<32x128xf32>
    %663 = arith.mulf %457, %662 : vector<32x128xf32>
    %664 = arith.addf %660, %663 : vector<32x128xf32>
    %c213 = arith.constant 213 : index
    %665 = memref.load %arg2[%c213] : memref<581xf32, #tpu.memory_space<smem>>
    %666 = vector.broadcast %665 : f32 to vector<32x128xf32>
    %667 = arith.mulf %500, %666 : vector<32x128xf32>
    %668 = arith.addf %664, %667 : vector<32x128xf32>
    %c533 = arith.constant 533 : index
    %669 = memref.load %arg2[%c533] : memref<581xf32, #tpu.memory_space<smem>>
    %670 = vector.broadcast %669 : f32 to vector<32x128xf32>
    %671 = arith.addf %668, %670 : vector<32x128xf32>
    %672 = math.tanh %671 : vector<32x128xf32>
    %c124 = arith.constant 124 : index
    %673 = memref.load %arg2[%c124] : memref<581xf32, #tpu.memory_space<smem>>
    %674 = vector.broadcast %673 : f32 to vector<32x128xf32>
    %675 = arith.mulf %113, %674 : vector<32x128xf32>
    %c134 = arith.constant 134 : index
    %676 = memref.load %arg2[%c134] : memref<581xf32, #tpu.memory_space<smem>>
    %677 = vector.broadcast %676 : f32 to vector<32x128xf32>
    %678 = arith.mulf %156, %677 : vector<32x128xf32>
    %679 = arith.addf %675, %678 : vector<32x128xf32>
    %c144 = arith.constant 144 : index
    %680 = memref.load %arg2[%c144] : memref<581xf32, #tpu.memory_space<smem>>
    %681 = vector.broadcast %680 : f32 to vector<32x128xf32>
    %682 = arith.mulf %199, %681 : vector<32x128xf32>
    %683 = arith.addf %679, %682 : vector<32x128xf32>
    %c154 = arith.constant 154 : index
    %684 = memref.load %arg2[%c154] : memref<581xf32, #tpu.memory_space<smem>>
    %685 = vector.broadcast %684 : f32 to vector<32x128xf32>
    %686 = arith.mulf %242, %685 : vector<32x128xf32>
    %687 = arith.addf %683, %686 : vector<32x128xf32>
    %c164 = arith.constant 164 : index
    %688 = memref.load %arg2[%c164] : memref<581xf32, #tpu.memory_space<smem>>
    %689 = vector.broadcast %688 : f32 to vector<32x128xf32>
    %690 = arith.mulf %285, %689 : vector<32x128xf32>
    %691 = arith.addf %687, %690 : vector<32x128xf32>
    %c174 = arith.constant 174 : index
    %692 = memref.load %arg2[%c174] : memref<581xf32, #tpu.memory_space<smem>>
    %693 = vector.broadcast %692 : f32 to vector<32x128xf32>
    %694 = arith.mulf %328, %693 : vector<32x128xf32>
    %695 = arith.addf %691, %694 : vector<32x128xf32>
    %c184 = arith.constant 184 : index
    %696 = memref.load %arg2[%c184] : memref<581xf32, #tpu.memory_space<smem>>
    %697 = vector.broadcast %696 : f32 to vector<32x128xf32>
    %698 = arith.mulf %371, %697 : vector<32x128xf32>
    %699 = arith.addf %695, %698 : vector<32x128xf32>
    %c194 = arith.constant 194 : index
    %700 = memref.load %arg2[%c194] : memref<581xf32, #tpu.memory_space<smem>>
    %701 = vector.broadcast %700 : f32 to vector<32x128xf32>
    %702 = arith.mulf %414, %701 : vector<32x128xf32>
    %703 = arith.addf %699, %702 : vector<32x128xf32>
    %c204 = arith.constant 204 : index
    %704 = memref.load %arg2[%c204] : memref<581xf32, #tpu.memory_space<smem>>
    %705 = vector.broadcast %704 : f32 to vector<32x128xf32>
    %706 = arith.mulf %457, %705 : vector<32x128xf32>
    %707 = arith.addf %703, %706 : vector<32x128xf32>
    %c214 = arith.constant 214 : index
    %708 = memref.load %arg2[%c214] : memref<581xf32, #tpu.memory_space<smem>>
    %709 = vector.broadcast %708 : f32 to vector<32x128xf32>
    %710 = arith.mulf %500, %709 : vector<32x128xf32>
    %711 = arith.addf %707, %710 : vector<32x128xf32>
    %c534 = arith.constant 534 : index
    %712 = memref.load %arg2[%c534] : memref<581xf32, #tpu.memory_space<smem>>
    %713 = vector.broadcast %712 : f32 to vector<32x128xf32>
    %714 = arith.addf %711, %713 : vector<32x128xf32>
    %715 = math.tanh %714 : vector<32x128xf32>
    %c125 = arith.constant 125 : index
    %716 = memref.load %arg2[%c125] : memref<581xf32, #tpu.memory_space<smem>>
    %717 = vector.broadcast %716 : f32 to vector<32x128xf32>
    %718 = arith.mulf %113, %717 : vector<32x128xf32>
    %c135 = arith.constant 135 : index
    %719 = memref.load %arg2[%c135] : memref<581xf32, #tpu.memory_space<smem>>
    %720 = vector.broadcast %719 : f32 to vector<32x128xf32>
    %721 = arith.mulf %156, %720 : vector<32x128xf32>
    %722 = arith.addf %718, %721 : vector<32x128xf32>
    %c145 = arith.constant 145 : index
    %723 = memref.load %arg2[%c145] : memref<581xf32, #tpu.memory_space<smem>>
    %724 = vector.broadcast %723 : f32 to vector<32x128xf32>
    %725 = arith.mulf %199, %724 : vector<32x128xf32>
    %726 = arith.addf %722, %725 : vector<32x128xf32>
    %c155 = arith.constant 155 : index
    %727 = memref.load %arg2[%c155] : memref<581xf32, #tpu.memory_space<smem>>
    %728 = vector.broadcast %727 : f32 to vector<32x128xf32>
    %729 = arith.mulf %242, %728 : vector<32x128xf32>
    %730 = arith.addf %726, %729 : vector<32x128xf32>
    %c165 = arith.constant 165 : index
    %731 = memref.load %arg2[%c165] : memref<581xf32, #tpu.memory_space<smem>>
    %732 = vector.broadcast %731 : f32 to vector<32x128xf32>
    %733 = arith.mulf %285, %732 : vector<32x128xf32>
    %734 = arith.addf %730, %733 : vector<32x128xf32>
    %c175 = arith.constant 175 : index
    %735 = memref.load %arg2[%c175] : memref<581xf32, #tpu.memory_space<smem>>
    %736 = vector.broadcast %735 : f32 to vector<32x128xf32>
    %737 = arith.mulf %328, %736 : vector<32x128xf32>
    %738 = arith.addf %734, %737 : vector<32x128xf32>
    %c185 = arith.constant 185 : index
    %739 = memref.load %arg2[%c185] : memref<581xf32, #tpu.memory_space<smem>>
    %740 = vector.broadcast %739 : f32 to vector<32x128xf32>
    %741 = arith.mulf %371, %740 : vector<32x128xf32>
    %742 = arith.addf %738, %741 : vector<32x128xf32>
    %c195 = arith.constant 195 : index
    %743 = memref.load %arg2[%c195] : memref<581xf32, #tpu.memory_space<smem>>
    %744 = vector.broadcast %743 : f32 to vector<32x128xf32>
    %745 = arith.mulf %414, %744 : vector<32x128xf32>
    %746 = arith.addf %742, %745 : vector<32x128xf32>
    %c205 = arith.constant 205 : index
    %747 = memref.load %arg2[%c205] : memref<581xf32, #tpu.memory_space<smem>>
    %748 = vector.broadcast %747 : f32 to vector<32x128xf32>
    %749 = arith.mulf %457, %748 : vector<32x128xf32>
    %750 = arith.addf %746, %749 : vector<32x128xf32>
    %c215 = arith.constant 215 : index
    %751 = memref.load %arg2[%c215] : memref<581xf32, #tpu.memory_space<smem>>
    %752 = vector.broadcast %751 : f32 to vector<32x128xf32>
    %753 = arith.mulf %500, %752 : vector<32x128xf32>
    %754 = arith.addf %750, %753 : vector<32x128xf32>
    %c535 = arith.constant 535 : index
    %755 = memref.load %arg2[%c535] : memref<581xf32, #tpu.memory_space<smem>>
    %756 = vector.broadcast %755 : f32 to vector<32x128xf32>
    %757 = arith.addf %754, %756 : vector<32x128xf32>
    %758 = math.tanh %757 : vector<32x128xf32>
    %c126 = arith.constant 126 : index
    %759 = memref.load %arg2[%c126] : memref<581xf32, #tpu.memory_space<smem>>
    %760 = vector.broadcast %759 : f32 to vector<32x128xf32>
    %761 = arith.mulf %113, %760 : vector<32x128xf32>
    %c136 = arith.constant 136 : index
    %762 = memref.load %arg2[%c136] : memref<581xf32, #tpu.memory_space<smem>>
    %763 = vector.broadcast %762 : f32 to vector<32x128xf32>
    %764 = arith.mulf %156, %763 : vector<32x128xf32>
    %765 = arith.addf %761, %764 : vector<32x128xf32>
    %c146 = arith.constant 146 : index
    %766 = memref.load %arg2[%c146] : memref<581xf32, #tpu.memory_space<smem>>
    %767 = vector.broadcast %766 : f32 to vector<32x128xf32>
    %768 = arith.mulf %199, %767 : vector<32x128xf32>
    %769 = arith.addf %765, %768 : vector<32x128xf32>
    %c156 = arith.constant 156 : index
    %770 = memref.load %arg2[%c156] : memref<581xf32, #tpu.memory_space<smem>>
    %771 = vector.broadcast %770 : f32 to vector<32x128xf32>
    %772 = arith.mulf %242, %771 : vector<32x128xf32>
    %773 = arith.addf %769, %772 : vector<32x128xf32>
    %c166 = arith.constant 166 : index
    %774 = memref.load %arg2[%c166] : memref<581xf32, #tpu.memory_space<smem>>
    %775 = vector.broadcast %774 : f32 to vector<32x128xf32>
    %776 = arith.mulf %285, %775 : vector<32x128xf32>
    %777 = arith.addf %773, %776 : vector<32x128xf32>
    %c176 = arith.constant 176 : index
    %778 = memref.load %arg2[%c176] : memref<581xf32, #tpu.memory_space<smem>>
    %779 = vector.broadcast %778 : f32 to vector<32x128xf32>
    %780 = arith.mulf %328, %779 : vector<32x128xf32>
    %781 = arith.addf %777, %780 : vector<32x128xf32>
    %c186 = arith.constant 186 : index
    %782 = memref.load %arg2[%c186] : memref<581xf32, #tpu.memory_space<smem>>
    %783 = vector.broadcast %782 : f32 to vector<32x128xf32>
    %784 = arith.mulf %371, %783 : vector<32x128xf32>
    %785 = arith.addf %781, %784 : vector<32x128xf32>
    %c196 = arith.constant 196 : index
    %786 = memref.load %arg2[%c196] : memref<581xf32, #tpu.memory_space<smem>>
    %787 = vector.broadcast %786 : f32 to vector<32x128xf32>
    %788 = arith.mulf %414, %787 : vector<32x128xf32>
    %789 = arith.addf %785, %788 : vector<32x128xf32>
    %c206 = arith.constant 206 : index
    %790 = memref.load %arg2[%c206] : memref<581xf32, #tpu.memory_space<smem>>
    %791 = vector.broadcast %790 : f32 to vector<32x128xf32>
    %792 = arith.mulf %457, %791 : vector<32x128xf32>
    %793 = arith.addf %789, %792 : vector<32x128xf32>
    %c216 = arith.constant 216 : index
    %794 = memref.load %arg2[%c216] : memref<581xf32, #tpu.memory_space<smem>>
    %795 = vector.broadcast %794 : f32 to vector<32x128xf32>
    %796 = arith.mulf %500, %795 : vector<32x128xf32>
    %797 = arith.addf %793, %796 : vector<32x128xf32>
    %c536 = arith.constant 536 : index
    %798 = memref.load %arg2[%c536] : memref<581xf32, #tpu.memory_space<smem>>
    %799 = vector.broadcast %798 : f32 to vector<32x128xf32>
    %800 = arith.addf %797, %799 : vector<32x128xf32>
    %801 = math.tanh %800 : vector<32x128xf32>
    %c127 = arith.constant 127 : index
    %802 = memref.load %arg2[%c127] : memref<581xf32, #tpu.memory_space<smem>>
    %803 = vector.broadcast %802 : f32 to vector<32x128xf32>
    %804 = arith.mulf %113, %803 : vector<32x128xf32>
    %c137 = arith.constant 137 : index
    %805 = memref.load %arg2[%c137] : memref<581xf32, #tpu.memory_space<smem>>
    %806 = vector.broadcast %805 : f32 to vector<32x128xf32>
    %807 = arith.mulf %156, %806 : vector<32x128xf32>
    %808 = arith.addf %804, %807 : vector<32x128xf32>
    %c147 = arith.constant 147 : index
    %809 = memref.load %arg2[%c147] : memref<581xf32, #tpu.memory_space<smem>>
    %810 = vector.broadcast %809 : f32 to vector<32x128xf32>
    %811 = arith.mulf %199, %810 : vector<32x128xf32>
    %812 = arith.addf %808, %811 : vector<32x128xf32>
    %c157 = arith.constant 157 : index
    %813 = memref.load %arg2[%c157] : memref<581xf32, #tpu.memory_space<smem>>
    %814 = vector.broadcast %813 : f32 to vector<32x128xf32>
    %815 = arith.mulf %242, %814 : vector<32x128xf32>
    %816 = arith.addf %812, %815 : vector<32x128xf32>
    %c167 = arith.constant 167 : index
    %817 = memref.load %arg2[%c167] : memref<581xf32, #tpu.memory_space<smem>>
    %818 = vector.broadcast %817 : f32 to vector<32x128xf32>
    %819 = arith.mulf %285, %818 : vector<32x128xf32>
    %820 = arith.addf %816, %819 : vector<32x128xf32>
    %c177 = arith.constant 177 : index
    %821 = memref.load %arg2[%c177] : memref<581xf32, #tpu.memory_space<smem>>
    %822 = vector.broadcast %821 : f32 to vector<32x128xf32>
    %823 = arith.mulf %328, %822 : vector<32x128xf32>
    %824 = arith.addf %820, %823 : vector<32x128xf32>
    %c187 = arith.constant 187 : index
    %825 = memref.load %arg2[%c187] : memref<581xf32, #tpu.memory_space<smem>>
    %826 = vector.broadcast %825 : f32 to vector<32x128xf32>
    %827 = arith.mulf %371, %826 : vector<32x128xf32>
    %828 = arith.addf %824, %827 : vector<32x128xf32>
    %c197 = arith.constant 197 : index
    %829 = memref.load %arg2[%c197] : memref<581xf32, #tpu.memory_space<smem>>
    %830 = vector.broadcast %829 : f32 to vector<32x128xf32>
    %831 = arith.mulf %414, %830 : vector<32x128xf32>
    %832 = arith.addf %828, %831 : vector<32x128xf32>
    %c207 = arith.constant 207 : index
    %833 = memref.load %arg2[%c207] : memref<581xf32, #tpu.memory_space<smem>>
    %834 = vector.broadcast %833 : f32 to vector<32x128xf32>
    %835 = arith.mulf %457, %834 : vector<32x128xf32>
    %836 = arith.addf %832, %835 : vector<32x128xf32>
    %c217 = arith.constant 217 : index
    %837 = memref.load %arg2[%c217] : memref<581xf32, #tpu.memory_space<smem>>
    %838 = vector.broadcast %837 : f32 to vector<32x128xf32>
    %839 = arith.mulf %500, %838 : vector<32x128xf32>
    %840 = arith.addf %836, %839 : vector<32x128xf32>
    %c537 = arith.constant 537 : index
    %841 = memref.load %arg2[%c537] : memref<581xf32, #tpu.memory_space<smem>>
    %842 = vector.broadcast %841 : f32 to vector<32x128xf32>
    %843 = arith.addf %840, %842 : vector<32x128xf32>
    %844 = math.tanh %843 : vector<32x128xf32>
    %c128 = arith.constant 128 : index
    %845 = memref.load %arg2[%c128] : memref<581xf32, #tpu.memory_space<smem>>
    %846 = vector.broadcast %845 : f32 to vector<32x128xf32>
    %847 = arith.mulf %113, %846 : vector<32x128xf32>
    %c138 = arith.constant 138 : index
    %848 = memref.load %arg2[%c138] : memref<581xf32, #tpu.memory_space<smem>>
    %849 = vector.broadcast %848 : f32 to vector<32x128xf32>
    %850 = arith.mulf %156, %849 : vector<32x128xf32>
    %851 = arith.addf %847, %850 : vector<32x128xf32>
    %c148 = arith.constant 148 : index
    %852 = memref.load %arg2[%c148] : memref<581xf32, #tpu.memory_space<smem>>
    %853 = vector.broadcast %852 : f32 to vector<32x128xf32>
    %854 = arith.mulf %199, %853 : vector<32x128xf32>
    %855 = arith.addf %851, %854 : vector<32x128xf32>
    %c158 = arith.constant 158 : index
    %856 = memref.load %arg2[%c158] : memref<581xf32, #tpu.memory_space<smem>>
    %857 = vector.broadcast %856 : f32 to vector<32x128xf32>
    %858 = arith.mulf %242, %857 : vector<32x128xf32>
    %859 = arith.addf %855, %858 : vector<32x128xf32>
    %c168 = arith.constant 168 : index
    %860 = memref.load %arg2[%c168] : memref<581xf32, #tpu.memory_space<smem>>
    %861 = vector.broadcast %860 : f32 to vector<32x128xf32>
    %862 = arith.mulf %285, %861 : vector<32x128xf32>
    %863 = arith.addf %859, %862 : vector<32x128xf32>
    %c178 = arith.constant 178 : index
    %864 = memref.load %arg2[%c178] : memref<581xf32, #tpu.memory_space<smem>>
    %865 = vector.broadcast %864 : f32 to vector<32x128xf32>
    %866 = arith.mulf %328, %865 : vector<32x128xf32>
    %867 = arith.addf %863, %866 : vector<32x128xf32>
    %c188 = arith.constant 188 : index
    %868 = memref.load %arg2[%c188] : memref<581xf32, #tpu.memory_space<smem>>
    %869 = vector.broadcast %868 : f32 to vector<32x128xf32>
    %870 = arith.mulf %371, %869 : vector<32x128xf32>
    %871 = arith.addf %867, %870 : vector<32x128xf32>
    %c198 = arith.constant 198 : index
    %872 = memref.load %arg2[%c198] : memref<581xf32, #tpu.memory_space<smem>>
    %873 = vector.broadcast %872 : f32 to vector<32x128xf32>
    %874 = arith.mulf %414, %873 : vector<32x128xf32>
    %875 = arith.addf %871, %874 : vector<32x128xf32>
    %c208 = arith.constant 208 : index
    %876 = memref.load %arg2[%c208] : memref<581xf32, #tpu.memory_space<smem>>
    %877 = vector.broadcast %876 : f32 to vector<32x128xf32>
    %878 = arith.mulf %457, %877 : vector<32x128xf32>
    %879 = arith.addf %875, %878 : vector<32x128xf32>
    %c218 = arith.constant 218 : index
    %880 = memref.load %arg2[%c218] : memref<581xf32, #tpu.memory_space<smem>>
    %881 = vector.broadcast %880 : f32 to vector<32x128xf32>
    %882 = arith.mulf %500, %881 : vector<32x128xf32>
    %883 = arith.addf %879, %882 : vector<32x128xf32>
    %c538 = arith.constant 538 : index
    %884 = memref.load %arg2[%c538] : memref<581xf32, #tpu.memory_space<smem>>
    %885 = vector.broadcast %884 : f32 to vector<32x128xf32>
    %886 = arith.addf %883, %885 : vector<32x128xf32>
    %887 = math.tanh %886 : vector<32x128xf32>
    %c129 = arith.constant 129 : index
    %888 = memref.load %arg2[%c129] : memref<581xf32, #tpu.memory_space<smem>>
    %889 = vector.broadcast %888 : f32 to vector<32x128xf32>
    %890 = arith.mulf %113, %889 : vector<32x128xf32>
    %c139 = arith.constant 139 : index
    %891 = memref.load %arg2[%c139] : memref<581xf32, #tpu.memory_space<smem>>
    %892 = vector.broadcast %891 : f32 to vector<32x128xf32>
    %893 = arith.mulf %156, %892 : vector<32x128xf32>
    %894 = arith.addf %890, %893 : vector<32x128xf32>
    %c149 = arith.constant 149 : index
    %895 = memref.load %arg2[%c149] : memref<581xf32, #tpu.memory_space<smem>>
    %896 = vector.broadcast %895 : f32 to vector<32x128xf32>
    %897 = arith.mulf %199, %896 : vector<32x128xf32>
    %898 = arith.addf %894, %897 : vector<32x128xf32>
    %c159 = arith.constant 159 : index
    %899 = memref.load %arg2[%c159] : memref<581xf32, #tpu.memory_space<smem>>
    %900 = vector.broadcast %899 : f32 to vector<32x128xf32>
    %901 = arith.mulf %242, %900 : vector<32x128xf32>
    %902 = arith.addf %898, %901 : vector<32x128xf32>
    %c169 = arith.constant 169 : index
    %903 = memref.load %arg2[%c169] : memref<581xf32, #tpu.memory_space<smem>>
    %904 = vector.broadcast %903 : f32 to vector<32x128xf32>
    %905 = arith.mulf %285, %904 : vector<32x128xf32>
    %906 = arith.addf %902, %905 : vector<32x128xf32>
    %c179 = arith.constant 179 : index
    %907 = memref.load %arg2[%c179] : memref<581xf32, #tpu.memory_space<smem>>
    %908 = vector.broadcast %907 : f32 to vector<32x128xf32>
    %909 = arith.mulf %328, %908 : vector<32x128xf32>
    %910 = arith.addf %906, %909 : vector<32x128xf32>
    %c189 = arith.constant 189 : index
    %911 = memref.load %arg2[%c189] : memref<581xf32, #tpu.memory_space<smem>>
    %912 = vector.broadcast %911 : f32 to vector<32x128xf32>
    %913 = arith.mulf %371, %912 : vector<32x128xf32>
    %914 = arith.addf %910, %913 : vector<32x128xf32>
    %c199 = arith.constant 199 : index
    %915 = memref.load %arg2[%c199] : memref<581xf32, #tpu.memory_space<smem>>
    %916 = vector.broadcast %915 : f32 to vector<32x128xf32>
    %917 = arith.mulf %414, %916 : vector<32x128xf32>
    %918 = arith.addf %914, %917 : vector<32x128xf32>
    %c209 = arith.constant 209 : index
    %919 = memref.load %arg2[%c209] : memref<581xf32, #tpu.memory_space<smem>>
    %920 = vector.broadcast %919 : f32 to vector<32x128xf32>
    %921 = arith.mulf %457, %920 : vector<32x128xf32>
    %922 = arith.addf %918, %921 : vector<32x128xf32>
    %c219 = arith.constant 219 : index
    %923 = memref.load %arg2[%c219] : memref<581xf32, #tpu.memory_space<smem>>
    %924 = vector.broadcast %923 : f32 to vector<32x128xf32>
    %925 = arith.mulf %500, %924 : vector<32x128xf32>
    %926 = arith.addf %922, %925 : vector<32x128xf32>
    %c539 = arith.constant 539 : index
    %927 = memref.load %arg2[%c539] : memref<581xf32, #tpu.memory_space<smem>>
    %928 = vector.broadcast %927 : f32 to vector<32x128xf32>
    %929 = arith.addf %926, %928 : vector<32x128xf32>
    %930 = math.tanh %929 : vector<32x128xf32>
    %c220 = arith.constant 220 : index
    %931 = memref.load %arg2[%c220] : memref<581xf32, #tpu.memory_space<smem>>
    %932 = vector.broadcast %931 : f32 to vector<32x128xf32>
    %933 = arith.mulf %543, %932 : vector<32x128xf32>
    %c230 = arith.constant 230 : index
    %934 = memref.load %arg2[%c230] : memref<581xf32, #tpu.memory_space<smem>>
    %935 = vector.broadcast %934 : f32 to vector<32x128xf32>
    %936 = arith.mulf %586, %935 : vector<32x128xf32>
    %937 = arith.addf %933, %936 : vector<32x128xf32>
    %c240 = arith.constant 240 : index
    %938 = memref.load %arg2[%c240] : memref<581xf32, #tpu.memory_space<smem>>
    %939 = vector.broadcast %938 : f32 to vector<32x128xf32>
    %940 = arith.mulf %629, %939 : vector<32x128xf32>
    %941 = arith.addf %937, %940 : vector<32x128xf32>
    %c250 = arith.constant 250 : index
    %942 = memref.load %arg2[%c250] : memref<581xf32, #tpu.memory_space<smem>>
    %943 = vector.broadcast %942 : f32 to vector<32x128xf32>
    %944 = arith.mulf %672, %943 : vector<32x128xf32>
    %945 = arith.addf %941, %944 : vector<32x128xf32>
    %c260 = arith.constant 260 : index
    %946 = memref.load %arg2[%c260] : memref<581xf32, #tpu.memory_space<smem>>
    %947 = vector.broadcast %946 : f32 to vector<32x128xf32>
    %948 = arith.mulf %715, %947 : vector<32x128xf32>
    %949 = arith.addf %945, %948 : vector<32x128xf32>
    %c270 = arith.constant 270 : index
    %950 = memref.load %arg2[%c270] : memref<581xf32, #tpu.memory_space<smem>>
    %951 = vector.broadcast %950 : f32 to vector<32x128xf32>
    %952 = arith.mulf %758, %951 : vector<32x128xf32>
    %953 = arith.addf %949, %952 : vector<32x128xf32>
    %c280 = arith.constant 280 : index
    %954 = memref.load %arg2[%c280] : memref<581xf32, #tpu.memory_space<smem>>
    %955 = vector.broadcast %954 : f32 to vector<32x128xf32>
    %956 = arith.mulf %801, %955 : vector<32x128xf32>
    %957 = arith.addf %953, %956 : vector<32x128xf32>
    %c290 = arith.constant 290 : index
    %958 = memref.load %arg2[%c290] : memref<581xf32, #tpu.memory_space<smem>>
    %959 = vector.broadcast %958 : f32 to vector<32x128xf32>
    %960 = arith.mulf %844, %959 : vector<32x128xf32>
    %961 = arith.addf %957, %960 : vector<32x128xf32>
    %c300 = arith.constant 300 : index
    %962 = memref.load %arg2[%c300] : memref<581xf32, #tpu.memory_space<smem>>
    %963 = vector.broadcast %962 : f32 to vector<32x128xf32>
    %964 = arith.mulf %887, %963 : vector<32x128xf32>
    %965 = arith.addf %961, %964 : vector<32x128xf32>
    %c310 = arith.constant 310 : index
    %966 = memref.load %arg2[%c310] : memref<581xf32, #tpu.memory_space<smem>>
    %967 = vector.broadcast %966 : f32 to vector<32x128xf32>
    %968 = arith.mulf %930, %967 : vector<32x128xf32>
    %969 = arith.addf %965, %968 : vector<32x128xf32>
    %c540 = arith.constant 540 : index
    %970 = memref.load %arg2[%c540] : memref<581xf32, #tpu.memory_space<smem>>
    %971 = vector.broadcast %970 : f32 to vector<32x128xf32>
    %972 = arith.addf %969, %971 : vector<32x128xf32>
    %973 = math.tanh %972 : vector<32x128xf32>
    %c221 = arith.constant 221 : index
    %974 = memref.load %arg2[%c221] : memref<581xf32, #tpu.memory_space<smem>>
    %975 = vector.broadcast %974 : f32 to vector<32x128xf32>
    %976 = arith.mulf %543, %975 : vector<32x128xf32>
    %c231 = arith.constant 231 : index
    %977 = memref.load %arg2[%c231] : memref<581xf32, #tpu.memory_space<smem>>
    %978 = vector.broadcast %977 : f32 to vector<32x128xf32>
    %979 = arith.mulf %586, %978 : vector<32x128xf32>
    %980 = arith.addf %976, %979 : vector<32x128xf32>
    %c241 = arith.constant 241 : index
    %981 = memref.load %arg2[%c241] : memref<581xf32, #tpu.memory_space<smem>>
    %982 = vector.broadcast %981 : f32 to vector<32x128xf32>
    %983 = arith.mulf %629, %982 : vector<32x128xf32>
    %984 = arith.addf %980, %983 : vector<32x128xf32>
    %c251 = arith.constant 251 : index
    %985 = memref.load %arg2[%c251] : memref<581xf32, #tpu.memory_space<smem>>
    %986 = vector.broadcast %985 : f32 to vector<32x128xf32>
    %987 = arith.mulf %672, %986 : vector<32x128xf32>
    %988 = arith.addf %984, %987 : vector<32x128xf32>
    %c261 = arith.constant 261 : index
    %989 = memref.load %arg2[%c261] : memref<581xf32, #tpu.memory_space<smem>>
    %990 = vector.broadcast %989 : f32 to vector<32x128xf32>
    %991 = arith.mulf %715, %990 : vector<32x128xf32>
    %992 = arith.addf %988, %991 : vector<32x128xf32>
    %c271 = arith.constant 271 : index
    %993 = memref.load %arg2[%c271] : memref<581xf32, #tpu.memory_space<smem>>
    %994 = vector.broadcast %993 : f32 to vector<32x128xf32>
    %995 = arith.mulf %758, %994 : vector<32x128xf32>
    %996 = arith.addf %992, %995 : vector<32x128xf32>
    %c281 = arith.constant 281 : index
    %997 = memref.load %arg2[%c281] : memref<581xf32, #tpu.memory_space<smem>>
    %998 = vector.broadcast %997 : f32 to vector<32x128xf32>
    %999 = arith.mulf %801, %998 : vector<32x128xf32>
    %1000 = arith.addf %996, %999 : vector<32x128xf32>
    %c291 = arith.constant 291 : index
    %1001 = memref.load %arg2[%c291] : memref<581xf32, #tpu.memory_space<smem>>
    %1002 = vector.broadcast %1001 : f32 to vector<32x128xf32>
    %1003 = arith.mulf %844, %1002 : vector<32x128xf32>
    %1004 = arith.addf %1000, %1003 : vector<32x128xf32>
    %c301 = arith.constant 301 : index
    %1005 = memref.load %arg2[%c301] : memref<581xf32, #tpu.memory_space<smem>>
    %1006 = vector.broadcast %1005 : f32 to vector<32x128xf32>
    %1007 = arith.mulf %887, %1006 : vector<32x128xf32>
    %1008 = arith.addf %1004, %1007 : vector<32x128xf32>
    %c311 = arith.constant 311 : index
    %1009 = memref.load %arg2[%c311] : memref<581xf32, #tpu.memory_space<smem>>
    %1010 = vector.broadcast %1009 : f32 to vector<32x128xf32>
    %1011 = arith.mulf %930, %1010 : vector<32x128xf32>
    %1012 = arith.addf %1008, %1011 : vector<32x128xf32>
    %c541 = arith.constant 541 : index
    %1013 = memref.load %arg2[%c541] : memref<581xf32, #tpu.memory_space<smem>>
    %1014 = vector.broadcast %1013 : f32 to vector<32x128xf32>
    %1015 = arith.addf %1012, %1014 : vector<32x128xf32>
    %1016 = math.tanh %1015 : vector<32x128xf32>
    %c222 = arith.constant 222 : index
    %1017 = memref.load %arg2[%c222] : memref<581xf32, #tpu.memory_space<smem>>
    %1018 = vector.broadcast %1017 : f32 to vector<32x128xf32>
    %1019 = arith.mulf %543, %1018 : vector<32x128xf32>
    %c232 = arith.constant 232 : index
    %1020 = memref.load %arg2[%c232] : memref<581xf32, #tpu.memory_space<smem>>
    %1021 = vector.broadcast %1020 : f32 to vector<32x128xf32>
    %1022 = arith.mulf %586, %1021 : vector<32x128xf32>
    %1023 = arith.addf %1019, %1022 : vector<32x128xf32>
    %c242 = arith.constant 242 : index
    %1024 = memref.load %arg2[%c242] : memref<581xf32, #tpu.memory_space<smem>>
    %1025 = vector.broadcast %1024 : f32 to vector<32x128xf32>
    %1026 = arith.mulf %629, %1025 : vector<32x128xf32>
    %1027 = arith.addf %1023, %1026 : vector<32x128xf32>
    %c252 = arith.constant 252 : index
    %1028 = memref.load %arg2[%c252] : memref<581xf32, #tpu.memory_space<smem>>
    %1029 = vector.broadcast %1028 : f32 to vector<32x128xf32>
    %1030 = arith.mulf %672, %1029 : vector<32x128xf32>
    %1031 = arith.addf %1027, %1030 : vector<32x128xf32>
    %c262 = arith.constant 262 : index
    %1032 = memref.load %arg2[%c262] : memref<581xf32, #tpu.memory_space<smem>>
    %1033 = vector.broadcast %1032 : f32 to vector<32x128xf32>
    %1034 = arith.mulf %715, %1033 : vector<32x128xf32>
    %1035 = arith.addf %1031, %1034 : vector<32x128xf32>
    %c272 = arith.constant 272 : index
    %1036 = memref.load %arg2[%c272] : memref<581xf32, #tpu.memory_space<smem>>
    %1037 = vector.broadcast %1036 : f32 to vector<32x128xf32>
    %1038 = arith.mulf %758, %1037 : vector<32x128xf32>
    %1039 = arith.addf %1035, %1038 : vector<32x128xf32>
    %c282 = arith.constant 282 : index
    %1040 = memref.load %arg2[%c282] : memref<581xf32, #tpu.memory_space<smem>>
    %1041 = vector.broadcast %1040 : f32 to vector<32x128xf32>
    %1042 = arith.mulf %801, %1041 : vector<32x128xf32>
    %1043 = arith.addf %1039, %1042 : vector<32x128xf32>
    %c292 = arith.constant 292 : index
    %1044 = memref.load %arg2[%c292] : memref<581xf32, #tpu.memory_space<smem>>
    %1045 = vector.broadcast %1044 : f32 to vector<32x128xf32>
    %1046 = arith.mulf %844, %1045 : vector<32x128xf32>
    %1047 = arith.addf %1043, %1046 : vector<32x128xf32>
    %c302 = arith.constant 302 : index
    %1048 = memref.load %arg2[%c302] : memref<581xf32, #tpu.memory_space<smem>>
    %1049 = vector.broadcast %1048 : f32 to vector<32x128xf32>
    %1050 = arith.mulf %887, %1049 : vector<32x128xf32>
    %1051 = arith.addf %1047, %1050 : vector<32x128xf32>
    %c312 = arith.constant 312 : index
    %1052 = memref.load %arg2[%c312] : memref<581xf32, #tpu.memory_space<smem>>
    %1053 = vector.broadcast %1052 : f32 to vector<32x128xf32>
    %1054 = arith.mulf %930, %1053 : vector<32x128xf32>
    %1055 = arith.addf %1051, %1054 : vector<32x128xf32>
    %c542 = arith.constant 542 : index
    %1056 = memref.load %arg2[%c542] : memref<581xf32, #tpu.memory_space<smem>>
    %1057 = vector.broadcast %1056 : f32 to vector<32x128xf32>
    %1058 = arith.addf %1055, %1057 : vector<32x128xf32>
    %1059 = math.tanh %1058 : vector<32x128xf32>
    %c223 = arith.constant 223 : index
    %1060 = memref.load %arg2[%c223] : memref<581xf32, #tpu.memory_space<smem>>
    %1061 = vector.broadcast %1060 : f32 to vector<32x128xf32>
    %1062 = arith.mulf %543, %1061 : vector<32x128xf32>
    %c233 = arith.constant 233 : index
    %1063 = memref.load %arg2[%c233] : memref<581xf32, #tpu.memory_space<smem>>
    %1064 = vector.broadcast %1063 : f32 to vector<32x128xf32>
    %1065 = arith.mulf %586, %1064 : vector<32x128xf32>
    %1066 = arith.addf %1062, %1065 : vector<32x128xf32>
    %c243 = arith.constant 243 : index
    %1067 = memref.load %arg2[%c243] : memref<581xf32, #tpu.memory_space<smem>>
    %1068 = vector.broadcast %1067 : f32 to vector<32x128xf32>
    %1069 = arith.mulf %629, %1068 : vector<32x128xf32>
    %1070 = arith.addf %1066, %1069 : vector<32x128xf32>
    %c253 = arith.constant 253 : index
    %1071 = memref.load %arg2[%c253] : memref<581xf32, #tpu.memory_space<smem>>
    %1072 = vector.broadcast %1071 : f32 to vector<32x128xf32>
    %1073 = arith.mulf %672, %1072 : vector<32x128xf32>
    %1074 = arith.addf %1070, %1073 : vector<32x128xf32>
    %c263 = arith.constant 263 : index
    %1075 = memref.load %arg2[%c263] : memref<581xf32, #tpu.memory_space<smem>>
    %1076 = vector.broadcast %1075 : f32 to vector<32x128xf32>
    %1077 = arith.mulf %715, %1076 : vector<32x128xf32>
    %1078 = arith.addf %1074, %1077 : vector<32x128xf32>
    %c273 = arith.constant 273 : index
    %1079 = memref.load %arg2[%c273] : memref<581xf32, #tpu.memory_space<smem>>
    %1080 = vector.broadcast %1079 : f32 to vector<32x128xf32>
    %1081 = arith.mulf %758, %1080 : vector<32x128xf32>
    %1082 = arith.addf %1078, %1081 : vector<32x128xf32>
    %c283 = arith.constant 283 : index
    %1083 = memref.load %arg2[%c283] : memref<581xf32, #tpu.memory_space<smem>>
    %1084 = vector.broadcast %1083 : f32 to vector<32x128xf32>
    %1085 = arith.mulf %801, %1084 : vector<32x128xf32>
    %1086 = arith.addf %1082, %1085 : vector<32x128xf32>
    %c293 = arith.constant 293 : index
    %1087 = memref.load %arg2[%c293] : memref<581xf32, #tpu.memory_space<smem>>
    %1088 = vector.broadcast %1087 : f32 to vector<32x128xf32>
    %1089 = arith.mulf %844, %1088 : vector<32x128xf32>
    %1090 = arith.addf %1086, %1089 : vector<32x128xf32>
    %c303 = arith.constant 303 : index
    %1091 = memref.load %arg2[%c303] : memref<581xf32, #tpu.memory_space<smem>>
    %1092 = vector.broadcast %1091 : f32 to vector<32x128xf32>
    %1093 = arith.mulf %887, %1092 : vector<32x128xf32>
    %1094 = arith.addf %1090, %1093 : vector<32x128xf32>
    %c313 = arith.constant 313 : index
    %1095 = memref.load %arg2[%c313] : memref<581xf32, #tpu.memory_space<smem>>
    %1096 = vector.broadcast %1095 : f32 to vector<32x128xf32>
    %1097 = arith.mulf %930, %1096 : vector<32x128xf32>
    %1098 = arith.addf %1094, %1097 : vector<32x128xf32>
    %c543 = arith.constant 543 : index
    %1099 = memref.load %arg2[%c543] : memref<581xf32, #tpu.memory_space<smem>>
    %1100 = vector.broadcast %1099 : f32 to vector<32x128xf32>
    %1101 = arith.addf %1098, %1100 : vector<32x128xf32>
    %1102 = math.tanh %1101 : vector<32x128xf32>
    %c224 = arith.constant 224 : index
    %1103 = memref.load %arg2[%c224] : memref<581xf32, #tpu.memory_space<smem>>
    %1104 = vector.broadcast %1103 : f32 to vector<32x128xf32>
    %1105 = arith.mulf %543, %1104 : vector<32x128xf32>
    %c234 = arith.constant 234 : index
    %1106 = memref.load %arg2[%c234] : memref<581xf32, #tpu.memory_space<smem>>
    %1107 = vector.broadcast %1106 : f32 to vector<32x128xf32>
    %1108 = arith.mulf %586, %1107 : vector<32x128xf32>
    %1109 = arith.addf %1105, %1108 : vector<32x128xf32>
    %c244 = arith.constant 244 : index
    %1110 = memref.load %arg2[%c244] : memref<581xf32, #tpu.memory_space<smem>>
    %1111 = vector.broadcast %1110 : f32 to vector<32x128xf32>
    %1112 = arith.mulf %629, %1111 : vector<32x128xf32>
    %1113 = arith.addf %1109, %1112 : vector<32x128xf32>
    %c254 = arith.constant 254 : index
    %1114 = memref.load %arg2[%c254] : memref<581xf32, #tpu.memory_space<smem>>
    %1115 = vector.broadcast %1114 : f32 to vector<32x128xf32>
    %1116 = arith.mulf %672, %1115 : vector<32x128xf32>
    %1117 = arith.addf %1113, %1116 : vector<32x128xf32>
    %c264 = arith.constant 264 : index
    %1118 = memref.load %arg2[%c264] : memref<581xf32, #tpu.memory_space<smem>>
    %1119 = vector.broadcast %1118 : f32 to vector<32x128xf32>
    %1120 = arith.mulf %715, %1119 : vector<32x128xf32>
    %1121 = arith.addf %1117, %1120 : vector<32x128xf32>
    %c274 = arith.constant 274 : index
    %1122 = memref.load %arg2[%c274] : memref<581xf32, #tpu.memory_space<smem>>
    %1123 = vector.broadcast %1122 : f32 to vector<32x128xf32>
    %1124 = arith.mulf %758, %1123 : vector<32x128xf32>
    %1125 = arith.addf %1121, %1124 : vector<32x128xf32>
    %c284 = arith.constant 284 : index
    %1126 = memref.load %arg2[%c284] : memref<581xf32, #tpu.memory_space<smem>>
    %1127 = vector.broadcast %1126 : f32 to vector<32x128xf32>
    %1128 = arith.mulf %801, %1127 : vector<32x128xf32>
    %1129 = arith.addf %1125, %1128 : vector<32x128xf32>
    %c294 = arith.constant 294 : index
    %1130 = memref.load %arg2[%c294] : memref<581xf32, #tpu.memory_space<smem>>
    %1131 = vector.broadcast %1130 : f32 to vector<32x128xf32>
    %1132 = arith.mulf %844, %1131 : vector<32x128xf32>
    %1133 = arith.addf %1129, %1132 : vector<32x128xf32>
    %c304 = arith.constant 304 : index
    %1134 = memref.load %arg2[%c304] : memref<581xf32, #tpu.memory_space<smem>>
    %1135 = vector.broadcast %1134 : f32 to vector<32x128xf32>
    %1136 = arith.mulf %887, %1135 : vector<32x128xf32>
    %1137 = arith.addf %1133, %1136 : vector<32x128xf32>
    %c314 = arith.constant 314 : index
    %1138 = memref.load %arg2[%c314] : memref<581xf32, #tpu.memory_space<smem>>
    %1139 = vector.broadcast %1138 : f32 to vector<32x128xf32>
    %1140 = arith.mulf %930, %1139 : vector<32x128xf32>
    %1141 = arith.addf %1137, %1140 : vector<32x128xf32>
    %c544 = arith.constant 544 : index
    %1142 = memref.load %arg2[%c544] : memref<581xf32, #tpu.memory_space<smem>>
    %1143 = vector.broadcast %1142 : f32 to vector<32x128xf32>
    %1144 = arith.addf %1141, %1143 : vector<32x128xf32>
    %1145 = math.tanh %1144 : vector<32x128xf32>
    %c225 = arith.constant 225 : index
    %1146 = memref.load %arg2[%c225] : memref<581xf32, #tpu.memory_space<smem>>
    %1147 = vector.broadcast %1146 : f32 to vector<32x128xf32>
    %1148 = arith.mulf %543, %1147 : vector<32x128xf32>
    %c235 = arith.constant 235 : index
    %1149 = memref.load %arg2[%c235] : memref<581xf32, #tpu.memory_space<smem>>
    %1150 = vector.broadcast %1149 : f32 to vector<32x128xf32>
    %1151 = arith.mulf %586, %1150 : vector<32x128xf32>
    %1152 = arith.addf %1148, %1151 : vector<32x128xf32>
    %c245 = arith.constant 245 : index
    %1153 = memref.load %arg2[%c245] : memref<581xf32, #tpu.memory_space<smem>>
    %1154 = vector.broadcast %1153 : f32 to vector<32x128xf32>
    %1155 = arith.mulf %629, %1154 : vector<32x128xf32>
    %1156 = arith.addf %1152, %1155 : vector<32x128xf32>
    %c255 = arith.constant 255 : index
    %1157 = memref.load %arg2[%c255] : memref<581xf32, #tpu.memory_space<smem>>
    %1158 = vector.broadcast %1157 : f32 to vector<32x128xf32>
    %1159 = arith.mulf %672, %1158 : vector<32x128xf32>
    %1160 = arith.addf %1156, %1159 : vector<32x128xf32>
    %c265 = arith.constant 265 : index
    %1161 = memref.load %arg2[%c265] : memref<581xf32, #tpu.memory_space<smem>>
    %1162 = vector.broadcast %1161 : f32 to vector<32x128xf32>
    %1163 = arith.mulf %715, %1162 : vector<32x128xf32>
    %1164 = arith.addf %1160, %1163 : vector<32x128xf32>
    %c275 = arith.constant 275 : index
    %1165 = memref.load %arg2[%c275] : memref<581xf32, #tpu.memory_space<smem>>
    %1166 = vector.broadcast %1165 : f32 to vector<32x128xf32>
    %1167 = arith.mulf %758, %1166 : vector<32x128xf32>
    %1168 = arith.addf %1164, %1167 : vector<32x128xf32>
    %c285 = arith.constant 285 : index
    %1169 = memref.load %arg2[%c285] : memref<581xf32, #tpu.memory_space<smem>>
    %1170 = vector.broadcast %1169 : f32 to vector<32x128xf32>
    %1171 = arith.mulf %801, %1170 : vector<32x128xf32>
    %1172 = arith.addf %1168, %1171 : vector<32x128xf32>
    %c295 = arith.constant 295 : index
    %1173 = memref.load %arg2[%c295] : memref<581xf32, #tpu.memory_space<smem>>
    %1174 = vector.broadcast %1173 : f32 to vector<32x128xf32>
    %1175 = arith.mulf %844, %1174 : vector<32x128xf32>
    %1176 = arith.addf %1172, %1175 : vector<32x128xf32>
    %c305 = arith.constant 305 : index
    %1177 = memref.load %arg2[%c305] : memref<581xf32, #tpu.memory_space<smem>>
    %1178 = vector.broadcast %1177 : f32 to vector<32x128xf32>
    %1179 = arith.mulf %887, %1178 : vector<32x128xf32>
    %1180 = arith.addf %1176, %1179 : vector<32x128xf32>
    %c315 = arith.constant 315 : index
    %1181 = memref.load %arg2[%c315] : memref<581xf32, #tpu.memory_space<smem>>
    %1182 = vector.broadcast %1181 : f32 to vector<32x128xf32>
    %1183 = arith.mulf %930, %1182 : vector<32x128xf32>
    %1184 = arith.addf %1180, %1183 : vector<32x128xf32>
    %c545 = arith.constant 545 : index
    %1185 = memref.load %arg2[%c545] : memref<581xf32, #tpu.memory_space<smem>>
    %1186 = vector.broadcast %1185 : f32 to vector<32x128xf32>
    %1187 = arith.addf %1184, %1186 : vector<32x128xf32>
    %1188 = math.tanh %1187 : vector<32x128xf32>
    %c226 = arith.constant 226 : index
    %1189 = memref.load %arg2[%c226] : memref<581xf32, #tpu.memory_space<smem>>
    %1190 = vector.broadcast %1189 : f32 to vector<32x128xf32>
    %1191 = arith.mulf %543, %1190 : vector<32x128xf32>
    %c236 = arith.constant 236 : index
    %1192 = memref.load %arg2[%c236] : memref<581xf32, #tpu.memory_space<smem>>
    %1193 = vector.broadcast %1192 : f32 to vector<32x128xf32>
    %1194 = arith.mulf %586, %1193 : vector<32x128xf32>
    %1195 = arith.addf %1191, %1194 : vector<32x128xf32>
    %c246 = arith.constant 246 : index
    %1196 = memref.load %arg2[%c246] : memref<581xf32, #tpu.memory_space<smem>>
    %1197 = vector.broadcast %1196 : f32 to vector<32x128xf32>
    %1198 = arith.mulf %629, %1197 : vector<32x128xf32>
    %1199 = arith.addf %1195, %1198 : vector<32x128xf32>
    %c256 = arith.constant 256 : index
    %1200 = memref.load %arg2[%c256] : memref<581xf32, #tpu.memory_space<smem>>
    %1201 = vector.broadcast %1200 : f32 to vector<32x128xf32>
    %1202 = arith.mulf %672, %1201 : vector<32x128xf32>
    %1203 = arith.addf %1199, %1202 : vector<32x128xf32>
    %c266 = arith.constant 266 : index
    %1204 = memref.load %arg2[%c266] : memref<581xf32, #tpu.memory_space<smem>>
    %1205 = vector.broadcast %1204 : f32 to vector<32x128xf32>
    %1206 = arith.mulf %715, %1205 : vector<32x128xf32>
    %1207 = arith.addf %1203, %1206 : vector<32x128xf32>
    %c276 = arith.constant 276 : index
    %1208 = memref.load %arg2[%c276] : memref<581xf32, #tpu.memory_space<smem>>
    %1209 = vector.broadcast %1208 : f32 to vector<32x128xf32>
    %1210 = arith.mulf %758, %1209 : vector<32x128xf32>
    %1211 = arith.addf %1207, %1210 : vector<32x128xf32>
    %c286 = arith.constant 286 : index
    %1212 = memref.load %arg2[%c286] : memref<581xf32, #tpu.memory_space<smem>>
    %1213 = vector.broadcast %1212 : f32 to vector<32x128xf32>
    %1214 = arith.mulf %801, %1213 : vector<32x128xf32>
    %1215 = arith.addf %1211, %1214 : vector<32x128xf32>
    %c296 = arith.constant 296 : index
    %1216 = memref.load %arg2[%c296] : memref<581xf32, #tpu.memory_space<smem>>
    %1217 = vector.broadcast %1216 : f32 to vector<32x128xf32>
    %1218 = arith.mulf %844, %1217 : vector<32x128xf32>
    %1219 = arith.addf %1215, %1218 : vector<32x128xf32>
    %c306 = arith.constant 306 : index
    %1220 = memref.load %arg2[%c306] : memref<581xf32, #tpu.memory_space<smem>>
    %1221 = vector.broadcast %1220 : f32 to vector<32x128xf32>
    %1222 = arith.mulf %887, %1221 : vector<32x128xf32>
    %1223 = arith.addf %1219, %1222 : vector<32x128xf32>
    %c316 = arith.constant 316 : index
    %1224 = memref.load %arg2[%c316] : memref<581xf32, #tpu.memory_space<smem>>
    %1225 = vector.broadcast %1224 : f32 to vector<32x128xf32>
    %1226 = arith.mulf %930, %1225 : vector<32x128xf32>
    %1227 = arith.addf %1223, %1226 : vector<32x128xf32>
    %c546 = arith.constant 546 : index
    %1228 = memref.load %arg2[%c546] : memref<581xf32, #tpu.memory_space<smem>>
    %1229 = vector.broadcast %1228 : f32 to vector<32x128xf32>
    %1230 = arith.addf %1227, %1229 : vector<32x128xf32>
    %1231 = math.tanh %1230 : vector<32x128xf32>
    %c227 = arith.constant 227 : index
    %1232 = memref.load %arg2[%c227] : memref<581xf32, #tpu.memory_space<smem>>
    %1233 = vector.broadcast %1232 : f32 to vector<32x128xf32>
    %1234 = arith.mulf %543, %1233 : vector<32x128xf32>
    %c237 = arith.constant 237 : index
    %1235 = memref.load %arg2[%c237] : memref<581xf32, #tpu.memory_space<smem>>
    %1236 = vector.broadcast %1235 : f32 to vector<32x128xf32>
    %1237 = arith.mulf %586, %1236 : vector<32x128xf32>
    %1238 = arith.addf %1234, %1237 : vector<32x128xf32>
    %c247 = arith.constant 247 : index
    %1239 = memref.load %arg2[%c247] : memref<581xf32, #tpu.memory_space<smem>>
    %1240 = vector.broadcast %1239 : f32 to vector<32x128xf32>
    %1241 = arith.mulf %629, %1240 : vector<32x128xf32>
    %1242 = arith.addf %1238, %1241 : vector<32x128xf32>
    %c257 = arith.constant 257 : index
    %1243 = memref.load %arg2[%c257] : memref<581xf32, #tpu.memory_space<smem>>
    %1244 = vector.broadcast %1243 : f32 to vector<32x128xf32>
    %1245 = arith.mulf %672, %1244 : vector<32x128xf32>
    %1246 = arith.addf %1242, %1245 : vector<32x128xf32>
    %c267 = arith.constant 267 : index
    %1247 = memref.load %arg2[%c267] : memref<581xf32, #tpu.memory_space<smem>>
    %1248 = vector.broadcast %1247 : f32 to vector<32x128xf32>
    %1249 = arith.mulf %715, %1248 : vector<32x128xf32>
    %1250 = arith.addf %1246, %1249 : vector<32x128xf32>
    %c277 = arith.constant 277 : index
    %1251 = memref.load %arg2[%c277] : memref<581xf32, #tpu.memory_space<smem>>
    %1252 = vector.broadcast %1251 : f32 to vector<32x128xf32>
    %1253 = arith.mulf %758, %1252 : vector<32x128xf32>
    %1254 = arith.addf %1250, %1253 : vector<32x128xf32>
    %c287 = arith.constant 287 : index
    %1255 = memref.load %arg2[%c287] : memref<581xf32, #tpu.memory_space<smem>>
    %1256 = vector.broadcast %1255 : f32 to vector<32x128xf32>
    %1257 = arith.mulf %801, %1256 : vector<32x128xf32>
    %1258 = arith.addf %1254, %1257 : vector<32x128xf32>
    %c297 = arith.constant 297 : index
    %1259 = memref.load %arg2[%c297] : memref<581xf32, #tpu.memory_space<smem>>
    %1260 = vector.broadcast %1259 : f32 to vector<32x128xf32>
    %1261 = arith.mulf %844, %1260 : vector<32x128xf32>
    %1262 = arith.addf %1258, %1261 : vector<32x128xf32>
    %c307 = arith.constant 307 : index
    %1263 = memref.load %arg2[%c307] : memref<581xf32, #tpu.memory_space<smem>>
    %1264 = vector.broadcast %1263 : f32 to vector<32x128xf32>
    %1265 = arith.mulf %887, %1264 : vector<32x128xf32>
    %1266 = arith.addf %1262, %1265 : vector<32x128xf32>
    %c317 = arith.constant 317 : index
    %1267 = memref.load %arg2[%c317] : memref<581xf32, #tpu.memory_space<smem>>
    %1268 = vector.broadcast %1267 : f32 to vector<32x128xf32>
    %1269 = arith.mulf %930, %1268 : vector<32x128xf32>
    %1270 = arith.addf %1266, %1269 : vector<32x128xf32>
    %c547 = arith.constant 547 : index
    %1271 = memref.load %arg2[%c547] : memref<581xf32, #tpu.memory_space<smem>>
    %1272 = vector.broadcast %1271 : f32 to vector<32x128xf32>
    %1273 = arith.addf %1270, %1272 : vector<32x128xf32>
    %1274 = math.tanh %1273 : vector<32x128xf32>
    %c228 = arith.constant 228 : index
    %1275 = memref.load %arg2[%c228] : memref<581xf32, #tpu.memory_space<smem>>
    %1276 = vector.broadcast %1275 : f32 to vector<32x128xf32>
    %1277 = arith.mulf %543, %1276 : vector<32x128xf32>
    %c238 = arith.constant 238 : index
    %1278 = memref.load %arg2[%c238] : memref<581xf32, #tpu.memory_space<smem>>
    %1279 = vector.broadcast %1278 : f32 to vector<32x128xf32>
    %1280 = arith.mulf %586, %1279 : vector<32x128xf32>
    %1281 = arith.addf %1277, %1280 : vector<32x128xf32>
    %c248 = arith.constant 248 : index
    %1282 = memref.load %arg2[%c248] : memref<581xf32, #tpu.memory_space<smem>>
    %1283 = vector.broadcast %1282 : f32 to vector<32x128xf32>
    %1284 = arith.mulf %629, %1283 : vector<32x128xf32>
    %1285 = arith.addf %1281, %1284 : vector<32x128xf32>
    %c258 = arith.constant 258 : index
    %1286 = memref.load %arg2[%c258] : memref<581xf32, #tpu.memory_space<smem>>
    %1287 = vector.broadcast %1286 : f32 to vector<32x128xf32>
    %1288 = arith.mulf %672, %1287 : vector<32x128xf32>
    %1289 = arith.addf %1285, %1288 : vector<32x128xf32>
    %c268 = arith.constant 268 : index
    %1290 = memref.load %arg2[%c268] : memref<581xf32, #tpu.memory_space<smem>>
    %1291 = vector.broadcast %1290 : f32 to vector<32x128xf32>
    %1292 = arith.mulf %715, %1291 : vector<32x128xf32>
    %1293 = arith.addf %1289, %1292 : vector<32x128xf32>
    %c278 = arith.constant 278 : index
    %1294 = memref.load %arg2[%c278] : memref<581xf32, #tpu.memory_space<smem>>
    %1295 = vector.broadcast %1294 : f32 to vector<32x128xf32>
    %1296 = arith.mulf %758, %1295 : vector<32x128xf32>
    %1297 = arith.addf %1293, %1296 : vector<32x128xf32>
    %c288 = arith.constant 288 : index
    %1298 = memref.load %arg2[%c288] : memref<581xf32, #tpu.memory_space<smem>>
    %1299 = vector.broadcast %1298 : f32 to vector<32x128xf32>
    %1300 = arith.mulf %801, %1299 : vector<32x128xf32>
    %1301 = arith.addf %1297, %1300 : vector<32x128xf32>
    %c298 = arith.constant 298 : index
    %1302 = memref.load %arg2[%c298] : memref<581xf32, #tpu.memory_space<smem>>
    %1303 = vector.broadcast %1302 : f32 to vector<32x128xf32>
    %1304 = arith.mulf %844, %1303 : vector<32x128xf32>
    %1305 = arith.addf %1301, %1304 : vector<32x128xf32>
    %c308 = arith.constant 308 : index
    %1306 = memref.load %arg2[%c308] : memref<581xf32, #tpu.memory_space<smem>>
    %1307 = vector.broadcast %1306 : f32 to vector<32x128xf32>
    %1308 = arith.mulf %887, %1307 : vector<32x128xf32>
    %1309 = arith.addf %1305, %1308 : vector<32x128xf32>
    %c318 = arith.constant 318 : index
    %1310 = memref.load %arg2[%c318] : memref<581xf32, #tpu.memory_space<smem>>
    %1311 = vector.broadcast %1310 : f32 to vector<32x128xf32>
    %1312 = arith.mulf %930, %1311 : vector<32x128xf32>
    %1313 = arith.addf %1309, %1312 : vector<32x128xf32>
    %c548 = arith.constant 548 : index
    %1314 = memref.load %arg2[%c548] : memref<581xf32, #tpu.memory_space<smem>>
    %1315 = vector.broadcast %1314 : f32 to vector<32x128xf32>
    %1316 = arith.addf %1313, %1315 : vector<32x128xf32>
    %1317 = math.tanh %1316 : vector<32x128xf32>
    %c229 = arith.constant 229 : index
    %1318 = memref.load %arg2[%c229] : memref<581xf32, #tpu.memory_space<smem>>
    %1319 = vector.broadcast %1318 : f32 to vector<32x128xf32>
    %1320 = arith.mulf %543, %1319 : vector<32x128xf32>
    %c239 = arith.constant 239 : index
    %1321 = memref.load %arg2[%c239] : memref<581xf32, #tpu.memory_space<smem>>
    %1322 = vector.broadcast %1321 : f32 to vector<32x128xf32>
    %1323 = arith.mulf %586, %1322 : vector<32x128xf32>
    %1324 = arith.addf %1320, %1323 : vector<32x128xf32>
    %c249 = arith.constant 249 : index
    %1325 = memref.load %arg2[%c249] : memref<581xf32, #tpu.memory_space<smem>>
    %1326 = vector.broadcast %1325 : f32 to vector<32x128xf32>
    %1327 = arith.mulf %629, %1326 : vector<32x128xf32>
    %1328 = arith.addf %1324, %1327 : vector<32x128xf32>
    %c259 = arith.constant 259 : index
    %1329 = memref.load %arg2[%c259] : memref<581xf32, #tpu.memory_space<smem>>
    %1330 = vector.broadcast %1329 : f32 to vector<32x128xf32>
    %1331 = arith.mulf %672, %1330 : vector<32x128xf32>
    %1332 = arith.addf %1328, %1331 : vector<32x128xf32>
    %c269 = arith.constant 269 : index
    %1333 = memref.load %arg2[%c269] : memref<581xf32, #tpu.memory_space<smem>>
    %1334 = vector.broadcast %1333 : f32 to vector<32x128xf32>
    %1335 = arith.mulf %715, %1334 : vector<32x128xf32>
    %1336 = arith.addf %1332, %1335 : vector<32x128xf32>
    %c279 = arith.constant 279 : index
    %1337 = memref.load %arg2[%c279] : memref<581xf32, #tpu.memory_space<smem>>
    %1338 = vector.broadcast %1337 : f32 to vector<32x128xf32>
    %1339 = arith.mulf %758, %1338 : vector<32x128xf32>
    %1340 = arith.addf %1336, %1339 : vector<32x128xf32>
    %c289 = arith.constant 289 : index
    %1341 = memref.load %arg2[%c289] : memref<581xf32, #tpu.memory_space<smem>>
    %1342 = vector.broadcast %1341 : f32 to vector<32x128xf32>
    %1343 = arith.mulf %801, %1342 : vector<32x128xf32>
    %1344 = arith.addf %1340, %1343 : vector<32x128xf32>
    %c299 = arith.constant 299 : index
    %1345 = memref.load %arg2[%c299] : memref<581xf32, #tpu.memory_space<smem>>
    %1346 = vector.broadcast %1345 : f32 to vector<32x128xf32>
    %1347 = arith.mulf %844, %1346 : vector<32x128xf32>
    %1348 = arith.addf %1344, %1347 : vector<32x128xf32>
    %c309 = arith.constant 309 : index
    %1349 = memref.load %arg2[%c309] : memref<581xf32, #tpu.memory_space<smem>>
    %1350 = vector.broadcast %1349 : f32 to vector<32x128xf32>
    %1351 = arith.mulf %887, %1350 : vector<32x128xf32>
    %1352 = arith.addf %1348, %1351 : vector<32x128xf32>
    %c319 = arith.constant 319 : index
    %1353 = memref.load %arg2[%c319] : memref<581xf32, #tpu.memory_space<smem>>
    %1354 = vector.broadcast %1353 : f32 to vector<32x128xf32>
    %1355 = arith.mulf %930, %1354 : vector<32x128xf32>
    %1356 = arith.addf %1352, %1355 : vector<32x128xf32>
    %c549 = arith.constant 549 : index
    %1357 = memref.load %arg2[%c549] : memref<581xf32, #tpu.memory_space<smem>>
    %1358 = vector.broadcast %1357 : f32 to vector<32x128xf32>
    %1359 = arith.addf %1356, %1358 : vector<32x128xf32>
    %1360 = math.tanh %1359 : vector<32x128xf32>
    %c320 = arith.constant 320 : index
    %1361 = memref.load %arg2[%c320] : memref<581xf32, #tpu.memory_space<smem>>
    %1362 = vector.broadcast %1361 : f32 to vector<32x128xf32>
    %1363 = arith.mulf %973, %1362 : vector<32x128xf32>
    %c330 = arith.constant 330 : index
    %1364 = memref.load %arg2[%c330] : memref<581xf32, #tpu.memory_space<smem>>
    %1365 = vector.broadcast %1364 : f32 to vector<32x128xf32>
    %1366 = arith.mulf %1016, %1365 : vector<32x128xf32>
    %1367 = arith.addf %1363, %1366 : vector<32x128xf32>
    %c340 = arith.constant 340 : index
    %1368 = memref.load %arg2[%c340] : memref<581xf32, #tpu.memory_space<smem>>
    %1369 = vector.broadcast %1368 : f32 to vector<32x128xf32>
    %1370 = arith.mulf %1059, %1369 : vector<32x128xf32>
    %1371 = arith.addf %1367, %1370 : vector<32x128xf32>
    %c350 = arith.constant 350 : index
    %1372 = memref.load %arg2[%c350] : memref<581xf32, #tpu.memory_space<smem>>
    %1373 = vector.broadcast %1372 : f32 to vector<32x128xf32>
    %1374 = arith.mulf %1102, %1373 : vector<32x128xf32>
    %1375 = arith.addf %1371, %1374 : vector<32x128xf32>
    %c360 = arith.constant 360 : index
    %1376 = memref.load %arg2[%c360] : memref<581xf32, #tpu.memory_space<smem>>
    %1377 = vector.broadcast %1376 : f32 to vector<32x128xf32>
    %1378 = arith.mulf %1145, %1377 : vector<32x128xf32>
    %1379 = arith.addf %1375, %1378 : vector<32x128xf32>
    %c370 = arith.constant 370 : index
    %1380 = memref.load %arg2[%c370] : memref<581xf32, #tpu.memory_space<smem>>
    %1381 = vector.broadcast %1380 : f32 to vector<32x128xf32>
    %1382 = arith.mulf %1188, %1381 : vector<32x128xf32>
    %1383 = arith.addf %1379, %1382 : vector<32x128xf32>
    %c380 = arith.constant 380 : index
    %1384 = memref.load %arg2[%c380] : memref<581xf32, #tpu.memory_space<smem>>
    %1385 = vector.broadcast %1384 : f32 to vector<32x128xf32>
    %1386 = arith.mulf %1231, %1385 : vector<32x128xf32>
    %1387 = arith.addf %1383, %1386 : vector<32x128xf32>
    %c390 = arith.constant 390 : index
    %1388 = memref.load %arg2[%c390] : memref<581xf32, #tpu.memory_space<smem>>
    %1389 = vector.broadcast %1388 : f32 to vector<32x128xf32>
    %1390 = arith.mulf %1274, %1389 : vector<32x128xf32>
    %1391 = arith.addf %1387, %1390 : vector<32x128xf32>
    %c400 = arith.constant 400 : index
    %1392 = memref.load %arg2[%c400] : memref<581xf32, #tpu.memory_space<smem>>
    %1393 = vector.broadcast %1392 : f32 to vector<32x128xf32>
    %1394 = arith.mulf %1317, %1393 : vector<32x128xf32>
    %1395 = arith.addf %1391, %1394 : vector<32x128xf32>
    %c410 = arith.constant 410 : index
    %1396 = memref.load %arg2[%c410] : memref<581xf32, #tpu.memory_space<smem>>
    %1397 = vector.broadcast %1396 : f32 to vector<32x128xf32>
    %1398 = arith.mulf %1360, %1397 : vector<32x128xf32>
    %1399 = arith.addf %1395, %1398 : vector<32x128xf32>
    %c550 = arith.constant 550 : index
    %1400 = memref.load %arg2[%c550] : memref<581xf32, #tpu.memory_space<smem>>
    %1401 = vector.broadcast %1400 : f32 to vector<32x128xf32>
    %1402 = arith.addf %1399, %1401 : vector<32x128xf32>
    %1403 = math.tanh %1402 : vector<32x128xf32>
    %c321 = arith.constant 321 : index
    %1404 = memref.load %arg2[%c321] : memref<581xf32, #tpu.memory_space<smem>>
    %1405 = vector.broadcast %1404 : f32 to vector<32x128xf32>
    %1406 = arith.mulf %973, %1405 : vector<32x128xf32>
    %c331 = arith.constant 331 : index
    %1407 = memref.load %arg2[%c331] : memref<581xf32, #tpu.memory_space<smem>>
    %1408 = vector.broadcast %1407 : f32 to vector<32x128xf32>
    %1409 = arith.mulf %1016, %1408 : vector<32x128xf32>
    %1410 = arith.addf %1406, %1409 : vector<32x128xf32>
    %c341 = arith.constant 341 : index
    %1411 = memref.load %arg2[%c341] : memref<581xf32, #tpu.memory_space<smem>>
    %1412 = vector.broadcast %1411 : f32 to vector<32x128xf32>
    %1413 = arith.mulf %1059, %1412 : vector<32x128xf32>
    %1414 = arith.addf %1410, %1413 : vector<32x128xf32>
    %c351 = arith.constant 351 : index
    %1415 = memref.load %arg2[%c351] : memref<581xf32, #tpu.memory_space<smem>>
    %1416 = vector.broadcast %1415 : f32 to vector<32x128xf32>
    %1417 = arith.mulf %1102, %1416 : vector<32x128xf32>
    %1418 = arith.addf %1414, %1417 : vector<32x128xf32>
    %c361 = arith.constant 361 : index
    %1419 = memref.load %arg2[%c361] : memref<581xf32, #tpu.memory_space<smem>>
    %1420 = vector.broadcast %1419 : f32 to vector<32x128xf32>
    %1421 = arith.mulf %1145, %1420 : vector<32x128xf32>
    %1422 = arith.addf %1418, %1421 : vector<32x128xf32>
    %c371 = arith.constant 371 : index
    %1423 = memref.load %arg2[%c371] : memref<581xf32, #tpu.memory_space<smem>>
    %1424 = vector.broadcast %1423 : f32 to vector<32x128xf32>
    %1425 = arith.mulf %1188, %1424 : vector<32x128xf32>
    %1426 = arith.addf %1422, %1425 : vector<32x128xf32>
    %c381 = arith.constant 381 : index
    %1427 = memref.load %arg2[%c381] : memref<581xf32, #tpu.memory_space<smem>>
    %1428 = vector.broadcast %1427 : f32 to vector<32x128xf32>
    %1429 = arith.mulf %1231, %1428 : vector<32x128xf32>
    %1430 = arith.addf %1426, %1429 : vector<32x128xf32>
    %c391 = arith.constant 391 : index
    %1431 = memref.load %arg2[%c391] : memref<581xf32, #tpu.memory_space<smem>>
    %1432 = vector.broadcast %1431 : f32 to vector<32x128xf32>
    %1433 = arith.mulf %1274, %1432 : vector<32x128xf32>
    %1434 = arith.addf %1430, %1433 : vector<32x128xf32>
    %c401 = arith.constant 401 : index
    %1435 = memref.load %arg2[%c401] : memref<581xf32, #tpu.memory_space<smem>>
    %1436 = vector.broadcast %1435 : f32 to vector<32x128xf32>
    %1437 = arith.mulf %1317, %1436 : vector<32x128xf32>
    %1438 = arith.addf %1434, %1437 : vector<32x128xf32>
    %c411 = arith.constant 411 : index
    %1439 = memref.load %arg2[%c411] : memref<581xf32, #tpu.memory_space<smem>>
    %1440 = vector.broadcast %1439 : f32 to vector<32x128xf32>
    %1441 = arith.mulf %1360, %1440 : vector<32x128xf32>
    %1442 = arith.addf %1438, %1441 : vector<32x128xf32>
    %c551 = arith.constant 551 : index
    %1443 = memref.load %arg2[%c551] : memref<581xf32, #tpu.memory_space<smem>>
    %1444 = vector.broadcast %1443 : f32 to vector<32x128xf32>
    %1445 = arith.addf %1442, %1444 : vector<32x128xf32>
    %1446 = math.tanh %1445 : vector<32x128xf32>
    %c322 = arith.constant 322 : index
    %1447 = memref.load %arg2[%c322] : memref<581xf32, #tpu.memory_space<smem>>
    %1448 = vector.broadcast %1447 : f32 to vector<32x128xf32>
    %1449 = arith.mulf %973, %1448 : vector<32x128xf32>
    %c332 = arith.constant 332 : index
    %1450 = memref.load %arg2[%c332] : memref<581xf32, #tpu.memory_space<smem>>
    %1451 = vector.broadcast %1450 : f32 to vector<32x128xf32>
    %1452 = arith.mulf %1016, %1451 : vector<32x128xf32>
    %1453 = arith.addf %1449, %1452 : vector<32x128xf32>
    %c342 = arith.constant 342 : index
    %1454 = memref.load %arg2[%c342] : memref<581xf32, #tpu.memory_space<smem>>
    %1455 = vector.broadcast %1454 : f32 to vector<32x128xf32>
    %1456 = arith.mulf %1059, %1455 : vector<32x128xf32>
    %1457 = arith.addf %1453, %1456 : vector<32x128xf32>
    %c352 = arith.constant 352 : index
    %1458 = memref.load %arg2[%c352] : memref<581xf32, #tpu.memory_space<smem>>
    %1459 = vector.broadcast %1458 : f32 to vector<32x128xf32>
    %1460 = arith.mulf %1102, %1459 : vector<32x128xf32>
    %1461 = arith.addf %1457, %1460 : vector<32x128xf32>
    %c362 = arith.constant 362 : index
    %1462 = memref.load %arg2[%c362] : memref<581xf32, #tpu.memory_space<smem>>
    %1463 = vector.broadcast %1462 : f32 to vector<32x128xf32>
    %1464 = arith.mulf %1145, %1463 : vector<32x128xf32>
    %1465 = arith.addf %1461, %1464 : vector<32x128xf32>
    %c372 = arith.constant 372 : index
    %1466 = memref.load %arg2[%c372] : memref<581xf32, #tpu.memory_space<smem>>
    %1467 = vector.broadcast %1466 : f32 to vector<32x128xf32>
    %1468 = arith.mulf %1188, %1467 : vector<32x128xf32>
    %1469 = arith.addf %1465, %1468 : vector<32x128xf32>
    %c382 = arith.constant 382 : index
    %1470 = memref.load %arg2[%c382] : memref<581xf32, #tpu.memory_space<smem>>
    %1471 = vector.broadcast %1470 : f32 to vector<32x128xf32>
    %1472 = arith.mulf %1231, %1471 : vector<32x128xf32>
    %1473 = arith.addf %1469, %1472 : vector<32x128xf32>
    %c392 = arith.constant 392 : index
    %1474 = memref.load %arg2[%c392] : memref<581xf32, #tpu.memory_space<smem>>
    %1475 = vector.broadcast %1474 : f32 to vector<32x128xf32>
    %1476 = arith.mulf %1274, %1475 : vector<32x128xf32>
    %1477 = arith.addf %1473, %1476 : vector<32x128xf32>
    %c402 = arith.constant 402 : index
    %1478 = memref.load %arg2[%c402] : memref<581xf32, #tpu.memory_space<smem>>
    %1479 = vector.broadcast %1478 : f32 to vector<32x128xf32>
    %1480 = arith.mulf %1317, %1479 : vector<32x128xf32>
    %1481 = arith.addf %1477, %1480 : vector<32x128xf32>
    %c412 = arith.constant 412 : index
    %1482 = memref.load %arg2[%c412] : memref<581xf32, #tpu.memory_space<smem>>
    %1483 = vector.broadcast %1482 : f32 to vector<32x128xf32>
    %1484 = arith.mulf %1360, %1483 : vector<32x128xf32>
    %1485 = arith.addf %1481, %1484 : vector<32x128xf32>
    %c552 = arith.constant 552 : index
    %1486 = memref.load %arg2[%c552] : memref<581xf32, #tpu.memory_space<smem>>
    %1487 = vector.broadcast %1486 : f32 to vector<32x128xf32>
    %1488 = arith.addf %1485, %1487 : vector<32x128xf32>
    %1489 = math.tanh %1488 : vector<32x128xf32>
    %c323 = arith.constant 323 : index
    %1490 = memref.load %arg2[%c323] : memref<581xf32, #tpu.memory_space<smem>>
    %1491 = vector.broadcast %1490 : f32 to vector<32x128xf32>
    %1492 = arith.mulf %973, %1491 : vector<32x128xf32>
    %c333 = arith.constant 333 : index
    %1493 = memref.load %arg2[%c333] : memref<581xf32, #tpu.memory_space<smem>>
    %1494 = vector.broadcast %1493 : f32 to vector<32x128xf32>
    %1495 = arith.mulf %1016, %1494 : vector<32x128xf32>
    %1496 = arith.addf %1492, %1495 : vector<32x128xf32>
    %c343 = arith.constant 343 : index
    %1497 = memref.load %arg2[%c343] : memref<581xf32, #tpu.memory_space<smem>>
    %1498 = vector.broadcast %1497 : f32 to vector<32x128xf32>
    %1499 = arith.mulf %1059, %1498 : vector<32x128xf32>
    %1500 = arith.addf %1496, %1499 : vector<32x128xf32>
    %c353 = arith.constant 353 : index
    %1501 = memref.load %arg2[%c353] : memref<581xf32, #tpu.memory_space<smem>>
    %1502 = vector.broadcast %1501 : f32 to vector<32x128xf32>
    %1503 = arith.mulf %1102, %1502 : vector<32x128xf32>
    %1504 = arith.addf %1500, %1503 : vector<32x128xf32>
    %c363 = arith.constant 363 : index
    %1505 = memref.load %arg2[%c363] : memref<581xf32, #tpu.memory_space<smem>>
    %1506 = vector.broadcast %1505 : f32 to vector<32x128xf32>
    %1507 = arith.mulf %1145, %1506 : vector<32x128xf32>
    %1508 = arith.addf %1504, %1507 : vector<32x128xf32>
    %c373 = arith.constant 373 : index
    %1509 = memref.load %arg2[%c373] : memref<581xf32, #tpu.memory_space<smem>>
    %1510 = vector.broadcast %1509 : f32 to vector<32x128xf32>
    %1511 = arith.mulf %1188, %1510 : vector<32x128xf32>
    %1512 = arith.addf %1508, %1511 : vector<32x128xf32>
    %c383 = arith.constant 383 : index
    %1513 = memref.load %arg2[%c383] : memref<581xf32, #tpu.memory_space<smem>>
    %1514 = vector.broadcast %1513 : f32 to vector<32x128xf32>
    %1515 = arith.mulf %1231, %1514 : vector<32x128xf32>
    %1516 = arith.addf %1512, %1515 : vector<32x128xf32>
    %c393 = arith.constant 393 : index
    %1517 = memref.load %arg2[%c393] : memref<581xf32, #tpu.memory_space<smem>>
    %1518 = vector.broadcast %1517 : f32 to vector<32x128xf32>
    %1519 = arith.mulf %1274, %1518 : vector<32x128xf32>
    %1520 = arith.addf %1516, %1519 : vector<32x128xf32>
    %c403 = arith.constant 403 : index
    %1521 = memref.load %arg2[%c403] : memref<581xf32, #tpu.memory_space<smem>>
    %1522 = vector.broadcast %1521 : f32 to vector<32x128xf32>
    %1523 = arith.mulf %1317, %1522 : vector<32x128xf32>
    %1524 = arith.addf %1520, %1523 : vector<32x128xf32>
    %c413 = arith.constant 413 : index
    %1525 = memref.load %arg2[%c413] : memref<581xf32, #tpu.memory_space<smem>>
    %1526 = vector.broadcast %1525 : f32 to vector<32x128xf32>
    %1527 = arith.mulf %1360, %1526 : vector<32x128xf32>
    %1528 = arith.addf %1524, %1527 : vector<32x128xf32>
    %c553 = arith.constant 553 : index
    %1529 = memref.load %arg2[%c553] : memref<581xf32, #tpu.memory_space<smem>>
    %1530 = vector.broadcast %1529 : f32 to vector<32x128xf32>
    %1531 = arith.addf %1528, %1530 : vector<32x128xf32>
    %1532 = math.tanh %1531 : vector<32x128xf32>
    %c324 = arith.constant 324 : index
    %1533 = memref.load %arg2[%c324] : memref<581xf32, #tpu.memory_space<smem>>
    %1534 = vector.broadcast %1533 : f32 to vector<32x128xf32>
    %1535 = arith.mulf %973, %1534 : vector<32x128xf32>
    %c334 = arith.constant 334 : index
    %1536 = memref.load %arg2[%c334] : memref<581xf32, #tpu.memory_space<smem>>
    %1537 = vector.broadcast %1536 : f32 to vector<32x128xf32>
    %1538 = arith.mulf %1016, %1537 : vector<32x128xf32>
    %1539 = arith.addf %1535, %1538 : vector<32x128xf32>
    %c344 = arith.constant 344 : index
    %1540 = memref.load %arg2[%c344] : memref<581xf32, #tpu.memory_space<smem>>
    %1541 = vector.broadcast %1540 : f32 to vector<32x128xf32>
    %1542 = arith.mulf %1059, %1541 : vector<32x128xf32>
    %1543 = arith.addf %1539, %1542 : vector<32x128xf32>
    %c354 = arith.constant 354 : index
    %1544 = memref.load %arg2[%c354] : memref<581xf32, #tpu.memory_space<smem>>
    %1545 = vector.broadcast %1544 : f32 to vector<32x128xf32>
    %1546 = arith.mulf %1102, %1545 : vector<32x128xf32>
    %1547 = arith.addf %1543, %1546 : vector<32x128xf32>
    %c364 = arith.constant 364 : index
    %1548 = memref.load %arg2[%c364] : memref<581xf32, #tpu.memory_space<smem>>
    %1549 = vector.broadcast %1548 : f32 to vector<32x128xf32>
    %1550 = arith.mulf %1145, %1549 : vector<32x128xf32>
    %1551 = arith.addf %1547, %1550 : vector<32x128xf32>
    %c374 = arith.constant 374 : index
    %1552 = memref.load %arg2[%c374] : memref<581xf32, #tpu.memory_space<smem>>
    %1553 = vector.broadcast %1552 : f32 to vector<32x128xf32>
    %1554 = arith.mulf %1188, %1553 : vector<32x128xf32>
    %1555 = arith.addf %1551, %1554 : vector<32x128xf32>
    %c384 = arith.constant 384 : index
    %1556 = memref.load %arg2[%c384] : memref<581xf32, #tpu.memory_space<smem>>
    %1557 = vector.broadcast %1556 : f32 to vector<32x128xf32>
    %1558 = arith.mulf %1231, %1557 : vector<32x128xf32>
    %1559 = arith.addf %1555, %1558 : vector<32x128xf32>
    %c394 = arith.constant 394 : index
    %1560 = memref.load %arg2[%c394] : memref<581xf32, #tpu.memory_space<smem>>
    %1561 = vector.broadcast %1560 : f32 to vector<32x128xf32>
    %1562 = arith.mulf %1274, %1561 : vector<32x128xf32>
    %1563 = arith.addf %1559, %1562 : vector<32x128xf32>
    %c404 = arith.constant 404 : index
    %1564 = memref.load %arg2[%c404] : memref<581xf32, #tpu.memory_space<smem>>
    %1565 = vector.broadcast %1564 : f32 to vector<32x128xf32>
    %1566 = arith.mulf %1317, %1565 : vector<32x128xf32>
    %1567 = arith.addf %1563, %1566 : vector<32x128xf32>
    %c414 = arith.constant 414 : index
    %1568 = memref.load %arg2[%c414] : memref<581xf32, #tpu.memory_space<smem>>
    %1569 = vector.broadcast %1568 : f32 to vector<32x128xf32>
    %1570 = arith.mulf %1360, %1569 : vector<32x128xf32>
    %1571 = arith.addf %1567, %1570 : vector<32x128xf32>
    %c554 = arith.constant 554 : index
    %1572 = memref.load %arg2[%c554] : memref<581xf32, #tpu.memory_space<smem>>
    %1573 = vector.broadcast %1572 : f32 to vector<32x128xf32>
    %1574 = arith.addf %1571, %1573 : vector<32x128xf32>
    %1575 = math.tanh %1574 : vector<32x128xf32>
    %c325 = arith.constant 325 : index
    %1576 = memref.load %arg2[%c325] : memref<581xf32, #tpu.memory_space<smem>>
    %1577 = vector.broadcast %1576 : f32 to vector<32x128xf32>
    %1578 = arith.mulf %973, %1577 : vector<32x128xf32>
    %c335 = arith.constant 335 : index
    %1579 = memref.load %arg2[%c335] : memref<581xf32, #tpu.memory_space<smem>>
    %1580 = vector.broadcast %1579 : f32 to vector<32x128xf32>
    %1581 = arith.mulf %1016, %1580 : vector<32x128xf32>
    %1582 = arith.addf %1578, %1581 : vector<32x128xf32>
    %c345 = arith.constant 345 : index
    %1583 = memref.load %arg2[%c345] : memref<581xf32, #tpu.memory_space<smem>>
    %1584 = vector.broadcast %1583 : f32 to vector<32x128xf32>
    %1585 = arith.mulf %1059, %1584 : vector<32x128xf32>
    %1586 = arith.addf %1582, %1585 : vector<32x128xf32>
    %c355 = arith.constant 355 : index
    %1587 = memref.load %arg2[%c355] : memref<581xf32, #tpu.memory_space<smem>>
    %1588 = vector.broadcast %1587 : f32 to vector<32x128xf32>
    %1589 = arith.mulf %1102, %1588 : vector<32x128xf32>
    %1590 = arith.addf %1586, %1589 : vector<32x128xf32>
    %c365 = arith.constant 365 : index
    %1591 = memref.load %arg2[%c365] : memref<581xf32, #tpu.memory_space<smem>>
    %1592 = vector.broadcast %1591 : f32 to vector<32x128xf32>
    %1593 = arith.mulf %1145, %1592 : vector<32x128xf32>
    %1594 = arith.addf %1590, %1593 : vector<32x128xf32>
    %c375 = arith.constant 375 : index
    %1595 = memref.load %arg2[%c375] : memref<581xf32, #tpu.memory_space<smem>>
    %1596 = vector.broadcast %1595 : f32 to vector<32x128xf32>
    %1597 = arith.mulf %1188, %1596 : vector<32x128xf32>
    %1598 = arith.addf %1594, %1597 : vector<32x128xf32>
    %c385 = arith.constant 385 : index
    %1599 = memref.load %arg2[%c385] : memref<581xf32, #tpu.memory_space<smem>>
    %1600 = vector.broadcast %1599 : f32 to vector<32x128xf32>
    %1601 = arith.mulf %1231, %1600 : vector<32x128xf32>
    %1602 = arith.addf %1598, %1601 : vector<32x128xf32>
    %c395 = arith.constant 395 : index
    %1603 = memref.load %arg2[%c395] : memref<581xf32, #tpu.memory_space<smem>>
    %1604 = vector.broadcast %1603 : f32 to vector<32x128xf32>
    %1605 = arith.mulf %1274, %1604 : vector<32x128xf32>
    %1606 = arith.addf %1602, %1605 : vector<32x128xf32>
    %c405 = arith.constant 405 : index
    %1607 = memref.load %arg2[%c405] : memref<581xf32, #tpu.memory_space<smem>>
    %1608 = vector.broadcast %1607 : f32 to vector<32x128xf32>
    %1609 = arith.mulf %1317, %1608 : vector<32x128xf32>
    %1610 = arith.addf %1606, %1609 : vector<32x128xf32>
    %c415 = arith.constant 415 : index
    %1611 = memref.load %arg2[%c415] : memref<581xf32, #tpu.memory_space<smem>>
    %1612 = vector.broadcast %1611 : f32 to vector<32x128xf32>
    %1613 = arith.mulf %1360, %1612 : vector<32x128xf32>
    %1614 = arith.addf %1610, %1613 : vector<32x128xf32>
    %c555 = arith.constant 555 : index
    %1615 = memref.load %arg2[%c555] : memref<581xf32, #tpu.memory_space<smem>>
    %1616 = vector.broadcast %1615 : f32 to vector<32x128xf32>
    %1617 = arith.addf %1614, %1616 : vector<32x128xf32>
    %1618 = math.tanh %1617 : vector<32x128xf32>
    %c326 = arith.constant 326 : index
    %1619 = memref.load %arg2[%c326] : memref<581xf32, #tpu.memory_space<smem>>
    %1620 = vector.broadcast %1619 : f32 to vector<32x128xf32>
    %1621 = arith.mulf %973, %1620 : vector<32x128xf32>
    %c336 = arith.constant 336 : index
    %1622 = memref.load %arg2[%c336] : memref<581xf32, #tpu.memory_space<smem>>
    %1623 = vector.broadcast %1622 : f32 to vector<32x128xf32>
    %1624 = arith.mulf %1016, %1623 : vector<32x128xf32>
    %1625 = arith.addf %1621, %1624 : vector<32x128xf32>
    %c346 = arith.constant 346 : index
    %1626 = memref.load %arg2[%c346] : memref<581xf32, #tpu.memory_space<smem>>
    %1627 = vector.broadcast %1626 : f32 to vector<32x128xf32>
    %1628 = arith.mulf %1059, %1627 : vector<32x128xf32>
    %1629 = arith.addf %1625, %1628 : vector<32x128xf32>
    %c356 = arith.constant 356 : index
    %1630 = memref.load %arg2[%c356] : memref<581xf32, #tpu.memory_space<smem>>
    %1631 = vector.broadcast %1630 : f32 to vector<32x128xf32>
    %1632 = arith.mulf %1102, %1631 : vector<32x128xf32>
    %1633 = arith.addf %1629, %1632 : vector<32x128xf32>
    %c366 = arith.constant 366 : index
    %1634 = memref.load %arg2[%c366] : memref<581xf32, #tpu.memory_space<smem>>
    %1635 = vector.broadcast %1634 : f32 to vector<32x128xf32>
    %1636 = arith.mulf %1145, %1635 : vector<32x128xf32>
    %1637 = arith.addf %1633, %1636 : vector<32x128xf32>
    %c376 = arith.constant 376 : index
    %1638 = memref.load %arg2[%c376] : memref<581xf32, #tpu.memory_space<smem>>
    %1639 = vector.broadcast %1638 : f32 to vector<32x128xf32>
    %1640 = arith.mulf %1188, %1639 : vector<32x128xf32>
    %1641 = arith.addf %1637, %1640 : vector<32x128xf32>
    %c386 = arith.constant 386 : index
    %1642 = memref.load %arg2[%c386] : memref<581xf32, #tpu.memory_space<smem>>
    %1643 = vector.broadcast %1642 : f32 to vector<32x128xf32>
    %1644 = arith.mulf %1231, %1643 : vector<32x128xf32>
    %1645 = arith.addf %1641, %1644 : vector<32x128xf32>
    %c396 = arith.constant 396 : index
    %1646 = memref.load %arg2[%c396] : memref<581xf32, #tpu.memory_space<smem>>
    %1647 = vector.broadcast %1646 : f32 to vector<32x128xf32>
    %1648 = arith.mulf %1274, %1647 : vector<32x128xf32>
    %1649 = arith.addf %1645, %1648 : vector<32x128xf32>
    %c406 = arith.constant 406 : index
    %1650 = memref.load %arg2[%c406] : memref<581xf32, #tpu.memory_space<smem>>
    %1651 = vector.broadcast %1650 : f32 to vector<32x128xf32>
    %1652 = arith.mulf %1317, %1651 : vector<32x128xf32>
    %1653 = arith.addf %1649, %1652 : vector<32x128xf32>
    %c416 = arith.constant 416 : index
    %1654 = memref.load %arg2[%c416] : memref<581xf32, #tpu.memory_space<smem>>
    %1655 = vector.broadcast %1654 : f32 to vector<32x128xf32>
    %1656 = arith.mulf %1360, %1655 : vector<32x128xf32>
    %1657 = arith.addf %1653, %1656 : vector<32x128xf32>
    %c556 = arith.constant 556 : index
    %1658 = memref.load %arg2[%c556] : memref<581xf32, #tpu.memory_space<smem>>
    %1659 = vector.broadcast %1658 : f32 to vector<32x128xf32>
    %1660 = arith.addf %1657, %1659 : vector<32x128xf32>
    %1661 = math.tanh %1660 : vector<32x128xf32>
    %c327 = arith.constant 327 : index
    %1662 = memref.load %arg2[%c327] : memref<581xf32, #tpu.memory_space<smem>>
    %1663 = vector.broadcast %1662 : f32 to vector<32x128xf32>
    %1664 = arith.mulf %973, %1663 : vector<32x128xf32>
    %c337 = arith.constant 337 : index
    %1665 = memref.load %arg2[%c337] : memref<581xf32, #tpu.memory_space<smem>>
    %1666 = vector.broadcast %1665 : f32 to vector<32x128xf32>
    %1667 = arith.mulf %1016, %1666 : vector<32x128xf32>
    %1668 = arith.addf %1664, %1667 : vector<32x128xf32>
    %c347 = arith.constant 347 : index
    %1669 = memref.load %arg2[%c347] : memref<581xf32, #tpu.memory_space<smem>>
    %1670 = vector.broadcast %1669 : f32 to vector<32x128xf32>
    %1671 = arith.mulf %1059, %1670 : vector<32x128xf32>
    %1672 = arith.addf %1668, %1671 : vector<32x128xf32>
    %c357 = arith.constant 357 : index
    %1673 = memref.load %arg2[%c357] : memref<581xf32, #tpu.memory_space<smem>>
    %1674 = vector.broadcast %1673 : f32 to vector<32x128xf32>
    %1675 = arith.mulf %1102, %1674 : vector<32x128xf32>
    %1676 = arith.addf %1672, %1675 : vector<32x128xf32>
    %c367 = arith.constant 367 : index
    %1677 = memref.load %arg2[%c367] : memref<581xf32, #tpu.memory_space<smem>>
    %1678 = vector.broadcast %1677 : f32 to vector<32x128xf32>
    %1679 = arith.mulf %1145, %1678 : vector<32x128xf32>
    %1680 = arith.addf %1676, %1679 : vector<32x128xf32>
    %c377 = arith.constant 377 : index
    %1681 = memref.load %arg2[%c377] : memref<581xf32, #tpu.memory_space<smem>>
    %1682 = vector.broadcast %1681 : f32 to vector<32x128xf32>
    %1683 = arith.mulf %1188, %1682 : vector<32x128xf32>
    %1684 = arith.addf %1680, %1683 : vector<32x128xf32>
    %c387 = arith.constant 387 : index
    %1685 = memref.load %arg2[%c387] : memref<581xf32, #tpu.memory_space<smem>>
    %1686 = vector.broadcast %1685 : f32 to vector<32x128xf32>
    %1687 = arith.mulf %1231, %1686 : vector<32x128xf32>
    %1688 = arith.addf %1684, %1687 : vector<32x128xf32>
    %c397 = arith.constant 397 : index
    %1689 = memref.load %arg2[%c397] : memref<581xf32, #tpu.memory_space<smem>>
    %1690 = vector.broadcast %1689 : f32 to vector<32x128xf32>
    %1691 = arith.mulf %1274, %1690 : vector<32x128xf32>
    %1692 = arith.addf %1688, %1691 : vector<32x128xf32>
    %c407 = arith.constant 407 : index
    %1693 = memref.load %arg2[%c407] : memref<581xf32, #tpu.memory_space<smem>>
    %1694 = vector.broadcast %1693 : f32 to vector<32x128xf32>
    %1695 = arith.mulf %1317, %1694 : vector<32x128xf32>
    %1696 = arith.addf %1692, %1695 : vector<32x128xf32>
    %c417 = arith.constant 417 : index
    %1697 = memref.load %arg2[%c417] : memref<581xf32, #tpu.memory_space<smem>>
    %1698 = vector.broadcast %1697 : f32 to vector<32x128xf32>
    %1699 = arith.mulf %1360, %1698 : vector<32x128xf32>
    %1700 = arith.addf %1696, %1699 : vector<32x128xf32>
    %c557 = arith.constant 557 : index
    %1701 = memref.load %arg2[%c557] : memref<581xf32, #tpu.memory_space<smem>>
    %1702 = vector.broadcast %1701 : f32 to vector<32x128xf32>
    %1703 = arith.addf %1700, %1702 : vector<32x128xf32>
    %1704 = math.tanh %1703 : vector<32x128xf32>
    %c328 = arith.constant 328 : index
    %1705 = memref.load %arg2[%c328] : memref<581xf32, #tpu.memory_space<smem>>
    %1706 = vector.broadcast %1705 : f32 to vector<32x128xf32>
    %1707 = arith.mulf %973, %1706 : vector<32x128xf32>
    %c338 = arith.constant 338 : index
    %1708 = memref.load %arg2[%c338] : memref<581xf32, #tpu.memory_space<smem>>
    %1709 = vector.broadcast %1708 : f32 to vector<32x128xf32>
    %1710 = arith.mulf %1016, %1709 : vector<32x128xf32>
    %1711 = arith.addf %1707, %1710 : vector<32x128xf32>
    %c348 = arith.constant 348 : index
    %1712 = memref.load %arg2[%c348] : memref<581xf32, #tpu.memory_space<smem>>
    %1713 = vector.broadcast %1712 : f32 to vector<32x128xf32>
    %1714 = arith.mulf %1059, %1713 : vector<32x128xf32>
    %1715 = arith.addf %1711, %1714 : vector<32x128xf32>
    %c358 = arith.constant 358 : index
    %1716 = memref.load %arg2[%c358] : memref<581xf32, #tpu.memory_space<smem>>
    %1717 = vector.broadcast %1716 : f32 to vector<32x128xf32>
    %1718 = arith.mulf %1102, %1717 : vector<32x128xf32>
    %1719 = arith.addf %1715, %1718 : vector<32x128xf32>
    %c368 = arith.constant 368 : index
    %1720 = memref.load %arg2[%c368] : memref<581xf32, #tpu.memory_space<smem>>
    %1721 = vector.broadcast %1720 : f32 to vector<32x128xf32>
    %1722 = arith.mulf %1145, %1721 : vector<32x128xf32>
    %1723 = arith.addf %1719, %1722 : vector<32x128xf32>
    %c378 = arith.constant 378 : index
    %1724 = memref.load %arg2[%c378] : memref<581xf32, #tpu.memory_space<smem>>
    %1725 = vector.broadcast %1724 : f32 to vector<32x128xf32>
    %1726 = arith.mulf %1188, %1725 : vector<32x128xf32>
    %1727 = arith.addf %1723, %1726 : vector<32x128xf32>
    %c388 = arith.constant 388 : index
    %1728 = memref.load %arg2[%c388] : memref<581xf32, #tpu.memory_space<smem>>
    %1729 = vector.broadcast %1728 : f32 to vector<32x128xf32>
    %1730 = arith.mulf %1231, %1729 : vector<32x128xf32>
    %1731 = arith.addf %1727, %1730 : vector<32x128xf32>
    %c398 = arith.constant 398 : index
    %1732 = memref.load %arg2[%c398] : memref<581xf32, #tpu.memory_space<smem>>
    %1733 = vector.broadcast %1732 : f32 to vector<32x128xf32>
    %1734 = arith.mulf %1274, %1733 : vector<32x128xf32>
    %1735 = arith.addf %1731, %1734 : vector<32x128xf32>
    %c408 = arith.constant 408 : index
    %1736 = memref.load %arg2[%c408] : memref<581xf32, #tpu.memory_space<smem>>
    %1737 = vector.broadcast %1736 : f32 to vector<32x128xf32>
    %1738 = arith.mulf %1317, %1737 : vector<32x128xf32>
    %1739 = arith.addf %1735, %1738 : vector<32x128xf32>
    %c418 = arith.constant 418 : index
    %1740 = memref.load %arg2[%c418] : memref<581xf32, #tpu.memory_space<smem>>
    %1741 = vector.broadcast %1740 : f32 to vector<32x128xf32>
    %1742 = arith.mulf %1360, %1741 : vector<32x128xf32>
    %1743 = arith.addf %1739, %1742 : vector<32x128xf32>
    %c558 = arith.constant 558 : index
    %1744 = memref.load %arg2[%c558] : memref<581xf32, #tpu.memory_space<smem>>
    %1745 = vector.broadcast %1744 : f32 to vector<32x128xf32>
    %1746 = arith.addf %1743, %1745 : vector<32x128xf32>
    %1747 = math.tanh %1746 : vector<32x128xf32>
    %c329 = arith.constant 329 : index
    %1748 = memref.load %arg2[%c329] : memref<581xf32, #tpu.memory_space<smem>>
    %1749 = vector.broadcast %1748 : f32 to vector<32x128xf32>
    %1750 = arith.mulf %973, %1749 : vector<32x128xf32>
    %c339 = arith.constant 339 : index
    %1751 = memref.load %arg2[%c339] : memref<581xf32, #tpu.memory_space<smem>>
    %1752 = vector.broadcast %1751 : f32 to vector<32x128xf32>
    %1753 = arith.mulf %1016, %1752 : vector<32x128xf32>
    %1754 = arith.addf %1750, %1753 : vector<32x128xf32>
    %c349 = arith.constant 349 : index
    %1755 = memref.load %arg2[%c349] : memref<581xf32, #tpu.memory_space<smem>>
    %1756 = vector.broadcast %1755 : f32 to vector<32x128xf32>
    %1757 = arith.mulf %1059, %1756 : vector<32x128xf32>
    %1758 = arith.addf %1754, %1757 : vector<32x128xf32>
    %c359 = arith.constant 359 : index
    %1759 = memref.load %arg2[%c359] : memref<581xf32, #tpu.memory_space<smem>>
    %1760 = vector.broadcast %1759 : f32 to vector<32x128xf32>
    %1761 = arith.mulf %1102, %1760 : vector<32x128xf32>
    %1762 = arith.addf %1758, %1761 : vector<32x128xf32>
    %c369 = arith.constant 369 : index
    %1763 = memref.load %arg2[%c369] : memref<581xf32, #tpu.memory_space<smem>>
    %1764 = vector.broadcast %1763 : f32 to vector<32x128xf32>
    %1765 = arith.mulf %1145, %1764 : vector<32x128xf32>
    %1766 = arith.addf %1762, %1765 : vector<32x128xf32>
    %c379 = arith.constant 379 : index
    %1767 = memref.load %arg2[%c379] : memref<581xf32, #tpu.memory_space<smem>>
    %1768 = vector.broadcast %1767 : f32 to vector<32x128xf32>
    %1769 = arith.mulf %1188, %1768 : vector<32x128xf32>
    %1770 = arith.addf %1766, %1769 : vector<32x128xf32>
    %c389 = arith.constant 389 : index
    %1771 = memref.load %arg2[%c389] : memref<581xf32, #tpu.memory_space<smem>>
    %1772 = vector.broadcast %1771 : f32 to vector<32x128xf32>
    %1773 = arith.mulf %1231, %1772 : vector<32x128xf32>
    %1774 = arith.addf %1770, %1773 : vector<32x128xf32>
    %c399 = arith.constant 399 : index
    %1775 = memref.load %arg2[%c399] : memref<581xf32, #tpu.memory_space<smem>>
    %1776 = vector.broadcast %1775 : f32 to vector<32x128xf32>
    %1777 = arith.mulf %1274, %1776 : vector<32x128xf32>
    %1778 = arith.addf %1774, %1777 : vector<32x128xf32>
    %c409 = arith.constant 409 : index
    %1779 = memref.load %arg2[%c409] : memref<581xf32, #tpu.memory_space<smem>>
    %1780 = vector.broadcast %1779 : f32 to vector<32x128xf32>
    %1781 = arith.mulf %1317, %1780 : vector<32x128xf32>
    %1782 = arith.addf %1778, %1781 : vector<32x128xf32>
    %c419 = arith.constant 419 : index
    %1783 = memref.load %arg2[%c419] : memref<581xf32, #tpu.memory_space<smem>>
    %1784 = vector.broadcast %1783 : f32 to vector<32x128xf32>
    %1785 = arith.mulf %1360, %1784 : vector<32x128xf32>
    %1786 = arith.addf %1782, %1785 : vector<32x128xf32>
    %c559 = arith.constant 559 : index
    %1787 = memref.load %arg2[%c559] : memref<581xf32, #tpu.memory_space<smem>>
    %1788 = vector.broadcast %1787 : f32 to vector<32x128xf32>
    %1789 = arith.addf %1786, %1788 : vector<32x128xf32>
    %1790 = math.tanh %1789 : vector<32x128xf32>
    %c420 = arith.constant 420 : index
    %1791 = memref.load %arg2[%c420] : memref<581xf32, #tpu.memory_space<smem>>
    %1792 = vector.broadcast %1791 : f32 to vector<32x128xf32>
    %1793 = arith.mulf %1403, %1792 : vector<32x128xf32>
    %c430 = arith.constant 430 : index
    %1794 = memref.load %arg2[%c430] : memref<581xf32, #tpu.memory_space<smem>>
    %1795 = vector.broadcast %1794 : f32 to vector<32x128xf32>
    %1796 = arith.mulf %1446, %1795 : vector<32x128xf32>
    %1797 = arith.addf %1793, %1796 : vector<32x128xf32>
    %c440 = arith.constant 440 : index
    %1798 = memref.load %arg2[%c440] : memref<581xf32, #tpu.memory_space<smem>>
    %1799 = vector.broadcast %1798 : f32 to vector<32x128xf32>
    %1800 = arith.mulf %1489, %1799 : vector<32x128xf32>
    %1801 = arith.addf %1797, %1800 : vector<32x128xf32>
    %c450 = arith.constant 450 : index
    %1802 = memref.load %arg2[%c450] : memref<581xf32, #tpu.memory_space<smem>>
    %1803 = vector.broadcast %1802 : f32 to vector<32x128xf32>
    %1804 = arith.mulf %1532, %1803 : vector<32x128xf32>
    %1805 = arith.addf %1801, %1804 : vector<32x128xf32>
    %c460 = arith.constant 460 : index
    %1806 = memref.load %arg2[%c460] : memref<581xf32, #tpu.memory_space<smem>>
    %1807 = vector.broadcast %1806 : f32 to vector<32x128xf32>
    %1808 = arith.mulf %1575, %1807 : vector<32x128xf32>
    %1809 = arith.addf %1805, %1808 : vector<32x128xf32>
    %c470 = arith.constant 470 : index
    %1810 = memref.load %arg2[%c470] : memref<581xf32, #tpu.memory_space<smem>>
    %1811 = vector.broadcast %1810 : f32 to vector<32x128xf32>
    %1812 = arith.mulf %1618, %1811 : vector<32x128xf32>
    %1813 = arith.addf %1809, %1812 : vector<32x128xf32>
    %c480 = arith.constant 480 : index
    %1814 = memref.load %arg2[%c480] : memref<581xf32, #tpu.memory_space<smem>>
    %1815 = vector.broadcast %1814 : f32 to vector<32x128xf32>
    %1816 = arith.mulf %1661, %1815 : vector<32x128xf32>
    %1817 = arith.addf %1813, %1816 : vector<32x128xf32>
    %c490 = arith.constant 490 : index
    %1818 = memref.load %arg2[%c490] : memref<581xf32, #tpu.memory_space<smem>>
    %1819 = vector.broadcast %1818 : f32 to vector<32x128xf32>
    %1820 = arith.mulf %1704, %1819 : vector<32x128xf32>
    %1821 = arith.addf %1817, %1820 : vector<32x128xf32>
    %c500 = arith.constant 500 : index
    %1822 = memref.load %arg2[%c500] : memref<581xf32, #tpu.memory_space<smem>>
    %1823 = vector.broadcast %1822 : f32 to vector<32x128xf32>
    %1824 = arith.mulf %1747, %1823 : vector<32x128xf32>
    %1825 = arith.addf %1821, %1824 : vector<32x128xf32>
    %c510 = arith.constant 510 : index
    %1826 = memref.load %arg2[%c510] : memref<581xf32, #tpu.memory_space<smem>>
    %1827 = vector.broadcast %1826 : f32 to vector<32x128xf32>
    %1828 = arith.mulf %1790, %1827 : vector<32x128xf32>
    %1829 = arith.addf %1825, %1828 : vector<32x128xf32>
    %c560 = arith.constant 560 : index
    %1830 = memref.load %arg2[%c560] : memref<581xf32, #tpu.memory_space<smem>>
    %1831 = vector.broadcast %1830 : f32 to vector<32x128xf32>
    %1832 = arith.addf %1829, %1831 : vector<32x128xf32>
    %1833 = math.tanh %1832 : vector<32x128xf32>
    %c421 = arith.constant 421 : index
    %1834 = memref.load %arg2[%c421] : memref<581xf32, #tpu.memory_space<smem>>
    %1835 = vector.broadcast %1834 : f32 to vector<32x128xf32>
    %1836 = arith.mulf %1403, %1835 : vector<32x128xf32>
    %c431 = arith.constant 431 : index
    %1837 = memref.load %arg2[%c431] : memref<581xf32, #tpu.memory_space<smem>>
    %1838 = vector.broadcast %1837 : f32 to vector<32x128xf32>
    %1839 = arith.mulf %1446, %1838 : vector<32x128xf32>
    %1840 = arith.addf %1836, %1839 : vector<32x128xf32>
    %c441 = arith.constant 441 : index
    %1841 = memref.load %arg2[%c441] : memref<581xf32, #tpu.memory_space<smem>>
    %1842 = vector.broadcast %1841 : f32 to vector<32x128xf32>
    %1843 = arith.mulf %1489, %1842 : vector<32x128xf32>
    %1844 = arith.addf %1840, %1843 : vector<32x128xf32>
    %c451 = arith.constant 451 : index
    %1845 = memref.load %arg2[%c451] : memref<581xf32, #tpu.memory_space<smem>>
    %1846 = vector.broadcast %1845 : f32 to vector<32x128xf32>
    %1847 = arith.mulf %1532, %1846 : vector<32x128xf32>
    %1848 = arith.addf %1844, %1847 : vector<32x128xf32>
    %c461 = arith.constant 461 : index
    %1849 = memref.load %arg2[%c461] : memref<581xf32, #tpu.memory_space<smem>>
    %1850 = vector.broadcast %1849 : f32 to vector<32x128xf32>
    %1851 = arith.mulf %1575, %1850 : vector<32x128xf32>
    %1852 = arith.addf %1848, %1851 : vector<32x128xf32>
    %c471 = arith.constant 471 : index
    %1853 = memref.load %arg2[%c471] : memref<581xf32, #tpu.memory_space<smem>>
    %1854 = vector.broadcast %1853 : f32 to vector<32x128xf32>
    %1855 = arith.mulf %1618, %1854 : vector<32x128xf32>
    %1856 = arith.addf %1852, %1855 : vector<32x128xf32>
    %c481 = arith.constant 481 : index
    %1857 = memref.load %arg2[%c481] : memref<581xf32, #tpu.memory_space<smem>>
    %1858 = vector.broadcast %1857 : f32 to vector<32x128xf32>
    %1859 = arith.mulf %1661, %1858 : vector<32x128xf32>
    %1860 = arith.addf %1856, %1859 : vector<32x128xf32>
    %c491 = arith.constant 491 : index
    %1861 = memref.load %arg2[%c491] : memref<581xf32, #tpu.memory_space<smem>>
    %1862 = vector.broadcast %1861 : f32 to vector<32x128xf32>
    %1863 = arith.mulf %1704, %1862 : vector<32x128xf32>
    %1864 = arith.addf %1860, %1863 : vector<32x128xf32>
    %c501 = arith.constant 501 : index
    %1865 = memref.load %arg2[%c501] : memref<581xf32, #tpu.memory_space<smem>>
    %1866 = vector.broadcast %1865 : f32 to vector<32x128xf32>
    %1867 = arith.mulf %1747, %1866 : vector<32x128xf32>
    %1868 = arith.addf %1864, %1867 : vector<32x128xf32>
    %c511 = arith.constant 511 : index
    %1869 = memref.load %arg2[%c511] : memref<581xf32, #tpu.memory_space<smem>>
    %1870 = vector.broadcast %1869 : f32 to vector<32x128xf32>
    %1871 = arith.mulf %1790, %1870 : vector<32x128xf32>
    %1872 = arith.addf %1868, %1871 : vector<32x128xf32>
    %c561 = arith.constant 561 : index
    %1873 = memref.load %arg2[%c561] : memref<581xf32, #tpu.memory_space<smem>>
    %1874 = vector.broadcast %1873 : f32 to vector<32x128xf32>
    %1875 = arith.addf %1872, %1874 : vector<32x128xf32>
    %1876 = math.tanh %1875 : vector<32x128xf32>
    %c422 = arith.constant 422 : index
    %1877 = memref.load %arg2[%c422] : memref<581xf32, #tpu.memory_space<smem>>
    %1878 = vector.broadcast %1877 : f32 to vector<32x128xf32>
    %1879 = arith.mulf %1403, %1878 : vector<32x128xf32>
    %c432 = arith.constant 432 : index
    %1880 = memref.load %arg2[%c432] : memref<581xf32, #tpu.memory_space<smem>>
    %1881 = vector.broadcast %1880 : f32 to vector<32x128xf32>
    %1882 = arith.mulf %1446, %1881 : vector<32x128xf32>
    %1883 = arith.addf %1879, %1882 : vector<32x128xf32>
    %c442 = arith.constant 442 : index
    %1884 = memref.load %arg2[%c442] : memref<581xf32, #tpu.memory_space<smem>>
    %1885 = vector.broadcast %1884 : f32 to vector<32x128xf32>
    %1886 = arith.mulf %1489, %1885 : vector<32x128xf32>
    %1887 = arith.addf %1883, %1886 : vector<32x128xf32>
    %c452 = arith.constant 452 : index
    %1888 = memref.load %arg2[%c452] : memref<581xf32, #tpu.memory_space<smem>>
    %1889 = vector.broadcast %1888 : f32 to vector<32x128xf32>
    %1890 = arith.mulf %1532, %1889 : vector<32x128xf32>
    %1891 = arith.addf %1887, %1890 : vector<32x128xf32>
    %c462 = arith.constant 462 : index
    %1892 = memref.load %arg2[%c462] : memref<581xf32, #tpu.memory_space<smem>>
    %1893 = vector.broadcast %1892 : f32 to vector<32x128xf32>
    %1894 = arith.mulf %1575, %1893 : vector<32x128xf32>
    %1895 = arith.addf %1891, %1894 : vector<32x128xf32>
    %c472 = arith.constant 472 : index
    %1896 = memref.load %arg2[%c472] : memref<581xf32, #tpu.memory_space<smem>>
    %1897 = vector.broadcast %1896 : f32 to vector<32x128xf32>
    %1898 = arith.mulf %1618, %1897 : vector<32x128xf32>
    %1899 = arith.addf %1895, %1898 : vector<32x128xf32>
    %c482 = arith.constant 482 : index
    %1900 = memref.load %arg2[%c482] : memref<581xf32, #tpu.memory_space<smem>>
    %1901 = vector.broadcast %1900 : f32 to vector<32x128xf32>
    %1902 = arith.mulf %1661, %1901 : vector<32x128xf32>
    %1903 = arith.addf %1899, %1902 : vector<32x128xf32>
    %c492 = arith.constant 492 : index
    %1904 = memref.load %arg2[%c492] : memref<581xf32, #tpu.memory_space<smem>>
    %1905 = vector.broadcast %1904 : f32 to vector<32x128xf32>
    %1906 = arith.mulf %1704, %1905 : vector<32x128xf32>
    %1907 = arith.addf %1903, %1906 : vector<32x128xf32>
    %c502 = arith.constant 502 : index
    %1908 = memref.load %arg2[%c502] : memref<581xf32, #tpu.memory_space<smem>>
    %1909 = vector.broadcast %1908 : f32 to vector<32x128xf32>
    %1910 = arith.mulf %1747, %1909 : vector<32x128xf32>
    %1911 = arith.addf %1907, %1910 : vector<32x128xf32>
    %c512 = arith.constant 512 : index
    %1912 = memref.load %arg2[%c512] : memref<581xf32, #tpu.memory_space<smem>>
    %1913 = vector.broadcast %1912 : f32 to vector<32x128xf32>
    %1914 = arith.mulf %1790, %1913 : vector<32x128xf32>
    %1915 = arith.addf %1911, %1914 : vector<32x128xf32>
    %c562 = arith.constant 562 : index
    %1916 = memref.load %arg2[%c562] : memref<581xf32, #tpu.memory_space<smem>>
    %1917 = vector.broadcast %1916 : f32 to vector<32x128xf32>
    %1918 = arith.addf %1915, %1917 : vector<32x128xf32>
    %1919 = math.tanh %1918 : vector<32x128xf32>
    %c423 = arith.constant 423 : index
    %1920 = memref.load %arg2[%c423] : memref<581xf32, #tpu.memory_space<smem>>
    %1921 = vector.broadcast %1920 : f32 to vector<32x128xf32>
    %1922 = arith.mulf %1403, %1921 : vector<32x128xf32>
    %c433 = arith.constant 433 : index
    %1923 = memref.load %arg2[%c433] : memref<581xf32, #tpu.memory_space<smem>>
    %1924 = vector.broadcast %1923 : f32 to vector<32x128xf32>
    %1925 = arith.mulf %1446, %1924 : vector<32x128xf32>
    %1926 = arith.addf %1922, %1925 : vector<32x128xf32>
    %c443 = arith.constant 443 : index
    %1927 = memref.load %arg2[%c443] : memref<581xf32, #tpu.memory_space<smem>>
    %1928 = vector.broadcast %1927 : f32 to vector<32x128xf32>
    %1929 = arith.mulf %1489, %1928 : vector<32x128xf32>
    %1930 = arith.addf %1926, %1929 : vector<32x128xf32>
    %c453 = arith.constant 453 : index
    %1931 = memref.load %arg2[%c453] : memref<581xf32, #tpu.memory_space<smem>>
    %1932 = vector.broadcast %1931 : f32 to vector<32x128xf32>
    %1933 = arith.mulf %1532, %1932 : vector<32x128xf32>
    %1934 = arith.addf %1930, %1933 : vector<32x128xf32>
    %c463 = arith.constant 463 : index
    %1935 = memref.load %arg2[%c463] : memref<581xf32, #tpu.memory_space<smem>>
    %1936 = vector.broadcast %1935 : f32 to vector<32x128xf32>
    %1937 = arith.mulf %1575, %1936 : vector<32x128xf32>
    %1938 = arith.addf %1934, %1937 : vector<32x128xf32>
    %c473 = arith.constant 473 : index
    %1939 = memref.load %arg2[%c473] : memref<581xf32, #tpu.memory_space<smem>>
    %1940 = vector.broadcast %1939 : f32 to vector<32x128xf32>
    %1941 = arith.mulf %1618, %1940 : vector<32x128xf32>
    %1942 = arith.addf %1938, %1941 : vector<32x128xf32>
    %c483 = arith.constant 483 : index
    %1943 = memref.load %arg2[%c483] : memref<581xf32, #tpu.memory_space<smem>>
    %1944 = vector.broadcast %1943 : f32 to vector<32x128xf32>
    %1945 = arith.mulf %1661, %1944 : vector<32x128xf32>
    %1946 = arith.addf %1942, %1945 : vector<32x128xf32>
    %c493 = arith.constant 493 : index
    %1947 = memref.load %arg2[%c493] : memref<581xf32, #tpu.memory_space<smem>>
    %1948 = vector.broadcast %1947 : f32 to vector<32x128xf32>
    %1949 = arith.mulf %1704, %1948 : vector<32x128xf32>
    %1950 = arith.addf %1946, %1949 : vector<32x128xf32>
    %c503 = arith.constant 503 : index
    %1951 = memref.load %arg2[%c503] : memref<581xf32, #tpu.memory_space<smem>>
    %1952 = vector.broadcast %1951 : f32 to vector<32x128xf32>
    %1953 = arith.mulf %1747, %1952 : vector<32x128xf32>
    %1954 = arith.addf %1950, %1953 : vector<32x128xf32>
    %c513 = arith.constant 513 : index
    %1955 = memref.load %arg2[%c513] : memref<581xf32, #tpu.memory_space<smem>>
    %1956 = vector.broadcast %1955 : f32 to vector<32x128xf32>
    %1957 = arith.mulf %1790, %1956 : vector<32x128xf32>
    %1958 = arith.addf %1954, %1957 : vector<32x128xf32>
    %c563 = arith.constant 563 : index
    %1959 = memref.load %arg2[%c563] : memref<581xf32, #tpu.memory_space<smem>>
    %1960 = vector.broadcast %1959 : f32 to vector<32x128xf32>
    %1961 = arith.addf %1958, %1960 : vector<32x128xf32>
    %1962 = math.tanh %1961 : vector<32x128xf32>
    %c424 = arith.constant 424 : index
    %1963 = memref.load %arg2[%c424] : memref<581xf32, #tpu.memory_space<smem>>
    %1964 = vector.broadcast %1963 : f32 to vector<32x128xf32>
    %1965 = arith.mulf %1403, %1964 : vector<32x128xf32>
    %c434 = arith.constant 434 : index
    %1966 = memref.load %arg2[%c434] : memref<581xf32, #tpu.memory_space<smem>>
    %1967 = vector.broadcast %1966 : f32 to vector<32x128xf32>
    %1968 = arith.mulf %1446, %1967 : vector<32x128xf32>
    %1969 = arith.addf %1965, %1968 : vector<32x128xf32>
    %c444 = arith.constant 444 : index
    %1970 = memref.load %arg2[%c444] : memref<581xf32, #tpu.memory_space<smem>>
    %1971 = vector.broadcast %1970 : f32 to vector<32x128xf32>
    %1972 = arith.mulf %1489, %1971 : vector<32x128xf32>
    %1973 = arith.addf %1969, %1972 : vector<32x128xf32>
    %c454 = arith.constant 454 : index
    %1974 = memref.load %arg2[%c454] : memref<581xf32, #tpu.memory_space<smem>>
    %1975 = vector.broadcast %1974 : f32 to vector<32x128xf32>
    %1976 = arith.mulf %1532, %1975 : vector<32x128xf32>
    %1977 = arith.addf %1973, %1976 : vector<32x128xf32>
    %c464 = arith.constant 464 : index
    %1978 = memref.load %arg2[%c464] : memref<581xf32, #tpu.memory_space<smem>>
    %1979 = vector.broadcast %1978 : f32 to vector<32x128xf32>
    %1980 = arith.mulf %1575, %1979 : vector<32x128xf32>
    %1981 = arith.addf %1977, %1980 : vector<32x128xf32>
    %c474 = arith.constant 474 : index
    %1982 = memref.load %arg2[%c474] : memref<581xf32, #tpu.memory_space<smem>>
    %1983 = vector.broadcast %1982 : f32 to vector<32x128xf32>
    %1984 = arith.mulf %1618, %1983 : vector<32x128xf32>
    %1985 = arith.addf %1981, %1984 : vector<32x128xf32>
    %c484 = arith.constant 484 : index
    %1986 = memref.load %arg2[%c484] : memref<581xf32, #tpu.memory_space<smem>>
    %1987 = vector.broadcast %1986 : f32 to vector<32x128xf32>
    %1988 = arith.mulf %1661, %1987 : vector<32x128xf32>
    %1989 = arith.addf %1985, %1988 : vector<32x128xf32>
    %c494 = arith.constant 494 : index
    %1990 = memref.load %arg2[%c494] : memref<581xf32, #tpu.memory_space<smem>>
    %1991 = vector.broadcast %1990 : f32 to vector<32x128xf32>
    %1992 = arith.mulf %1704, %1991 : vector<32x128xf32>
    %1993 = arith.addf %1989, %1992 : vector<32x128xf32>
    %c504 = arith.constant 504 : index
    %1994 = memref.load %arg2[%c504] : memref<581xf32, #tpu.memory_space<smem>>
    %1995 = vector.broadcast %1994 : f32 to vector<32x128xf32>
    %1996 = arith.mulf %1747, %1995 : vector<32x128xf32>
    %1997 = arith.addf %1993, %1996 : vector<32x128xf32>
    %c514 = arith.constant 514 : index
    %1998 = memref.load %arg2[%c514] : memref<581xf32, #tpu.memory_space<smem>>
    %1999 = vector.broadcast %1998 : f32 to vector<32x128xf32>
    %2000 = arith.mulf %1790, %1999 : vector<32x128xf32>
    %2001 = arith.addf %1997, %2000 : vector<32x128xf32>
    %c564 = arith.constant 564 : index
    %2002 = memref.load %arg2[%c564] : memref<581xf32, #tpu.memory_space<smem>>
    %2003 = vector.broadcast %2002 : f32 to vector<32x128xf32>
    %2004 = arith.addf %2001, %2003 : vector<32x128xf32>
    %2005 = math.tanh %2004 : vector<32x128xf32>
    %c425 = arith.constant 425 : index
    %2006 = memref.load %arg2[%c425] : memref<581xf32, #tpu.memory_space<smem>>
    %2007 = vector.broadcast %2006 : f32 to vector<32x128xf32>
    %2008 = arith.mulf %1403, %2007 : vector<32x128xf32>
    %c435 = arith.constant 435 : index
    %2009 = memref.load %arg2[%c435] : memref<581xf32, #tpu.memory_space<smem>>
    %2010 = vector.broadcast %2009 : f32 to vector<32x128xf32>
    %2011 = arith.mulf %1446, %2010 : vector<32x128xf32>
    %2012 = arith.addf %2008, %2011 : vector<32x128xf32>
    %c445 = arith.constant 445 : index
    %2013 = memref.load %arg2[%c445] : memref<581xf32, #tpu.memory_space<smem>>
    %2014 = vector.broadcast %2013 : f32 to vector<32x128xf32>
    %2015 = arith.mulf %1489, %2014 : vector<32x128xf32>
    %2016 = arith.addf %2012, %2015 : vector<32x128xf32>
    %c455 = arith.constant 455 : index
    %2017 = memref.load %arg2[%c455] : memref<581xf32, #tpu.memory_space<smem>>
    %2018 = vector.broadcast %2017 : f32 to vector<32x128xf32>
    %2019 = arith.mulf %1532, %2018 : vector<32x128xf32>
    %2020 = arith.addf %2016, %2019 : vector<32x128xf32>
    %c465 = arith.constant 465 : index
    %2021 = memref.load %arg2[%c465] : memref<581xf32, #tpu.memory_space<smem>>
    %2022 = vector.broadcast %2021 : f32 to vector<32x128xf32>
    %2023 = arith.mulf %1575, %2022 : vector<32x128xf32>
    %2024 = arith.addf %2020, %2023 : vector<32x128xf32>
    %c475 = arith.constant 475 : index
    %2025 = memref.load %arg2[%c475] : memref<581xf32, #tpu.memory_space<smem>>
    %2026 = vector.broadcast %2025 : f32 to vector<32x128xf32>
    %2027 = arith.mulf %1618, %2026 : vector<32x128xf32>
    %2028 = arith.addf %2024, %2027 : vector<32x128xf32>
    %c485 = arith.constant 485 : index
    %2029 = memref.load %arg2[%c485] : memref<581xf32, #tpu.memory_space<smem>>
    %2030 = vector.broadcast %2029 : f32 to vector<32x128xf32>
    %2031 = arith.mulf %1661, %2030 : vector<32x128xf32>
    %2032 = arith.addf %2028, %2031 : vector<32x128xf32>
    %c495 = arith.constant 495 : index
    %2033 = memref.load %arg2[%c495] : memref<581xf32, #tpu.memory_space<smem>>
    %2034 = vector.broadcast %2033 : f32 to vector<32x128xf32>
    %2035 = arith.mulf %1704, %2034 : vector<32x128xf32>
    %2036 = arith.addf %2032, %2035 : vector<32x128xf32>
    %c505 = arith.constant 505 : index
    %2037 = memref.load %arg2[%c505] : memref<581xf32, #tpu.memory_space<smem>>
    %2038 = vector.broadcast %2037 : f32 to vector<32x128xf32>
    %2039 = arith.mulf %1747, %2038 : vector<32x128xf32>
    %2040 = arith.addf %2036, %2039 : vector<32x128xf32>
    %c515 = arith.constant 515 : index
    %2041 = memref.load %arg2[%c515] : memref<581xf32, #tpu.memory_space<smem>>
    %2042 = vector.broadcast %2041 : f32 to vector<32x128xf32>
    %2043 = arith.mulf %1790, %2042 : vector<32x128xf32>
    %2044 = arith.addf %2040, %2043 : vector<32x128xf32>
    %c565 = arith.constant 565 : index
    %2045 = memref.load %arg2[%c565] : memref<581xf32, #tpu.memory_space<smem>>
    %2046 = vector.broadcast %2045 : f32 to vector<32x128xf32>
    %2047 = arith.addf %2044, %2046 : vector<32x128xf32>
    %2048 = math.tanh %2047 : vector<32x128xf32>
    %c426 = arith.constant 426 : index
    %2049 = memref.load %arg2[%c426] : memref<581xf32, #tpu.memory_space<smem>>
    %2050 = vector.broadcast %2049 : f32 to vector<32x128xf32>
    %2051 = arith.mulf %1403, %2050 : vector<32x128xf32>
    %c436 = arith.constant 436 : index
    %2052 = memref.load %arg2[%c436] : memref<581xf32, #tpu.memory_space<smem>>
    %2053 = vector.broadcast %2052 : f32 to vector<32x128xf32>
    %2054 = arith.mulf %1446, %2053 : vector<32x128xf32>
    %2055 = arith.addf %2051, %2054 : vector<32x128xf32>
    %c446 = arith.constant 446 : index
    %2056 = memref.load %arg2[%c446] : memref<581xf32, #tpu.memory_space<smem>>
    %2057 = vector.broadcast %2056 : f32 to vector<32x128xf32>
    %2058 = arith.mulf %1489, %2057 : vector<32x128xf32>
    %2059 = arith.addf %2055, %2058 : vector<32x128xf32>
    %c456 = arith.constant 456 : index
    %2060 = memref.load %arg2[%c456] : memref<581xf32, #tpu.memory_space<smem>>
    %2061 = vector.broadcast %2060 : f32 to vector<32x128xf32>
    %2062 = arith.mulf %1532, %2061 : vector<32x128xf32>
    %2063 = arith.addf %2059, %2062 : vector<32x128xf32>
    %c466 = arith.constant 466 : index
    %2064 = memref.load %arg2[%c466] : memref<581xf32, #tpu.memory_space<smem>>
    %2065 = vector.broadcast %2064 : f32 to vector<32x128xf32>
    %2066 = arith.mulf %1575, %2065 : vector<32x128xf32>
    %2067 = arith.addf %2063, %2066 : vector<32x128xf32>
    %c476 = arith.constant 476 : index
    %2068 = memref.load %arg2[%c476] : memref<581xf32, #tpu.memory_space<smem>>
    %2069 = vector.broadcast %2068 : f32 to vector<32x128xf32>
    %2070 = arith.mulf %1618, %2069 : vector<32x128xf32>
    %2071 = arith.addf %2067, %2070 : vector<32x128xf32>
    %c486 = arith.constant 486 : index
    %2072 = memref.load %arg2[%c486] : memref<581xf32, #tpu.memory_space<smem>>
    %2073 = vector.broadcast %2072 : f32 to vector<32x128xf32>
    %2074 = arith.mulf %1661, %2073 : vector<32x128xf32>
    %2075 = arith.addf %2071, %2074 : vector<32x128xf32>
    %c496 = arith.constant 496 : index
    %2076 = memref.load %arg2[%c496] : memref<581xf32, #tpu.memory_space<smem>>
    %2077 = vector.broadcast %2076 : f32 to vector<32x128xf32>
    %2078 = arith.mulf %1704, %2077 : vector<32x128xf32>
    %2079 = arith.addf %2075, %2078 : vector<32x128xf32>
    %c506 = arith.constant 506 : index
    %2080 = memref.load %arg2[%c506] : memref<581xf32, #tpu.memory_space<smem>>
    %2081 = vector.broadcast %2080 : f32 to vector<32x128xf32>
    %2082 = arith.mulf %1747, %2081 : vector<32x128xf32>
    %2083 = arith.addf %2079, %2082 : vector<32x128xf32>
    %c516 = arith.constant 516 : index
    %2084 = memref.load %arg2[%c516] : memref<581xf32, #tpu.memory_space<smem>>
    %2085 = vector.broadcast %2084 : f32 to vector<32x128xf32>
    %2086 = arith.mulf %1790, %2085 : vector<32x128xf32>
    %2087 = arith.addf %2083, %2086 : vector<32x128xf32>
    %c566 = arith.constant 566 : index
    %2088 = memref.load %arg2[%c566] : memref<581xf32, #tpu.memory_space<smem>>
    %2089 = vector.broadcast %2088 : f32 to vector<32x128xf32>
    %2090 = arith.addf %2087, %2089 : vector<32x128xf32>
    %2091 = math.tanh %2090 : vector<32x128xf32>
    %c427 = arith.constant 427 : index
    %2092 = memref.load %arg2[%c427] : memref<581xf32, #tpu.memory_space<smem>>
    %2093 = vector.broadcast %2092 : f32 to vector<32x128xf32>
    %2094 = arith.mulf %1403, %2093 : vector<32x128xf32>
    %c437 = arith.constant 437 : index
    %2095 = memref.load %arg2[%c437] : memref<581xf32, #tpu.memory_space<smem>>
    %2096 = vector.broadcast %2095 : f32 to vector<32x128xf32>
    %2097 = arith.mulf %1446, %2096 : vector<32x128xf32>
    %2098 = arith.addf %2094, %2097 : vector<32x128xf32>
    %c447 = arith.constant 447 : index
    %2099 = memref.load %arg2[%c447] : memref<581xf32, #tpu.memory_space<smem>>
    %2100 = vector.broadcast %2099 : f32 to vector<32x128xf32>
    %2101 = arith.mulf %1489, %2100 : vector<32x128xf32>
    %2102 = arith.addf %2098, %2101 : vector<32x128xf32>
    %c457 = arith.constant 457 : index
    %2103 = memref.load %arg2[%c457] : memref<581xf32, #tpu.memory_space<smem>>
    %2104 = vector.broadcast %2103 : f32 to vector<32x128xf32>
    %2105 = arith.mulf %1532, %2104 : vector<32x128xf32>
    %2106 = arith.addf %2102, %2105 : vector<32x128xf32>
    %c467 = arith.constant 467 : index
    %2107 = memref.load %arg2[%c467] : memref<581xf32, #tpu.memory_space<smem>>
    %2108 = vector.broadcast %2107 : f32 to vector<32x128xf32>
    %2109 = arith.mulf %1575, %2108 : vector<32x128xf32>
    %2110 = arith.addf %2106, %2109 : vector<32x128xf32>
    %c477 = arith.constant 477 : index
    %2111 = memref.load %arg2[%c477] : memref<581xf32, #tpu.memory_space<smem>>
    %2112 = vector.broadcast %2111 : f32 to vector<32x128xf32>
    %2113 = arith.mulf %1618, %2112 : vector<32x128xf32>
    %2114 = arith.addf %2110, %2113 : vector<32x128xf32>
    %c487 = arith.constant 487 : index
    %2115 = memref.load %arg2[%c487] : memref<581xf32, #tpu.memory_space<smem>>
    %2116 = vector.broadcast %2115 : f32 to vector<32x128xf32>
    %2117 = arith.mulf %1661, %2116 : vector<32x128xf32>
    %2118 = arith.addf %2114, %2117 : vector<32x128xf32>
    %c497 = arith.constant 497 : index
    %2119 = memref.load %arg2[%c497] : memref<581xf32, #tpu.memory_space<smem>>
    %2120 = vector.broadcast %2119 : f32 to vector<32x128xf32>
    %2121 = arith.mulf %1704, %2120 : vector<32x128xf32>
    %2122 = arith.addf %2118, %2121 : vector<32x128xf32>
    %c507 = arith.constant 507 : index
    %2123 = memref.load %arg2[%c507] : memref<581xf32, #tpu.memory_space<smem>>
    %2124 = vector.broadcast %2123 : f32 to vector<32x128xf32>
    %2125 = arith.mulf %1747, %2124 : vector<32x128xf32>
    %2126 = arith.addf %2122, %2125 : vector<32x128xf32>
    %c517 = arith.constant 517 : index
    %2127 = memref.load %arg2[%c517] : memref<581xf32, #tpu.memory_space<smem>>
    %2128 = vector.broadcast %2127 : f32 to vector<32x128xf32>
    %2129 = arith.mulf %1790, %2128 : vector<32x128xf32>
    %2130 = arith.addf %2126, %2129 : vector<32x128xf32>
    %c567 = arith.constant 567 : index
    %2131 = memref.load %arg2[%c567] : memref<581xf32, #tpu.memory_space<smem>>
    %2132 = vector.broadcast %2131 : f32 to vector<32x128xf32>
    %2133 = arith.addf %2130, %2132 : vector<32x128xf32>
    %2134 = math.tanh %2133 : vector<32x128xf32>
    %c428 = arith.constant 428 : index
    %2135 = memref.load %arg2[%c428] : memref<581xf32, #tpu.memory_space<smem>>
    %2136 = vector.broadcast %2135 : f32 to vector<32x128xf32>
    %2137 = arith.mulf %1403, %2136 : vector<32x128xf32>
    %c438 = arith.constant 438 : index
    %2138 = memref.load %arg2[%c438] : memref<581xf32, #tpu.memory_space<smem>>
    %2139 = vector.broadcast %2138 : f32 to vector<32x128xf32>
    %2140 = arith.mulf %1446, %2139 : vector<32x128xf32>
    %2141 = arith.addf %2137, %2140 : vector<32x128xf32>
    %c448 = arith.constant 448 : index
    %2142 = memref.load %arg2[%c448] : memref<581xf32, #tpu.memory_space<smem>>
    %2143 = vector.broadcast %2142 : f32 to vector<32x128xf32>
    %2144 = arith.mulf %1489, %2143 : vector<32x128xf32>
    %2145 = arith.addf %2141, %2144 : vector<32x128xf32>
    %c458 = arith.constant 458 : index
    %2146 = memref.load %arg2[%c458] : memref<581xf32, #tpu.memory_space<smem>>
    %2147 = vector.broadcast %2146 : f32 to vector<32x128xf32>
    %2148 = arith.mulf %1532, %2147 : vector<32x128xf32>
    %2149 = arith.addf %2145, %2148 : vector<32x128xf32>
    %c468 = arith.constant 468 : index
    %2150 = memref.load %arg2[%c468] : memref<581xf32, #tpu.memory_space<smem>>
    %2151 = vector.broadcast %2150 : f32 to vector<32x128xf32>
    %2152 = arith.mulf %1575, %2151 : vector<32x128xf32>
    %2153 = arith.addf %2149, %2152 : vector<32x128xf32>
    %c478 = arith.constant 478 : index
    %2154 = memref.load %arg2[%c478] : memref<581xf32, #tpu.memory_space<smem>>
    %2155 = vector.broadcast %2154 : f32 to vector<32x128xf32>
    %2156 = arith.mulf %1618, %2155 : vector<32x128xf32>
    %2157 = arith.addf %2153, %2156 : vector<32x128xf32>
    %c488 = arith.constant 488 : index
    %2158 = memref.load %arg2[%c488] : memref<581xf32, #tpu.memory_space<smem>>
    %2159 = vector.broadcast %2158 : f32 to vector<32x128xf32>
    %2160 = arith.mulf %1661, %2159 : vector<32x128xf32>
    %2161 = arith.addf %2157, %2160 : vector<32x128xf32>
    %c498 = arith.constant 498 : index
    %2162 = memref.load %arg2[%c498] : memref<581xf32, #tpu.memory_space<smem>>
    %2163 = vector.broadcast %2162 : f32 to vector<32x128xf32>
    %2164 = arith.mulf %1704, %2163 : vector<32x128xf32>
    %2165 = arith.addf %2161, %2164 : vector<32x128xf32>
    %c508 = arith.constant 508 : index
    %2166 = memref.load %arg2[%c508] : memref<581xf32, #tpu.memory_space<smem>>
    %2167 = vector.broadcast %2166 : f32 to vector<32x128xf32>
    %2168 = arith.mulf %1747, %2167 : vector<32x128xf32>
    %2169 = arith.addf %2165, %2168 : vector<32x128xf32>
    %c518 = arith.constant 518 : index
    %2170 = memref.load %arg2[%c518] : memref<581xf32, #tpu.memory_space<smem>>
    %2171 = vector.broadcast %2170 : f32 to vector<32x128xf32>
    %2172 = arith.mulf %1790, %2171 : vector<32x128xf32>
    %2173 = arith.addf %2169, %2172 : vector<32x128xf32>
    %c568 = arith.constant 568 : index
    %2174 = memref.load %arg2[%c568] : memref<581xf32, #tpu.memory_space<smem>>
    %2175 = vector.broadcast %2174 : f32 to vector<32x128xf32>
    %2176 = arith.addf %2173, %2175 : vector<32x128xf32>
    %2177 = math.tanh %2176 : vector<32x128xf32>
    %c429 = arith.constant 429 : index
    %2178 = memref.load %arg2[%c429] : memref<581xf32, #tpu.memory_space<smem>>
    %2179 = vector.broadcast %2178 : f32 to vector<32x128xf32>
    %2180 = arith.mulf %1403, %2179 : vector<32x128xf32>
    %c439 = arith.constant 439 : index
    %2181 = memref.load %arg2[%c439] : memref<581xf32, #tpu.memory_space<smem>>
    %2182 = vector.broadcast %2181 : f32 to vector<32x128xf32>
    %2183 = arith.mulf %1446, %2182 : vector<32x128xf32>
    %2184 = arith.addf %2180, %2183 : vector<32x128xf32>
    %c449 = arith.constant 449 : index
    %2185 = memref.load %arg2[%c449] : memref<581xf32, #tpu.memory_space<smem>>
    %2186 = vector.broadcast %2185 : f32 to vector<32x128xf32>
    %2187 = arith.mulf %1489, %2186 : vector<32x128xf32>
    %2188 = arith.addf %2184, %2187 : vector<32x128xf32>
    %c459 = arith.constant 459 : index
    %2189 = memref.load %arg2[%c459] : memref<581xf32, #tpu.memory_space<smem>>
    %2190 = vector.broadcast %2189 : f32 to vector<32x128xf32>
    %2191 = arith.mulf %1532, %2190 : vector<32x128xf32>
    %2192 = arith.addf %2188, %2191 : vector<32x128xf32>
    %c469 = arith.constant 469 : index
    %2193 = memref.load %arg2[%c469] : memref<581xf32, #tpu.memory_space<smem>>
    %2194 = vector.broadcast %2193 : f32 to vector<32x128xf32>
    %2195 = arith.mulf %1575, %2194 : vector<32x128xf32>
    %2196 = arith.addf %2192, %2195 : vector<32x128xf32>
    %c479 = arith.constant 479 : index
    %2197 = memref.load %arg2[%c479] : memref<581xf32, #tpu.memory_space<smem>>
    %2198 = vector.broadcast %2197 : f32 to vector<32x128xf32>
    %2199 = arith.mulf %1618, %2198 : vector<32x128xf32>
    %2200 = arith.addf %2196, %2199 : vector<32x128xf32>
    %c489 = arith.constant 489 : index
    %2201 = memref.load %arg2[%c489] : memref<581xf32, #tpu.memory_space<smem>>
    %2202 = vector.broadcast %2201 : f32 to vector<32x128xf32>
    %2203 = arith.mulf %1661, %2202 : vector<32x128xf32>
    %2204 = arith.addf %2200, %2203 : vector<32x128xf32>
    %c499 = arith.constant 499 : index
    %2205 = memref.load %arg2[%c499] : memref<581xf32, #tpu.memory_space<smem>>
    %2206 = vector.broadcast %2205 : f32 to vector<32x128xf32>
    %2207 = arith.mulf %1704, %2206 : vector<32x128xf32>
    %2208 = arith.addf %2204, %2207 : vector<32x128xf32>
    %c509 = arith.constant 509 : index
    %2209 = memref.load %arg2[%c509] : memref<581xf32, #tpu.memory_space<smem>>
    %2210 = vector.broadcast %2209 : f32 to vector<32x128xf32>
    %2211 = arith.mulf %1747, %2210 : vector<32x128xf32>
    %2212 = arith.addf %2208, %2211 : vector<32x128xf32>
    %c519 = arith.constant 519 : index
    %2213 = memref.load %arg2[%c519] : memref<581xf32, #tpu.memory_space<smem>>
    %2214 = vector.broadcast %2213 : f32 to vector<32x128xf32>
    %2215 = arith.mulf %1790, %2214 : vector<32x128xf32>
    %2216 = arith.addf %2212, %2215 : vector<32x128xf32>
    %c569 = arith.constant 569 : index
    %2217 = memref.load %arg2[%c569] : memref<581xf32, #tpu.memory_space<smem>>
    %2218 = vector.broadcast %2217 : f32 to vector<32x128xf32>
    %2219 = arith.addf %2216, %2218 : vector<32x128xf32>
    %2220 = math.tanh %2219 : vector<32x128xf32>
    %c570 = arith.constant 570 : index
    %2221 = memref.load %arg2[%c570] : memref<581xf32, #tpu.memory_space<smem>>
    %2222 = vector.broadcast %2221 : f32 to vector<32x128xf32>
    %2223 = arith.mulf %1833, %2222 : vector<32x128xf32>
    %c571 = arith.constant 571 : index
    %2224 = memref.load %arg2[%c571] : memref<581xf32, #tpu.memory_space<smem>>
    %2225 = vector.broadcast %2224 : f32 to vector<32x128xf32>
    %2226 = arith.mulf %1876, %2225 : vector<32x128xf32>
    %2227 = arith.addf %2223, %2226 : vector<32x128xf32>
    %c572 = arith.constant 572 : index
    %2228 = memref.load %arg2[%c572] : memref<581xf32, #tpu.memory_space<smem>>
    %2229 = vector.broadcast %2228 : f32 to vector<32x128xf32>
    %2230 = arith.mulf %1919, %2229 : vector<32x128xf32>
    %2231 = arith.addf %2227, %2230 : vector<32x128xf32>
    %c573 = arith.constant 573 : index
    %2232 = memref.load %arg2[%c573] : memref<581xf32, #tpu.memory_space<smem>>
    %2233 = vector.broadcast %2232 : f32 to vector<32x128xf32>
    %2234 = arith.mulf %1962, %2233 : vector<32x128xf32>
    %2235 = arith.addf %2231, %2234 : vector<32x128xf32>
    %c574 = arith.constant 574 : index
    %2236 = memref.load %arg2[%c574] : memref<581xf32, #tpu.memory_space<smem>>
    %2237 = vector.broadcast %2236 : f32 to vector<32x128xf32>
    %2238 = arith.mulf %2005, %2237 : vector<32x128xf32>
    %2239 = arith.addf %2235, %2238 : vector<32x128xf32>
    %c575 = arith.constant 575 : index
    %2240 = memref.load %arg2[%c575] : memref<581xf32, #tpu.memory_space<smem>>
    %2241 = vector.broadcast %2240 : f32 to vector<32x128xf32>
    %2242 = arith.mulf %2048, %2241 : vector<32x128xf32>
    %2243 = arith.addf %2239, %2242 : vector<32x128xf32>
    %c576 = arith.constant 576 : index
    %2244 = memref.load %arg2[%c576] : memref<581xf32, #tpu.memory_space<smem>>
    %2245 = vector.broadcast %2244 : f32 to vector<32x128xf32>
    %2246 = arith.mulf %2091, %2245 : vector<32x128xf32>
    %2247 = arith.addf %2243, %2246 : vector<32x128xf32>
    %c577 = arith.constant 577 : index
    %2248 = memref.load %arg2[%c577] : memref<581xf32, #tpu.memory_space<smem>>
    %2249 = vector.broadcast %2248 : f32 to vector<32x128xf32>
    %2250 = arith.mulf %2134, %2249 : vector<32x128xf32>
    %2251 = arith.addf %2247, %2250 : vector<32x128xf32>
    %c578 = arith.constant 578 : index
    %2252 = memref.load %arg2[%c578] : memref<581xf32, #tpu.memory_space<smem>>
    %2253 = vector.broadcast %2252 : f32 to vector<32x128xf32>
    %2254 = arith.mulf %2177, %2253 : vector<32x128xf32>
    %2255 = arith.addf %2251, %2254 : vector<32x128xf32>
    %c579 = arith.constant 579 : index
    %2256 = memref.load %arg2[%c579] : memref<581xf32, #tpu.memory_space<smem>>
    %2257 = vector.broadcast %2256 : f32 to vector<32x128xf32>
    %2258 = arith.mulf %2220, %2257 : vector<32x128xf32>
    %2259 = arith.addf %2255, %2258 : vector<32x128xf32>
    %c580 = arith.constant 580 : index
    %2260 = memref.load %arg2[%c580] : memref<581xf32, #tpu.memory_space<smem>>
    %2261 = vector.broadcast %2260 : f32 to vector<32x128xf32>
    %2262 = arith.addf %2259, %2261 : vector<32x128xf32>
    %c0_2 = arith.constant 0 : index
    %c0_3 = arith.constant 0 : index
    %2263 = vector.load %arg3[%c0_2, %c0_3] : memref<32x128xf32, #tpu.memory_space<vmem>>, vector<32x128xf32>
    tpu.vector_store %arg3[%c0_2, %c0_3], %2262 {strides = array<i32>} : memref<32x128xf32, #tpu.memory_space<vmem>>, vector<32x128xf32>,
    return
  }
  func.func @transform_0(%arg0: i32) -> (i32, i32) {
    %c0_i32 = arith.constant 0 : i32
    %c0_i32_0 = arith.constant 0 : i32
    return %arg0, %c0_i32 : i32, i32
  }
  func.func @transform_1(%arg0: i32) -> i32 {
    %c0_i32 = arith.constant 0 : i32
    %c0_i32_0 = arith.constant 0 : i32
    return %c0_i32 : i32
  }
  func.func @transform_2(%arg0: i32) -> (i32, i32) {
    %c0_i32 = arith.constant 0 : i32
    %c0_i32_0 = arith.constant 0 : i32
    return %arg0, %c0_i32 : i32, i32
  }
}

</mosaic_0001>

<llo_original>
// kernel: tpu_custom_call.1
$region0: #{tpu_custom_call.1}
  #allocation0 [shape = 'u32[]', space=smem, size = 0x4, offset = 0x4, fixed_abs, tag = 'smem constant byte address 0x4 - core index']
  #allocation1 [shape = 'u32[72,128]{1,0:T(1,128)}', space=vmem, size = 0x9000, scoped, tag = 'internal scratch']
  %s0 = inlined_call_operand.hbm [shape: f32[64,128], index: 0, kind: input, shape index: {}]
  %s1 = inlined_call_operand.hbm [shape: f32[581], index: 1, kind: input, shape index: {}]
  %s2 = inlined_call_operand.hbm [shape: f32[64,128], index: 2, kind: output, shape index: {}]
  %s3 = sld [smem:[#allocation0]]
  $region49: #{tpu_custom_call.1} parent=0
    _
  %s5 = ssub.s32 1, %s3
  %s6 = scalar_select 0, %s5, %s3
  $region1: #{tpu_custom_call.1} parent=0
    #allocation2 [shape = 'u8[32768]{0}', space=vmem, size = 0x8000, scoped, tag = 'input window, operand 0']
    #allocation3 [shape = 's32[2]{0}', space=sflag, size = 0x8, scoped, tag = 'scoped memory for tpu_custom_call.1']
    #allocation4 [shape = 's32[2]{0}', space=sflag, size = 0x8, scoped, tag = 'scoped memory for tpu_custom_call.1']
    #allocation5 [shape = 's32[2]{0}', space=sflag, size = 0x8, scoped, tag = 'scoped memory for tpu_custom_call.1']
    #allocation6 [shape = 'u8[2560]{0}', space=smem, size = 0xa00, scoped, tag = 'input window, operand 1, single buffered']
    #allocation7 [shape = 'u8[32768]{0}', space=vmem, size = 0x8000, scoped, tag = 'output window, operand 0']
    %7 = vsyncpa [#allocation3], 0
    %s8 = scalar_lea.sflag [#allocation3], 1
    %9 = vsyncpa %s8, 0
    %10 = vsyncpa [#allocation5], 0
    %11 = vsyncpa [#allocation4], 0
    %s12 = scalar_lea.sflag [#allocation4], 1
    %13 = vsyncpa %s12, 0
    loop: start=0, step=1, limit=4
    $region2: #{tpu_custom_call.1} parent=1 // loop_pre_header
      _
    $region3: #{tpu_custom_call.1} parent=1 // loop_header
      %s15 = sphi 0, %s19
      %p16 = scmp.ge.s32.totalorder %s15, 4
      %s25 = sphi 0, %s27
      %s28 = sphi 0, %s25
      %s29 = sphi 0, %s28
      %s45 = sphi 0, %s29
      %s49 = sphi 0, %s49
      %s51 = sphi 0, %s49
      %s52 = sphi 0, %s51
      %s66 = sphi 0, %s52
      %s72 = sphi 0, %s74
      %s75 = sphi 0, %s72
      %s76 = sphi 0, %s75
      %s92 = sphi 0, %s76
    $region4: #{tpu_custom_call.1} parent=1 // loop_header_branch
      %18 = sbr.rel (%p16) target = $region8
    $region5: #{tpu_custom_call.1} parent=1 // loop_body
      %s20 = ssub.s32 %s15, 1
      %s21 = ssub.s32 %s15, 2
      %s22 = sadd.s32 %s15, 1
      %s23 = ssub.s32 %s15, %s22
      %p24 = scmp.eq.s32.totalorder %s23, 0
      %s26 = sadd.s32 %s25, 1
      %s27 = scalar_select %p24, %s25, %s26
      %p30 = pneg %p24
      %p31 = scmp.eq.s32.totalorder %s15, 1
      %p32 = por %p30, %p31
      %p33 = scmp.ne.s32.totalorder %s25, %s28
      %p34 = scmp.eq.s32.totalorder %s15, 0
      %p35 = por %p33, %p34
      %p36 = scmp.ne.s32.totalorder %s25, %s28
      %p37 = scmp.eq.s32.totalorder %s20, 1
      %p38 = por %p36, %p37
      %p39 = scmp.ne.s32.totalorder %s28, %s29
      %p40 = scmp.eq.s32.totalorder %s20, 0
      %p41 = por %p39, %p40
      %p42 = scmp.ne.s32.totalorder %s28, %s29
      %p43 = scmp.eq.s32.totalorder %s21, 1
      %p44 = por %p42, %p43
      %p46 = scmp.ne.s32.totalorder %s29, %s45
      %p47 = scmp.eq.s32.totalorder %s21, 0
      %p48 = por %p46, %p47
      %s50 = sadd.s32 %s49, 1
      %p53 = scmp.eq.s32.totalorder %s15, 1
      %p54 = scmp.ne.s32.totalorder %s49, %s51
      %p55 = scmp.eq.s32.totalorder %s15, 0
      %p56 = por %p54, %p55
      %p57 = scmp.ne.s32.totalorder %s49, %s51
      %p58 = scmp.eq.s32.totalorder %s20, 1
      %p59 = por %p57, %p58
      %p60 = scmp.ne.s32.totalorder %s51, %s52
      %p61 = scmp.eq.s32.totalorder %s20, 0
      %p62 = por %p60, %p61
      %p63 = scmp.ne.s32.totalorder %s51, %s52
      %p64 = scmp.eq.s32.totalorder %s21, 1
      %p65 = por %p63, %p64
      %p67 = scmp.ne.s32.totalorder %s52, %s66
      %p68 = scmp.eq.s32.totalorder %s21, 0
      %p69 = por %p67, %p68
      %s70 = ssub.s32 %s15, %s22
      %p71 = scmp.eq.s32.totalorder %s70, 0
      %s73 = sadd.s32 %s72, 1
      %s74 = scalar_select %p71, %s72, %s73
      %p77 = pneg %p71
      %p78 = scmp.eq.s32.totalorder %s15, 1
      %p79 = por %p77, %p78
      %p80 = scmp.ne.s32.totalorder %s72, %s75
      %p81 = scmp.eq.s32.totalorder %s15, 0
      %p82 = por %p80, %p81
      %p83 = scmp.ne.s32.totalorder %s72, %s75
      %p84 = scmp.eq.s32.totalorder %s20, 1
      %p85 = por %p83, %p84
      %p86 = scmp.ne.s32.totalorder %s75, %s76
      %p87 = scmp.eq.s32.totalorder %s20, 0
      %p88 = por %p86, %p87
      %p89 = scmp.ne.s32.totalorder %s75, %s76
      %p90 = scmp.eq.s32.totalorder %s21, 1
      %p91 = por %p89, %p90
      %p93 = scmp.ne.s32.totalorder %s76, %s92
      %p94 = scmp.eq.s32.totalorder %s21, 0
      %p95 = por %p93, %p94
      %p96 = scmp.le.s32.totalorder 1, %s15
      %p97 = scmp.lt.s32.totalorder %s15, 3
      %p98 = pnand %p96, %p97
      %p99 = pneg %p98
      // Predicated region
      $region9: #{tpu_custom_call.1} parent=5 // pred_check
        _
      $region10: #{tpu_custom_call.1} parent=5 // pred_check_branch
        %101 = sbr.rel (%p98) target = $region12
      $region11: #{tpu_custom_call.1} parent=5 // pred_region
        %s102 = ssub.s32 %s15, 1
        // Predicated region
        $region13: #{tpu_custom_call.1} parent=11 // pred_check
          %p103 = pneg %p62
        $region14: #{tpu_custom_call.1} parent=11 // pred_check_branch
          %105 = sbr.rel (%p103) target = $region16
        $region15: #{tpu_custom_call.1} parent=11 // pred_region
          %107 = vsyncadd [#allocation5], 0
          %s109 = sshll.u32 %s1, 4
          %s110 = int_to_ptr.hbm [resolvable:$true] %s109
          %112 = dma.hbm_to_smem %s110, 80, [#allocation6], [#allocation5]
        $region16: #{tpu_custom_call.1} parent=11 // pred_fallthru
          _
      $region12: #{tpu_custom_call.1} parent=5 // pred_fallthru
        _
      %p113 = scmp.lt.s32.totalorder %s15, 2
      // Predicated region
      $region17: #{tpu_custom_call.1} parent=5 // pred_check
        %p114 = pneg %p113
      $region18: #{tpu_custom_call.1} parent=5 // pred_check_branch
        %116 = sbr.rel (%p114) target = $region20
      $region19: #{tpu_custom_call.1} parent=5 // pred_region
        // Predicated region
        $region21: #{tpu_custom_call.1} parent=19 // pred_check
          %p117 = pneg %p35
        $region22: #{tpu_custom_call.1} parent=19 // pred_check_branch
          %119 = sbr.rel (%p117) target = $region24
        $region23: #{tpu_custom_call.1} parent=19 // pred_region
          %s120 = sand.u32 %s25, 1
          %s121 = scalar_lea.sflag [#allocation3], %s120
          %s122 = sand.u32 %s25, 1
          %s123 = smul.addr %s122, 32
          %s124 = scalar_lea.vmem [#allocation2], %s123
          %s125 = smul.u32 4, %s15
          %127 = vsyncadd %s121, 0
          %s128 = smul.addr %s125, 8
          %s129 = scalar_lea.hbm %s0, %s128
          %s130 = sshll.u32 %s129, 4
          %s131 = int_to_ptr.hbm [resolvable:$true] %s130
          %s132 = sshll.u32 %s124, 4
          %s133 = int_to_ptr.vmem [resolvable:$true] %s132
          %138 = dma.hbm_to_vmem [thread:$0]  %s131, 512, %s133, %s121, 128, 128, 8
        $region24: #{tpu_custom_call.1} parent=19 // pred_fallthru
          _
      $region20: #{tpu_custom_call.1} parent=5 // pred_fallthru
        _
      %p139 = scmp.le.s32.totalorder 1, %s15
      %p140 = scmp.lt.s32.totalorder %s15, 3
      %p141 = pnand %p139, %p140
      %p142 = pneg %p141
      // Predicated region
      $region25: #{tpu_custom_call.1} parent=5 // pred_check
        _
      $region26: #{tpu_custom_call.1} parent=5 // pred_check_branch
        %144 = sbr.rel (%p141) target = $region28
      $region27: #{tpu_custom_call.1} parent=5 // pred_region
        %s145 = ssub.s32 %s15, 1
        %s146 = sand.u32 %s28, 1
        %s147 = scalar_lea.sflag [#allocation3], %s146
        %s148 = sand.u32 %s28, 1
        %s149 = smul.addr %s148, 32
        %s150 = scalar_lea.vmem [#allocation2], %s149
        // Predicated region
        $region29: #{tpu_custom_call.1} parent=27 // pred_check
          %p151 = pneg %p41
        $region30: #{tpu_custom_call.1} parent=27 // pred_check_branch
          %153 = sbr.rel (%p151) target = $region32
        $region31: #{tpu_custom_call.1} parent=27 // pred_region
          %155 = dma.done %s147, 512
        $region32: #{tpu_custom_call.1} parent=27 // pred_fallthru
          _
        // Predicated region
        $region33: #{tpu_custom_call.1} parent=27 // pred_check
          %p156 = pneg %p62
        $region34: #{tpu_custom_call.1} parent=27 // pred_check_branch
          %158 = sbr.rel (%p156) target = $region36
        $region35: #{tpu_custom_call.1} parent=27 // pred_region
          %160 = dma.done [#allocation5], 80
        $region36: #{tpu_custom_call.1} parent=27 // pred_fallthru
          _
        %161 = sfence
        %s162 = sand.u32 %s28, 1
        %s163 = scalar_lea.sflag [#allocation3], %s162
        %s164 = sand.u32 %s28, 1
        %s165 = smul.addr %s164, 32
        %s166 = scalar_lea.vmem [#allocation2], %s165
        %p167 = pneg %p41
        %p168 = pneg %p38
        %p169 = pneg %p62
        %p170 = pneg %p59
        %p171 = pneg %p88
        %p172 = pneg %p85
        %s173 = sand.u32 %s75, 1
        %s174 = scalar_lea.sflag [#allocation4], %s173
        %s175 = sand.u32 %s75, 1
        %s176 = smul.addr %s175, 32
        %s177 = scalar_lea.vmem [#allocation7], %s176
        %s178 = smul.u32 4, %s20
        %s179 = smul.u32 4, %s20
        %v180 = vld [vmem:[%s150] sm:$0xff]
        %v181 = vld [vmem:[%s150 + $0x8] sm:$0xff]
        %v182 = vld [vmem:[%s150 + $0x10] sm:$0xff]
        %v183 = vld [vmem:[%s150 + $0x18] sm:$0xff]
        %s184 = sld [smem:[#allocation6]]
        %v185 = vstv %s184
        %v186 = vmul.f32 %v180, %v185
        %v187 = vmul.f32 %v181, %v185
        %v188 = vmul.f32 %v182, %v185
        %v189 = vmul.f32 %v183, %v185
        %s190 = sld [smem:[#allocation6 + $0xa]]
        %v191 = vstv %s190
        %v192 = vadd.f32 %v186, %v191
        %v193 = vadd.f32 %v187, %v191
        %v194 = vadd.f32 %v188, %v191
        %v195 = vadd.f32 %v189, %v191
        %v196 = vtanh.pop %v192
        %v197 = vtanh.pop %v193
        %v198 = vtanh.pop %v194
        %v199 = vtanh.pop %v195
        %s200 = sld [smem:[#allocation6 + $0x1]]
        %v201 = vstv %s200
        %v202 = vmul.f32 %v180, %v201
        %v203 = vmul.f32 %v181, %v201
        %v204 = vmul.f32 %v182, %v201
        %v205 = vmul.f32 %v183, %v201
        %s206 = sld [smem:[#allocation6 + $0xb]]
        %v207 = vstv %s206
        %v208 = vadd.f32 %v202, %v207
        %v209 = vadd.f32 %v203, %v207
        %v210 = vadd.f32 %v204, %v207
        %v211 = vadd.f32 %v205, %v207
        %v212 = vtanh.pop %v208
        %v213 = vtanh.pop %v209
        %v214 = vtanh.pop %v210
        %v215 = vtanh.pop %v211
        %s216 = sld [smem:[#allocation6 + $0x2]]
        %v217 = vstv %s216
        %v218 = vmul.f32 %v180, %v217
        %v219 = vmul.f32 %v181, %v217
        %v220 = vmul.f32 %v182, %v217
        %v221 = vmul.f32 %v183, %v217
        %s222 = sld [smem:[#allocation6 + $0xc]]
        %v223 = vstv %s222
        %v224 = vadd.f32 %v218, %v223
        %v225 = vadd.f32 %v219, %v223
        %v226 = vadd.f32 %v220, %v223
        %v227 = vadd.f32 %v221, %v223
        %v228 = vtanh.pop %v224
        %v229 = vtanh.pop %v225
        %v230 = vtanh.pop %v226
        %v231 = vtanh.pop %v227
        %s232 = sld [smem:[#allocation6 + $0x3]]
        %v233 = vstv %s232
        %v234 = vmul.f32 %v180, %v233
        %v235 = vmul.f32 %v181, %v233
        %v236 = vmul.f32 %v182, %v233
        %v237 = vmul.f32 %v183, %v233
        %s238 = sld [smem:[#allocation6 + $0xd]]
        %v239 = vstv %s238
        %v240 = vadd.f32 %v234, %v239
        %v241 = vadd.f32 %v235, %v239
        %v242 = vadd.f32 %v236, %v239
        %v243 = vadd.f32 %v237, %v239
        %v244 = vtanh.pop %v240
        %v245 = vtanh.pop %v241
        %v246 = vtanh.pop %v242
        %v247 = vtanh.pop %v243
        %s248 = sld [smem:[#allocation6 + $0x4]]
        %v249 = vstv %s248
        %v250 = vmul.f32 %v180, %v249
        %v251 = vmul.f32 %v181, %v249
        %v252 = vmul.f32 %v182, %v249
        %v253 = vmul.f32 %v183, %v249
        %s254 = sld [smem:[#allocation6 + $0xe]]
        %v255 = vstv %s254
        %v256 = vadd.f32 %v250, %v255
        %v257 = vadd.f32 %v251, %v255
        %v258 = vadd.f32 %v252, %v255
        %v259 = vadd.f32 %v253, %v255
        %v260 = vtanh.pop %v256
        %v261 = vtanh.pop %v257
        %v262 = vtanh.pop %v258
        %v263 = vtanh.pop %v259
        %s264 = sld [smem:[#allocation6 + $0x5]]
        %v265 = vstv %s264
        %v266 = vmul.f32 %v180, %v265
        %v267 = vmul.f32 %v181, %v265
        %v268 = vmul.f32 %v182, %v265
        %v269 = vmul.f32 %v183, %v265
        %s270 = sld [smem:[#allocation6 + $0xf]]
        %v271 = vstv %s270
        %v272 = vadd.f32 %v266, %v271
        %v273 = vadd.f32 %v267, %v271
        %v274 = vadd.f32 %v268, %v271
        %v275 = vadd.f32 %v269, %v271
        %v276 = vtanh.pop %v272
        %v277 = vtanh.pop %v273
        %v278 = vtanh.pop %v274
        %v279 = vtanh.pop %v275
        %s280 = sld [smem:[#allocation6 + $0x6]]
        %v281 = vstv %s280
        %v282 = vmul.f32 %v180, %v281
        %v283 = vmul.f32 %v181, %v281
        %v284 = vmul.f32 %v182, %v281
        %v285 = vmul.f32 %v183, %v281
        %s286 = sld [smem:[#allocation6 + $0x10]]
        %v287 = vstv %s286
        %v288 = vadd.f32 %v282, %v287
        %v289 = vadd.f32 %v283, %v287
        %v290 = vadd.f32 %v284, %v287
        %v291 = vadd.f32 %v285, %v287
        %v292 = vtanh.pop %v288
        %v293 = vtanh.pop %v289
        %v294 = vtanh.pop %v290
        %v295 = vtanh.pop %v291
        %s296 = sld [smem:[#allocation6 + $0x7]]
        %v297 = vstv %s296
        %v298 = vmul.f32 %v180, %v297
        %v299 = vmul.f32 %v181, %v297
        %v300 = vmul.f32 %v182, %v297
        %v301 = vmul.f32 %v183, %v297
        %s302 = sld [smem:[#allocation6 + $0x11]]
        %v303 = vstv %s302
        %v304 = vadd.f32 %v298, %v303
        %v305 = vadd.f32 %v299, %v303
        %v306 = vadd.f32 %v300, %v303
        %v307 = vadd.f32 %v301, %v303
        %v308 = vtanh.pop %v304
        %v309 = vtanh.pop %v305
        %v310 = vtanh.pop %v306
        %v311 = vtanh.pop %v307
        %s312 = sld [smem:[#allocation6 + $0x8]]
        %v313 = vstv %s312
        %v314 = vmul.f32 %v180, %v313
        %v315 = vmul.f32 %v181, %v313
        %v316 = vmul.f32 %v182, %v313
        %v317 = vmul.f32 %v183, %v313
        %s318 = sld [smem:[#allocation6 + $0x12]]
        %v319 = vstv %s318
        %v320 = vadd.f32 %v314, %v319
        %v321 = vadd.f32 %v315, %v319
        %v322 = vadd.f32 %v316, %v319
        %v323 = vadd.f32 %v317, %v319
        %v324 = vtanh.pop %v320
        %v325 = vtanh.pop %v321
        %v326 = vtanh.pop %v322
        %v327 = vtanh.pop %v323
        %s328 = sld [smem:[#allocation6 + $0x9]]
        %v329 = vstv %s328
        %v330 = vmul.f32 %v180, %v329
        %v331 = vmul.f32 %v181, %v329
        %v332 = vmul.f32 %v182, %v329
        %v333 = vmul.f32 %v183, %v329
        %s334 = sld [smem:[#allocation6 + $0x13]]
        %v335 = vstv %s334
        %v336 = vadd.f32 %v330, %v335
        %v337 = vadd.f32 %v331, %v335
        %v338 = vadd.f32 %v332, %v335
        %v339 = vadd.f32 %v333, %v335
        %v340 = vtanh.pop %v336
        %v341 = vtanh.pop %v337
        %v342 = vtanh.pop %v338
        %v343 = vtanh.pop %v339
        %s344 = sld [smem:[#allocation6 + $0x14]]
        %v345 = vstv %s344
        %v346 = vmul.f32 %v196, %v345
        %v347 = vmul.f32 %v197, %v345
        %v348 = vmul.f32 %v198, %v345
        %v349 = vmul.f32 %v199, %v345
        %s350 = sld [smem:[#allocation6 + $0x1e]]
        %v351 = vstv %s350
        %v352 = vmul.f32 %v212, %v351
        %v353 = vmul.f32 %v213, %v351
        %v354 = vmul.f32 %v214, %v351
        %v355 = vmul.f32 %v215, %v351
        %v356 = vadd.f32 %v346, %v352
        %v357 = vadd.f32 %v347, %v353
        %v358 = vadd.f32 %v348, %v354
        %v359 = vadd.f32 %v349, %v355
        %s360 = sld [smem:[#allocation6 + $0x28]]
        %v361 = vstv %s360
        %v362 = vmul.f32 %v228, %v361
        %v363 = vmul.f32 %v229, %v361
        %v364 = vmul.f32 %v230, %v361
        %v365 = vmul.f32 %v231, %v361
        %v366 = vadd.f32 %v356, %v362
        %v367 = vadd.f32 %v357, %v363
        %v368 = vadd.f32 %v358, %v364
        %v369 = vadd.f32 %v359, %v365
        %s370 = sld [smem:[#allocation6 + $0x32]]
        %v371 = vstv %s370
        %v372 = vmul.f32 %v244, %v371
        %v373 = vmul.f32 %v245, %v371
        %v374 = vmul.f32 %v246, %v371
        %v375 = vmul.f32 %v247, %v371
        %v376 = vadd.f32 %v366, %v372
        %v377 = vadd.f32 %v367, %v373
        %v378 = vadd.f32 %v368, %v374
        %v379 = vadd.f32 %v369, %v375
        %s380 = sld [smem:[#allocation6 + $0x3c]]
        %v381 = vstv %s380
        %v382 = vmul.f32 %v260, %v381
        %v383 = vmul.f32 %v261, %v381
        %v384 = vmul.f32 %v262, %v381
        %v385 = vmul.f32 %v263, %v381
        %v386 = vadd.f32 %v376, %v382
        %v387 = vadd.f32 %v377, %v383
        %v388 = vadd.f32 %v378, %v384
        %v389 = vadd.f32 %v379, %v385
        %s390 = sld [smem:[#allocation6 + $0x46]]
        %v391 = vstv %s390
        %v392 = vmul.f32 %v276, %v391
        %v393 = vmul.f32 %v277, %v391
        %v394 = vmul.f32 %v278, %v391
        %v395 = vmul.f32 %v279, %v391
        %v396 = vadd.f32 %v386, %v392
        %v397 = vadd.f32 %v387, %v393
        %v398 = vadd.f32 %v388, %v394
        %v399 = vadd.f32 %v389, %v395
        %s400 = sld [smem:[#allocation6 + $0x50]]
        %v401 = vstv %s400
        %v402 = vmul.f32 %v292, %v401
        %v403 = vmul.f32 %v293, %v401
        %v404 = vmul.f32 %v294, %v401
        %v405 = vmul.f32 %v295, %v401
        %v406 = vadd.f32 %v396, %v402
        %v407 = vadd.f32 %v397, %v403
        %v408 = vadd.f32 %v398, %v404
        %v409 = vadd.f32 %v399, %v405
        %s410 = sld [smem:[#allocation6 + $0x5a]]
        %v411 = vstv %s410
        %v412 = vmul.f32 %v308, %v411
        %v413 = vmul.f32 %v309, %v411
        %v414 = vmul.f32 %v310, %v411
        %v415 = vmul.f32 %v311, %v411
        %v416 = vadd.f32 %v406, %v412
        %v417 = vadd.f32 %v407, %v413
        %v418 = vadd.f32 %v408, %v414
        %v419 = vadd.f32 %v409, %v415
        %s420 = sld [smem:[#allocation6 + $0x64]]
        %v421 = vstv %s420
        %v422 = vmul.f32 %v324, %v421
        %v423 = vmul.f32 %v325, %v421
        %v424 = vmul.f32 %v326, %v421
        %v425 = vmul.f32 %v327, %v421
        %v426 = vadd.f32 %v416, %v422
        %v427 = vadd.f32 %v417, %v423
        %v428 = vadd.f32 %v418, %v424
        %v429 = vadd.f32 %v419, %v425
        %s430 = sld [smem:[#allocation6 + $0x6e]]
        %v431 = vstv %s430
        %v432 = vmul.f32 %v340, %v431
        %v433 = vmul.f32 %v341, %v431
        %v434 = vmul.f32 %v342, %v431
        %v435 = vmul.f32 %v343, %v431
        %v436 = vadd.f32 %v426, %v432
        %v437 = vadd.f32 %v427, %v433
        %v438 = vadd.f32 %v428, %v434
        %v439 = vadd.f32 %v429, %v435
        %s440 = sld [smem:[#allocation6 + $0x208]]
        %v441 = vstv %s440
        %v442 = vadd.f32 %v436, %v441
        %v443 = vadd.f32 %v437, %v441
        %v444 = vadd.f32 %v438, %v441
        %v445 = vadd.f32 %v439, %v441
        %v446 = vtanh.pop %v442
        %v447 = vtanh.pop %v443
        %v448 = vtanh.pop %v444
        %v449 = vtanh.pop %v445
        %s450 = sld [smem:[#allocation6 + $0x15]]
        %v451 = vstv %s450
        %v452 = vmul.f32 %v196, %v451
        %v453 = vmul.f32 %v197, %v451
        %v454 = vmul.f32 %v198, %v451
        %v455 = vmul.f32 %v199, %v451
        %s456 = sld [smem:[#allocation6 + $0x1f]]
        %v457 = vstv %s456
        %v458 = vmul.f32 %v212, %v457
        %v459 = vmul.f32 %v213, %v457
        %v460 = vmul.f32 %v214, %v457
        %v461 = vmul.f32 %v215, %v457
        %v462 = vadd.f32 %v452, %v458
        %v463 = vadd.f32 %v453, %v459
        %v464 = vadd.f32 %v454, %v460
        %v465 = vadd.f32 %v455, %v461
        %s466 = sld [smem:[#allocation6 + $0x29]]
        %v467 = vstv %s466
        %v468 = vmul.f32 %v228, %v467
        %v469 = vmul.f32 %v229, %v467
        %v470 = vmul.f32 %v230, %v467
        %v471 = vmul.f32 %v231, %v467
        %v472 = vadd.f32 %v462, %v468
        %v473 = vadd.f32 %v463, %v469
        %v474 = vadd.f32 %v464, %v470
        %v475 = vadd.f32 %v465, %v471
        %s476 = sld [smem:[#allocation6 + $0x33]]
        %v477 = vstv %s476
        %v478 = vmul.f32 %v244, %v477
        %v479 = vmul.f32 %v245, %v477
        %v480 = vmul.f32 %v246, %v477
        %v481 = vmul.f32 %v247, %v477
        %v482 = vadd.f32 %v472, %v478
        %v483 = vadd.f32 %v473, %v479
        %v484 = vadd.f32 %v474, %v480
        %v485 = vadd.f32 %v475, %v481
        %s486 = sld [smem:[#allocation6 + $0x3d]]
        %v487 = vstv %s486
        %v488 = vmul.f32 %v260, %v487
        %v489 = vmul.f32 %v261, %v487
        %v490 = vmul.f32 %v262, %v487
        %v491 = vmul.f32 %v263, %v487
        %v492 = vadd.f32 %v482, %v488
        %v493 = vadd.f32 %v483, %v489
        %v494 = vadd.f32 %v484, %v490
        %v495 = vadd.f32 %v485, %v491
        %s496 = sld [smem:[#allocation6 + $0x47]]
        %v497 = vstv %s496
        %v498 = vmul.f32 %v276, %v497
        %v499 = vmul.f32 %v277, %v497
        %v500 = vmul.f32 %v278, %v497
        %v501 = vmul.f32 %v279, %v497
        %v502 = vadd.f32 %v492, %v498
        %v503 = vadd.f32 %v493, %v499
        %v504 = vadd.f32 %v494, %v500
        %v505 = vadd.f32 %v495, %v501
        %s506 = sld [smem:[#allocation6 + $0x51]]
        %v507 = vstv %s506
        %v508 = vmul.f32 %v292, %v507
        %v509 = vmul.f32 %v293, %v507
        %v510 = vmul.f32 %v294, %v507
        %v511 = vmul.f32 %v295, %v507
        %v512 = vadd.f32 %v502, %v508
        %v513 = vadd.f32 %v503, %v509
        %v514 = vadd.f32 %v504, %v510
        %v515 = vadd.f32 %v505, %v511
        %s516 = sld [smem:[#allocation6 + $0x5b]]
        %v517 = vstv %s516
        %v518 = vmul.f32 %v308, %v517
        %v519 = vmul.f32 %v309, %v517
        %v520 = vmul.f32 %v310, %v517
        %v521 = vmul.f32 %v311, %v517
        %v522 = vadd.f32 %v512, %v518
        %v523 = vadd.f32 %v513, %v519
        %v524 = vadd.f32 %v514, %v520
        %v525 = vadd.f32 %v515, %v521
        %s526 = sld [smem:[#allocation6 + $0x65]]
        %v527 = vstv %s526
        %v528 = vmul.f32 %v324, %v527
        %v529 = vmul.f32 %v325, %v527
        %v530 = vmul.f32 %v326, %v527
        %v531 = vmul.f32 %v327, %v527
        %v532 = vadd.f32 %v522, %v528
        %v533 = vadd.f32 %v523, %v529
        %v534 = vadd.f32 %v524, %v530
        %v535 = vadd.f32 %v525, %v531
        %s536 = sld [smem:[#allocation6 + $0x6f]]
        %v537 = vstv %s536
        %v538 = vmul.f32 %v340, %v537
        %v539 = vmul.f32 %v341, %v537
        %v540 = vmul.f32 %v342, %v537
        %v541 = vmul.f32 %v343, %v537
        %v542 = vadd.f32 %v532, %v538
        %v543 = vadd.f32 %v533, %v539
        %v544 = vadd.f32 %v534, %v540
        %v545 = vadd.f32 %v535, %v541
        %s546 = sld [smem:[#allocation6 + $0x209]]
        %v547 = vstv %s546
        %v548 = vadd.f32 %v542, %v547
        %v549 = vadd.f32 %v543, %v547
        %v550 = vadd.f32 %v544, %v547
        %v551 = vadd.f32 %v545, %v547
        %v552 = vtanh.pop %v548
        %v553 = vtanh.pop %v549
        %v554 = vtanh.pop %v550
        %v555 = vtanh.pop %v551
        %s556 = sld [smem:[#allocation6 + $0x16]]
        %v557 = vstv %s556
        %v558 = vmul.f32 %v196, %v557
        %v559 = vmul.f32 %v197, %v557
        %v560 = vmul.f32 %v198, %v557
        %v561 = vmul.f32 %v199, %v557
        %s562 = sld [smem:[#allocation6 + $0x20]]
        %v563 = vstv %s562
        %v564 = vmul.f32 %v212, %v563
        %v565 = vmul.f32 %v213, %v563
        %v566 = vmul.f32 %v214, %v563
        %v567 = vmul.f32 %v215, %v563
        %v568 = vadd.f32 %v558, %v564
        %v569 = vadd.f32 %v559, %v565
        %v570 = vadd.f32 %v560, %v566
        %v571 = vadd.f32 %v561, %v567
        %s572 = sld [smem:[#allocation6 + $0x2a]]
        %v573 = vstv %s572
        %v574 = vmul.f32 %v228, %v573
        %v575 = vmul.f32 %v229, %v573
        %v576 = vmul.f32 %v230, %v573
        %v577 = vmul.f32 %v231, %v573
        %v578 = vadd.f32 %v568, %v574
        %v579 = vadd.f32 %v569, %v575
        %v580 = vadd.f32 %v570, %v576
        %v581 = vadd.f32 %v571, %v577
        %s582 = sld [smem:[#allocation6 + $0x34]]
        %v583 = vstv %s582
        %v584 = vmul.f32 %v244, %v583
        %v585 = vmul.f32 %v245, %v583
        %v586 = vmul.f32 %v246, %v583
        %v587 = vmul.f32 %v247, %v583
        %v588 = vadd.f32 %v578, %v584
        %v589 = vadd.f32 %v579, %v585
        %v590 = vadd.f32 %v580, %v586
        %v591 = vadd.f32 %v581, %v587
        %s592 = sld [smem:[#allocation6 + $0x3e]]
        %v593 = vstv %s592
        %v594 = vmul.f32 %v260, %v593
        %v595 = vmul.f32 %v261, %v593
        %v596 = vmul.f32 %v262, %v593
        %v597 = vmul.f32 %v263, %v593
        %v598 = vadd.f32 %v588, %v594
        %v599 = vadd.f32 %v589, %v595
        %v600 = vadd.f32 %v590, %v596
        %v601 = vadd.f32 %v591, %v597
        %s602 = sld [smem:[#allocation6 + $0x48]]
        %v603 = vstv %s602
        %v604 = vmul.f32 %v276, %v603
        %v605 = vmul.f32 %v277, %v603
        %v606 = vmul.f32 %v278, %v603
        %v607 = vmul.f32 %v279, %v603
        %v608 = vadd.f32 %v598, %v604
        %v609 = vadd.f32 %v599, %v605
        %v610 = vadd.f32 %v600, %v606
        %v611 = vadd.f32 %v601, %v607
        %s612 = sld [smem:[#allocation6 + $0x52]]
        %v613 = vstv %s612
        %v614 = vmul.f32 %v292, %v613
        %v615 = vmul.f32 %v293, %v613
        %v616 = vmul.f32 %v294, %v613
        %v617 = vmul.f32 %v295, %v613
        %v618 = vadd.f32 %v608, %v614
        %v619 = vadd.f32 %v609, %v615
        %v620 = vadd.f32 %v610, %v616
        %v621 = vadd.f32 %v611, %v617
        %s622 = sld [smem:[#allocation6 + $0x5c]]
        %v623 = vstv %s622
        %v624 = vmul.f32 %v308, %v623
        %v625 = vmul.f32 %v309, %v623
        %v626 = vmul.f32 %v310, %v623
        %v627 = vmul.f32 %v311, %v623
        %v628 = vadd.f32 %v618, %v624
        %v629 = vadd.f32 %v619, %v625
        %v630 = vadd.f32 %v620, %v626
        %v631 = vadd.f32 %v621, %v627
        %s632 = sld [smem:[#allocation6 + $0x66]]
        %v633 = vstv %s632
        %v634 = vmul.f32 %v324, %v633
        %v635 = vmul.f32 %v325, %v633
        %v636 = vmul.f32 %v326, %v633
        %v637 = vmul.f32 %v327, %v633
        %v638 = vadd.f32 %v628, %v634
        %v639 = vadd.f32 %v629, %v635
        %v640 = vadd.f32 %v630, %v636
        %v641 = vadd.f32 %v631, %v637
        %s642 = sld [smem:[#allocation6 + $0x70]]
        %v643 = vstv %s642
        %v644 = vmul.f32 %v340, %v643
        %v645 = vmul.f32 %v341, %v643
        %v646 = vmul.f32 %v342, %v643
        %v647 = vmul.f32 %v343, %v643
        %v648 = vadd.f32 %v638, %v644
        %v649 = vadd.f32 %v639, %v645
        %v650 = vadd.f32 %v640, %v646
        %v651 = vadd.f32 %v641, %v647
        %s652 = sld [smem:[#allocation6 + $0x20a]]
        %v653 = vstv %s652
        %v654 = vadd.f32 %v648, %v653
        %v655 = vadd.f32 %v649, %v653
        %v656 = vadd.f32 %v650, %v653
        %v657 = vadd.f32 %v651, %v653
        %v658 = vtanh.pop %v654
        %v659 = vtanh.pop %v655
        %v660 = vtanh.pop %v656
        %v661 = vtanh.pop %v657
        %s662 = sld [smem:[#allocation6 + $0x17]]
        %v663 = vstv %s662
        %v664 = vmul.f32 %v196, %v663
        %v665 = vmul.f32 %v197, %v663
        %v666 = vmul.f32 %v198, %v663
        %v667 = vmul.f32 %v199, %v663
        %s668 = sld [smem:[#allocation6 + $0x21]]
        %v669 = vstv %s668
        %v670 = vmul.f32 %v212, %v669
        %v671 = vmul.f32 %v213, %v669
        %v672 = vmul.f32 %v214, %v669
        %v673 = vmul.f32 %v215, %v669
        %v674 = vadd.f32 %v664, %v670
        %v675 = vadd.f32 %v665, %v671
        %v676 = vadd.f32 %v666, %v672
        %v677 = vadd.f32 %v667, %v673
        %s678 = sld [smem:[#allocation6 + $0x2b]]
        %v679 = vstv %s678
        %v680 = vmul.f32 %v228, %v679
        %v681 = vmul.f32 %v229, %v679
        %v682 = vmul.f32 %v230, %v679
        %v683 = vmul.f32 %v231, %v679
        %v684 = vadd.f32 %v674, %v680
        %v685 = vadd.f32 %v675, %v681
        %v686 = vadd.f32 %v676, %v682
        %v687 = vadd.f32 %v677, %v683
        %s688 = sld [smem:[#allocation6 + $0x35]]
        %v689 = vstv %s688
        %v690 = vmul.f32 %v244, %v689
        %v691 = vmul.f32 %v245, %v689
        %v692 = vmul.f32 %v246, %v689
        %v693 = vmul.f32 %v247, %v689
        %v694 = vadd.f32 %v684, %v690
        %v695 = vadd.f32 %v685, %v691
        %v696 = vadd.f32 %v686, %v692
        %v697 = vadd.f32 %v687, %v693
        %s698 = sld [smem:[#allocation6 + $0x3f]]
        %v699 = vstv %s698
        %v700 = vmul.f32 %v260, %v699
        %v701 = vmul.f32 %v261, %v699
        %v702 = vmul.f32 %v262, %v699
        %v703 = vmul.f32 %v263, %v699
        %v704 = vadd.f32 %v694, %v700
        %v705 = vadd.f32 %v695, %v701
        %v706 = vadd.f32 %v696, %v702
        %v707 = vadd.f32 %v697, %v703
        %s708 = sld [smem:[#allocation6 + $0x49]]
        %v709 = vstv %s708
        %v710 = vmul.f32 %v276, %v709
        %v711 = vmul.f32 %v277, %v709
        %v712 = vmul.f32 %v278, %v709
        %v713 = vmul.f32 %v279, %v709
        %v714 = vadd.f32 %v704, %v710
        %v715 = vadd.f32 %v705, %v711
        %v716 = vadd.f32 %v706, %v712
        %v717 = vadd.f32 %v707, %v713
        %s718 = sld [smem:[#allocation6 + $0x53]]
        %v719 = vstv %s718
        %v720 = vmul.f32 %v292, %v719
        %v721 = vmul.f32 %v293, %v719
        %v722 = vmul.f32 %v294, %v719
        %v723 = vmul.f32 %v295, %v719
        %v724 = vadd.f32 %v714, %v720
        %v725 = vadd.f32 %v715, %v721
        %v726 = vadd.f32 %v716, %v722
        %v727 = vadd.f32 %v717, %v723
        %s728 = sld [smem:[#allocation6 + $0x5d]]
        %v729 = vstv %s728
        %v730 = vmul.f32 %v308, %v729
        %v731 = vmul.f32 %v309, %v729
        %v732 = vmul.f32 %v310, %v729
        %v733 = vmul.f32 %v311, %v729
        %v734 = vadd.f32 %v724, %v730
        %v735 = vadd.f32 %v725, %v731
        %v736 = vadd.f32 %v726, %v732
        %v737 = vadd.f32 %v727, %v733
        %s738 = sld [smem:[#allocation6 + $0x67]]
        %v739 = vstv %s738
        %v740 = vmul.f32 %v324, %v739
        %v741 = vmul.f32 %v325, %v739
        %v742 = vmul.f32 %v326, %v739
        %v743 = vmul.f32 %v327, %v739
        %v744 = vadd.f32 %v734, %v740
        %v745 = vadd.f32 %v735, %v741
        %v746 = vadd.f32 %v736, %v742
        %v747 = vadd.f32 %v737, %v743
        %s748 = sld [smem:[#allocation6 + $0x71]]
        %v749 = vstv %s748
        %v750 = vmul.f32 %v340, %v749
        %v751 = vmul.f32 %v341, %v749
        %v752 = vmul.f32 %v342, %v749
        %v753 = vmul.f32 %v343, %v749
        %v754 = vadd.f32 %v744, %v750
        %v755 = vadd.f32 %v745, %v751
        %v756 = vadd.f32 %v746, %v752
        %v757 = vadd.f32 %v747, %v753
        %s758 = sld [smem:[#allocation6 + $0x20b]]
        %v759 = vstv %s758
        %v760 = vadd.f32 %v754, %v759
        %v761 = vadd.f32 %v755, %v759
        %v762 = vadd.f32 %v756, %v759
        %v763 = vadd.f32 %v757, %v759
        %v764 = vtanh.pop %v760
        %v765 = vtanh.pop %v761
        %v766 = vtanh.pop %v762
        %v767 = vtanh.pop %v763
        %s768 = sld [smem:[#allocation6 + $0x18]]
        %v769 = vstv %s768
        %v770 = vmul.f32 %v196, %v769
        %v771 = vmul.f32 %v197, %v769
        %v772 = vmul.f32 %v198, %v769
        %v773 = vmul.f32 %v199, %v769
        %s774 = sld [smem:[#allocation6 + $0x22]]
        %v775 = vstv %s774
        %v776 = vmul.f32 %v212, %v775
        %v777 = vmul.f32 %v213, %v775
        %v778 = vmul.f32 %v214, %v775
        %v779 = vmul.f32 %v215, %v775
        %v780 = vadd.f32 %v770, %v776
        %v781 = vadd.f32 %v771, %v777
        %v782 = vadd.f32 %v772, %v778
        %v783 = vadd.f32 %v773, %v779
        %s784 = sld [smem:[#allocation6 + $0x2c]]
        %v785 = vstv %s784
        %v786 = vmul.f32 %v228, %v785
        %v787 = vmul.f32 %v229, %v785
        %v788 = vmul.f32 %v230, %v785
        %v789 = vmul.f32 %v231, %v785
        %v790 = vadd.f32 %v780, %v786
        %v791 = vadd.f32 %v781, %v787
        %v792 = vadd.f32 %v782, %v788
        %v793 = vadd.f32 %v783, %v789
        %s794 = sld [smem:[#allocation6 + $0x36]]
        %v795 = vstv %s794
        %v796 = vmul.f32 %v244, %v795
        %v797 = vmul.f32 %v245, %v795
        %v798 = vmul.f32 %v246, %v795
        %v799 = vmul.f32 %v247, %v795
        %v800 = vadd.f32 %v790, %v796
        %v801 = vadd.f32 %v791, %v797
        %v802 = vadd.f32 %v792, %v798
        %v803 = vadd.f32 %v793, %v799
        %s804 = sld [smem:[#allocation6 + $0x40]]
        %v805 = vstv %s804
        %v806 = vmul.f32 %v260, %v805
        %v807 = vmul.f32 %v261, %v805
        %v808 = vmul.f32 %v262, %v805
        %v809 = vmul.f32 %v263, %v805
        %v810 = vadd.f32 %v800, %v806
        %v811 = vadd.f32 %v801, %v807
        %v812 = vadd.f32 %v802, %v808
        %v813 = vadd.f32 %v803, %v809
        %s814 = sld [smem:[#allocation6 + $0x4a]]
        %v815 = vstv %s814
        %v816 = vmul.f32 %v276, %v815
        %v817 = vmul.f32 %v277, %v815
        %v818 = vmul.f32 %v278, %v815
        %v819 = vmul.f32 %v279, %v815
        %v820 = vadd.f32 %v810, %v816
        %v821 = vadd.f32 %v811, %v817
        %v822 = vadd.f32 %v812, %v818
        %v823 = vadd.f32 %v813, %v819
        %s824 = sld [smem:[#allocation6 + $0x54]]
        %v825 = vstv %s824
        %v826 = vmul.f32 %v292, %v825
        %v827 = vmul.f32 %v293, %v825
        %v828 = vmul.f32 %v294, %v825
        %v829 = vmul.f32 %v295, %v825
        %v830 = vadd.f32 %v820, %v826
        %v831 = vadd.f32 %v821, %v827
        %v832 = vadd.f32 %v822, %v828
        %v833 = vadd.f32 %v823, %v829
        %s834 = sld [smem:[#allocation6 + $0x5e]]
        %v835 = vstv %s834
        %v836 = vmul.f32 %v308, %v835
        %v837 = vmul.f32 %v309, %v835
        %v838 = vmul.f32 %v310, %v835
        %v839 = vmul.f32 %v311, %v835
        %v840 = vadd.f32 %v830, %v836
        %v841 = vadd.f32 %v831, %v837
        %v842 = vadd.f32 %v832, %v838
        %v843 = vadd.f32 %v833, %v839
        %s844 = sld [smem:[#allocation6 + $0x68]]
        %v845 = vstv %s844
        %v846 = vmul.f32 %v324, %v845
        %v847 = vmul.f32 %v325, %v845
        %v848 = vmul.f32 %v326, %v845
        %v849 = vmul.f32 %v327, %v845
        %v850 = vadd.f32 %v840, %v846
        %v851 = vadd.f32 %v841, %v847
        %v852 = vadd.f32 %v842, %v848
        %v853 = vadd.f32 %v843, %v849
        %s854 = sld [smem:[#allocation6 + $0x72]]
        %v855 = vstv %s854
        %v856 = vmul.f32 %v340, %v855
        %v857 = vmul.f32 %v341, %v855
        %v858 = vmul.f32 %v342, %v855
        %v859 = vmul.f32 %v343, %v855
        %v860 = vadd.f32 %v850, %v856
        %v861 = vadd.f32 %v851, %v857
        %v862 = vadd.f32 %v852, %v858
        %v863 = vadd.f32 %v853, %v859
        %s864 = sld [smem:[#allocation6 + $0x20c]]
        %v865 = vstv %s864
        %v866 = vadd.f32 %v860, %v865
        %v867 = vadd.f32 %v861, %v865
        %v868 = vadd.f32 %v862, %v865
        %v869 = vadd.f32 %v863, %v865
        %v870 = vtanh.pop %v866
        %v871 = vtanh.pop %v867
        %v872 = vtanh.pop %v868
        %v873 = vtanh.pop %v869
        %s874 = sld [smem:[#allocation6 + $0x19]]
        %v875 = vstv %s874
        %v876 = vmul.f32 %v196, %v875
        %v877 = vmul.f32 %v197, %v875
        %v878 = vmul.f32 %v198, %v875
        %v879 = vmul.f32 %v199, %v875
        %s880 = sld [smem:[#allocation6 + $0x23]]
        %v881 = vstv %s880
        %v882 = vmul.f32 %v212, %v881
        %v883 = vmul.f32 %v213, %v881
        %v884 = vmul.f32 %v214, %v881
        %v885 = vmul.f32 %v215, %v881
        %v886 = vadd.f32 %v876, %v882
        %v887 = vadd.f32 %v877, %v883
        %v888 = vadd.f32 %v878, %v884
        %v889 = vadd.f32 %v879, %v885
        %s890 = sld [smem:[#allocation6 + $0x2d]]
        %v891 = vstv %s890
        %v892 = vmul.f32 %v228, %v891
        %v893 = vmul.f32 %v229, %v891
        %v894 = vmul.f32 %v230, %v891
        %v895 = vmul.f32 %v231, %v891
        %v896 = vadd.f32 %v886, %v892
        %v897 = vadd.f32 %v887, %v893
        %v898 = vadd.f32 %v888, %v894
        %v899 = vadd.f32 %v889, %v895
        %s900 = sld [smem:[#allocation6 + $0x37]]
        %v901 = vstv %s900
        %v902 = vmul.f32 %v244, %v901
        %v903 = vmul.f32 %v245, %v901
        %v904 = vmul.f32 %v246, %v901
        %v905 = vmul.f32 %v247, %v901
        %v906 = vadd.f32 %v896, %v902
        %v907 = vadd.f32 %v897, %v903
        %v908 = vadd.f32 %v898, %v904
        %v909 = vadd.f32 %v899, %v905
        %s910 = sld [smem:[#allocation6 + $0x41]]
        %v911 = vstv %s910
        %v912 = vmul.f32 %v260, %v911
        %v913 = vmul.f32 %v261, %v911
        %v914 = vmul.f32 %v262, %v911
        %v915 = vmul.f32 %v263, %v911
        %v916 = vadd.f32 %v906, %v912
        %v917 = vadd.f32 %v907, %v913
        %v918 = vadd.f32 %v908, %v914
        %v919 = vadd.f32 %v909, %v915
        %s920 = sld [smem:[#allocation6 + $0x4b]]
        %v921 = vstv %s920
        %v922 = vmul.f32 %v276, %v921
        %v923 = vmul.f32 %v277, %v921
        %v924 = vmul.f32 %v278, %v921
        %v925 = vmul.f32 %v279, %v921
        %v926 = vadd.f32 %v916, %v922
        %v927 = vadd.f32 %v917, %v923
        %v928 = vadd.f32 %v918, %v924
        %v929 = vadd.f32 %v919, %v925
        %s930 = sld [smem:[#allocation6 + $0x55]]
        %v931 = vstv %s930
        %v932 = vmul.f32 %v292, %v931
        %v933 = vmul.f32 %v293, %v931
        %v934 = vmul.f32 %v294, %v931
        %v935 = vmul.f32 %v295, %v931
        %v936 = vadd.f32 %v926, %v932
        %v937 = vadd.f32 %v927, %v933
        %v938 = vadd.f32 %v928, %v934
        %v939 = vadd.f32 %v929, %v935
        %s940 = sld [smem:[#allocation6 + $0x5f]]
        %v941 = vstv %s940
        %v942 = vmul.f32 %v308, %v941
        %v943 = vmul.f32 %v309, %v941
        %v944 = vmul.f32 %v310, %v941
        %v945 = vmul.f32 %v311, %v941
        %v946 = vadd.f32 %v936, %v942
        %v947 = vadd.f32 %v937, %v943
        %v948 = vadd.f32 %v938, %v944
        %v949 = vadd.f32 %v939, %v945
        %s950 = sld [smem:[#allocation6 + $0x69]]
        %v951 = vstv %s950
        %v952 = vmul.f32 %v324, %v951
        %v953 = vmul.f32 %v325, %v951
        %v954 = vmul.f32 %v326, %v951
        %v955 = vmul.f32 %v327, %v951
        %v956 = vadd.f32 %v946, %v952
        %v957 = vadd.f32 %v947, %v953
        %v958 = vadd.f32 %v948, %v954
        %v959 = vadd.f32 %v949, %v955
        %s960 = sld [smem:[#allocation6 + $0x73]]
        %v961 = vstv %s960
        %v962 = vmul.f32 %v340, %v961
        %v963 = vmul.f32 %v341, %v961
        %v964 = vmul.f32 %v342, %v961
        %v965 = vmul.f32 %v343, %v961
        %v966 = vadd.f32 %v956, %v962
        %v967 = vadd.f32 %v957, %v963
        %v968 = vadd.f32 %v958, %v964
        %v969 = vadd.f32 %v959, %v965
        %s970 = sld [smem:[#allocation6 + $0x20d]]
        %v971 = vstv %s970
        %v972 = vadd.f32 %v966, %v971
        %v973 = vadd.f32 %v967, %v971
        %v974 = vadd.f32 %v968, %v971
        %v975 = vadd.f32 %v969, %v971
        %v976 = vtanh.pop %v972
        %v977 = vtanh.pop %v973
        %v978 = vtanh.pop %v974
        %v979 = vtanh.pop %v975
        %s980 = sld [smem:[#allocation6 + $0x1a]]
        %v981 = vstv %s980
        %v982 = vmul.f32 %v196, %v981
        %v983 = vmul.f32 %v197, %v981
        %v984 = vmul.f32 %v198, %v981
        %v985 = vmul.f32 %v199, %v981
        %s986 = sld [smem:[#allocation6 + $0x24]]
        %v987 = vstv %s986
        %v988 = vmul.f32 %v212, %v987
        %v989 = vmul.f32 %v213, %v987
        %v990 = vmul.f32 %v214, %v987
        %v991 = vmul.f32 %v215, %v987
        %v992 = vadd.f32 %v982, %v988
        %v993 = vadd.f32 %v983, %v989
        %v994 = vadd.f32 %v984, %v990
        %v995 = vadd.f32 %v985, %v991
        %s996 = sld [smem:[#allocation6 + $0x2e]]
        %v997 = vstv %s996
        %v998 = vmul.f32 %v228, %v997
        %v999 = vmul.f32 %v229, %v997
        %v1000 = vmul.f32 %v230, %v997
        %v1001 = vmul.f32 %v231, %v997
        %v1002 = vadd.f32 %v992, %v998
        %v1003 = vadd.f32 %v993, %v999
        %v1004 = vadd.f32 %v994, %v1000
        %v1005 = vadd.f32 %v995, %v1001
        %s1006 = sld [smem:[#allocation6 + $0x38]]
        %v1007 = vstv %s1006
        %v1008 = vmul.f32 %v244, %v1007
        %v1009 = vmul.f32 %v245, %v1007
        %v1010 = vmul.f32 %v246, %v1007
        %v1011 = vmul.f32 %v247, %v1007
        %v1012 = vadd.f32 %v1002, %v1008
        %v1013 = vadd.f32 %v1003, %v1009
        %v1014 = vadd.f32 %v1004, %v1010
        %v1015 = vadd.f32 %v1005, %v1011
        %s1016 = sld [smem:[#allocation6 + $0x42]]
        %v1017 = vstv %s1016
        %v1018 = vmul.f32 %v260, %v1017
        %v1019 = vmul.f32 %v261, %v1017
        %v1020 = vmul.f32 %v262, %v1017
        %v1021 = vmul.f32 %v263, %v1017
        %v1022 = vadd.f32 %v1012, %v1018
        %v1023 = vadd.f32 %v1013, %v1019
        %v1024 = vadd.f32 %v1014, %v1020
        %v1025 = vadd.f32 %v1015, %v1021
        %s1026 = sld [smem:[#allocation6 + $0x4c]]
        %v1027 = vstv %s1026
        %v1028 = vmul.f32 %v276, %v1027
        %v1029 = vmul.f32 %v277, %v1027
        %v1030 = vmul.f32 %v278, %v1027
        %v1031 = vmul.f32 %v279, %v1027
        %v1032 = vadd.f32 %v1022, %v1028
        %v1033 = vadd.f32 %v1023, %v1029
        %v1034 = vadd.f32 %v1024, %v1030
        %v1035 = vadd.f32 %v1025, %v1031
        %s1036 = sld [smem:[#allocation6 + $0x56]]
        %v1037 = vstv %s1036
        %v1038 = vmul.f32 %v292, %v1037
        %v1039 = vmul.f32 %v293, %v1037
        %v1040 = vmul.f32 %v294, %v1037
        %v1041 = vmul.f32 %v295, %v1037
        %v1042 = vadd.f32 %v1032, %v1038
        %v1043 = vadd.f32 %v1033, %v1039
        %v1044 = vadd.f32 %v1034, %v1040
        %v1045 = vadd.f32 %v1035, %v1041
        %s1046 = sld [smem:[#allocation6 + $0x60]]
        %v1047 = vstv %s1046
        %v1048 = vmul.f32 %v308, %v1047
        %v1049 = vmul.f32 %v309, %v1047
        %v1050 = vmul.f32 %v310, %v1047
        %v1051 = vmul.f32 %v311, %v1047
        %v1052 = vadd.f32 %v1042, %v1048
        %v1053 = vadd.f32 %v1043, %v1049
        %v1054 = vadd.f32 %v1044, %v1050
        %v1055 = vadd.f32 %v1045, %v1051
        %s1056 = sld [smem:[#allocation6 + $0x6a]]
        %v1057 = vstv %s1056
        %v1058 = vmul.f32 %v324, %v1057
        %v1059 = vmul.f32 %v325, %v1057
        %v1060 = vmul.f32 %v326, %v1057
        %v1061 = vmul.f32 %v327, %v1057
        %v1062 = vadd.f32 %v1052, %v1058
        %v1063 = vadd.f32 %v1053, %v1059
        %v1064 = vadd.f32 %v1054, %v1060
        %v1065 = vadd.f32 %v1055, %v1061
        %s1066 = sld [smem:[#allocation6 + $0x74]]
        %v1067 = vstv %s1066
        %v1068 = vmul.f32 %v340, %v1067
        %v1069 = vmul.f32 %v341, %v1067
        %v1070 = vmul.f32 %v342, %v1067
        %v1071 = vmul.f32 %v343, %v1067
        %v1072 = vadd.f32 %v1062, %v1068
        %v1073 = vadd.f32 %v1063, %v1069
        %v1074 = vadd.f32 %v1064, %v1070
        %v1075 = vadd.f32 %v1065, %v1071
        %s1076 = sld [smem:[#allocation6 + $0x20e]]
        %v1077 = vstv %s1076
        %v1078 = vadd.f32 %v1072, %v1077
        %v1079 = vadd.f32 %v1073, %v1077
        %v1080 = vadd.f32 %v1074, %v1077
        %v1081 = vadd.f32 %v1075, %v1077
        %v1082 = vtanh.pop %v1078
        %v1083 = vtanh.pop %v1079
        %v1084 = vtanh.pop %v1080
        %v1085 = vtanh.pop %v1081
        %s1086 = sld [smem:[#allocation6 + $0x1b]]
        %v1087 = vstv %s1086
        %v1088 = vmul.f32 %v196, %v1087
        %v1089 = vmul.f32 %v197, %v1087
        %v1090 = vmul.f32 %v198, %v1087
        %v1091 = vmul.f32 %v199, %v1087
        %s1092 = sld [smem:[#allocation6 + $0x25]]
        %v1093 = vstv %s1092
        %v1094 = vmul.f32 %v212, %v1093
        %v1095 = vmul.f32 %v213, %v1093
        %v1096 = vmul.f32 %v214, %v1093
        %v1097 = vmul.f32 %v215, %v1093
        %v1098 = vadd.f32 %v1088, %v1094
        %v1099 = vadd.f32 %v1089, %v1095
        %v1100 = vadd.f32 %v1090, %v1096
        %v1101 = vadd.f32 %v1091, %v1097
        %s1102 = sld [smem:[#allocation6 + $0x2f]]
        %v1103 = vstv %s1102
        %v1104 = vmul.f32 %v228, %v1103
        %v1105 = vmul.f32 %v229, %v1103
        %v1106 = vmul.f32 %v230, %v1103
        %v1107 = vmul.f32 %v231, %v1103
        %v1108 = vadd.f32 %v1098, %v1104
        %v1109 = vadd.f32 %v1099, %v1105
        %v1110 = vadd.f32 %v1100, %v1106
        %v1111 = vadd.f32 %v1101, %v1107
        %s1112 = sld [smem:[#allocation6 + $0x39]]
        %v1113 = vstv %s1112
        %v1114 = vmul.f32 %v244, %v1113
        %v1115 = vmul.f32 %v245, %v1113
        %v1116 = vmul.f32 %v246, %v1113
        %v1117 = vmul.f32 %v247, %v1113
        %v1118 = vadd.f32 %v1108, %v1114
        %v1119 = vadd.f32 %v1109, %v1115
        %v1120 = vadd.f32 %v1110, %v1116
        %v1121 = vadd.f32 %v1111, %v1117
        %s1122 = sld [smem:[#allocation6 + $0x43]]
        %v1123 = vstv %s1122
        %v1124 = vmul.f32 %v260, %v1123
        %v1125 = vmul.f32 %v261, %v1123
        %v1126 = vmul.f32 %v262, %v1123
        %v1127 = vmul.f32 %v263, %v1123
        %v1128 = vadd.f32 %v1118, %v1124
        %v1129 = vadd.f32 %v1119, %v1125
        %v1130 = vadd.f32 %v1120, %v1126
        %v1131 = vadd.f32 %v1121, %v1127
        %s1132 = sld [smem:[#allocation6 + $0x4d]]
        %v1133 = vstv %s1132
        %v1134 = vmul.f32 %v276, %v1133
        %v1135 = vmul.f32 %v277, %v1133
        %v1136 = vmul.f32 %v278, %v1133
        %v1137 = vmul.f32 %v279, %v1133
        %v1138 = vadd.f32 %v1128, %v1134
        %v1139 = vadd.f32 %v1129, %v1135
        %v1140 = vadd.f32 %v1130, %v1136
        %v1141 = vadd.f32 %v1131, %v1137
        %s1142 = sld [smem:[#allocation6 + $0x57]]
        %v1143 = vstv %s1142
        %v1144 = vmul.f32 %v292, %v1143
        %v1145 = vmul.f32 %v293, %v1143
        %v1146 = vmul.f32 %v294, %v1143
        %v1147 = vmul.f32 %v295, %v1143
        %v1148 = vadd.f32 %v1138, %v1144
        %v1149 = vadd.f32 %v1139, %v1145
        %v1150 = vadd.f32 %v1140, %v1146
        %v1151 = vadd.f32 %v1141, %v1147
        %s1152 = sld [smem:[#allocation6 + $0x61]]
        %v1153 = vstv %s1152
        %v1154 = vmul.f32 %v308, %v1153
        %v1155 = vmul.f32 %v309, %v1153
        %v1156 = vmul.f32 %v310, %v1153
        %v1157 = vmul.f32 %v311, %v1153
        %v1158 = vadd.f32 %v1148, %v1154
        %v1159 = vadd.f32 %v1149, %v1155
        %v1160 = vadd.f32 %v1150, %v1156
        %v1161 = vadd.f32 %v1151, %v1157
        %s1162 = sld [smem:[#allocation6 + $0x6b]]
        %v1163 = vstv %s1162
        %v1164 = vmul.f32 %v324, %v1163
        %v1165 = vmul.f32 %v325, %v1163
        %v1166 = vmul.f32 %v326, %v1163
        %v1167 = vmul.f32 %v327, %v1163
        %v1168 = vadd.f32 %v1158, %v1164
        %v1169 = vadd.f32 %v1159, %v1165
        %v1170 = vadd.f32 %v1160, %v1166
        %v1171 = vadd.f32 %v1161, %v1167
        %s1172 = sld [smem:[#allocation6 + $0x75]]
        %v1173 = vstv %s1172
        %v1174 = vmul.f32 %v340, %v1173
        %v1175 = vmul.f32 %v341, %v1173
        %v1176 = vmul.f32 %v342, %v1173
        %v1177 = vmul.f32 %v343, %v1173
        %v1178 = vadd.f32 %v1168, %v1174
        %v1179 = vadd.f32 %v1169, %v1175
        %v1180 = vadd.f32 %v1170, %v1176
        %v1181 = vadd.f32 %v1171, %v1177
        %s1182 = sld [smem:[#allocation6 + $0x20f]]
        %v1183 = vstv %s1182
        %v1184 = vadd.f32 %v1178, %v1183
        %v1185 = vadd.f32 %v1179, %v1183
        %v1186 = vadd.f32 %v1180, %v1183
        %v1187 = vadd.f32 %v1181, %v1183
        %v1188 = vtanh.pop %v1184
        %v1189 = vtanh.pop %v1185
        %v1190 = vtanh.pop %v1186
        %v1191 = vtanh.pop %v1187
        %s1192 = sld [smem:[#allocation6 + $0x1c]]
        %v1193 = vstv %s1192
        %v1194 = vmul.f32 %v196, %v1193
        %v1195 = vmul.f32 %v197, %v1193
        %v1196 = vmul.f32 %v198, %v1193
        %v1197 = vmul.f32 %v199, %v1193
        %s1198 = sld [smem:[#allocation6 + $0x26]]
        %v1199 = vstv %s1198
        %v1200 = vmul.f32 %v212, %v1199
        %v1201 = vmul.f32 %v213, %v1199
        %v1202 = vmul.f32 %v214, %v1199
        %v1203 = vmul.f32 %v215, %v1199
        %v1204 = vadd.f32 %v1194, %v1200
        %v1205 = vadd.f32 %v1195, %v1201
        %v1206 = vadd.f32 %v1196, %v1202
        %v1207 = vadd.f32 %v1197, %v1203
        %s1208 = sld [smem:[#allocation6 + $0x30]]
        %v1209 = vstv %s1208
        %v1210 = vmul.f32 %v228, %v1209
        %v1211 = vmul.f32 %v229, %v1209
        %v1212 = vmul.f32 %v230, %v1209
        %v1213 = vmul.f32 %v231, %v1209
        %v1214 = vadd.f32 %v1204, %v1210
        %v1215 = vadd.f32 %v1205, %v1211
        %v1216 = vadd.f32 %v1206, %v1212
        %v1217 = vadd.f32 %v1207, %v1213
        %s1218 = sld [smem:[#allocation6 + $0x3a]]
        %v1219 = vstv %s1218
        %v1220 = vmul.f32 %v244, %v1219
        %v1221 = vmul.f32 %v245, %v1219
        %v1222 = vmul.f32 %v246, %v1219
        %v1223 = vmul.f32 %v247, %v1219
        %v1224 = vadd.f32 %v1214, %v1220
        %v1225 = vadd.f32 %v1215, %v1221
        %v1226 = vadd.f32 %v1216, %v1222
        %v1227 = vadd.f32 %v1217, %v1223
        %s1228 = sld [smem:[#allocation6 + $0x44]]
        %v1229 = vstv %s1228
        %v1230 = vmul.f32 %v260, %v1229
        %v1231 = vmul.f32 %v261, %v1229
        %v1232 = vmul.f32 %v262, %v1229
        %v1233 = vmul.f32 %v263, %v1229
        %v1234 = vadd.f32 %v1224, %v1230
        %v1235 = vadd.f32 %v1225, %v1231
        %v1236 = vadd.f32 %v1226, %v1232
        %v1237 = vadd.f32 %v1227, %v1233
        %s1238 = sld [smem:[#allocation6 + $0x4e]]
        %v1239 = vstv %s1238
        %v1240 = vmul.f32 %v276, %v1239
        %v1241 = vmul.f32 %v277, %v1239
        %v1242 = vmul.f32 %v278, %v1239
        %v1243 = vmul.f32 %v279, %v1239
        %v1244 = vadd.f32 %v1234, %v1240
        %v1245 = vadd.f32 %v1235, %v1241
        %v1246 = vadd.f32 %v1236, %v1242
        %v1247 = vadd.f32 %v1237, %v1243
        %s1248 = sld [smem:[#allocation6 + $0x58]]
        %v1249 = vstv %s1248
        %v1250 = vmul.f32 %v292, %v1249
        %v1251 = vmul.f32 %v293, %v1249
        %v1252 = vmul.f32 %v294, %v1249
        %v1253 = vmul.f32 %v295, %v1249
        %v1254 = vadd.f32 %v1244, %v1250
        %v1255 = vadd.f32 %v1245, %v1251
        %v1256 = vadd.f32 %v1246, %v1252
        %v1257 = vadd.f32 %v1247, %v1253
        %s1258 = sld [smem:[#allocation6 + $0x62]]
        %v1259 = vstv %s1258
        %v1260 = vmul.f32 %v308, %v1259
        %v1261 = vmul.f32 %v309, %v1259
        %v1262 = vmul.f32 %v310, %v1259
        %v1263 = vmul.f32 %v311, %v1259
        %v1264 = vadd.f32 %v1254, %v1260
        %v1265 = vadd.f32 %v1255, %v1261
        %v1266 = vadd.f32 %v1256, %v1262
        %v1267 = vadd.f32 %v1257, %v1263
        %s1268 = sld [smem:[#allocation6 + $0x6c]]
        %v1269 = vstv %s1268
        %v1270 = vmul.f32 %v324, %v1269
        %v1271 = vmul.f32 %v325, %v1269
        %v1272 = vmul.f32 %v326, %v1269
        %v1273 = vmul.f32 %v327, %v1269
        %v1274 = vadd.f32 %v1264, %v1270
        %v1275 = vadd.f32 %v1265, %v1271
        %v1276 = vadd.f32 %v1266, %v1272
        %v1277 = vadd.f32 %v1267, %v1273
        %s1278 = sld [smem:[#allocation6 + $0x76]]
        %v1279 = vstv %s1278
        %v1280 = vmul.f32 %v340, %v1279
        %v1281 = vmul.f32 %v341, %v1279
        %v1282 = vmul.f32 %v342, %v1279
        %v1283 = vmul.f32 %v343, %v1279
        %v1284 = vadd.f32 %v1274, %v1280
        %v1285 = vadd.f32 %v1275, %v1281
        %v1286 = vadd.f32 %v1276, %v1282
        %v1287 = vadd.f32 %v1277, %v1283
        %s1288 = sld [smem:[#allocation6 + $0x210]]
        %v1289 = vstv %s1288
        %v1290 = vadd.f32 %v1284, %v1289
        %v1291 = vadd.f32 %v1285, %v1289
        %v1292 = vadd.f32 %v1286, %v1289
        %v1293 = vadd.f32 %v1287, %v1289
        %v1294 = vtanh.pop %v1290
        %v1295 = vtanh.pop %v1291
        %v1296 = vtanh.pop %v1292
        %v1297 = vtanh.pop %v1293
        %s1298 = sld [smem:[#allocation6 + $0x1d]]
        %v1299 = vstv %s1298
        %v1300 = vmul.f32 %v196, %v1299
        %v1301 = vmul.f32 %v197, %v1299
        %v1302 = vmul.f32 %v198, %v1299
        %v1303 = vmul.f32 %v199, %v1299
        %s1304 = sld [smem:[#allocation6 + $0x27]]
        %v1305 = vstv %s1304
        %v1306 = vmul.f32 %v212, %v1305
        %v1307 = vmul.f32 %v213, %v1305
        %v1308 = vmul.f32 %v214, %v1305
        %v1309 = vmul.f32 %v215, %v1305
        %v1310 = vadd.f32 %v1300, %v1306
        %v1311 = vadd.f32 %v1301, %v1307
        %v1312 = vadd.f32 %v1302, %v1308
        %v1313 = vadd.f32 %v1303, %v1309
        %s1314 = sld [smem:[#allocation6 + $0x31]]
        %v1315 = vstv %s1314
        %v1316 = vmul.f32 %v228, %v1315
        %v1317 = vmul.f32 %v229, %v1315
        %v1318 = vmul.f32 %v230, %v1315
        %v1319 = vmul.f32 %v231, %v1315
        %v1320 = vadd.f32 %v1310, %v1316
        %v1321 = vadd.f32 %v1311, %v1317
        %v1322 = vadd.f32 %v1312, %v1318
        %v1323 = vadd.f32 %v1313, %v1319
        %s1324 = sld [smem:[#allocation6 + $0x3b]]
        %v1325 = vstv %s1324
        %v1326 = vmul.f32 %v244, %v1325
        %v1327 = vmul.f32 %v245, %v1325
        %v1328 = vmul.f32 %v246, %v1325
        %v1329 = vmul.f32 %v247, %v1325
        %v1330 = vadd.f32 %v1320, %v1326
        %v1331 = vadd.f32 %v1321, %v1327
        %v1332 = vadd.f32 %v1322, %v1328
        %v1333 = vadd.f32 %v1323, %v1329
        %s1334 = sld [smem:[#allocation6 + $0x45]]
        %v1335 = vstv %s1334
        %v1336 = vmul.f32 %v260, %v1335
        %v1337 = vmul.f32 %v261, %v1335
        %v1338 = vmul.f32 %v262, %v1335
        %v1339 = vmul.f32 %v263, %v1335
        %v1340 = vadd.f32 %v1330, %v1336
        %v1341 = vadd.f32 %v1331, %v1337
        %v1342 = vadd.f32 %v1332, %v1338
        %v1343 = vadd.f32 %v1333, %v1339
        %s1344 = sld [smem:[#allocation6 + $0x4f]]
        %v1345 = vstv %s1344
        %v1346 = vmul.f32 %v276, %v1345
        %v1347 = vmul.f32 %v277, %v1345
        %v1348 = vmul.f32 %v278, %v1345
        %v1349 = vmul.f32 %v279, %v1345
        %v1350 = vadd.f32 %v1340, %v1346
        %v1351 = vadd.f32 %v1341, %v1347
        %v1352 = vadd.f32 %v1342, %v1348
        %v1353 = vadd.f32 %v1343, %v1349
        %s1354 = sld [smem:[#allocation6 + $0x59]]
        %v1355 = vstv %s1354
        %v1356 = vmul.f32 %v292, %v1355
        %v1357 = vmul.f32 %v293, %v1355
        %v1358 = vmul.f32 %v294, %v1355
        %v1359 = vmul.f32 %v295, %v1355
        %v1360 = vadd.f32 %v1350, %v1356
        %v1361 = vadd.f32 %v1351, %v1357
        %v1362 = vadd.f32 %v1352, %v1358
        %v1363 = vadd.f32 %v1353, %v1359
        %s1364 = sld [smem:[#allocation6 + $0x63]]
        %v1365 = vstv %s1364
        %v1366 = vmul.f32 %v308, %v1365
        %v1367 = vmul.f32 %v309, %v1365
        %v1368 = vmul.f32 %v310, %v1365
        %v1369 = vmul.f32 %v311, %v1365
        %v1370 = vadd.f32 %v1360, %v1366
        %v1371 = vadd.f32 %v1361, %v1367
        %v1372 = vadd.f32 %v1362, %v1368
        %v1373 = vadd.f32 %v1363, %v1369
        %s1374 = sld [smem:[#allocation6 + $0x6d]]
        %v1375 = vstv %s1374
        %v1376 = vmul.f32 %v324, %v1375
        %v1377 = vmul.f32 %v325, %v1375
        %v1378 = vmul.f32 %v326, %v1375
        %v1379 = vmul.f32 %v327, %v1375
        %v1380 = vadd.f32 %v1370, %v1376
        %v1381 = vadd.f32 %v1371, %v1377
        %v1382 = vadd.f32 %v1372, %v1378
        %v1383 = vadd.f32 %v1373, %v1379
        %s1384 = sld [smem:[#allocation6 + $0x77]]
        %v1385 = vstv %s1384
        %v1386 = vmul.f32 %v340, %v1385
        %v1387 = vmul.f32 %v341, %v1385
        %v1388 = vmul.f32 %v342, %v1385
        %v1389 = vmul.f32 %v343, %v1385
        %v1390 = vadd.f32 %v1380, %v1386
        %v1391 = vadd.f32 %v1381, %v1387
        %v1392 = vadd.f32 %v1382, %v1388
        %v1393 = vadd.f32 %v1383, %v1389
        %s1394 = sld [smem:[#allocation6 + $0x211]]
        %v1395 = vstv %s1394
        %v1396 = vadd.f32 %v1390, %v1395
        %v1397 = vadd.f32 %v1391, %v1395
        %v1398 = vadd.f32 %v1392, %v1395
        %v1399 = vadd.f32 %v1393, %v1395
        %v1400 = vtanh.pop %v1396
        %v1401 = vtanh.pop %v1397
        %v1402 = vtanh.pop %v1398
        %v1403 = vtanh.pop %v1399
        %s1404 = sld [smem:[#allocation6 + $0x78]]
        %v1405 = vstv %s1404
        %v1406 = vmul.f32 %v446, %v1405
        %v1407 = vmul.f32 %v447, %v1405
        %v1408 = vmul.f32 %v448, %v1405
        %v1409 = vmul.f32 %v449, %v1405
        %s1410 = sld [smem:[#allocation6 + $0x82]]
        %v1411 = vstv %s1410
        %v1412 = vmul.f32 %v552, %v1411
        %v1413 = vmul.f32 %v553, %v1411
        %v1414 = vmul.f32 %v554, %v1411
        %v1415 = vmul.f32 %v555, %v1411
        %v1416 = vadd.f32 %v1406, %v1412
        %v1417 = vadd.f32 %v1407, %v1413
        %v1418 = vadd.f32 %v1408, %v1414
        %v1419 = vadd.f32 %v1409, %v1415
        %s1420 = sld [smem:[#allocation6 + $0x8c]]
        %v1421 = vstv %s1420
        %v1422 = vmul.f32 %v658, %v1421
        %v1423 = vmul.f32 %v659, %v1421
        %v1424 = vmul.f32 %v660, %v1421
        %v1425 = vmul.f32 %v661, %v1421
        %v1426 = vadd.f32 %v1416, %v1422
        %v1427 = vadd.f32 %v1417, %v1423
        %v1428 = vadd.f32 %v1418, %v1424
        %v1429 = vadd.f32 %v1419, %v1425
        %s1430 = sld [smem:[#allocation6 + $0x96]]
        %v1431 = vstv %s1430
        %v1432 = vmul.f32 %v764, %v1431
        %v1433 = vmul.f32 %v765, %v1431
        %v1434 = vmul.f32 %v766, %v1431
        %v1435 = vmul.f32 %v767, %v1431
        %v1436 = vadd.f32 %v1426, %v1432
        %v1437 = vadd.f32 %v1427, %v1433
        %v1438 = vadd.f32 %v1428, %v1434
        %v1439 = vadd.f32 %v1429, %v1435
        %s1440 = sld [smem:[#allocation6 + $0xa0]]
        %v1441 = vstv %s1440
        %v1442 = vmul.f32 %v870, %v1441
        %v1443 = vmul.f32 %v871, %v1441
        %v1444 = vmul.f32 %v872, %v1441
        %v1445 = vmul.f32 %v873, %v1441
        %v1446 = vadd.f32 %v1436, %v1442
        %v1447 = vadd.f32 %v1437, %v1443
        %v1448 = vadd.f32 %v1438, %v1444
        %v1449 = vadd.f32 %v1439, %v1445
        %s1450 = sld [smem:[#allocation6 + $0xaa]]
        %v1451 = vstv %s1450
        %v1452 = vmul.f32 %v976, %v1451
        %v1453 = vmul.f32 %v977, %v1451
        %v1454 = vmul.f32 %v978, %v1451
        %v1455 = vmul.f32 %v979, %v1451
        %v1456 = vadd.f32 %v1446, %v1452
        %v1457 = vadd.f32 %v1447, %v1453
        %v1458 = vadd.f32 %v1448, %v1454
        %v1459 = vadd.f32 %v1449, %v1455
        %s1460 = sld [smem:[#allocation6 + $0xb4]]
        %v1461 = vstv %s1460
        %v1462 = vmul.f32 %v1082, %v1461
        %v1463 = vmul.f32 %v1083, %v1461
        %v1464 = vmul.f32 %v1084, %v1461
        %v1465 = vmul.f32 %v1085, %v1461
        %v1466 = vadd.f32 %v1456, %v1462
        %v1467 = vadd.f32 %v1457, %v1463
        %v1468 = vadd.f32 %v1458, %v1464
        %v1469 = vadd.f32 %v1459, %v1465
        %s1470 = sld [smem:[#allocation6 + $0xbe]]
        %v1471 = vstv %s1470
        %v1472 = vmul.f32 %v1188, %v1471
        %v1473 = vmul.f32 %v1189, %v1471
        %v1474 = vmul.f32 %v1190, %v1471
        %v1475 = vmul.f32 %v1191, %v1471
        %v1476 = vadd.f32 %v1466, %v1472
        %v1477 = vadd.f32 %v1467, %v1473
        %v1478 = vadd.f32 %v1468, %v1474
        %v1479 = vadd.f32 %v1469, %v1475
        %s1480 = sld [smem:[#allocation6 + $0xc8]]
        %v1481 = vstv %s1480
        %v1482 = vmul.f32 %v1294, %v1481
        %v1483 = vmul.f32 %v1295, %v1481
        %v1484 = vmul.f32 %v1296, %v1481
        %v1485 = vmul.f32 %v1297, %v1481
        %v1486 = vadd.f32 %v1476, %v1482
        %v1487 = vadd.f32 %v1477, %v1483
        %v1488 = vadd.f32 %v1478, %v1484
        %v1489 = vadd.f32 %v1479, %v1485
        %s1490 = sld [smem:[#allocation6 + $0xd2]]
        %v1491 = vstv %s1490
        %v1492 = vmul.f32 %v1400, %v1491
        %v1493 = vmul.f32 %v1401, %v1491
        %v1494 = vmul.f32 %v1402, %v1491
        %v1495 = vmul.f32 %v1403, %v1491
        %v1496 = vadd.f32 %v1486, %v1492
        %v1497 = vadd.f32 %v1487, %v1493
        %v1498 = vadd.f32 %v1488, %v1494
        %v1499 = vadd.f32 %v1489, %v1495
        %s1500 = sld [smem:[#allocation6 + $0x212]]
        %v1501 = vstv %s1500
        %v1502 = vadd.f32 %v1496, %v1501
        %v1503 = vadd.f32 %v1497, %v1501
        %v1504 = vadd.f32 %v1498, %v1501
        %v1505 = vadd.f32 %v1499, %v1501
        %v1506 = vtanh.pop %v1502
        %v1507 = vtanh.pop %v1503
        %v1508 = vtanh.pop %v1504
        %v1509 = vtanh.pop %v1505
        %s1510 = sld [smem:[#allocation6 + $0x79]]
        %v1511 = vstv %s1510
        %v1512 = vmul.f32 %v446, %v1511
        %v1513 = vmul.f32 %v447, %v1511
        %v1514 = vmul.f32 %v448, %v1511
        %v1515 = vmul.f32 %v449, %v1511
        %s1516 = sld [smem:[#allocation6 + $0x83]]
        %v1517 = vstv %s1516
        %v1518 = vmul.f32 %v552, %v1517
        %v1519 = vmul.f32 %v553, %v1517
        %v1520 = vmul.f32 %v554, %v1517
        %v1521 = vmul.f32 %v555, %v1517
        %v1522 = vadd.f32 %v1512, %v1518
        %v1523 = vadd.f32 %v1513, %v1519
        %v1524 = vadd.f32 %v1514, %v1520
        %v1525 = vadd.f32 %v1515, %v1521
        %s1526 = sld [smem:[#allocation6 + $0x8d]]
        %v1527 = vstv %s1526
        %v1528 = vmul.f32 %v658, %v1527
        %v1529 = vmul.f32 %v659, %v1527
        %v1530 = vmul.f32 %v660, %v1527
        %v1531 = vmul.f32 %v661, %v1527
        %v1532 = vadd.f32 %v1522, %v1528
        %v1533 = vadd.f32 %v1523, %v1529
        %v1534 = vadd.f32 %v1524, %v1530
        %v1535 = vadd.f32 %v1525, %v1531
        %s1536 = sld [smem:[#allocation6 + $0x97]]
        %v1537 = vstv %s1536
        %v1538 = vmul.f32 %v764, %v1537
        %v1539 = vmul.f32 %v765, %v1537
        %v1540 = vmul.f32 %v766, %v1537
        %v1541 = vmul.f32 %v767, %v1537
        %v1542 = vadd.f32 %v1532, %v1538
        %v1543 = vadd.f32 %v1533, %v1539
        %v1544 = vadd.f32 %v1534, %v1540
        %v1545 = vadd.f32 %v1535, %v1541
        %s1546 = sld [smem:[#allocation6 + $0xa1]]
        %v1547 = vstv %s1546
        %v1548 = vmul.f32 %v870, %v1547
        %v1549 = vmul.f32 %v871, %v1547
        %v1550 = vmul.f32 %v872, %v1547
        %v1551 = vmul.f32 %v873, %v1547
        %v1552 = vadd.f32 %v1542, %v1548
        %v1553 = vadd.f32 %v1543, %v1549
        %v1554 = vadd.f32 %v1544, %v1550
        %v1555 = vadd.f32 %v1545, %v1551
        %s1556 = sld [smem:[#allocation6 + $0xab]]
        %v1557 = vstv %s1556
        %v1558 = vmul.f32 %v976, %v1557
        %v1559 = vmul.f32 %v977, %v1557
        %v1560 = vmul.f32 %v978, %v1557
        %v1561 = vmul.f32 %v979, %v1557
        %v1562 = vadd.f32 %v1552, %v1558
        %v1563 = vadd.f32 %v1553, %v1559
        %v1564 = vadd.f32 %v1554, %v1560
        %v1565 = vadd.f32 %v1555, %v1561
        %s1566 = sld [smem:[#allocation6 + $0xb5]]
        %v1567 = vstv %s1566
        %v1568 = vmul.f32 %v1082, %v1567
        %v1569 = vmul.f32 %v1083, %v1567
        %v1570 = vmul.f32 %v1084, %v1567
        %v1571 = vmul.f32 %v1085, %v1567
        %v1572 = vadd.f32 %v1562, %v1568
        %v1573 = vadd.f32 %v1563, %v1569
        %v1574 = vadd.f32 %v1564, %v1570
        %v1575 = vadd.f32 %v1565, %v1571
        %s1576 = sld [smem:[#allocation6 + $0xbf]]
        %v1577 = vstv %s1576
        %v1578 = vmul.f32 %v1188, %v1577
        %v1579 = vmul.f32 %v1189, %v1577
        %v1580 = vmul.f32 %v1190, %v1577
        %v1581 = vmul.f32 %v1191, %v1577
        %v1582 = vadd.f32 %v1572, %v1578
        %v1583 = vadd.f32 %v1573, %v1579
        %v1584 = vadd.f32 %v1574, %v1580
        %v1585 = vadd.f32 %v1575, %v1581
        %s1586 = sld [smem:[#allocation6 + $0xc9]]
        %v1587 = vstv %s1586
        %v1588 = vmul.f32 %v1294, %v1587
        %v1589 = vmul.f32 %v1295, %v1587
        %v1590 = vmul.f32 %v1296, %v1587
        %v1591 = vmul.f32 %v1297, %v1587
        %v1592 = vadd.f32 %v1582, %v1588
        %v1593 = vadd.f32 %v1583, %v1589
        %v1594 = vadd.f32 %v1584, %v1590
        %v1595 = vadd.f32 %v1585, %v1591
        %s1596 = sld [smem:[#allocation6 + $0xd3]]
        %v1597 = vstv %s1596
        %v1598 = vmul.f32 %v1400, %v1597
        %v1599 = vmul.f32 %v1401, %v1597
        %v1600 = vmul.f32 %v1402, %v1597
        %v1601 = vmul.f32 %v1403, %v1597
        %v1602 = vadd.f32 %v1592, %v1598
        %v1603 = vadd.f32 %v1593, %v1599
        %v1604 = vadd.f32 %v1594, %v1600
        %v1605 = vadd.f32 %v1595, %v1601
        %s1606 = sld [smem:[#allocation6 + $0x213]]
        %v1607 = vstv %s1606
        %v1608 = vadd.f32 %v1602, %v1607
        %v1609 = vadd.f32 %v1603, %v1607
        %v1610 = vadd.f32 %v1604, %v1607
        %v1611 = vadd.f32 %v1605, %v1607
        %v1612 = vtanh.pop %v1608
        %v1613 = vtanh.pop %v1609
        %v1614 = vtanh.pop %v1610
        %v1615 = vtanh.pop %v1611
        %s1616 = sld [smem:[#allocation6 + $0x7a]]
        %v1617 = vstv %s1616
        %v1618 = vmul.f32 %v446, %v1617
        %v1619 = vmul.f32 %v447, %v1617
        %v1620 = vmul.f32 %v448, %v1617
        %v1621 = vmul.f32 %v449, %v1617
        %s1622 = sld [smem:[#allocation6 + $0x84]]
        %v1623 = vstv %s1622
        %v1624 = vmul.f32 %v552, %v1623
        %v1625 = vmul.f32 %v553, %v1623
        %v1626 = vmul.f32 %v554, %v1623
        %v1627 = vmul.f32 %v555, %v1623
        %v1628 = vadd.f32 %v1618, %v1624
        %v1629 = vadd.f32 %v1619, %v1625
        %v1630 = vadd.f32 %v1620, %v1626
        %v1631 = vadd.f32 %v1621, %v1627
        %s1632 = sld [smem:[#allocation6 + $0x8e]]
        %v1633 = vstv %s1632
        %v1634 = vmul.f32 %v658, %v1633
        %v1635 = vmul.f32 %v659, %v1633
        %v1636 = vmul.f32 %v660, %v1633
        %v1637 = vmul.f32 %v661, %v1633
        %v1638 = vadd.f32 %v1628, %v1634
        %v1639 = vadd.f32 %v1629, %v1635
        %v1640 = vadd.f32 %v1630, %v1636
        %v1641 = vadd.f32 %v1631, %v1637
        %s1642 = sld [smem:[#allocation6 + $0x98]]
        %v1643 = vstv %s1642
        %v1644 = vmul.f32 %v764, %v1643
        %v1645 = vmul.f32 %v765, %v1643
        %v1646 = vmul.f32 %v766, %v1643
        %v1647 = vmul.f32 %v767, %v1643
        %v1648 = vadd.f32 %v1638, %v1644
        %v1649 = vadd.f32 %v1639, %v1645
        %v1650 = vadd.f32 %v1640, %v1646
        %v1651 = vadd.f32 %v1641, %v1647
        %s1652 = sld [smem:[#allocation6 + $0xa2]]
        %v1653 = vstv %s1652
        %v1654 = vmul.f32 %v870, %v1653
        %v1655 = vmul.f32 %v871, %v1653
        %v1656 = vmul.f32 %v872, %v1653
        %v1657 = vmul.f32 %v873, %v1653
        %v1658 = vadd.f32 %v1648, %v1654
        %v1659 = vadd.f32 %v1649, %v1655
        %v1660 = vadd.f32 %v1650, %v1656
        %v1661 = vadd.f32 %v1651, %v1657
        %s1662 = sld [smem:[#allocation6 + $0xac]]
        %v1663 = vstv %s1662
        %v1664 = vmul.f32 %v976, %v1663
        %v1665 = vmul.f32 %v977, %v1663
        %v1666 = vmul.f32 %v978, %v1663
        %v1667 = vmul.f32 %v979, %v1663
        %v1668 = vadd.f32 %v1658, %v1664
        %v1669 = vadd.f32 %v1659, %v1665
        %v1670 = vadd.f32 %v1660, %v1666
        %v1671 = vadd.f32 %v1661, %v1667
        %s1672 = sld [smem:[#allocation6 + $0xb6]]
        %v1673 = vstv %s1672
        %v1674 = vmul.f32 %v1082, %v1673
        %v1675 = vmul.f32 %v1083, %v1673
        %v1676 = vmul.f32 %v1084, %v1673
        %v1677 = vmul.f32 %v1085, %v1673
        %v1678 = vadd.f32 %v1668, %v1674
        %v1679 = vadd.f32 %v1669, %v1675
        %v1680 = vadd.f32 %v1670, %v1676
        %v1681 = vadd.f32 %v1671, %v1677
        %s1682 = sld [smem:[#allocation6 + $0xc0]]
        %v1683 = vstv %s1682
        %v1684 = vmul.f32 %v1188, %v1683
        %v1685 = vmul.f32 %v1189, %v1683
        %v1686 = vmul.f32 %v1190, %v1683
        %v1687 = vmul.f32 %v1191, %v1683
        %v1688 = vadd.f32 %v1678, %v1684
        %v1689 = vadd.f32 %v1679, %v1685
        %v1690 = vadd.f32 %v1680, %v1686
        %v1691 = vadd.f32 %v1681, %v1687
        %s1692 = sld [smem:[#allocation6 + $0xca]]
        %v1693 = vstv %s1692
        %v1694 = vmul.f32 %v1294, %v1693
        %v1695 = vmul.f32 %v1295, %v1693
        %v1696 = vmul.f32 %v1296, %v1693
        %v1697 = vmul.f32 %v1297, %v1693
        %v1698 = vadd.f32 %v1688, %v1694
        %v1699 = vadd.f32 %v1689, %v1695
        %v1700 = vadd.f32 %v1690, %v1696
        %v1701 = vadd.f32 %v1691, %v1697
        %s1702 = sld [smem:[#allocation6 + $0xd4]]
        %v1703 = vstv %s1702
        %v1704 = vmul.f32 %v1400, %v1703
        %v1705 = vmul.f32 %v1401, %v1703
        %v1706 = vmul.f32 %v1402, %v1703
        %v1707 = vmul.f32 %v1403, %v1703
        %v1708 = vadd.f32 %v1698, %v1704
        %v1709 = vadd.f32 %v1699, %v1705
        %v1710 = vadd.f32 %v1700, %v1706
        %v1711 = vadd.f32 %v1701, %v1707
        %s1712 = sld [smem:[#allocation6 + $0x214]]
        %v1713 = vstv %s1712
        %v1714 = vadd.f32 %v1708, %v1713
        %v1715 = vadd.f32 %v1709, %v1713
        %v1716 = vadd.f32 %v1710, %v1713
        %v1717 = vadd.f32 %v1711, %v1713
        %v1718 = vtanh.pop %v1714
        %v1719 = vtanh.pop %v1715
        %v1720 = vtanh.pop %v1716
        %v1721 = vtanh.pop %v1717
        %s1722 = sld [smem:[#allocation6 + $0x7b]]
        %v1723 = vstv %s1722
        %v1724 = vmul.f32 %v446, %v1723
        %v1725 = vmul.f32 %v447, %v1723
        %v1726 = vmul.f32 %v448, %v1723
        %v1727 = vmul.f32 %v449, %v1723
        %s1728 = sld [smem:[#allocation6 + $0x85]]
        %v1729 = vstv %s1728
        %v1730 = vmul.f32 %v552, %v1729
        %v1731 = vmul.f32 %v553, %v1729
        %v1732 = vmul.f32 %v554, %v1729
        %v1733 = vmul.f32 %v555, %v1729
        %v1734 = vadd.f32 %v1724, %v1730
        %v1735 = vadd.f32 %v1725, %v1731
        %v1736 = vadd.f32 %v1726, %v1732
        %v1737 = vadd.f32 %v1727, %v1733
        %s1738 = sld [smem:[#allocation6 + $0x8f]]
        %v1739 = vstv %s1738
        %v1740 = vmul.f32 %v658, %v1739
        %v1741 = vmul.f32 %v659, %v1739
        %v1742 = vmul.f32 %v660, %v1739
        %v1743 = vmul.f32 %v661, %v1739
        %v1744 = vadd.f32 %v1734, %v1740
        %v1745 = vadd.f32 %v1735, %v1741
        %v1746 = vadd.f32 %v1736, %v1742
        %v1747 = vadd.f32 %v1737, %v1743
        %s1748 = sld [smem:[#allocation6 + $0x99]]
        %v1749 = vstv %s1748
        %v1750 = vmul.f32 %v764, %v1749
        %v1751 = vmul.f32 %v765, %v1749
        %v1752 = vmul.f32 %v766, %v1749
        %v1753 = vmul.f32 %v767, %v1749
        %v1754 = vadd.f32 %v1744, %v1750
        %v1755 = vadd.f32 %v1745, %v1751
        %v1756 = vadd.f32 %v1746, %v1752
        %v1757 = vadd.f32 %v1747, %v1753
        %s1758 = sld [smem:[#allocation6 + $0xa3]]
        %v1759 = vstv %s1758
        %v1760 = vmul.f32 %v870, %v1759
        %v1761 = vmul.f32 %v871, %v1759
        %v1762 = vmul.f32 %v872, %v1759
        %v1763 = vmul.f32 %v873, %v1759
        %v1764 = vadd.f32 %v1754, %v1760
        %v1765 = vadd.f32 %v1755, %v1761
        %v1766 = vadd.f32 %v1756, %v1762
        %v1767 = vadd.f32 %v1757, %v1763
        %s1768 = sld [smem:[#allocation6 + $0xad]]
        %v1769 = vstv %s1768
        %v1770 = vmul.f32 %v976, %v1769
        %v1771 = vmul.f32 %v977, %v1769
        %v1772 = vmul.f32 %v978, %v1769
        %v1773 = vmul.f32 %v979, %v1769
        %v1774 = vadd.f32 %v1764, %v1770
        %v1775 = vadd.f32 %v1765, %v1771
        %v1776 = vadd.f32 %v1766, %v1772
        %v1777 = vadd.f32 %v1767, %v1773
        %s1778 = sld [smem:[#allocation6 + $0xb7]]
        %v1779 = vstv %s1778
        %v1780 = vmul.f32 %v1082, %v1779
        %v1781 = vmul.f32 %v1083, %v1779
        %v1782 = vmul.f32 %v1084, %v1779
        %v1783 = vmul.f32 %v1085, %v1779
        %v1784 = vadd.f32 %v1774, %v1780
        %v1785 = vadd.f32 %v1775, %v1781
        %v1786 = vadd.f32 %v1776, %v1782
        %v1787 = vadd.f32 %v1777, %v1783
        %s1788 = sld [smem:[#allocation6 + $0xc1]]
        %v1789 = vstv %s1788
        %v1790 = vmul.f32 %v1188, %v1789
        %v1791 = vmul.f32 %v1189, %v1789
        %v1792 = vmul.f32 %v1190, %v1789
        %v1793 = vmul.f32 %v1191, %v1789
        %v1794 = vadd.f32 %v1784, %v1790
        %v1795 = vadd.f32 %v1785, %v1791
        %v1796 = vadd.f32 %v1786, %v1792
        %v1797 = vadd.f32 %v1787, %v1793
        %s1798 = sld [smem:[#allocation6 + $0xcb]]
        %v1799 = vstv %s1798
        %v1800 = vmul.f32 %v1294, %v1799
        %v1801 = vmul.f32 %v1295, %v1799
        %v1802 = vmul.f32 %v1296, %v1799
        %v1803 = vmul.f32 %v1297, %v1799
        %v1804 = vadd.f32 %v1794, %v1800
        %v1805 = vadd.f32 %v1795, %v1801
        %v1806 = vadd.f32 %v1796, %v1802
        %v1807 = vadd.f32 %v1797, %v1803
        %s1808 = sld [smem:[#allocation6 + $0xd5]]
        %v1809 = vstv %s1808
        %v1810 = vmul.f32 %v1400, %v1809
        %v1811 = vmul.f32 %v1401, %v1809
        %v1812 = vmul.f32 %v1402, %v1809
        %v1813 = vmul.f32 %v1403, %v1809
        %v1814 = vadd.f32 %v1804, %v1810
        %v1815 = vadd.f32 %v1805, %v1811
        %v1816 = vadd.f32 %v1806, %v1812
        %v1817 = vadd.f32 %v1807, %v1813
        %s1818 = sld [smem:[#allocation6 + $0x215]]
        %v1819 = vstv %s1818
        %v1820 = vadd.f32 %v1814, %v1819
        %v1821 = vadd.f32 %v1815, %v1819
        %v1822 = vadd.f32 %v1816, %v1819
        %v1823 = vadd.f32 %v1817, %v1819
        %v1824 = vtanh.pop %v1820
        %v1825 = vtanh.pop %v1821
        %v1826 = vtanh.pop %v1822
        %v1827 = vtanh.pop %v1823
        %s1828 = sld [smem:[#allocation6 + $0x7c]]
        %v1829 = vstv %s1828
        %v1830 = vmul.f32 %v446, %v1829
        %v1831 = vmul.f32 %v447, %v1829
        %v1832 = vmul.f32 %v448, %v1829
        %v1833 = vmul.f32 %v449, %v1829
        %s1834 = sld [smem:[#allocation6 + $0x86]]
        %v1835 = vstv %s1834
        %v1836 = vmul.f32 %v552, %v1835
        %v1837 = vmul.f32 %v553, %v1835
        %v1838 = vmul.f32 %v554, %v1835
        %v1839 = vmul.f32 %v555, %v1835
        %v1840 = vadd.f32 %v1830, %v1836
        %v1841 = vadd.f32 %v1831, %v1837
        %v1842 = vadd.f32 %v1832, %v1838
        %v1843 = vadd.f32 %v1833, %v1839
        %s1844 = sld [smem:[#allocation6 + $0x90]]
        %v1845 = vstv %s1844
        %v1846 = vmul.f32 %v658, %v1845
        %v1847 = vmul.f32 %v659, %v1845
        %v1848 = vmul.f32 %v660, %v1845
        %v1849 = vmul.f32 %v661, %v1845
        %v1850 = vadd.f32 %v1840, %v1846
        %v1851 = vadd.f32 %v1841, %v1847
        %v1852 = vadd.f32 %v1842, %v1848
        %v1853 = vadd.f32 %v1843, %v1849
        %s1854 = sld [smem:[#allocation6 + $0x9a]]
        %v1855 = vstv %s1854
        %v1856 = vmul.f32 %v764, %v1855
        %v1857 = vmul.f32 %v765, %v1855
        %v1858 = vmul.f32 %v766, %v1855
        %v1859 = vmul.f32 %v767, %v1855
        %v1860 = vadd.f32 %v1850, %v1856
        %v1861 = vadd.f32 %v1851, %v1857
        %v1862 = vadd.f32 %v1852, %v1858
        %v1863 = vadd.f32 %v1853, %v1859
        %s1864 = sld [smem:[#allocation6 + $0xa4]]
        %v1865 = vstv %s1864
        %v1866 = vmul.f32 %v870, %v1865
        %v1867 = vmul.f32 %v871, %v1865
        %v1868 = vmul.f32 %v872, %v1865
        %v1869 = vmul.f32 %v873, %v1865
        %v1870 = vadd.f32 %v1860, %v1866
        %v1871 = vadd.f32 %v1861, %v1867
        %v1872 = vadd.f32 %v1862, %v1868
        %v1873 = vadd.f32 %v1863, %v1869
        %s1874 = sld [smem:[#allocation6 + $0xae]]
        %v1875 = vstv %s1874
        %v1876 = vmul.f32 %v976, %v1875
        %v1877 = vmul.f32 %v977, %v1875
        %v1878 = vmul.f32 %v978, %v1875
        %v1879 = vmul.f32 %v979, %v1875
        %v1880 = vadd.f32 %v1870, %v1876
        %v1881 = vadd.f32 %v1871, %v1877
        %v1882 = vadd.f32 %v1872, %v1878
        %v1883 = vadd.f32 %v1873, %v1879
        %s1884 = sld [smem:[#allocation6 + $0xb8]]
        %v1885 = vstv %s1884
        %v1886 = vmul.f32 %v1082, %v1885
        %v1887 = vmul.f32 %v1083, %v1885
        %v1888 = vmul.f32 %v1084, %v1885
        %v1889 = vmul.f32 %v1085, %v1885
        %v1890 = vadd.f32 %v1880, %v1886
        %v1891 = vadd.f32 %v1881, %v1887
        %v1892 = vadd.f32 %v1882, %v1888
        %v1893 = vadd.f32 %v1883, %v1889
        %s1894 = sld [smem:[#allocation6 + $0xc2]]
        %v1895 = vstv %s1894
        %v1896 = vmul.f32 %v1188, %v1895
        %v1897 = vmul.f32 %v1189, %v1895
        %v1898 = vmul.f32 %v1190, %v1895
        %v1899 = vmul.f32 %v1191, %v1895
        %v1900 = vadd.f32 %v1890, %v1896
        %v1901 = vadd.f32 %v1891, %v1897
        %v1902 = vadd.f32 %v1892, %v1898
        %v1903 = vadd.f32 %v1893, %v1899
        %s1904 = sld [smem:[#allocation6 + $0xcc]]
        %v1905 = vstv %s1904
        %v1906 = vmul.f32 %v1294, %v1905
        %v1907 = vmul.f32 %v1295, %v1905
        %v1908 = vmul.f32 %v1296, %v1905
        %v1909 = vmul.f32 %v1297, %v1905
        %v1910 = vadd.f32 %v1900, %v1906
        %v1911 = vadd.f32 %v1901, %v1907
        %v1912 = vadd.f32 %v1902, %v1908
        %v1913 = vadd.f32 %v1903, %v1909
        %s1914 = sld [smem:[#allocation6 + $0xd6]]
        %v1915 = vstv %s1914
        %v1916 = vmul.f32 %v1400, %v1915
        %v1917 = vmul.f32 %v1401, %v1915
        %v1918 = vmul.f32 %v1402, %v1915
        %v1919 = vmul.f32 %v1403, %v1915
        %v1920 = vadd.f32 %v1910, %v1916
        %v1921 = vadd.f32 %v1911, %v1917
        %v1922 = vadd.f32 %v1912, %v1918
        %v1923 = vadd.f32 %v1913, %v1919
        %s1924 = sld [smem:[#allocation6 + $0x216]]
        %v1925 = vstv %s1924
        %v1926 = vadd.f32 %v1920, %v1925
        %v1927 = vadd.f32 %v1921, %v1925
        %v1928 = vadd.f32 %v1922, %v1925
        %v1929 = vadd.f32 %v1923, %v1925
        %v1930 = vtanh.pop %v1926
        %v1931 = vtanh.pop %v1927
        %v1932 = vtanh.pop %v1928
        %v1933 = vtanh.pop %v1929
        %s1934 = sld [smem:[#allocation6 + $0x7d]]
        %v1935 = vstv %s1934
        %v1936 = vmul.f32 %v446, %v1935
        %v1937 = vmul.f32 %v447, %v1935
        %v1938 = vmul.f32 %v448, %v1935
        %v1939 = vmul.f32 %v449, %v1935
        %s1940 = sld [smem:[#allocation6 + $0x87]]
        %v1941 = vstv %s1940
        %v1942 = vmul.f32 %v552, %v1941
        %v1943 = vmul.f32 %v553, %v1941
        %v1944 = vmul.f32 %v554, %v1941
        %v1945 = vmul.f32 %v555, %v1941
        %v1946 = vadd.f32 %v1936, %v1942
        %v1947 = vadd.f32 %v1937, %v1943
        %v1948 = vadd.f32 %v1938, %v1944
        %v1949 = vadd.f32 %v1939, %v1945
        %s1950 = sld [smem:[#allocation6 + $0x91]]
        %v1951 = vstv %s1950
        %v1952 = vmul.f32 %v658, %v1951
        %v1953 = vmul.f32 %v659, %v1951
        %v1954 = vmul.f32 %v660, %v1951
        %v1955 = vmul.f32 %v661, %v1951
        %v1956 = vadd.f32 %v1946, %v1952
        %v1957 = vadd.f32 %v1947, %v1953
        %v1958 = vadd.f32 %v1948, %v1954
        %v1959 = vadd.f32 %v1949, %v1955
        %s1960 = sld [smem:[#allocation6 + $0x9b]]
        %v1961 = vstv %s1960
        %v1962 = vmul.f32 %v764, %v1961
        %v1963 = vmul.f32 %v765, %v1961
        %v1964 = vmul.f32 %v766, %v1961
        %v1965 = vmul.f32 %v767, %v1961
        %v1966 = vadd.f32 %v1956, %v1962
        %v1967 = vadd.f32 %v1957, %v1963
        %v1968 = vadd.f32 %v1958, %v1964
        %v1969 = vadd.f32 %v1959, %v1965
        %s1970 = sld [smem:[#allocation6 + $0xa5]]
        %v1971 = vstv %s1970
        %v1972 = vmul.f32 %v870, %v1971
        %v1973 = vmul.f32 %v871, %v1971
        %v1974 = vmul.f32 %v872, %v1971
        %v1975 = vmul.f32 %v873, %v1971
        %v1976 = vadd.f32 %v1966, %v1972
        %v1977 = vadd.f32 %v1967, %v1973
        %v1978 = vadd.f32 %v1968, %v1974
        %v1979 = vadd.f32 %v1969, %v1975
        %s1980 = sld [smem:[#allocation6 + $0xaf]]
        %v1981 = vstv %s1980
        %v1982 = vmul.f32 %v976, %v1981
        %v1983 = vmul.f32 %v977, %v1981
        %v1984 = vmul.f32 %v978, %v1981
        %v1985 = vmul.f32 %v979, %v1981
        %v1986 = vadd.f32 %v1976, %v1982
        %v1987 = vadd.f32 %v1977, %v1983
        %v1988 = vadd.f32 %v1978, %v1984
        %v1989 = vadd.f32 %v1979, %v1985
        %s1990 = sld [smem:[#allocation6 + $0xb9]]
        %v1991 = vstv %s1990
        %v1992 = vmul.f32 %v1082, %v1991
        %v1993 = vmul.f32 %v1083, %v1991
        %v1994 = vmul.f32 %v1084, %v1991
        %v1995 = vmul.f32 %v1085, %v1991
        %v1996 = vadd.f32 %v1986, %v1992
        %v1997 = vadd.f32 %v1987, %v1993
        %v1998 = vadd.f32 %v1988, %v1994
        %v1999 = vadd.f32 %v1989, %v1995
        %s2000 = sld [smem:[#allocation6 + $0xc3]]
        %v2001 = vstv %s2000
        %v2002 = vmul.f32 %v1188, %v2001
        %v2003 = vmul.f32 %v1189, %v2001
        %v2004 = vmul.f32 %v1190, %v2001
        %v2005 = vmul.f32 %v1191, %v2001
        %v2006 = vadd.f32 %v1996, %v2002
        %v2007 = vadd.f32 %v1997, %v2003
        %v2008 = vadd.f32 %v1998, %v2004
        %v2009 = vadd.f32 %v1999, %v2005
        %s2010 = sld [smem:[#allocation6 + $0xcd]]
        %v2011 = vstv %s2010
        %v2012 = vmul.f32 %v1294, %v2011
        %v2013 = vmul.f32 %v1295, %v2011
        %v2014 = vmul.f32 %v1296, %v2011
        %v2015 = vmul.f32 %v1297, %v2011
        %v2016 = vadd.f32 %v2006, %v2012
        %v2017 = vadd.f32 %v2007, %v2013
        %v2018 = vadd.f32 %v2008, %v2014
        %v2019 = vadd.f32 %v2009, %v2015
        %s2020 = sld [smem:[#allocation6 + $0xd7]]
        %v2021 = vstv %s2020
        %v2022 = vmul.f32 %v1400, %v2021
        %v2023 = vmul.f32 %v1401, %v2021
        %v2024 = vmul.f32 %v1402, %v2021
        %v2025 = vmul.f32 %v1403, %v2021
        %v2026 = vadd.f32 %v2016, %v2022
        %v2027 = vadd.f32 %v2017, %v2023
        %v2028 = vadd.f32 %v2018, %v2024
        %v2029 = vadd.f32 %v2019, %v2025
        %s2030 = sld [smem:[#allocation6 + $0x217]]
        %v2031 = vstv %s2030
        %v2032 = vadd.f32 %v2026, %v2031
        %v2033 = vadd.f32 %v2027, %v2031
        %v2034 = vadd.f32 %v2028, %v2031
        %v2035 = vadd.f32 %v2029, %v2031
        %v2036 = vtanh.pop %v2032
        %v2037 = vtanh.pop %v2033
        %v2038 = vtanh.pop %v2034
        %v2039 = vtanh.pop %v2035
        %s2040 = sld [smem:[#allocation6 + $0x7e]]
        %v2041 = vstv %s2040
        %v2042 = vmul.f32 %v446, %v2041
        %v2043 = vmul.f32 %v447, %v2041
        %v2044 = vmul.f32 %v448, %v2041
        %v2045 = vmul.f32 %v449, %v2041
        %s2046 = sld [smem:[#allocation6 + $0x88]]
        %v2047 = vstv %s2046
        %v2048 = vmul.f32 %v552, %v2047
        %v2049 = vmul.f32 %v553, %v2047
        %v2050 = vmul.f32 %v554, %v2047
        %v2051 = vmul.f32 %v555, %v2047
        %v2052 = vadd.f32 %v2042, %v2048
        %v2053 = vadd.f32 %v2043, %v2049
        %v2054 = vadd.f32 %v2044, %v2050
        %v2055 = vadd.f32 %v2045, %v2051
        %s2056 = sld [smem:[#allocation6 + $0x92]]
        %v2057 = vstv %s2056
        %v2058 = vmul.f32 %v658, %v2057
        %v2059 = vmul.f32 %v659, %v2057
        %v2060 = vmul.f32 %v660, %v2057
        %v2061 = vmul.f32 %v661, %v2057
        %v2062 = vadd.f32 %v2052, %v2058
        %v2063 = vadd.f32 %v2053, %v2059
        %v2064 = vadd.f32 %v2054, %v2060
        %v2065 = vadd.f32 %v2055, %v2061
        %s2066 = sld [smem:[#allocation6 + $0x9c]]
        %v2067 = vstv %s2066
        %v2068 = vmul.f32 %v764, %v2067
        %v2069 = vmul.f32 %v765, %v2067
        %v2070 = vmul.f32 %v766, %v2067
        %v2071 = vmul.f32 %v767, %v2067
        %v2072 = vadd.f32 %v2062, %v2068
        %v2073 = vadd.f32 %v2063, %v2069
        %v2074 = vadd.f32 %v2064, %v2070
        %v2075 = vadd.f32 %v2065, %v2071
        %s2076 = sld [smem:[#allocation6 + $0xa6]]
        %v2077 = vstv %s2076
        %v2078 = vmul.f32 %v870, %v2077
        %v2079 = vmul.f32 %v871, %v2077
        %v2080 = vmul.f32 %v872, %v2077
        %v2081 = vmul.f32 %v873, %v2077
        %v2082 = vadd.f32 %v2072, %v2078
        %v2083 = vadd.f32 %v2073, %v2079
        %v2084 = vadd.f32 %v2074, %v2080
        %v2085 = vadd.f32 %v2075, %v2081
        %s2086 = sld [smem:[#allocation6 + $0xb0]]
        %v2087 = vstv %s2086
        %v2088 = vmul.f32 %v976, %v2087
        %v2089 = vmul.f32 %v977, %v2087
        %v2090 = vmul.f32 %v978, %v2087
        %v2091 = vmul.f32 %v979, %v2087
        %v2092 = vadd.f32 %v2082, %v2088
        %v2093 = vadd.f32 %v2083, %v2089
        %v2094 = vadd.f32 %v2084, %v2090
        %v2095 = vadd.f32 %v2085, %v2091
        %s2096 = sld [smem:[#allocation6 + $0xba]]
        %v2097 = vstv %s2096
        %v2098 = vmul.f32 %v1082, %v2097
        %v2099 = vmul.f32 %v1083, %v2097
        %v2100 = vmul.f32 %v1084, %v2097
        %v2101 = vmul.f32 %v1085, %v2097
        %v2102 = vadd.f32 %v2092, %v2098
        %v2103 = vadd.f32 %v2093, %v2099
        %v2104 = vadd.f32 %v2094, %v2100
        %v2105 = vadd.f32 %v2095, %v2101
        %s2106 = sld [smem:[#allocation6 + $0xc4]]
        %v2107 = vstv %s2106
        %v2108 = vmul.f32 %v1188, %v2107
        %v2109 = vmul.f32 %v1189, %v2107
        %v2110 = vmul.f32 %v1190, %v2107
        %v2111 = vmul.f32 %v1191, %v2107
        %v2112 = vadd.f32 %v2102, %v2108
        %v2113 = vadd.f32 %v2103, %v2109
        %v2114 = vadd.f32 %v2104, %v2110
        %v2115 = vadd.f32 %v2105, %v2111
        %s2116 = sld [smem:[#allocation6 + $0xce]]
        %v2117 = vstv %s2116
        %v2118 = vmul.f32 %v1294, %v2117
        %v2119 = vmul.f32 %v1295, %v2117
        %v2120 = vmul.f32 %v1296, %v2117
        %v2121 = vmul.f32 %v1297, %v2117
        %v2122 = vadd.f32 %v2112, %v2118
        %v2123 = vadd.f32 %v2113, %v2119
        %v2124 = vadd.f32 %v2114, %v2120
        %v2125 = vadd.f32 %v2115, %v2121
        %s2126 = sld [smem:[#allocation6 + $0xd8]]
        %v2127 = vstv %s2126
        %v2128 = vmul.f32 %v1400, %v2127
        %v2129 = vmul.f32 %v1401, %v2127
        %v2130 = vmul.f32 %v1402, %v2127
        %v2131 = vmul.f32 %v1403, %v2127
        %v2132 = vadd.f32 %v2122, %v2128
        %v2133 = vadd.f32 %v2123, %v2129
        %v2134 = vadd.f32 %v2124, %v2130
        %v2135 = vadd.f32 %v2125, %v2131
        %s2136 = sld [smem:[#allocation6 + $0x218]]
        %v2137 = vstv %s2136
        %v2138 = vadd.f32 %v2132, %v2137
        %v2139 = vadd.f32 %v2133, %v2137
        %v2140 = vadd.f32 %v2134, %v2137
        %v2141 = vadd.f32 %v2135, %v2137
        %v2142 = vtanh.pop %v2138
        %v2143 = vtanh.pop %v2139
        %v2144 = vtanh.pop %v2140
        %v2145 = vtanh.pop %v2141
        %s2146 = sld [smem:[#allocation6 + $0x7f]]
        %v2147 = vstv %s2146
        %v2148 = vmul.f32 %v446, %v2147
        %v2149 = vmul.f32 %v447, %v2147
        %v2150 = vmul.f32 %v448, %v2147
        %v2151 = vmul.f32 %v449, %v2147
        %s2152 = sld [smem:[#allocation6 + $0x89]]
        %v2153 = vstv %s2152
        %v2154 = vmul.f32 %v552, %v2153
        %v2155 = vmul.f32 %v553, %v2153
        %v2156 = vmul.f32 %v554, %v2153
        %v2157 = vmul.f32 %v555, %v2153
        %v2158 = vadd.f32 %v2148, %v2154
        %v2159 = vadd.f32 %v2149, %v2155
        %v2160 = vadd.f32 %v2150, %v2156
        %v2161 = vadd.f32 %v2151, %v2157
        %s2162 = sld [smem:[#allocation6 + $0x93]]
        %v2163 = vstv %s2162
        %v2164 = vmul.f32 %v658, %v2163
        %v2165 = vmul.f32 %v659, %v2163
        %v2166 = vmul.f32 %v660, %v2163
        %v2167 = vmul.f32 %v661, %v2163
        %v2168 = vadd.f32 %v2158, %v2164
        %v2169 = vadd.f32 %v2159, %v2165
        %v2170 = vadd.f32 %v2160, %v2166
        %v2171 = vadd.f32 %v2161, %v2167
        %s2172 = sld [smem:[#allocation6 + $0x9d]]
        %v2173 = vstv %s2172
        %v2174 = vmul.f32 %v764, %v2173
        %v2175 = vmul.f32 %v765, %v2173
        %v2176 = vmul.f32 %v766, %v2173
        %v2177 = vmul.f32 %v767, %v2173
        %v2178 = vadd.f32 %v2168, %v2174
        %v2179 = vadd.f32 %v2169, %v2175
        %v2180 = vadd.f32 %v2170, %v2176
        %v2181 = vadd.f32 %v2171, %v2177
        %s2182 = sld [smem:[#allocation6 + $0xa7]]
        %v2183 = vstv %s2182
        %v2184 = vmul.f32 %v870, %v2183
        %v2185 = vmul.f32 %v871, %v2183
        %v2186 = vmul.f32 %v872, %v2183
        %v2187 = vmul.f32 %v873, %v2183
        %v2188 = vadd.f32 %v2178, %v2184
        %v2189 = vadd.f32 %v2179, %v2185
        %v2190 = vadd.f32 %v2180, %v2186
        %v2191 = vadd.f32 %v2181, %v2187
        %s2192 = sld [smem:[#allocation6 + $0xb1]]
        %v2193 = vstv %s2192
        %v2194 = vmul.f32 %v976, %v2193
        %v2195 = vmul.f32 %v977, %v2193
        %v2196 = vmul.f32 %v978, %v2193
        %v2197 = vmul.f32 %v979, %v2193
        %v2198 = vadd.f32 %v2188, %v2194
        %v2199 = vadd.f32 %v2189, %v2195
        %v2200 = vadd.f32 %v2190, %v2196
        %v2201 = vadd.f32 %v2191, %v2197
        %s2202 = sld [smem:[#allocation6 + $0xbb]]
        %v2203 = vstv %s2202
        %v2204 = vmul.f32 %v1082, %v2203
        %v2205 = vmul.f32 %v1083, %v2203
        %v2206 = vmul.f32 %v1084, %v2203
        %v2207 = vmul.f32 %v1085, %v2203
        %v2208 = vadd.f32 %v2198, %v2204
        %v2209 = vadd.f32 %v2199, %v2205
        %v2210 = vadd.f32 %v2200, %v2206
        %v2211 = vadd.f32 %v2201, %v2207
        %s2212 = sld [smem:[#allocation6 + $0xc5]]
        %v2213 = vstv %s2212
        %v2214 = vmul.f32 %v1188, %v2213
        %v2215 = vmul.f32 %v1189, %v2213
        %v2216 = vmul.f32 %v1190, %v2213
        %v2217 = vmul.f32 %v1191, %v2213
        %v2218 = vadd.f32 %v2208, %v2214
        %v2219 = vadd.f32 %v2209, %v2215
        %v2220 = vadd.f32 %v2210, %v2216
        %v2221 = vadd.f32 %v2211, %v2217
        %s2222 = sld [smem:[#allocation6 + $0xcf]]
        %v2223 = vstv %s2222
        %v2224 = vmul.f32 %v1294, %v2223
        %v2225 = vmul.f32 %v1295, %v2223
        %v2226 = vmul.f32 %v1296, %v2223
        %v2227 = vmul.f32 %v1297, %v2223
        %v2228 = vadd.f32 %v2218, %v2224
        %v2229 = vadd.f32 %v2219, %v2225
        %v2230 = vadd.f32 %v2220, %v2226
        %v2231 = vadd.f32 %v2221, %v2227
        %s2232 = sld [smem:[#allocation6 + $0xd9]]
        %v2233 = vstv %s2232
        %v2234 = vmul.f32 %v1400, %v2233
        %v2235 = vmul.f32 %v1401, %v2233
        %v2236 = vmul.f32 %v1402, %v2233
        %v2237 = vmul.f32 %v1403, %v2233
        %v2238 = vadd.f32 %v2228, %v2234
        %v2239 = vadd.f32 %v2229, %v2235
        %v2240 = vadd.f32 %v2230, %v2236
        %v2241 = vadd.f32 %v2231, %v2237
        %s2242 = sld [smem:[#allocation6 + $0x219]]
        %v2243 = vstv %s2242
        %v2244 = vadd.f32 %v2238, %v2243
        %v2245 = vadd.f32 %v2239, %v2243
        %v2246 = vadd.f32 %v2240, %v2243
        %v2247 = vadd.f32 %v2241, %v2243
        %v2248 = vtanh.pop %v2244
        %v2249 = vtanh.pop %v2245
        %v2250 = vtanh.pop %v2246
        %v2251 = vtanh.pop %v2247
        %s2252 = sld [smem:[#allocation6 + $0x80]]
        %v2253 = vstv %s2252
        %v2254 = vmul.f32 %v446, %v2253
        %v2255 = vmul.f32 %v447, %v2253
        %v2256 = vmul.f32 %v448, %v2253
        %v2257 = vmul.f32 %v449, %v2253
        %s2258 = sld [smem:[#allocation6 + $0x8a]]
        %v2259 = vstv %s2258
        %v2260 = vmul.f32 %v552, %v2259
        %v2261 = vmul.f32 %v553, %v2259
        %v2262 = vmul.f32 %v554, %v2259
        %v2263 = vmul.f32 %v555, %v2259
        %v2264 = vadd.f32 %v2254, %v2260
        %v2265 = vadd.f32 %v2255, %v2261
        %v2266 = vadd.f32 %v2256, %v2262
        %v2267 = vadd.f32 %v2257, %v2263
        %s2268 = sld [smem:[#allocation6 + $0x94]]
        %v2269 = vstv %s2268
        %v2270 = vmul.f32 %v658, %v2269
        %v2271 = vmul.f32 %v659, %v2269
        %v2272 = vmul.f32 %v660, %v2269
        %v2273 = vmul.f32 %v661, %v2269
        %v2274 = vadd.f32 %v2264, %v2270
        %v2275 = vadd.f32 %v2265, %v2271
        %v2276 = vadd.f32 %v2266, %v2272
        %v2277 = vadd.f32 %v2267, %v2273
        %s2278 = sld [smem:[#allocation6 + $0x9e]]
        %v2279 = vstv %s2278
        %v2280 = vmul.f32 %v764, %v2279
        %v2281 = vmul.f32 %v765, %v2279
        %v2282 = vmul.f32 %v766, %v2279
        %v2283 = vmul.f32 %v767, %v2279
        %v2284 = vadd.f32 %v2274, %v2280
        %v2285 = vadd.f32 %v2275, %v2281
        %v2286 = vadd.f32 %v2276, %v2282
        %v2287 = vadd.f32 %v2277, %v2283
        %s2288 = sld [smem:[#allocation6 + $0xa8]]
        %v2289 = vstv %s2288
        %v2290 = vmul.f32 %v870, %v2289
        %v2291 = vmul.f32 %v871, %v2289
        %v2292 = vmul.f32 %v872, %v2289
        %v2293 = vmul.f32 %v873, %v2289
        %v2294 = vadd.f32 %v2284, %v2290
        %v2295 = vadd.f32 %v2285, %v2291
        %v2296 = vadd.f32 %v2286, %v2292
        %v2297 = vadd.f32 %v2287, %v2293
        %s2298 = sld [smem:[#allocation6 + $0xb2]]
        %v2299 = vstv %s2298
        %v2300 = vmul.f32 %v976, %v2299
        %v2301 = vmul.f32 %v977, %v2299
        %v2302 = vmul.f32 %v978, %v2299
        %v2303 = vmul.f32 %v979, %v2299
        %v2304 = vadd.f32 %v2294, %v2300
        %v2305 = vadd.f32 %v2295, %v2301
        %v2306 = vadd.f32 %v2296, %v2302
        %v2307 = vadd.f32 %v2297, %v2303
        %s2308 = sld [smem:[#allocation6 + $0xbc]]
        %v2309 = vstv %s2308
        %v2310 = vmul.f32 %v1082, %v2309
        %v2311 = vmul.f32 %v1083, %v2309
        %v2312 = vmul.f32 %v1084, %v2309
        %v2313 = vmul.f32 %v1085, %v2309
        %v2314 = vadd.f32 %v2304, %v2310
        %v2315 = vadd.f32 %v2305, %v2311
        %v2316 = vadd.f32 %v2306, %v2312
        %v2317 = vadd.f32 %v2307, %v2313
        %s2318 = sld [smem:[#allocation6 + $0xc6]]
        %v2319 = vstv %s2318
        %v2320 = vmul.f32 %v1188, %v2319
        %v2321 = vmul.f32 %v1189, %v2319
        %v2322 = vmul.f32 %v1190, %v2319
        %v2323 = vmul.f32 %v1191, %v2319
        %v2324 = vadd.f32 %v2314, %v2320
        %v2325 = vadd.f32 %v2315, %v2321
        %v2326 = vadd.f32 %v2316, %v2322
        %v2327 = vadd.f32 %v2317, %v2323
        %s2328 = sld [smem:[#allocation6 + $0xd0]]
        %v2329 = vstv %s2328
        %v2330 = vmul.f32 %v1294, %v2329
        %v2331 = vmul.f32 %v1295, %v2329
        %v2332 = vmul.f32 %v1296, %v2329
        %v2333 = vmul.f32 %v1297, %v2329
        %v2334 = vadd.f32 %v2324, %v2330
        %v2335 = vadd.f32 %v2325, %v2331
        %v2336 = vadd.f32 %v2326, %v2332
        %v2337 = vadd.f32 %v2327, %v2333
        %s2338 = sld [smem:[#allocation6 + $0xda]]
        %v2339 = vstv %s2338
        %v2340 = vmul.f32 %v1400, %v2339
        %v2341 = vmul.f32 %v1401, %v2339
        %v2342 = vmul.f32 %v1402, %v2339
        %v2343 = vmul.f32 %v1403, %v2339
        %v2344 = vadd.f32 %v2334, %v2340
        %v2345 = vadd.f32 %v2335, %v2341
        %v2346 = vadd.f32 %v2336, %v2342
        %v2347 = vadd.f32 %v2337, %v2343
        %s2348 = sld [smem:[#allocation6 + $0x21a]]
        %v2349 = vstv %s2348
        %v2350 = vadd.f32 %v2344, %v2349
        %v2351 = vadd.f32 %v2345, %v2349
        %v2352 = vadd.f32 %v2346, %v2349
        %v2353 = vadd.f32 %v2347, %v2349
        %v2354 = vtanh.pop %v2350
        %v2355 = vtanh.pop %v2351
        %v2356 = vtanh.pop %v2352
        %v2357 = vtanh.pop %v2353
        %s2358 = sld [smem:[#allocation6 + $0x81]]
        %v2359 = vstv %s2358
        %v2360 = vmul.f32 %v446, %v2359
        %v2361 = vmul.f32 %v447, %v2359
        %v2362 = vmul.f32 %v448, %v2359
        %v2363 = vmul.f32 %v449, %v2359
        %s2364 = sld [smem:[#allocation6 + $0x8b]]
        %v2365 = vstv %s2364
        %v2366 = vmul.f32 %v552, %v2365
        %v2367 = vmul.f32 %v553, %v2365
        %v2368 = vmul.f32 %v554, %v2365
        %v2369 = vmul.f32 %v555, %v2365
        %v2370 = vadd.f32 %v2360, %v2366
        %v2371 = vadd.f32 %v2361, %v2367
        %v2372 = vadd.f32 %v2362, %v2368
        %v2373 = vadd.f32 %v2363, %v2369
        %s2374 = sld [smem:[#allocation6 + $0x95]]
        %v2375 = vstv %s2374
        %v2376 = vmul.f32 %v658, %v2375
        %v2377 = vmul.f32 %v659, %v2375
        %v2378 = vmul.f32 %v660, %v2375
        %v2379 = vmul.f32 %v661, %v2375
        %v2380 = vadd.f32 %v2370, %v2376
        %v2381 = vadd.f32 %v2371, %v2377
        %v2382 = vadd.f32 %v2372, %v2378
        %v2383 = vadd.f32 %v2373, %v2379
        %s2384 = sld [smem:[#allocation6 + $0x9f]]
        %v2385 = vstv %s2384
        %v2386 = vmul.f32 %v764, %v2385
        %v2387 = vmul.f32 %v765, %v2385
        %v2388 = vmul.f32 %v766, %v2385
        %v2389 = vmul.f32 %v767, %v2385
        %v2390 = vadd.f32 %v2380, %v2386
        %v2391 = vadd.f32 %v2381, %v2387
        %v2392 = vadd.f32 %v2382, %v2388
        %v2393 = vadd.f32 %v2383, %v2389
        %s2394 = sld [smem:[#allocation6 + $0xa9]]
        %v2395 = vstv %s2394
        %v2396 = vmul.f32 %v870, %v2395
        %v2397 = vmul.f32 %v871, %v2395
        %v2398 = vmul.f32 %v872, %v2395
        %v2399 = vmul.f32 %v873, %v2395
        %v2400 = vadd.f32 %v2390, %v2396
        %v2401 = vadd.f32 %v2391, %v2397
        %v2402 = vadd.f32 %v2392, %v2398
        %v2403 = vadd.f32 %v2393, %v2399
        %s2404 = sld [smem:[#allocation6 + $0xb3]]
        %v2405 = vstv %s2404
        %v2406 = vmul.f32 %v976, %v2405
        %v2407 = vmul.f32 %v977, %v2405
        %v2408 = vmul.f32 %v978, %v2405
        %v2409 = vmul.f32 %v979, %v2405
        %v2410 = vadd.f32 %v2400, %v2406
        %v2411 = vadd.f32 %v2401, %v2407
        %v2412 = vadd.f32 %v2402, %v2408
        %v2413 = vadd.f32 %v2403, %v2409
        %s2414 = sld [smem:[#allocation6 + $0xbd]]
        %v2415 = vstv %s2414
        %v2416 = vmul.f32 %v1082, %v2415
        %v2417 = vmul.f32 %v1083, %v2415
        %v2418 = vmul.f32 %v1084, %v2415
        %v2419 = vmul.f32 %v1085, %v2415
        %v2420 = vadd.f32 %v2410, %v2416
        %v2421 = vadd.f32 %v2411, %v2417
        %v2422 = vadd.f32 %v2412, %v2418
        %v2423 = vadd.f32 %v2413, %v2419
        %s2424 = sld [smem:[#allocation6 + $0xc7]]
        %v2425 = vstv %s2424
        %v2426 = vmul.f32 %v1188, %v2425
        %v2427 = vmul.f32 %v1189, %v2425
        %v2428 = vmul.f32 %v1190, %v2425
        %v2429 = vmul.f32 %v1191, %v2425
        %v2430 = vadd.f32 %v2420, %v2426
        %v2431 = vadd.f32 %v2421, %v2427
        %v2432 = vadd.f32 %v2422, %v2428
        %v2433 = vadd.f32 %v2423, %v2429
        %s2434 = sld [smem:[#allocation6 + $0xd1]]
        %v2435 = vstv %s2434
        %v2436 = vmul.f32 %v1294, %v2435
        %v2437 = vmul.f32 %v1295, %v2435
        %v2438 = vmul.f32 %v1296, %v2435
        %v2439 = vmul.f32 %v1297, %v2435
        %v2440 = vadd.f32 %v2430, %v2436
        %v2441 = vadd.f32 %v2431, %v2437
        %v2442 = vadd.f32 %v2432, %v2438
        %v2443 = vadd.f32 %v2433, %v2439
        %s2444 = sld [smem:[#allocation6 + $0xdb]]
        %v2445 = vstv %s2444
        %v2446 = vmul.f32 %v1400, %v2445
        %v2447 = vmul.f32 %v1401, %v2445
        %v2448 = vmul.f32 %v1402, %v2445
        %v2449 = vmul.f32 %v1403, %v2445
        %v2450 = vadd.f32 %v2440, %v2446
        %v2451 = vadd.f32 %v2441, %v2447
        %v2452 = vadd.f32 %v2442, %v2448
        %v2453 = vadd.f32 %v2443, %v2449
        %s2454 = sld [smem:[#allocation6 + $0x21b]]
        %v2455 = vstv %s2454
        %v2456 = vadd.f32 %v2450, %v2455
        %v2457 = vadd.f32 %v2451, %v2455
        %v2458 = vadd.f32 %v2452, %v2455
        %v2459 = vadd.f32 %v2453, %v2455
        %v2460 = vtanh.pop %v2456
        %v2461 = vtanh.pop %v2457
        %v2462 = vtanh.pop %v2458
        %v2463 = vtanh.pop %v2459
        %s2464 = sld [smem:[#allocation6 + $0xdc]]
        %v2465 = vstv %s2464
        %v2466 = vmul.f32 %v1506, %v2465
        %v2467 = vmul.f32 %v1507, %v2465
        %v2468 = vmul.f32 %v1508, %v2465
        %v2469 = vmul.f32 %v1509, %v2465
        %s2470 = sld [smem:[#allocation6 + $0xe6]]
        %v2471 = vstv %s2470
        %v2472 = vmul.f32 %v1612, %v2471
        %v2473 = vmul.f32 %v1613, %v2471
        %v2474 = vmul.f32 %v1614, %v2471
        %v2475 = vmul.f32 %v1615, %v2471
        %v2476 = vadd.f32 %v2466, %v2472
        %v2477 = vadd.f32 %v2467, %v2473
        %v2478 = vadd.f32 %v2468, %v2474
        %v2479 = vadd.f32 %v2469, %v2475
        %s2480 = sld [smem:[#allocation6 + $0xf0]]
        %v2481 = vstv %s2480
        %v2482 = vmul.f32 %v1718, %v2481
        %v2483 = vmul.f32 %v1719, %v2481
        %v2484 = vmul.f32 %v1720, %v2481
        %v2485 = vmul.f32 %v1721, %v2481
        %v2486 = vadd.f32 %v2476, %v2482
        %v2487 = vadd.f32 %v2477, %v2483
        %v2488 = vadd.f32 %v2478, %v2484
        %v2489 = vadd.f32 %v2479, %v2485
        %s2490 = sld [smem:[#allocation6 + $0xfa]]
        %v2491 = vstv %s2490
        %v2492 = vmul.f32 %v1824, %v2491
        %v2493 = vmul.f32 %v1825, %v2491
        %v2494 = vmul.f32 %v1826, %v2491
        %v2495 = vmul.f32 %v1827, %v2491
        %v2496 = vadd.f32 %v2486, %v2492
        %v2497 = vadd.f32 %v2487, %v2493
        %v2498 = vadd.f32 %v2488, %v2494
        %v2499 = vadd.f32 %v2489, %v2495
        %s2500 = sld [smem:[#allocation6 + $0x104]]
        %v2501 = vstv %s2500
        %v2502 = vmul.f32 %v1930, %v2501
        %v2503 = vmul.f32 %v1931, %v2501
        %v2504 = vmul.f32 %v1932, %v2501
        %v2505 = vmul.f32 %v1933, %v2501
        %v2506 = vadd.f32 %v2496, %v2502
        %v2507 = vadd.f32 %v2497, %v2503
        %v2508 = vadd.f32 %v2498, %v2504
        %v2509 = vadd.f32 %v2499, %v2505
        %s2510 = sld [smem:[#allocation6 + $0x10e]]
        %v2511 = vstv %s2510
        %v2512 = vmul.f32 %v2036, %v2511
        %v2513 = vmul.f32 %v2037, %v2511
        %v2514 = vmul.f32 %v2038, %v2511
        %v2515 = vmul.f32 %v2039, %v2511
        %v2516 = vadd.f32 %v2506, %v2512
        %v2517 = vadd.f32 %v2507, %v2513
        %v2518 = vadd.f32 %v2508, %v2514
        %v2519 = vadd.f32 %v2509, %v2515
        %s2520 = sld [smem:[#allocation6 + $0x118]]
        %v2521 = vstv %s2520
        %v2522 = vmul.f32 %v2142, %v2521
        %v2523 = vmul.f32 %v2143, %v2521
        %v2524 = vmul.f32 %v2144, %v2521
        %v2525 = vmul.f32 %v2145, %v2521
        %v2526 = vadd.f32 %v2516, %v2522
        %v2527 = vadd.f32 %v2517, %v2523
        %v2528 = vadd.f32 %v2518, %v2524
        %v2529 = vadd.f32 %v2519, %v2525
        %s2530 = sld [smem:[#allocation6 + $0x122]]
        %v2531 = vstv %s2530
        %v2532 = vmul.f32 %v2248, %v2531
        %v2533 = vmul.f32 %v2249, %v2531
        %v2534 = vmul.f32 %v2250, %v2531
        %v2535 = vmul.f32 %v2251, %v2531
        %v2536 = vadd.f32 %v2526, %v2532
        %v2537 = vadd.f32 %v2527, %v2533
        %v2538 = vadd.f32 %v2528, %v2534
        %v2539 = vadd.f32 %v2529, %v2535
        %s2540 = sld [smem:[#allocation6 + $0x12c]]
        %v2541 = vstv %s2540
        %v2542 = vmul.f32 %v2354, %v2541
        %v2543 = vmul.f32 %v2355, %v2541
        %v2544 = vmul.f32 %v2356, %v2541
        %v2545 = vmul.f32 %v2357, %v2541
        %v2546 = vadd.f32 %v2536, %v2542
        %v2547 = vadd.f32 %v2537, %v2543
        %v2548 = vadd.f32 %v2538, %v2544
        %v2549 = vadd.f32 %v2539, %v2545
        %s2550 = sld [smem:[#allocation6 + $0x136]]
        %v2551 = vstv %s2550
        %v2552 = vmul.f32 %v2460, %v2551
        %v2553 = vmul.f32 %v2461, %v2551
        %v2554 = vmul.f32 %v2462, %v2551
        %v2555 = vmul.f32 %v2463, %v2551
        %v2556 = vadd.f32 %v2546, %v2552
        %v2557 = vadd.f32 %v2547, %v2553
        %v2558 = vadd.f32 %v2548, %v2554
        %v2559 = vadd.f32 %v2549, %v2555
        %s2560 = sld [smem:[#allocation6 + $0x21c]]
        %v2561 = vstv %s2560
        %v2562 = vadd.f32 %v2556, %v2561
        %v2563 = vadd.f32 %v2557, %v2561
        %v2564 = vadd.f32 %v2558, %v2561
        %v2565 = vadd.f32 %v2559, %v2561
        %v2566 = vtanh.pop %v2562
        %v2567 = vtanh.pop %v2563
        %v2568 = vtanh.pop %v2564
        %v2569 = vtanh.pop %v2565
        %s2570 = sld [smem:[#allocation6 + $0xdd]]
        %v2571 = vstv %s2570
        %v2572 = vmul.f32 %v1506, %v2571
        %v2573 = vmul.f32 %v1507, %v2571
        %v2574 = vmul.f32 %v1508, %v2571
        %v2575 = vmul.f32 %v1509, %v2571
        %s2576 = sld [smem:[#allocation6 + $0xe7]]
        %v2577 = vstv %s2576
        %v2578 = vmul.f32 %v1612, %v2577
        %v2579 = vmul.f32 %v1613, %v2577
        %v2580 = vmul.f32 %v1614, %v2577
        %v2581 = vmul.f32 %v1615, %v2577
        %v2582 = vadd.f32 %v2572, %v2578
        %v2583 = vadd.f32 %v2573, %v2579
        %v2584 = vadd.f32 %v2574, %v2580
        %v2585 = vadd.f32 %v2575, %v2581
        %s2586 = sld [smem:[#allocation6 + $0xf1]]
        %v2587 = vstv %s2586
        %v2588 = vmul.f32 %v1718, %v2587
        %v2589 = vmul.f32 %v1719, %v2587
        %v2590 = vmul.f32 %v1720, %v2587
        %v2591 = vmul.f32 %v1721, %v2587
        %v2592 = vadd.f32 %v2582, %v2588
        %v2593 = vadd.f32 %v2583, %v2589
        %v2594 = vadd.f32 %v2584, %v2590
        %v2595 = vadd.f32 %v2585, %v2591
        %s2596 = sld [smem:[#allocation6 + $0xfb]]
        %v2597 = vstv %s2596
        %v2598 = vmul.f32 %v1824, %v2597
        %v2599 = vmul.f32 %v1825, %v2597
        %v2600 = vmul.f32 %v1826, %v2597
        %v2601 = vmul.f32 %v1827, %v2597
        %v2602 = vadd.f32 %v2592, %v2598
        %v2603 = vadd.f32 %v2593, %v2599
        %v2604 = vadd.f32 %v2594, %v2600
        %v2605 = vadd.f32 %v2595, %v2601
        %s2606 = sld [smem:[#allocation6 + $0x105]]
        %v2607 = vstv %s2606
        %v2608 = vmul.f32 %v1930, %v2607
        %v2609 = vmul.f32 %v1931, %v2607
        %v2610 = vmul.f32 %v1932, %v2607
        %v2611 = vmul.f32 %v1933, %v2607
        %v2612 = vadd.f32 %v2602, %v2608
        %v2613 = vadd.f32 %v2603, %v2609
        %v2614 = vadd.f32 %v2604, %v2610
        %v2615 = vadd.f32 %v2605, %v2611
        %s2616 = sld [smem:[#allocation6 + $0x10f]]
        %v2617 = vstv %s2616
        %v2618 = vmul.f32 %v2036, %v2617
        %v2619 = vmul.f32 %v2037, %v2617
        %v2620 = vmul.f32 %v2038, %v2617
        %v2621 = vmul.f32 %v2039, %v2617
        %v2622 = vadd.f32 %v2612, %v2618
        %v2623 = vadd.f32 %v2613, %v2619
        %v2624 = vadd.f32 %v2614, %v2620
        %v2625 = vadd.f32 %v2615, %v2621
        %s2626 = sld [smem:[#allocation6 + $0x119]]
        %v2627 = vstv %s2626
        %v2628 = vmul.f32 %v2142, %v2627
        %v2629 = vmul.f32 %v2143, %v2627
        %v2630 = vmul.f32 %v2144, %v2627
        %v2631 = vmul.f32 %v2145, %v2627
        %v2632 = vadd.f32 %v2622, %v2628
        %v2633 = vadd.f32 %v2623, %v2629
        %v2634 = vadd.f32 %v2624, %v2630
        %v2635 = vadd.f32 %v2625, %v2631
        %s2636 = sld [smem:[#allocation6 + $0x123]]
        %v2637 = vstv %s2636
        %v2638 = vmul.f32 %v2248, %v2637
        %v2639 = vmul.f32 %v2249, %v2637
        %v2640 = vmul.f32 %v2250, %v2637
        %v2641 = vmul.f32 %v2251, %v2637
        %v2642 = vadd.f32 %v2632, %v2638
        %v2643 = vadd.f32 %v2633, %v2639
        %v2644 = vadd.f32 %v2634, %v2640
        %v2645 = vadd.f32 %v2635, %v2641
        %s2646 = sld [smem:[#allocation6 + $0x12d]]
        %v2647 = vstv %s2646
        %v2648 = vmul.f32 %v2354, %v2647
        %v2649 = vmul.f32 %v2355, %v2647
        %v2650 = vmul.f32 %v2356, %v2647
        %v2651 = vmul.f32 %v2357, %v2647
        %v2652 = vadd.f32 %v2642, %v2648
        %v2653 = vadd.f32 %v2643, %v2649
        %v2654 = vadd.f32 %v2644, %v2650
        %v2655 = vadd.f32 %v2645, %v2651
        %s2656 = sld [smem:[#allocation6 + $0x137]]
        %v2657 = vstv %s2656
        %v2658 = vmul.f32 %v2460, %v2657
        %v2659 = vmul.f32 %v2461, %v2657
        %v2660 = vmul.f32 %v2462, %v2657
        %v2661 = vmul.f32 %v2463, %v2657
        %v2662 = vadd.f32 %v2652, %v2658
        %v2663 = vadd.f32 %v2653, %v2659
        %v2664 = vadd.f32 %v2654, %v2660
        %v2665 = vadd.f32 %v2655, %v2661
        %s2666 = sld [smem:[#allocation6 + $0x21d]]
        %v2667 = vstv %s2666
        %v2668 = vadd.f32 %v2662, %v2667
        %v2669 = vadd.f32 %v2663, %v2667
        %v2670 = vadd.f32 %v2664, %v2667
        %v2671 = vadd.f32 %v2665, %v2667
        %v2672 = vtanh.pop %v2668
        %v2673 = vtanh.pop %v2669
        %v2674 = vtanh.pop %v2670
        %v2675 = vtanh.pop %v2671
        %s2676 = sld [smem:[#allocation6 + $0xde]]
        %v2677 = vstv %s2676
        %v2678 = vmul.f32 %v1506, %v2677
        %v2679 = vmul.f32 %v1507, %v2677
        %v2680 = vmul.f32 %v1508, %v2677
        %v2681 = vmul.f32 %v1509, %v2677
        %s2682 = sld [smem:[#allocation6 + $0xe8]]
        %v2683 = vstv %s2682
        %v2684 = vmul.f32 %v1612, %v2683
        %v2685 = vmul.f32 %v1613, %v2683
        %v2686 = vmul.f32 %v1614, %v2683
        %v2687 = vmul.f32 %v1615, %v2683
        %v2688 = vadd.f32 %v2678, %v2684
        %v2689 = vadd.f32 %v2679, %v2685
        %v2690 = vadd.f32 %v2680, %v2686
        %v2691 = vadd.f32 %v2681, %v2687
        %s2692 = sld [smem:[#allocation6 + $0xf2]]
        %v2693 = vstv %s2692
        %v2694 = vmul.f32 %v1718, %v2693
        %v2695 = vmul.f32 %v1719, %v2693
        %v2696 = vmul.f32 %v1720, %v2693
        %v2697 = vmul.f32 %v1721, %v2693
        %v2698 = vadd.f32 %v2688, %v2694
        %v2699 = vadd.f32 %v2689, %v2695
        %v2700 = vadd.f32 %v2690, %v2696
        %v2701 = vadd.f32 %v2691, %v2697
        %s2702 = sld [smem:[#allocation6 + $0xfc]]
        %v2703 = vstv %s2702
        %v2704 = vmul.f32 %v1824, %v2703
        %v2705 = vmul.f32 %v1825, %v2703
        %v2706 = vmul.f32 %v1826, %v2703
        %v2707 = vmul.f32 %v1827, %v2703
        %v2708 = vadd.f32 %v2698, %v2704
        %v2709 = vadd.f32 %v2699, %v2705
        %v2710 = vadd.f32 %v2700, %v2706
        %v2711 = vadd.f32 %v2701, %v2707
        %s2712 = sld [smem:[#allocation6 + $0x106]]
        %v2713 = vstv %s2712
        %v2714 = vmul.f32 %v1930, %v2713
        %v2715 = vmul.f32 %v1931, %v2713
        %v2716 = vmul.f32 %v1932, %v2713
        %v2717 = vmul.f32 %v1933, %v2713
        %v2718 = vadd.f32 %v2708, %v2714
        %v2719 = vadd.f32 %v2709, %v2715
        %v2720 = vadd.f32 %v2710, %v2716
        %v2721 = vadd.f32 %v2711, %v2717
        %s2722 = sld [smem:[#allocation6 + $0x110]]
        %v2723 = vstv %s2722
        %v2724 = vmul.f32 %v2036, %v2723
        %v2725 = vmul.f32 %v2037, %v2723
        %v2726 = vmul.f32 %v2038, %v2723
        %v2727 = vmul.f32 %v2039, %v2723
        %v2728 = vadd.f32 %v2718, %v2724
        %v2729 = vadd.f32 %v2719, %v2725
        %v2730 = vadd.f32 %v2720, %v2726
        %v2731 = vadd.f32 %v2721, %v2727
        %s2732 = sld [smem:[#allocation6 + $0x11a]]
        %v2733 = vstv %s2732
        %v2734 = vmul.f32 %v2142, %v2733
        %v2735 = vmul.f32 %v2143, %v2733
        %v2736 = vmul.f32 %v2144, %v2733
        %v2737 = vmul.f32 %v2145, %v2733
        %v2738 = vadd.f32 %v2728, %v2734
        %v2739 = vadd.f32 %v2729, %v2735
        %v2740 = vadd.f32 %v2730, %v2736
        %v2741 = vadd.f32 %v2731, %v2737
        %s2742 = sld [smem:[#allocation6 + $0x124]]
        %v2743 = vstv %s2742
        %v2744 = vmul.f32 %v2248, %v2743
        %v2745 = vmul.f32 %v2249, %v2743
        %v2746 = vmul.f32 %v2250, %v2743
        %v2747 = vmul.f32 %v2251, %v2743
        %v2748 = vadd.f32 %v2738, %v2744
        %v2749 = vadd.f32 %v2739, %v2745
        %v2750 = vadd.f32 %v2740, %v2746
        %v2751 = vadd.f32 %v2741, %v2747
        %s2752 = sld [smem:[#allocation6 + $0x12e]]
        %v2753 = vstv %s2752
        %v2754 = vmul.f32 %v2354, %v2753
        %v2755 = vmul.f32 %v2355, %v2753
        %v2756 = vmul.f32 %v2356, %v2753
        %v2757 = vmul.f32 %v2357, %v2753
        %v2758 = vadd.f32 %v2748, %v2754
        %v2759 = vadd.f32 %v2749, %v2755
        %v2760 = vadd.f32 %v2750, %v2756
        %v2761 = vadd.f32 %v2751, %v2757
        %s2762 = sld [smem:[#allocation6 + $0x138]]
        %v2763 = vstv %s2762
        %v2764 = vmul.f32 %v2460, %v2763
        %v2765 = vmul.f32 %v2461, %v2763
        %v2766 = vmul.f32 %v2462, %v2763
        %v2767 = vmul.f32 %v2463, %v2763
        %v2768 = vadd.f32 %v2758, %v2764
        %v2769 = vadd.f32 %v2759, %v2765
        %v2770 = vadd.f32 %v2760, %v2766
        %v2771 = vadd.f32 %v2761, %v2767
        %s2772 = sld [smem:[#allocation6 + $0x21e]]
        %v2773 = vstv %s2772
        %v2774 = vadd.f32 %v2768, %v2773
        %v2775 = vadd.f32 %v2769, %v2773
        %v2776 = vadd.f32 %v2770, %v2773
        %v2777 = vadd.f32 %v2771, %v2773
        %v2778 = vtanh.pop %v2774
        %v2779 = vtanh.pop %v2775
        %v2780 = vtanh.pop %v2776
        %v2781 = vtanh.pop %v2777
        %s2782 = sld [smem:[#allocation6 + $0xdf]]
        %v2783 = vstv %s2782
        %v2784 = vmul.f32 %v1506, %v2783
        %v2785 = vmul.f32 %v1507, %v2783
        %v2786 = vmul.f32 %v1508, %v2783
        %v2787 = vmul.f32 %v1509, %v2783
        %s2788 = sld [smem:[#allocation6 + $0xe9]]
        %v2789 = vstv %s2788
        %v2790 = vmul.f32 %v1612, %v2789
        %v2791 = vmul.f32 %v1613, %v2789
        %v2792 = vmul.f32 %v1614, %v2789
        %v2793 = vmul.f32 %v1615, %v2789
        %v2794 = vadd.f32 %v2784, %v2790
        %v2795 = vadd.f32 %v2785, %v2791
        %v2796 = vadd.f32 %v2786, %v2792
        %v2797 = vadd.f32 %v2787, %v2793
        %s2798 = sld [smem:[#allocation6 + $0xf3]]
        %v2799 = vstv %s2798
        %v2800 = vmul.f32 %v1718, %v2799
        %v2801 = vmul.f32 %v1719, %v2799
        %v2802 = vmul.f32 %v1720, %v2799
        %v2803 = vmul.f32 %v1721, %v2799
        %v2804 = vadd.f32 %v2794, %v2800
        %v2805 = vadd.f32 %v2795, %v2801
        %v2806 = vadd.f32 %v2796, %v2802
        %v2807 = vadd.f32 %v2797, %v2803
        %s2808 = sld [smem:[#allocation6 + $0xfd]]
        %v2809 = vstv %s2808
        %v2810 = vmul.f32 %v1824, %v2809
        %v2811 = vmul.f32 %v1825, %v2809
        %v2812 = vmul.f32 %v1826, %v2809
        %v2813 = vmul.f32 %v1827, %v2809
        %v2814 = vadd.f32 %v2804, %v2810
        %v2815 = vadd.f32 %v2805, %v2811
        %v2816 = vadd.f32 %v2806, %v2812
        %v2817 = vadd.f32 %v2807, %v2813
        %s2818 = sld [smem:[#allocation6 + $0x107]]
        %v2819 = vstv %s2818
        %v2820 = vmul.f32 %v1930, %v2819
        %v2821 = vmul.f32 %v1931, %v2819
        %v2822 = vmul.f32 %v1932, %v2819
        %v2823 = vmul.f32 %v1933, %v2819
        %v2824 = vadd.f32 %v2814, %v2820
        %v2825 = vadd.f32 %v2815, %v2821
        %v2826 = vadd.f32 %v2816, %v2822
        %v2827 = vadd.f32 %v2817, %v2823
        %s2828 = sld [smem:[#allocation6 + $0x111]]
        %v2829 = vstv %s2828
        %v2830 = vmul.f32 %v2036, %v2829
        %v2831 = vmul.f32 %v2037, %v2829
        %v2832 = vmul.f32 %v2038, %v2829
        %v2833 = vmul.f32 %v2039, %v2829
        %v2834 = vadd.f32 %v2824, %v2830
        %v2835 = vadd.f32 %v2825, %v2831
        %v2836 = vadd.f32 %v2826, %v2832
        %v2837 = vadd.f32 %v2827, %v2833
        %s2838 = sld [smem:[#allocation6 + $0x11b]]
        %v2839 = vstv %s2838
        %v2840 = vmul.f32 %v2142, %v2839
        %v2841 = vmul.f32 %v2143, %v2839
        %v2842 = vmul.f32 %v2144, %v2839
        %v2843 = vmul.f32 %v2145, %v2839
        %v2844 = vadd.f32 %v2834, %v2840
        %v2845 = vadd.f32 %v2835, %v2841
        %v2846 = vadd.f32 %v2836, %v2842
        %v2847 = vadd.f32 %v2837, %v2843
        %s2848 = sld [smem:[#allocation6 + $0x125]]
        %v2849 = vstv %s2848
        %v2850 = vmul.f32 %v2248, %v2849
        %v2851 = vmul.f32 %v2249, %v2849
        %v2852 = vmul.f32 %v2250, %v2849
        %v2853 = vmul.f32 %v2251, %v2849
        %v2854 = vadd.f32 %v2844, %v2850
        %v2855 = vadd.f32 %v2845, %v2851
        %v2856 = vadd.f32 %v2846, %v2852
        %v2857 = vadd.f32 %v2847, %v2853
        %s2858 = sld [smem:[#allocation6 + $0x12f]]
        %v2859 = vstv %s2858
        %v2860 = vmul.f32 %v2354, %v2859
        %v2861 = vmul.f32 %v2355, %v2859
        %v2862 = vmul.f32 %v2356, %v2859
        %v2863 = vmul.f32 %v2357, %v2859
        %v2864 = vadd.f32 %v2854, %v2860
        %v2865 = vadd.f32 %v2855, %v2861
        %v2866 = vadd.f32 %v2856, %v2862
        %v2867 = vadd.f32 %v2857, %v2863
        %s2868 = sld [smem:[#allocation6 + $0x139]]
        %v2869 = vstv %s2868
        %v2870 = vmul.f32 %v2460, %v2869
        %v2871 = vmul.f32 %v2461, %v2869
        %v2872 = vmul.f32 %v2462, %v2869
        %v2873 = vmul.f32 %v2463, %v2869
        %v2874 = vadd.f32 %v2864, %v2870
        %v2875 = vadd.f32 %v2865, %v2871
        %v2876 = vadd.f32 %v2866, %v2872
        %v2877 = vadd.f32 %v2867, %v2873
        %s2878 = sld [smem:[#allocation6 + $0x21f]]
        %v2879 = vstv %s2878
        %v2880 = vadd.f32 %v2874, %v2879
        %v2881 = vadd.f32 %v2875, %v2879
        %v2882 = vadd.f32 %v2876, %v2879
        %v2883 = vadd.f32 %v2877, %v2879
        %v2884 = vtanh.pop %v2880
        %v2885 = vtanh.pop %v2881
        %v2886 = vtanh.pop %v2882
        %v2887 = vtanh.pop %v2883
        %s2888 = sld [smem:[#allocation6 + $0xe0]]
        %v2889 = vstv %s2888
        %v2890 = vmul.f32 %v1506, %v2889
        %v2891 = vmul.f32 %v1507, %v2889
        %v2892 = vmul.f32 %v1508, %v2889
        %v2893 = vmul.f32 %v1509, %v2889
        %s2894 = sld [smem:[#allocation6 + $0xea]]
        %v2895 = vstv %s2894
        %v2896 = vmul.f32 %v1612, %v2895
        %v2897 = vmul.f32 %v1613, %v2895
        %v2898 = vmul.f32 %v1614, %v2895
        %v2899 = vmul.f32 %v1615, %v2895
        %v2900 = vadd.f32 %v2890, %v2896
        %v2901 = vadd.f32 %v2891, %v2897
        %v2902 = vadd.f32 %v2892, %v2898
        %v2903 = vadd.f32 %v2893, %v2899
        %s2904 = sld [smem:[#allocation6 + $0xf4]]
        %v2905 = vstv %s2904
        %v2906 = vmul.f32 %v1718, %v2905
        %v2907 = vmul.f32 %v1719, %v2905
        %v2908 = vmul.f32 %v1720, %v2905
        %v2909 = vmul.f32 %v1721, %v2905
        %v2910 = vadd.f32 %v2900, %v2906
        %v2911 = vadd.f32 %v2901, %v2907
        %v2912 = vadd.f32 %v2902, %v2908
        %v2913 = vadd.f32 %v2903, %v2909
        %s2914 = sld [smem:[#allocation6 + $0xfe]]
        %v2915 = vstv %s2914
        %v2916 = vmul.f32 %v1824, %v2915
        %v2917 = vmul.f32 %v1825, %v2915
        %v2918 = vmul.f32 %v1826, %v2915
        %v2919 = vmul.f32 %v1827, %v2915
        %v2920 = vadd.f32 %v2910, %v2916
        %v2921 = vadd.f32 %v2911, %v2917
        %v2922 = vadd.f32 %v2912, %v2918
        %v2923 = vadd.f32 %v2913, %v2919
        %s2924 = sld [smem:[#allocation6 + $0x108]]
        %v2925 = vstv %s2924
        %v2926 = vmul.f32 %v1930, %v2925
        %v2927 = vmul.f32 %v1931, %v2925
        %v2928 = vmul.f32 %v1932, %v2925
        %v2929 = vmul.f32 %v1933, %v2925
        %v2930 = vadd.f32 %v2920, %v2926
        %v2931 = vadd.f32 %v2921, %v2927
        %v2932 = vadd.f32 %v2922, %v2928
        %v2933 = vadd.f32 %v2923, %v2929
        %s2934 = sld [smem:[#allocation6 + $0x112]]
        %v2935 = vstv %s2934
        %v2936 = vmul.f32 %v2036, %v2935
        %v2937 = vmul.f32 %v2037, %v2935
        %v2938 = vmul.f32 %v2038, %v2935
        %v2939 = vmul.f32 %v2039, %v2935
        %v2940 = vadd.f32 %v2930, %v2936
        %v2941 = vadd.f32 %v2931, %v2937
        %v2942 = vadd.f32 %v2932, %v2938
        %v2943 = vadd.f32 %v2933, %v2939
        %s2944 = sld [smem:[#allocation6 + $0x11c]]
        %v2945 = vstv %s2944
        %v2946 = vmul.f32 %v2142, %v2945
        %v2947 = vmul.f32 %v2143, %v2945
        %v2948 = vmul.f32 %v2144, %v2945
        %v2949 = vmul.f32 %v2145, %v2945
        %v2950 = vadd.f32 %v2940, %v2946
        %v2951 = vadd.f32 %v2941, %v2947
        %v2952 = vadd.f32 %v2942, %v2948
        %v2953 = vadd.f32 %v2943, %v2949
        %s2954 = sld [smem:[#allocation6 + $0x126]]
        %v2955 = vstv %s2954
        %v2956 = vmul.f32 %v2248, %v2955
        %v2957 = vmul.f32 %v2249, %v2955
        %v2958 = vmul.f32 %v2250, %v2955
        %v2959 = vmul.f32 %v2251, %v2955
        %v2960 = vadd.f32 %v2950, %v2956
        %v2961 = vadd.f32 %v2951, %v2957
        %v2962 = vadd.f32 %v2952, %v2958
        %v2963 = vadd.f32 %v2953, %v2959
        %s2964 = sld [smem:[#allocation6 + $0x130]]
        %v2965 = vstv %s2964
        %v2966 = vmul.f32 %v2354, %v2965
        %v2967 = vmul.f32 %v2355, %v2965
        %v2968 = vmul.f32 %v2356, %v2965
        %v2969 = vmul.f32 %v2357, %v2965
        %v2970 = vadd.f32 %v2960, %v2966
        %v2971 = vadd.f32 %v2961, %v2967
        %v2972 = vadd.f32 %v2962, %v2968
        %v2973 = vadd.f32 %v2963, %v2969
        %s2974 = sld [smem:[#allocation6 + $0x13a]]
        %v2975 = vstv %s2974
        %v2976 = vmul.f32 %v2460, %v2975
        %v2977 = vmul.f32 %v2461, %v2975
        %v2978 = vmul.f32 %v2462, %v2975
        %v2979 = vmul.f32 %v2463, %v2975
        %v2980 = vadd.f32 %v2970, %v2976
        %v2981 = vadd.f32 %v2971, %v2977
        %v2982 = vadd.f32 %v2972, %v2978
        %v2983 = vadd.f32 %v2973, %v2979
        %s2984 = sld [smem:[#allocation6 + $0x220]]
        %v2985 = vstv %s2984
        %v2986 = vadd.f32 %v2980, %v2985
        %v2987 = vadd.f32 %v2981, %v2985
        %v2988 = vadd.f32 %v2982, %v2985
        %v2989 = vadd.f32 %v2983, %v2985
        %v2990 = vtanh.pop %v2986
        %v2991 = vtanh.pop %v2987
        %v2992 = vtanh.pop %v2988
        %v2993 = vtanh.pop %v2989
        %s2994 = sld [smem:[#allocation6 + $0xe1]]
        %v2995 = vstv %s2994
        %v2996 = vmul.f32 %v1506, %v2995
        %v2997 = vmul.f32 %v1507, %v2995
        %v2998 = vmul.f32 %v1508, %v2995
        %v2999 = vmul.f32 %v1509, %v2995
        %s3000 = sld [smem:[#allocation6 + $0xeb]]
        %v3001 = vstv %s3000
        %v3002 = vmul.f32 %v1612, %v3001
        %v3003 = vmul.f32 %v1613, %v3001
        %v3004 = vmul.f32 %v1614, %v3001
        %v3005 = vmul.f32 %v1615, %v3001
        %v3006 = vadd.f32 %v2996, %v3002
        %v3007 = vadd.f32 %v2997, %v3003
        %v3008 = vadd.f32 %v2998, %v3004
        %v3009 = vadd.f32 %v2999, %v3005
        %s3010 = sld [smem:[#allocation6 + $0xf5]]
        %v3011 = vstv %s3010
        %v3012 = vmul.f32 %v1718, %v3011
        %v3013 = vmul.f32 %v1719, %v3011
        %v3014 = vmul.f32 %v1720, %v3011
        %v3015 = vmul.f32 %v1721, %v3011
        %v3016 = vadd.f32 %v3006, %v3012
        %v3017 = vadd.f32 %v3007, %v3013
        %v3018 = vadd.f32 %v3008, %v3014
        %v3019 = vadd.f32 %v3009, %v3015
        %s3020 = sld [smem:[#allocation6 + $0xff]]
        %v3021 = vstv %s3020
        %v3022 = vmul.f32 %v1824, %v3021
        %v3023 = vmul.f32 %v1825, %v3021
        %v3024 = vmul.f32 %v1826, %v3021
        %v3025 = vmul.f32 %v1827, %v3021
        %v3026 = vadd.f32 %v3016, %v3022
        %v3027 = vadd.f32 %v3017, %v3023
        %v3028 = vadd.f32 %v3018, %v3024
        %v3029 = vadd.f32 %v3019, %v3025
        %s3030 = sld [smem:[#allocation6 + $0x109]]
        %v3031 = vstv %s3030
        %v3032 = vmul.f32 %v1930, %v3031
        %v3033 = vmul.f32 %v1931, %v3031
        %v3034 = vmul.f32 %v1932, %v3031
        %v3035 = vmul.f32 %v1933, %v3031
        %v3036 = vadd.f32 %v3026, %v3032
        %v3037 = vadd.f32 %v3027, %v3033
        %v3038 = vadd.f32 %v3028, %v3034
        %v3039 = vadd.f32 %v3029, %v3035
        %s3040 = sld [smem:[#allocation6 + $0x113]]
        %v3041 = vstv %s3040
        %v3042 = vmul.f32 %v2036, %v3041
        %v3043 = vmul.f32 %v2037, %v3041
        %v3044 = vmul.f32 %v2038, %v3041
        %v3045 = vmul.f32 %v2039, %v3041
        %v3046 = vadd.f32 %v3036, %v3042
        %v3047 = vadd.f32 %v3037, %v3043
        %v3048 = vadd.f32 %v3038, %v3044
        %v3049 = vadd.f32 %v3039, %v3045
        %s3050 = sld [smem:[#allocation6 + $0x11d]]
        %v3051 = vstv %s3050
        %v3052 = vmul.f32 %v2142, %v3051
        %v3053 = vmul.f32 %v2143, %v3051
        %v3054 = vmul.f32 %v2144, %v3051
        %v3055 = vmul.f32 %v2145, %v3051
        %v3056 = vadd.f32 %v3046, %v3052
        %v3057 = vadd.f32 %v3047, %v3053
        %v3058 = vadd.f32 %v3048, %v3054
        %v3059 = vadd.f32 %v3049, %v3055
        %s3060 = sld [smem:[#allocation6 + $0x127]]
        %v3061 = vstv %s3060
        %v3062 = vmul.f32 %v2248, %v3061
        %v3063 = vmul.f32 %v2249, %v3061
        %v3064 = vmul.f32 %v2250, %v3061
        %v3065 = vmul.f32 %v2251, %v3061
        %v3066 = vadd.f32 %v3056, %v3062
        %v3067 = vadd.f32 %v3057, %v3063
        %v3068 = vadd.f32 %v3058, %v3064
        %v3069 = vadd.f32 %v3059, %v3065
        %s3070 = sld [smem:[#allocation6 + $0x131]]
        %v3071 = vstv %s3070
        %v3072 = vmul.f32 %v2354, %v3071
        %v3073 = vmul.f32 %v2355, %v3071
        %v3074 = vmul.f32 %v2356, %v3071
        %v3075 = vmul.f32 %v2357, %v3071
        %v3076 = vadd.f32 %v3066, %v3072
        %v3077 = vadd.f32 %v3067, %v3073
        %v3078 = vadd.f32 %v3068, %v3074
        %v3079 = vadd.f32 %v3069, %v3075
        %s3080 = sld [smem:[#allocation6 + $0x13b]]
        %v3081 = vstv %s3080
        %v3082 = vmul.f32 %v2460, %v3081
        %v3083 = vmul.f32 %v2461, %v3081
        %v3084 = vmul.f32 %v2462, %v3081
        %v3085 = vmul.f32 %v2463, %v3081
        %v3086 = vadd.f32 %v3076, %v3082
        %v3087 = vadd.f32 %v3077, %v3083
        %v3088 = vadd.f32 %v3078, %v3084
        %v3089 = vadd.f32 %v3079, %v3085
        %s3090 = sld [smem:[#allocation6 + $0x221]]
        %v3091 = vstv %s3090
        %v3092 = vadd.f32 %v3086, %v3091
        %v3093 = vadd.f32 %v3087, %v3091
        %v3094 = vadd.f32 %v3088, %v3091
        %v3095 = vadd.f32 %v3089, %v3091
        %v3096 = vtanh.pop %v3092
        %v3097 = vtanh.pop %v3093
        %v3098 = vtanh.pop %v3094
        %v3099 = vtanh.pop %v3095
        %s3100 = sld [smem:[#allocation6 + $0xe2]]
        %v3101 = vstv %s3100
        %v3102 = vmul.f32 %v1506, %v3101
        %v3103 = vmul.f32 %v1507, %v3101
        %v3104 = vmul.f32 %v1508, %v3101
        %v3105 = vmul.f32 %v1509, %v3101
        %s3106 = sld [smem:[#allocation6 + $0xec]]
        %v3107 = vstv %s3106
        %v3108 = vmul.f32 %v1612, %v3107
        %v3109 = vmul.f32 %v1613, %v3107
        %v3110 = vmul.f32 %v1614, %v3107
        %v3111 = vmul.f32 %v1615, %v3107
        %v3112 = vadd.f32 %v3102, %v3108
        %v3113 = vadd.f32 %v3103, %v3109
        %v3114 = vadd.f32 %v3104, %v3110
        %v3115 = vadd.f32 %v3105, %v3111
        %s3116 = sld [smem:[#allocation6 + $0xf6]]
        %v3117 = vstv %s3116
        %v3118 = vmul.f32 %v1718, %v3117
        %v3119 = vmul.f32 %v1719, %v3117
        %v3120 = vmul.f32 %v1720, %v3117
        %v3121 = vmul.f32 %v1721, %v3117
        %v3122 = vadd.f32 %v3112, %v3118
        %v3123 = vadd.f32 %v3113, %v3119
        %v3124 = vadd.f32 %v3114, %v3120
        %v3125 = vadd.f32 %v3115, %v3121
        %s3126 = sld [smem:[#allocation6 + $0x100]]
        %v3127 = vstv %s3126
        %v3128 = vmul.f32 %v1824, %v3127
        %v3129 = vmul.f32 %v1825, %v3127
        %v3130 = vmul.f32 %v1826, %v3127
        %v3131 = vmul.f32 %v1827, %v3127
        %v3132 = vadd.f32 %v3122, %v3128
        %v3133 = vadd.f32 %v3123, %v3129
        %v3134 = vadd.f32 %v3124, %v3130
        %v3135 = vadd.f32 %v3125, %v3131
        %s3136 = sld [smem:[#allocation6 + $0x10a]]
        %v3137 = vstv %s3136
        %v3138 = vmul.f32 %v1930, %v3137
        %v3139 = vmul.f32 %v1931, %v3137
        %v3140 = vmul.f32 %v1932, %v3137
        %v3141 = vmul.f32 %v1933, %v3137
        %v3142 = vadd.f32 %v3132, %v3138
        %v3143 = vadd.f32 %v3133, %v3139
        %v3144 = vadd.f32 %v3134, %v3140
        %v3145 = vadd.f32 %v3135, %v3141
        %s3146 = sld [smem:[#allocation6 + $0x114]]
        %v3147 = vstv %s3146
        %v3148 = vmul.f32 %v2036, %v3147
        %v3149 = vmul.f32 %v2037, %v3147
        %v3150 = vmul.f32 %v2038, %v3147
        %v3151 = vmul.f32 %v2039, %v3147
        %v3152 = vadd.f32 %v3142, %v3148
        %v3153 = vadd.f32 %v3143, %v3149
        %v3154 = vadd.f32 %v3144, %v3150
        %v3155 = vadd.f32 %v3145, %v3151
        %s3156 = sld [smem:[#allocation6 + $0x11e]]
        %v3157 = vstv %s3156
        %v3158 = vmul.f32 %v2142, %v3157
        %v3159 = vmul.f32 %v2143, %v3157
        %v3160 = vmul.f32 %v2144, %v3157
        %v3161 = vmul.f32 %v2145, %v3157
        %v3162 = vadd.f32 %v3152, %v3158
        %v3163 = vadd.f32 %v3153, %v3159
        %v3164 = vadd.f32 %v3154, %v3160
        %v3165 = vadd.f32 %v3155, %v3161
        %s3166 = sld [smem:[#allocation6 + $0x128]]
        %v3167 = vstv %s3166
        %v3168 = vmul.f32 %v2248, %v3167
        %v3169 = vmul.f32 %v2249, %v3167
        %v3170 = vmul.f32 %v2250, %v3167
        %v3171 = vmul.f32 %v2251, %v3167
        %v3172 = vadd.f32 %v3162, %v3168
        %v3173 = vadd.f32 %v3163, %v3169
        %v3174 = vadd.f32 %v3164, %v3170
        %v3175 = vadd.f32 %v3165, %v3171
        %s3176 = sld [smem:[#allocation6 + $0x132]]
        %v3177 = vstv %s3176
        %v3178 = vmul.f32 %v2354, %v3177
        %v3179 = vmul.f32 %v2355, %v3177
        %v3180 = vmul.f32 %v2356, %v3177
        %v3181 = vmul.f32 %v2357, %v3177
        %v3182 = vadd.f32 %v3172, %v3178
        %v3183 = vadd.f32 %v3173, %v3179
        %v3184 = vadd.f32 %v3174, %v3180
        %v3185 = vadd.f32 %v3175, %v3181
        %s3186 = sld [smem:[#allocation6 + $0x13c]]
        %v3187 = vstv %s3186
        %v3188 = vmul.f32 %v2460, %v3187
        %v3189 = vmul.f32 %v2461, %v3187
        %v3190 = vmul.f32 %v2462, %v3187
        %v3191 = vmul.f32 %v2463, %v3187
        %v3192 = vadd.f32 %v3182, %v3188
        %v3193 = vadd.f32 %v3183, %v3189
        %v3194 = vadd.f32 %v3184, %v3190
        %v3195 = vadd.f32 %v3185, %v3191
        %s3196 = sld [smem:[#allocation6 + $0x222]]
        %v3197 = vstv %s3196
        %v3198 = vadd.f32 %v3192, %v3197
        %v3199 = vadd.f32 %v3193, %v3197
        %v3200 = vadd.f32 %v3194, %v3197
        %v3201 = vadd.f32 %v3195, %v3197
        %v3202 = vtanh.pop %v3198
        %v3203 = vtanh.pop %v3199
        %v3204 = vtanh.pop %v3200
        %v3205 = vtanh.pop %v3201
        %s3206 = sld [smem:[#allocation6 + $0xe3]]
        %v3207 = vstv %s3206
        %v3208 = vmul.f32 %v1506, %v3207
        %v3209 = vmul.f32 %v1507, %v3207
        %v3210 = vmul.f32 %v1508, %v3207
        %v3211 = vmul.f32 %v1509, %v3207
        %s3212 = sld [smem:[#allocation6 + $0xed]]
        %v3213 = vstv %s3212
        %v3214 = vmul.f32 %v1612, %v3213
        %v3215 = vmul.f32 %v1613, %v3213
        %v3216 = vmul.f32 %v1614, %v3213
        %v3217 = vmul.f32 %v1615, %v3213
        %v3218 = vadd.f32 %v3208, %v3214
        %v3219 = vadd.f32 %v3209, %v3215
        %v3220 = vadd.f32 %v3210, %v3216
        %v3221 = vadd.f32 %v3211, %v3217
        %s3222 = sld [smem:[#allocation6 + $0xf7]]
        %v3223 = vstv %s3222
        %v3224 = vmul.f32 %v1718, %v3223
        %v3225 = vmul.f32 %v1719, %v3223
        %v3226 = vmul.f32 %v1720, %v3223
        %v3227 = vmul.f32 %v1721, %v3223
        %v3228 = vadd.f32 %v3218, %v3224
        %v3229 = vadd.f32 %v3219, %v3225
        %v3230 = vadd.f32 %v3220, %v3226
        %v3231 = vadd.f32 %v3221, %v3227
        %s3232 = sld [smem:[#allocation6 + $0x101]]
        %v3233 = vstv %s3232
        %v3234 = vmul.f32 %v1824, %v3233
        %v3235 = vmul.f32 %v1825, %v3233
        %v3236 = vmul.f32 %v1826, %v3233
        %v3237 = vmul.f32 %v1827, %v3233
        %v3238 = vadd.f32 %v3228, %v3234
        %v3239 = vadd.f32 %v3229, %v3235
        %v3240 = vadd.f32 %v3230, %v3236
        %v3241 = vadd.f32 %v3231, %v3237
        %s3242 = sld [smem:[#allocation6 + $0x10b]]
        %v3243 = vstv %s3242
        %v3244 = vmul.f32 %v1930, %v3243
        %v3245 = vmul.f32 %v1931, %v3243
        %v3246 = vmul.f32 %v1932, %v3243
        %v3247 = vmul.f32 %v1933, %v3243
        %v3248 = vadd.f32 %v3238, %v3244
        %v3249 = vadd.f32 %v3239, %v3245
        %v3250 = vadd.f32 %v3240, %v3246
        %v3251 = vadd.f32 %v3241, %v3247
        %s3252 = sld [smem:[#allocation6 + $0x115]]
        %v3253 = vstv %s3252
        %v3254 = vmul.f32 %v2036, %v3253
        %v3255 = vmul.f32 %v2037, %v3253
        %v3256 = vmul.f32 %v2038, %v3253
        %v3257 = vmul.f32 %v2039, %v3253
        %v3258 = vadd.f32 %v3248, %v3254
        %v3259 = vadd.f32 %v3249, %v3255
        %v3260 = vadd.f32 %v3250, %v3256
        %v3261 = vadd.f32 %v3251, %v3257
        %s3262 = sld [smem:[#allocation6 + $0x11f]]
        %v3263 = vstv %s3262
        %v3264 = vmul.f32 %v2142, %v3263
        %v3265 = vmul.f32 %v2143, %v3263
        %v3266 = vmul.f32 %v2144, %v3263
        %v3267 = vmul.f32 %v2145, %v3263
        %v3268 = vadd.f32 %v3258, %v3264
        %v3269 = vadd.f32 %v3259, %v3265
        %v3270 = vadd.f32 %v3260, %v3266
        %v3271 = vadd.f32 %v3261, %v3267
        %s3272 = sld [smem:[#allocation6 + $0x129]]
        %v3273 = vstv %s3272
        %v3274 = vmul.f32 %v2248, %v3273
        %v3275 = vmul.f32 %v2249, %v3273
        %v3276 = vmul.f32 %v2250, %v3273
        %v3277 = vmul.f32 %v2251, %v3273
        %v3278 = vadd.f32 %v3268, %v3274
        %v3279 = vadd.f32 %v3269, %v3275
        %v3280 = vadd.f32 %v3270, %v3276
        %v3281 = vadd.f32 %v3271, %v3277
        %s3282 = sld [smem:[#allocation6 + $0x133]]
        %v3283 = vstv %s3282
        %v3284 = vmul.f32 %v2354, %v3283
        %v3285 = vmul.f32 %v2355, %v3283
        %v3286 = vmul.f32 %v2356, %v3283
        %v3287 = vmul.f32 %v2357, %v3283
        %v3288 = vadd.f32 %v3278, %v3284
        %v3289 = vadd.f32 %v3279, %v3285
        %v3290 = vadd.f32 %v3280, %v3286
        %v3291 = vadd.f32 %v3281, %v3287
        %s3292 = sld [smem:[#allocation6 + $0x13d]]
        %v3293 = vstv %s3292
        %v3294 = vmul.f32 %v2460, %v3293
        %v3295 = vmul.f32 %v2461, %v3293
        %v3296 = vmul.f32 %v2462, %v3293
        %v3297 = vmul.f32 %v2463, %v3293
        %v3298 = vadd.f32 %v3288, %v3294
        %v3299 = vadd.f32 %v3289, %v3295
        %v3300 = vadd.f32 %v3290, %v3296
        %v3301 = vadd.f32 %v3291, %v3297
        %s3302 = sld [smem:[#allocation6 + $0x223]]
        %v3303 = vstv %s3302
        %v3304 = vadd.f32 %v3298, %v3303
        %v3305 = vadd.f32 %v3299, %v3303
        %v3306 = vadd.f32 %v3300, %v3303
        %v3307 = vadd.f32 %v3301, %v3303
        %v3308 = vtanh.pop %v3304
        %v3309 = vtanh.pop %v3305
        %v3310 = vtanh.pop %v3306
        %v3311 = vtanh.pop %v3307
        %s3312 = sld [smem:[#allocation6 + $0xe4]]
        %v3313 = vstv %s3312
        %v3314 = vmul.f32 %v1506, %v3313
        %v3315 = vmul.f32 %v1507, %v3313
        %v3316 = vmul.f32 %v1508, %v3313
        %v3317 = vmul.f32 %v1509, %v3313
        %s3318 = sld [smem:[#allocation6 + $0xee]]
        %v3319 = vstv %s3318
        %v3320 = vmul.f32 %v1612, %v3319
        %v3321 = vmul.f32 %v1613, %v3319
        %v3322 = vmul.f32 %v1614, %v3319
        %v3323 = vmul.f32 %v1615, %v3319
        %v3324 = vadd.f32 %v3314, %v3320
        %v3325 = vadd.f32 %v3315, %v3321
        %v3326 = vadd.f32 %v3316, %v3322
        %v3327 = vadd.f32 %v3317, %v3323
        %s3328 = sld [smem:[#allocation6 + $0xf8]]
        %v3329 = vstv %s3328
        %v3330 = vmul.f32 %v1718, %v3329
        %v3331 = vmul.f32 %v1719, %v3329
        %v3332 = vmul.f32 %v1720, %v3329
        %v3333 = vmul.f32 %v1721, %v3329
        %v3334 = vadd.f32 %v3324, %v3330
        %v3335 = vadd.f32 %v3325, %v3331
        %v3336 = vadd.f32 %v3326, %v3332
        %v3337 = vadd.f32 %v3327, %v3333
        %s3338 = sld [smem:[#allocation6 + $0x102]]
        %v3339 = vstv %s3338
        %v3340 = vmul.f32 %v1824, %v3339
        %v3341 = vmul.f32 %v1825, %v3339
        %v3342 = vmul.f32 %v1826, %v3339
        %v3343 = vmul.f32 %v1827, %v3339
        %v3344 = vadd.f32 %v3334, %v3340
        %v3345 = vadd.f32 %v3335, %v3341
        %v3346 = vadd.f32 %v3336, %v3342
        %v3347 = vadd.f32 %v3337, %v3343
        %s3348 = sld [smem:[#allocation6 + $0x10c]]
        %v3349 = vstv %s3348
        %v3350 = vmul.f32 %v1930, %v3349
        %v3351 = vmul.f32 %v1931, %v3349
        %v3352 = vmul.f32 %v1932, %v3349
        %v3353 = vmul.f32 %v1933, %v3349
        %v3354 = vadd.f32 %v3344, %v3350
        %v3355 = vadd.f32 %v3345, %v3351
        %v3356 = vadd.f32 %v3346, %v3352
        %v3357 = vadd.f32 %v3347, %v3353
        %s3358 = sld [smem:[#allocation6 + $0x116]]
        %v3359 = vstv %s3358
        %v3360 = vmul.f32 %v2036, %v3359
        %v3361 = vmul.f32 %v2037, %v3359
        %v3362 = vmul.f32 %v2038, %v3359
        %v3363 = vmul.f32 %v2039, %v3359
        %v3364 = vadd.f32 %v3354, %v3360
        %v3365 = vadd.f32 %v3355, %v3361
        %v3366 = vadd.f32 %v3356, %v3362
        %v3367 = vadd.f32 %v3357, %v3363
        %s3368 = sld [smem:[#allocation6 + $0x120]]
        %v3369 = vstv %s3368
        %v3370 = vmul.f32 %v2142, %v3369
        %v3371 = vmul.f32 %v2143, %v3369
        %v3372 = vmul.f32 %v2144, %v3369
        %v3373 = vmul.f32 %v2145, %v3369
        %v3374 = vadd.f32 %v3364, %v3370
        %v3375 = vadd.f32 %v3365, %v3371
        %v3376 = vadd.f32 %v3366, %v3372
        %v3377 = vadd.f32 %v3367, %v3373
        %s3378 = sld [smem:[#allocation6 + $0x12a]]
        %v3379 = vstv %s3378
        %v3380 = vmul.f32 %v2248, %v3379
        %v3381 = vmul.f32 %v2249, %v3379
        %v3382 = vmul.f32 %v2250, %v3379
        %v3383 = vmul.f32 %v2251, %v3379
        %v3384 = vadd.f32 %v3374, %v3380
        %v3385 = vadd.f32 %v3375, %v3381
        %v3386 = vadd.f32 %v3376, %v3382
        %v3387 = vadd.f32 %v3377, %v3383
        %s3388 = sld [smem:[#allocation6 + $0x134]]
        %v3389 = vstv %s3388
        %v3390 = vmul.f32 %v2354, %v3389
        %v3391 = vmul.f32 %v2355, %v3389
        %v3392 = vmul.f32 %v2356, %v3389
        %v3393 = vmul.f32 %v2357, %v3389
        %v3394 = vadd.f32 %v3384, %v3390
        %v3395 = vadd.f32 %v3385, %v3391
        %v3396 = vadd.f32 %v3386, %v3392
        %v3397 = vadd.f32 %v3387, %v3393
        %s3398 = sld [smem:[#allocation6 + $0x13e]]
        %v3399 = vstv %s3398
        %v3400 = vmul.f32 %v2460, %v3399
        %v3401 = vmul.f32 %v2461, %v3399
        %v3402 = vmul.f32 %v2462, %v3399
        %v3403 = vmul.f32 %v2463, %v3399
        %v3404 = vadd.f32 %v3394, %v3400
        %v3405 = vadd.f32 %v3395, %v3401
        %v3406 = vadd.f32 %v3396, %v3402
        %v3407 = vadd.f32 %v3397, %v3403
        %s3408 = sld [smem:[#allocation6 + $0x224]]
        %v3409 = vstv %s3408
        %v3410 = vadd.f32 %v3404, %v3409
        %v3411 = vadd.f32 %v3405, %v3409
        %v3412 = vadd.f32 %v3406, %v3409
        %v3413 = vadd.f32 %v3407, %v3409
        %v3414 = vtanh.pop %v3410
        %v3415 = vtanh.pop %v3411
        %v3416 = vtanh.pop %v3412
        %v3417 = vtanh.pop %v3413
        %s3418 = sld [smem:[#allocation6 + $0xe5]]
        %v3419 = vstv %s3418
        %v3420 = vmul.f32 %v1506, %v3419
        %v3421 = vmul.f32 %v1507, %v3419
        %v3422 = vmul.f32 %v1508, %v3419
        %v3423 = vmul.f32 %v1509, %v3419
        %s3424 = sld [smem:[#allocation6 + $0xef]]
        %v3425 = vstv %s3424
        %v3426 = vmul.f32 %v1612, %v3425
        %v3427 = vmul.f32 %v1613, %v3425
        %v3428 = vmul.f32 %v1614, %v3425
        %v3429 = vmul.f32 %v1615, %v3425
        %v3430 = vadd.f32 %v3420, %v3426
        %v3431 = vadd.f32 %v3421, %v3427
        %v3432 = vadd.f32 %v3422, %v3428
        %v3433 = vadd.f32 %v3423, %v3429
        %s3434 = sld [smem:[#allocation6 + $0xf9]]
        %v3435 = vstv %s3434
        %v3436 = vmul.f32 %v1718, %v3435
        %v3437 = vmul.f32 %v1719, %v3435
        %v3438 = vmul.f32 %v1720, %v3435
        %v3439 = vmul.f32 %v1721, %v3435
        %v3440 = vadd.f32 %v3430, %v3436
        %v3441 = vadd.f32 %v3431, %v3437
        %v3442 = vadd.f32 %v3432, %v3438
        %v3443 = vadd.f32 %v3433, %v3439
        %s3444 = sld [smem:[#allocation6 + $0x103]]
        %v3445 = vstv %s3444
        %v3446 = vmul.f32 %v1824, %v3445
        %v3447 = vmul.f32 %v1825, %v3445
        %v3448 = vmul.f32 %v1826, %v3445
        %v3449 = vmul.f32 %v1827, %v3445
        %v3450 = vadd.f32 %v3440, %v3446
        %v3451 = vadd.f32 %v3441, %v3447
        %v3452 = vadd.f32 %v3442, %v3448
        %v3453 = vadd.f32 %v3443, %v3449
        %s3454 = sld [smem:[#allocation6 + $0x10d]]
        %v3455 = vstv %s3454
        %v3456 = vmul.f32 %v1930, %v3455
        %v3457 = vmul.f32 %v1931, %v3455
        %v3458 = vmul.f32 %v1932, %v3455
        %v3459 = vmul.f32 %v1933, %v3455
        %v3460 = vadd.f32 %v3450, %v3456
        %v3461 = vadd.f32 %v3451, %v3457
        %v3462 = vadd.f32 %v3452, %v3458
        %v3463 = vadd.f32 %v3453, %v3459
        %s3464 = sld [smem:[#allocation6 + $0x117]]
        %v3465 = vstv %s3464
        %v3466 = vmul.f32 %v2036, %v3465
        %v3467 = vmul.f32 %v2037, %v3465
        %v3468 = vmul.f32 %v2038, %v3465
        %v3469 = vmul.f32 %v2039, %v3465
        %v3470 = vadd.f32 %v3460, %v3466
        %v3471 = vadd.f32 %v3461, %v3467
        %v3472 = vadd.f32 %v3462, %v3468
        %v3473 = vadd.f32 %v3463, %v3469
        %s3474 = sld [smem:[#allocation6 + $0x121]]
        %v3475 = vstv %s3474
        %v3476 = vmul.f32 %v2142, %v3475
        %v3477 = vmul.f32 %v2143, %v3475
        %v3478 = vmul.f32 %v2144, %v3475
        %v3479 = vmul.f32 %v2145, %v3475
        %v3480 = vadd.f32 %v3470, %v3476
        %v3481 = vadd.f32 %v3471, %v3477
        %v3482 = vadd.f32 %v3472, %v3478
        %v3483 = vadd.f32 %v3473, %v3479
        %s3484 = sld [smem:[#allocation6 + $0x12b]]
        %v3485 = vstv %s3484
        %v3486 = vmul.f32 %v2248, %v3485
        %v3487 = vmul.f32 %v2249, %v3485
        %v3488 = vmul.f32 %v2250, %v3485
        %v3489 = vmul.f32 %v2251, %v3485
        %v3490 = vadd.f32 %v3480, %v3486
        %v3491 = vadd.f32 %v3481, %v3487
        %v3492 = vadd.f32 %v3482, %v3488
        %v3493 = vadd.f32 %v3483, %v3489
        %s3494 = sld [smem:[#allocation6 + $0x135]]
        %v3495 = vstv %s3494
        %v3496 = vmul.f32 %v2354, %v3495
        %v3497 = vmul.f32 %v2355, %v3495
        %v3498 = vmul.f32 %v2356, %v3495
        %v3499 = vmul.f32 %v2357, %v3495
        %v3500 = vadd.f32 %v3490, %v3496
        %v3501 = vadd.f32 %v3491, %v3497
        %v3502 = vadd.f32 %v3492, %v3498
        %v3503 = vadd.f32 %v3493, %v3499
        %s3504 = sld [smem:[#allocation6 + $0x13f]]
        %v3505 = vstv %s3504
        %v3506 = vmul.f32 %v2460, %v3505
        %v3507 = vmul.f32 %v2461, %v3505
        %v3508 = vmul.f32 %v2462, %v3505
        %v3509 = vmul.f32 %v2463, %v3505
        %v3510 = vadd.f32 %v3500, %v3506
        %v3511 = vadd.f32 %v3501, %v3507
        %v3512 = vadd.f32 %v3502, %v3508
        %v3513 = vadd.f32 %v3503, %v3509
        %s3514 = sld [smem:[#allocation6 + $0x225]]
        %v3515 = vstv %s3514
        %v3516 = vadd.f32 %v3510, %v3515
        %v3517 = vadd.f32 %v3511, %v3515
        %v3518 = vadd.f32 %v3512, %v3515
        %v3519 = vadd.f32 %v3513, %v3515
        %v3520 = vtanh.pop %v3516
        %v3521 = vtanh.pop %v3517
        %v3522 = vtanh.pop %v3518
        %v3523 = vtanh.pop %v3519
        %s3524 = sld [smem:[#allocation6 + $0x140]]
        %v3525 = vstv %s3524
        %v3526 = vmul.f32 %v2566, %v3525
        %v3527 = vmul.f32 %v2567, %v3525
        %v3528 = vmul.f32 %v2568, %v3525
        %v3529 = vmul.f32 %v2569, %v3525
        %s3530 = sld [smem:[#allocation6 + $0x14a]]
        %v3531 = vstv %s3530
        %v3532 = vmul.f32 %v2672, %v3531
        %v3533 = vmul.f32 %v2673, %v3531
        %v3534 = vmul.f32 %v2674, %v3531
        %v3535 = vmul.f32 %v2675, %v3531
        %v3536 = vadd.f32 %v3526, %v3532
        %v3537 = vadd.f32 %v3527, %v3533
        %v3538 = vadd.f32 %v3528, %v3534
        %v3539 = vadd.f32 %v3529, %v3535
        %s3540 = sld [smem:[#allocation6 + $0x154]]
        %v3541 = vstv %s3540
        %v3542 = vmul.f32 %v2778, %v3541
        %v3543 = vmul.f32 %v2779, %v3541
        %v3544 = vmul.f32 %v2780, %v3541
        %v3545 = vmul.f32 %v2781, %v3541
        %v3546 = vadd.f32 %v3536, %v3542
        %v3547 = vadd.f32 %v3537, %v3543
        %v3548 = vadd.f32 %v3538, %v3544
        %v3549 = vadd.f32 %v3539, %v3545
        %s3550 = sld [smem:[#allocation6 + $0x15e]]
        %v3551 = vstv %s3550
        %v3552 = vmul.f32 %v2884, %v3551
        %v3553 = vmul.f32 %v2885, %v3551
        %v3554 = vmul.f32 %v2886, %v3551
        %v3555 = vmul.f32 %v2887, %v3551
        %v3556 = vadd.f32 %v3546, %v3552
        %v3557 = vadd.f32 %v3547, %v3553
        %v3558 = vadd.f32 %v3548, %v3554
        %v3559 = vadd.f32 %v3549, %v3555
        %s3560 = sld [smem:[#allocation6 + $0x168]]
        %v3561 = vstv %s3560
        %v3562 = vmul.f32 %v2990, %v3561
        %v3563 = vmul.f32 %v2991, %v3561
        %v3564 = vmul.f32 %v2992, %v3561
        %v3565 = vmul.f32 %v2993, %v3561
        %v3566 = vadd.f32 %v3556, %v3562
        %v3567 = vadd.f32 %v3557, %v3563
        %v3568 = vadd.f32 %v3558, %v3564
        %v3569 = vadd.f32 %v3559, %v3565
        %s3570 = sld [smem:[#allocation6 + $0x172]]
        %v3571 = vstv %s3570
        %v3572 = vmul.f32 %v3096, %v3571
        %v3573 = vmul.f32 %v3097, %v3571
        %v3574 = vmul.f32 %v3098, %v3571
        %v3575 = vmul.f32 %v3099, %v3571
        %v3576 = vadd.f32 %v3566, %v3572
        %v3577 = vadd.f32 %v3567, %v3573
        %v3578 = vadd.f32 %v3568, %v3574
        %v3579 = vadd.f32 %v3569, %v3575
        %s3580 = sld [smem:[#allocation6 + $0x17c]]
        %v3581 = vstv %s3580
        %v3582 = vmul.f32 %v3202, %v3581
        %v3583 = vmul.f32 %v3203, %v3581
        %v3584 = vmul.f32 %v3204, %v3581
        %v3585 = vmul.f32 %v3205, %v3581
        %v3586 = vadd.f32 %v3576, %v3582
        %v3587 = vadd.f32 %v3577, %v3583
        %v3588 = vadd.f32 %v3578, %v3584
        %v3589 = vadd.f32 %v3579, %v3585
        %s3590 = sld [smem:[#allocation6 + $0x186]]
        %v3591 = vstv %s3590
        %v3592 = vmul.f32 %v3308, %v3591
        %v3593 = vmul.f32 %v3309, %v3591
        %v3594 = vmul.f32 %v3310, %v3591
        %v3595 = vmul.f32 %v3311, %v3591
        %v3596 = vadd.f32 %v3586, %v3592
        %v3597 = vadd.f32 %v3587, %v3593
        %v3598 = vadd.f32 %v3588, %v3594
        %v3599 = vadd.f32 %v3589, %v3595
        %s3600 = sld [smem:[#allocation6 + $0x190]]
        %v3601 = vstv %s3600
        %v3602 = vmul.f32 %v3414, %v3601
        %v3603 = vmul.f32 %v3415, %v3601
        %v3604 = vmul.f32 %v3416, %v3601
        %v3605 = vmul.f32 %v3417, %v3601
        %v3606 = vadd.f32 %v3596, %v3602
        %v3607 = vadd.f32 %v3597, %v3603
        %v3608 = vadd.f32 %v3598, %v3604
        %v3609 = vadd.f32 %v3599, %v3605
        %s3610 = sld [smem:[#allocation6 + $0x19a]]
        %v3611 = vstv %s3610
        %v3612 = vmul.f32 %v3520, %v3611
        %v3613 = vmul.f32 %v3521, %v3611
        %v3614 = vmul.f32 %v3522, %v3611
        %v3615 = vmul.f32 %v3523, %v3611
        %v3616 = vadd.f32 %v3606, %v3612
        %v3617 = vadd.f32 %v3607, %v3613
        %v3618 = vadd.f32 %v3608, %v3614
        %v3619 = vadd.f32 %v3609, %v3615
        %s3620 = sld [smem:[#allocation6 + $0x226]]
        %v3621 = vstv %s3620
        %v3622 = vadd.f32 %v3616, %v3621
        %v3623 = vadd.f32 %v3617, %v3621
        %v3624 = vadd.f32 %v3618, %v3621
        %v3625 = vadd.f32 %v3619, %v3621
        %v3626 = vtanh.pop %v3622
        %v3627 = vtanh.pop %v3623
        %v3628 = vtanh.pop %v3624
        %v3629 = vtanh.pop %v3625
        %s3630 = sld [smem:[#allocation6 + $0x141]]
        %v3631 = vstv %s3630
        %v3632 = vmul.f32 %v2566, %v3631
        %v3633 = vmul.f32 %v2567, %v3631
        %v3634 = vmul.f32 %v2568, %v3631
        %v3635 = vmul.f32 %v2569, %v3631
        %s3636 = sld [smem:[#allocation6 + $0x14b]]
        %v3637 = vstv %s3636
        %v3638 = vmul.f32 %v2672, %v3637
        %v3639 = vmul.f32 %v2673, %v3637
        %v3640 = vmul.f32 %v2674, %v3637
        %v3641 = vmul.f32 %v2675, %v3637
        %v3642 = vadd.f32 %v3632, %v3638
        %v3643 = vadd.f32 %v3633, %v3639
        %v3644 = vadd.f32 %v3634, %v3640
        %v3645 = vadd.f32 %v3635, %v3641
        %s3646 = sld [smem:[#allocation6 + $0x155]]
        %v3647 = vstv %s3646
        %v3648 = vmul.f32 %v2778, %v3647
        %v3649 = vmul.f32 %v2779, %v3647
        %v3650 = vmul.f32 %v2780, %v3647
        %v3651 = vmul.f32 %v2781, %v3647
        %v3652 = vadd.f32 %v3642, %v3648
        %v3653 = vadd.f32 %v3643, %v3649
        %v3654 = vadd.f32 %v3644, %v3650
        %v3655 = vadd.f32 %v3645, %v3651
        %s3656 = sld [smem:[#allocation6 + $0x15f]]
        %v3657 = vstv %s3656
        %v3658 = vmul.f32 %v2884, %v3657
        %v3659 = vmul.f32 %v2885, %v3657
        %v3660 = vmul.f32 %v2886, %v3657
        %v3661 = vmul.f32 %v2887, %v3657
        %v3662 = vadd.f32 %v3652, %v3658
        %v3663 = vadd.f32 %v3653, %v3659
        %v3664 = vadd.f32 %v3654, %v3660
        %v3665 = vadd.f32 %v3655, %v3661
        %s3666 = sld [smem:[#allocation6 + $0x169]]
        %v3667 = vstv %s3666
        %v3668 = vmul.f32 %v2990, %v3667
        %v3669 = vmul.f32 %v2991, %v3667
        %v3670 = vmul.f32 %v2992, %v3667
        %v3671 = vmul.f32 %v2993, %v3667
        %v3672 = vadd.f32 %v3662, %v3668
        %v3673 = vadd.f32 %v3663, %v3669
        %v3674 = vadd.f32 %v3664, %v3670
        %v3675 = vadd.f32 %v3665, %v3671
        %s3676 = sld [smem:[#allocation6 + $0x173]]
        %v3677 = vstv %s3676
        %v3678 = vmul.f32 %v3096, %v3677
        %v3679 = vmul.f32 %v3097, %v3677
        %v3680 = vmul.f32 %v3098, %v3677
        %v3681 = vmul.f32 %v3099, %v3677
        %v3682 = vadd.f32 %v3672, %v3678
        %v3683 = vadd.f32 %v3673, %v3679
        %v3684 = vadd.f32 %v3674, %v3680
        %v3685 = vadd.f32 %v3675, %v3681
        %s3686 = sld [smem:[#allocation6 + $0x17d]]
        %v3687 = vstv %s3686
        %v3688 = vmul.f32 %v3202, %v3687
        %v3689 = vmul.f32 %v3203, %v3687
        %v3690 = vmul.f32 %v3204, %v3687
        %v3691 = vmul.f32 %v3205, %v3687
        %v3692 = vadd.f32 %v3682, %v3688
        %v3693 = vadd.f32 %v3683, %v3689
        %v3694 = vadd.f32 %v3684, %v3690
        %v3695 = vadd.f32 %v3685, %v3691
        %s3696 = sld [smem:[#allocation6 + $0x187]]
        %v3697 = vstv %s3696
        %v3698 = vmul.f32 %v3308, %v3697
        %v3699 = vmul.f32 %v3309, %v3697
        %v3700 = vmul.f32 %v3310, %v3697
        %v3701 = vmul.f32 %v3311, %v3697
        %v3702 = vadd.f32 %v3692, %v3698
        %v3703 = vadd.f32 %v3693, %v3699
        %v3704 = vadd.f32 %v3694, %v3700
        %v3705 = vadd.f32 %v3695, %v3701
        %s3706 = sld [smem:[#allocation6 + $0x191]]
        %v3707 = vstv %s3706
        %v3708 = vmul.f32 %v3414, %v3707
        %v3709 = vmul.f32 %v3415, %v3707
        %v3710 = vmul.f32 %v3416, %v3707
        %v3711 = vmul.f32 %v3417, %v3707
        %v3712 = vadd.f32 %v3702, %v3708
        %v3713 = vadd.f32 %v3703, %v3709
        %v3714 = vadd.f32 %v3704, %v3710
        %v3715 = vadd.f32 %v3705, %v3711
        %s3716 = sld [smem:[#allocation6 + $0x19b]]
        %v3717 = vstv %s3716
        %v3718 = vmul.f32 %v3520, %v3717
        %v3719 = vmul.f32 %v3521, %v3717
        %v3720 = vmul.f32 %v3522, %v3717
        %v3721 = vmul.f32 %v3523, %v3717
        %v3722 = vadd.f32 %v3712, %v3718
        %v3723 = vadd.f32 %v3713, %v3719
        %v3724 = vadd.f32 %v3714, %v3720
        %v3725 = vadd.f32 %v3715, %v3721
        %s3726 = sld [smem:[#allocation6 + $0x227]]
        %v3727 = vstv %s3726
        %v3728 = vadd.f32 %v3722, %v3727
        %v3729 = vadd.f32 %v3723, %v3727
        %v3730 = vadd.f32 %v3724, %v3727
        %v3731 = vadd.f32 %v3725, %v3727
        %v3732 = vtanh.pop %v3728
        %v3733 = vtanh.pop %v3729
        %v3734 = vtanh.pop %v3730
        %v3735 = vtanh.pop %v3731
        %s3736 = sld [smem:[#allocation6 + $0x142]]
        %v3737 = vstv %s3736
        %v3738 = vmul.f32 %v2566, %v3737
        %v3739 = vmul.f32 %v2567, %v3737
        %v3740 = vmul.f32 %v2568, %v3737
        %v3741 = vmul.f32 %v2569, %v3737
        %s3742 = sld [smem:[#allocation6 + $0x14c]]
        %v3743 = vstv %s3742
        %v3744 = vmul.f32 %v2672, %v3743
        %v3745 = vmul.f32 %v2673, %v3743
        %v3746 = vmul.f32 %v2674, %v3743
        %v3747 = vmul.f32 %v2675, %v3743
        %v3748 = vadd.f32 %v3738, %v3744
        %v3749 = vadd.f32 %v3739, %v3745
        %v3750 = vadd.f32 %v3740, %v3746
        %v3751 = vadd.f32 %v3741, %v3747
        %s3752 = sld [smem:[#allocation6 + $0x156]]
        %v3753 = vstv %s3752
        %v3754 = vmul.f32 %v2778, %v3753
        %v3755 = vmul.f32 %v2779, %v3753
        %v3756 = vmul.f32 %v2780, %v3753
        %v3757 = vmul.f32 %v2781, %v3753
        %v3758 = vadd.f32 %v3748, %v3754
        %v3759 = vadd.f32 %v3749, %v3755
        %v3760 = vadd.f32 %v3750, %v3756
        %v3761 = vadd.f32 %v3751, %v3757
        %s3762 = sld [smem:[#allocation6 + $0x160]]
        %v3763 = vstv %s3762
        %v3764 = vmul.f32 %v2884, %v3763
        %v3765 = vmul.f32 %v2885, %v3763
        %v3766 = vmul.f32 %v2886, %v3763
        %v3767 = vmul.f32 %v2887, %v3763
        %v3768 = vadd.f32 %v3758, %v3764
        %v3769 = vadd.f32 %v3759, %v3765
        %v3770 = vadd.f32 %v3760, %v3766
        %v3771 = vadd.f32 %v3761, %v3767
        %s3772 = sld [smem:[#allocation6 + $0x16a]]
        %v3773 = vstv %s3772
        %v3774 = vmul.f32 %v2990, %v3773
        %v3775 = vmul.f32 %v2991, %v3773
        %v3776 = vmul.f32 %v2992, %v3773
        %v3777 = vmul.f32 %v2993, %v3773
        %v3778 = vadd.f32 %v3768, %v3774
        %v3779 = vadd.f32 %v3769, %v3775
        %v3780 = vadd.f32 %v3770, %v3776
        %v3781 = vadd.f32 %v3771, %v3777
        %s3782 = sld [smem:[#allocation6 + $0x174]]
        %v3783 = vstv %s3782
        %v3784 = vmul.f32 %v3096, %v3783
        %v3785 = vmul.f32 %v3097, %v3783
        %v3786 = vmul.f32 %v3098, %v3783
        %v3787 = vmul.f32 %v3099, %v3783
        %v3788 = vadd.f32 %v3778, %v3784
        %v3789 = vadd.f32 %v3779, %v3785
        %v3790 = vadd.f32 %v3780, %v3786
        %v3791 = vadd.f32 %v3781, %v3787
        %s3792 = sld [smem:[#allocation6 + $0x17e]]
        %v3793 = vstv %s3792
        %v3794 = vmul.f32 %v3202, %v3793
        %v3795 = vmul.f32 %v3203, %v3793
        %v3796 = vmul.f32 %v3204, %v3793
        %v3797 = vmul.f32 %v3205, %v3793
        %v3798 = vadd.f32 %v3788, %v3794
        %v3799 = vadd.f32 %v3789, %v3795
        %v3800 = vadd.f32 %v3790, %v3796
        %v3801 = vadd.f32 %v3791, %v3797
        %s3802 = sld [smem:[#allocation6 + $0x188]]
        %v3803 = vstv %s3802
        %v3804 = vmul.f32 %v3308, %v3803
        %v3805 = vmul.f32 %v3309, %v3803
        %v3806 = vmul.f32 %v3310, %v3803
        %v3807 = vmul.f32 %v3311, %v3803
        %v3808 = vadd.f32 %v3798, %v3804
        %v3809 = vadd.f32 %v3799, %v3805
        %v3810 = vadd.f32 %v3800, %v3806
        %v3811 = vadd.f32 %v3801, %v3807
        %s3812 = sld [smem:[#allocation6 + $0x192]]
        %v3813 = vstv %s3812
        %v3814 = vmul.f32 %v3414, %v3813
        %v3815 = vmul.f32 %v3415, %v3813
        %v3816 = vmul.f32 %v3416, %v3813
        %v3817 = vmul.f32 %v3417, %v3813
        %v3818 = vadd.f32 %v3808, %v3814
        %v3819 = vadd.f32 %v3809, %v3815
        %v3820 = vadd.f32 %v3810, %v3816
        %v3821 = vadd.f32 %v3811, %v3817
        %s3822 = sld [smem:[#allocation6 + $0x19c]]
        %v3823 = vstv %s3822
        %v3824 = vmul.f32 %v3520, %v3823
        %v3825 = vmul.f32 %v3521, %v3823
        %v3826 = vmul.f32 %v3522, %v3823
        %v3827 = vmul.f32 %v3523, %v3823
        %v3828 = vadd.f32 %v3818, %v3824
        %v3829 = vadd.f32 %v3819, %v3825
        %v3830 = vadd.f32 %v3820, %v3826
        %v3831 = vadd.f32 %v3821, %v3827
        %s3832 = sld [smem:[#allocation6 + $0x228]]
        %v3833 = vstv %s3832
        %v3834 = vadd.f32 %v3828, %v3833
        %v3835 = vadd.f32 %v3829, %v3833
        %v3836 = vadd.f32 %v3830, %v3833
        %v3837 = vadd.f32 %v3831, %v3833
        %v3838 = vtanh.pop %v3834
        %v3839 = vtanh.pop %v3835
        %v3840 = vtanh.pop %v3836
        %v3841 = vtanh.pop %v3837
        %s3842 = sld [smem:[#allocation6 + $0x143]]
        %v3843 = vstv %s3842
        %v3844 = vmul.f32 %v2566, %v3843
        %v3845 = vmul.f32 %v2567, %v3843
        %v3846 = vmul.f32 %v2568, %v3843
        %v3847 = vmul.f32 %v2569, %v3843
        %s3848 = sld [smem:[#allocation6 + $0x14d]]
        %v3849 = vstv %s3848
        %v3850 = vmul.f32 %v2672, %v3849
        %v3851 = vmul.f32 %v2673, %v3849
        %v3852 = vmul.f32 %v2674, %v3849
        %v3853 = vmul.f32 %v2675, %v3849
        %v3854 = vadd.f32 %v3844, %v3850
        %v3855 = vadd.f32 %v3845, %v3851
        %v3856 = vadd.f32 %v3846, %v3852
        %v3857 = vadd.f32 %v3847, %v3853
        %s3858 = sld [smem:[#allocation6 + $0x157]]
        %v3859 = vstv %s3858
        %v3860 = vmul.f32 %v2778, %v3859
        %v3861 = vmul.f32 %v2779, %v3859
        %v3862 = vmul.f32 %v2780, %v3859
        %v3863 = vmul.f32 %v2781, %v3859
        %v3864 = vadd.f32 %v3854, %v3860
        %v3865 = vadd.f32 %v3855, %v3861
        %v3866 = vadd.f32 %v3856, %v3862
        %v3867 = vadd.f32 %v3857, %v3863
        %s3868 = sld [smem:[#allocation6 + $0x161]]
        %v3869 = vstv %s3868
        %v3870 = vmul.f32 %v2884, %v3869
        %v3871 = vmul.f32 %v2885, %v3869
        %v3872 = vmul.f32 %v2886, %v3869
        %v3873 = vmul.f32 %v2887, %v3869
        %v3874 = vadd.f32 %v3864, %v3870
        %v3875 = vadd.f32 %v3865, %v3871
        %v3876 = vadd.f32 %v3866, %v3872
        %v3877 = vadd.f32 %v3867, %v3873
        %s3878 = sld [smem:[#allocation6 + $0x16b]]
        %v3879 = vstv %s3878
        %v3880 = vmul.f32 %v2990, %v3879
        %v3881 = vmul.f32 %v2991, %v3879
        %v3882 = vmul.f32 %v2992, %v3879
        %v3883 = vmul.f32 %v2993, %v3879
        %v3884 = vadd.f32 %v3874, %v3880
        %v3885 = vadd.f32 %v3875, %v3881
        %v3886 = vadd.f32 %v3876, %v3882
        %v3887 = vadd.f32 %v3877, %v3883
        %s3888 = sld [smem:[#allocation6 + $0x175]]
        %v3889 = vstv %s3888
        %v3890 = vmul.f32 %v3096, %v3889
        %v3891 = vmul.f32 %v3097, %v3889
        %v3892 = vmul.f32 %v3098, %v3889
        %v3893 = vmul.f32 %v3099, %v3889
        %v3894 = vadd.f32 %v3884, %v3890
        %v3895 = vadd.f32 %v3885, %v3891
        %v3896 = vadd.f32 %v3886, %v3892
        %v3897 = vadd.f32 %v3887, %v3893
        %s3898 = sld [smem:[#allocation6 + $0x17f]]
        %v3899 = vstv %s3898
        %v3900 = vmul.f32 %v3202, %v3899
        %v3901 = vmul.f32 %v3203, %v3899
        %v3902 = vmul.f32 %v3204, %v3899
        %v3903 = vmul.f32 %v3205, %v3899
        %v3904 = vadd.f32 %v3894, %v3900
        %v3905 = vadd.f32 %v3895, %v3901
        %v3906 = vadd.f32 %v3896, %v3902
        %v3907 = vadd.f32 %v3897, %v3903
        %s3908 = sld [smem:[#allocation6 + $0x189]]
        %v3909 = vstv %s3908
        %v3910 = vmul.f32 %v3308, %v3909
        %v3911 = vmul.f32 %v3309, %v3909
        %v3912 = vmul.f32 %v3310, %v3909
        %v3913 = vmul.f32 %v3311, %v3909
        %v3914 = vadd.f32 %v3904, %v3910
        %v3915 = vadd.f32 %v3905, %v3911
        %v3916 = vadd.f32 %v3906, %v3912
        %v3917 = vadd.f32 %v3907, %v3913
        %s3918 = sld [smem:[#allocation6 + $0x193]]
        %v3919 = vstv %s3918
        %v3920 = vmul.f32 %v3414, %v3919
        %v3921 = vmul.f32 %v3415, %v3919
        %v3922 = vmul.f32 %v3416, %v3919
        %v3923 = vmul.f32 %v3417, %v3919
        %v3924 = vadd.f32 %v3914, %v3920
        %v3925 = vadd.f32 %v3915, %v3921
        %v3926 = vadd.f32 %v3916, %v3922
        %v3927 = vadd.f32 %v3917, %v3923
        %s3928 = sld [smem:[#allocation6 + $0x19d]]
        %v3929 = vstv %s3928
        %v3930 = vmul.f32 %v3520, %v3929
        %v3931 = vmul.f32 %v3521, %v3929
        %v3932 = vmul.f32 %v3522, %v3929
        %v3933 = vmul.f32 %v3523, %v3929
        %v3934 = vadd.f32 %v3924, %v3930
        %v3935 = vadd.f32 %v3925, %v3931
        %v3936 = vadd.f32 %v3926, %v3932
        %v3937 = vadd.f32 %v3927, %v3933
        %s3938 = sld [smem:[#allocation6 + $0x229]]
        %v3939 = vstv %s3938
        %v3940 = vadd.f32 %v3934, %v3939
        %v3941 = vadd.f32 %v3935, %v3939
        %v3942 = vadd.f32 %v3936, %v3939
        %v3943 = vadd.f32 %v3937, %v3939
        %v3944 = vtanh.pop %v3940
        %v3945 = vtanh.pop %v3941
        %v3946 = vtanh.pop %v3942
        %v3947 = vtanh.pop %v3943
        %s3948 = sld [smem:[#allocation6 + $0x144]]
        %v3949 = vstv %s3948
        %v3950 = vmul.f32 %v2566, %v3949
        %v3951 = vmul.f32 %v2567, %v3949
        %v3952 = vmul.f32 %v2568, %v3949
        %v3953 = vmul.f32 %v2569, %v3949
        %s3954 = sld [smem:[#allocation6 + $0x14e]]
        %v3955 = vstv %s3954
        %v3956 = vmul.f32 %v2672, %v3955
        %v3957 = vmul.f32 %v2673, %v3955
        %v3958 = vmul.f32 %v2674, %v3955
        %v3959 = vmul.f32 %v2675, %v3955
        %v3960 = vadd.f32 %v3950, %v3956
        %v3961 = vadd.f32 %v3951, %v3957
        %v3962 = vadd.f32 %v3952, %v3958
        %v3963 = vadd.f32 %v3953, %v3959
        %s3964 = sld [smem:[#allocation6 + $0x158]]
        %v3965 = vstv %s3964
        %v3966 = vmul.f32 %v2778, %v3965
        %v3967 = vmul.f32 %v2779, %v3965
        %v3968 = vmul.f32 %v2780, %v3965
        %v3969 = vmul.f32 %v2781, %v3965
        %v3970 = vadd.f32 %v3960, %v3966
        %v3971 = vadd.f32 %v3961, %v3967
        %v3972 = vadd.f32 %v3962, %v3968
        %v3973 = vadd.f32 %v3963, %v3969
        %s3974 = sld [smem:[#allocation6 + $0x162]]
        %v3975 = vstv %s3974
        %v3976 = vmul.f32 %v2884, %v3975
        %v3977 = vmul.f32 %v2885, %v3975
        %v3978 = vmul.f32 %v2886, %v3975
        %v3979 = vmul.f32 %v2887, %v3975
        %v3980 = vadd.f32 %v3970, %v3976
        %v3981 = vadd.f32 %v3971, %v3977
        %v3982 = vadd.f32 %v3972, %v3978
        %v3983 = vadd.f32 %v3973, %v3979
        %s3984 = sld [smem:[#allocation6 + $0x16c]]
        %v3985 = vstv %s3984
        %v3986 = vmul.f32 %v2990, %v3985
        %v3987 = vmul.f32 %v2991, %v3985
        %v3988 = vmul.f32 %v2992, %v3985
        %v3989 = vmul.f32 %v2993, %v3985
        %v3990 = vadd.f32 %v3980, %v3986
        %v3991 = vadd.f32 %v3981, %v3987
        %v3992 = vadd.f32 %v3982, %v3988
        %v3993 = vadd.f32 %v3983, %v3989
        %s3994 = sld [smem:[#allocation6 + $0x176]]
        %v3995 = vstv %s3994
        %v3996 = vmul.f32 %v3096, %v3995
        %v3997 = vmul.f32 %v3097, %v3995
        %v3998 = vmul.f32 %v3098, %v3995
        %v3999 = vmul.f32 %v3099, %v3995
        %v4000 = vadd.f32 %v3990, %v3996
        %v4001 = vadd.f32 %v3991, %v3997
        %v4002 = vadd.f32 %v3992, %v3998
        %v4003 = vadd.f32 %v3993, %v3999
        %s4004 = sld [smem:[#allocation6 + $0x180]]
        %v4005 = vstv %s4004
        %v4006 = vmul.f32 %v3202, %v4005
        %v4007 = vmul.f32 %v3203, %v4005
        %v4008 = vmul.f32 %v3204, %v4005
        %v4009 = vmul.f32 %v3205, %v4005
        %v4010 = vadd.f32 %v4000, %v4006
        %v4011 = vadd.f32 %v4001, %v4007
        %v4012 = vadd.f32 %v4002, %v4008
        %v4013 = vadd.f32 %v4003, %v4009
        %s4014 = sld [smem:[#allocation6 + $0x18a]]
        %v4015 = vstv %s4014
        %v4016 = vmul.f32 %v3308, %v4015
        %v4017 = vmul.f32 %v3309, %v4015
        %v4018 = vmul.f32 %v3310, %v4015
        %v4019 = vmul.f32 %v3311, %v4015
        %v4020 = vadd.f32 %v4010, %v4016
        %v4021 = vadd.f32 %v4011, %v4017
        %v4022 = vadd.f32 %v4012, %v4018
        %v4023 = vadd.f32 %v4013, %v4019
        %s4024 = sld [smem:[#allocation6 + $0x194]]
        %v4025 = vstv %s4024
        %v4026 = vmul.f32 %v3414, %v4025
        %v4027 = vmul.f32 %v3415, %v4025
        %v4028 = vmul.f32 %v3416, %v4025
        %v4029 = vmul.f32 %v3417, %v4025
        %v4030 = vadd.f32 %v4020, %v4026
        %v4031 = vadd.f32 %v4021, %v4027
        %v4032 = vadd.f32 %v4022, %v4028
        %v4033 = vadd.f32 %v4023, %v4029
        %s4034 = sld [smem:[#allocation6 + $0x19e]]
        %v4035 = vstv %s4034
        %v4036 = vmul.f32 %v3520, %v4035
        %v4037 = vmul.f32 %v3521, %v4035
        %v4038 = vmul.f32 %v3522, %v4035
        %v4039 = vmul.f32 %v3523, %v4035
        %v4040 = vadd.f32 %v4030, %v4036
        %v4041 = vadd.f32 %v4031, %v4037
        %v4042 = vadd.f32 %v4032, %v4038
        %v4043 = vadd.f32 %v4033, %v4039
        %s4044 = sld [smem:[#allocation6 + $0x22a]]
        %v4045 = vstv %s4044
        %v4046 = vadd.f32 %v4040, %v4045
        %v4047 = vadd.f32 %v4041, %v4045
        %v4048 = vadd.f32 %v4042, %v4045
        %v4049 = vadd.f32 %v4043, %v4045
        %v4050 = vtanh.pop %v4046
        %v4051 = vtanh.pop %v4047
        %v4052 = vtanh.pop %v4048
        %v4053 = vtanh.pop %v4049
        %s4054 = sld [smem:[#allocation6 + $0x145]]
        %v4055 = vstv %s4054
        %v4056 = vmul.f32 %v2566, %v4055
        %v4057 = vmul.f32 %v2567, %v4055
        %v4058 = vmul.f32 %v2568, %v4055
        %v4059 = vmul.f32 %v2569, %v4055
        %s4060 = sld [smem:[#allocation6 + $0x14f]]
        %v4061 = vstv %s4060
        %v4062 = vmul.f32 %v2672, %v4061
        %v4063 = vmul.f32 %v2673, %v4061
        %v4064 = vmul.f32 %v2674, %v4061
        %v4065 = vmul.f32 %v2675, %v4061
        %v4066 = vadd.f32 %v4056, %v4062
        %v4067 = vadd.f32 %v4057, %v4063
        %v4068 = vadd.f32 %v4058, %v4064
        %v4069 = vadd.f32 %v4059, %v4065
        %s4070 = sld [smem:[#allocation6 + $0x159]]
        %v4071 = vstv %s4070
        %v4072 = vmul.f32 %v2778, %v4071
        %v4073 = vmul.f32 %v2779, %v4071
        %v4074 = vmul.f32 %v2780, %v4071
        %v4075 = vmul.f32 %v2781, %v4071
        %v4076 = vadd.f32 %v4066, %v4072
        %v4077 = vadd.f32 %v4067, %v4073
        %v4078 = vadd.f32 %v4068, %v4074
        %v4079 = vadd.f32 %v4069, %v4075
        %s4080 = sld [smem:[#allocation6 + $0x163]]
        %v4081 = vstv %s4080
        %v4082 = vmul.f32 %v2884, %v4081
        %v4083 = vmul.f32 %v2885, %v4081
        %v4084 = vmul.f32 %v2886, %v4081
        %v4085 = vmul.f32 %v2887, %v4081
        %v4086 = vadd.f32 %v4076, %v4082
        %v4087 = vadd.f32 %v4077, %v4083
        %v4088 = vadd.f32 %v4078, %v4084
        %v4089 = vadd.f32 %v4079, %v4085
        %s4090 = sld [smem:[#allocation6 + $0x16d]]
        %v4091 = vstv %s4090
        %v4092 = vmul.f32 %v2990, %v4091
        %v4093 = vmul.f32 %v2991, %v4091
        %v4094 = vmul.f32 %v2992, %v4091
        %v4095 = vmul.f32 %v2993, %v4091
        %v4096 = vadd.f32 %v4086, %v4092
        %v4097 = vadd.f32 %v4087, %v4093
        %v4098 = vadd.f32 %v4088, %v4094
        %v4099 = vadd.f32 %v4089, %v4095
        %s4100 = sld [smem:[#allocation6 + $0x177]]
        %v4101 = vstv %s4100
        %v4102 = vmul.f32 %v3096, %v4101
        %v4103 = vmul.f32 %v3097, %v4101
        %v4104 = vmul.f32 %v3098, %v4101
        %v4105 = vmul.f32 %v3099, %v4101
        %v4106 = vadd.f32 %v4096, %v4102
        %v4107 = vadd.f32 %v4097, %v4103
        %v4108 = vadd.f32 %v4098, %v4104
        %v4109 = vadd.f32 %v4099, %v4105
        %s4110 = sld [smem:[#allocation6 + $0x181]]
        %v4111 = vstv %s4110
        %v4112 = vmul.f32 %v3202, %v4111
        %v4113 = vmul.f32 %v3203, %v4111
        %v4114 = vmul.f32 %v3204, %v4111
        %v4115 = vmul.f32 %v3205, %v4111
        %v4116 = vadd.f32 %v4106, %v4112
        %v4117 = vadd.f32 %v4107, %v4113
        %v4118 = vadd.f32 %v4108, %v4114
        %v4119 = vadd.f32 %v4109, %v4115
        %s4120 = sld [smem:[#allocation6 + $0x18b]]
        %v4121 = vstv %s4120
        %v4122 = vmul.f32 %v3308, %v4121
        %v4123 = vmul.f32 %v3309, %v4121
        %v4124 = vmul.f32 %v3310, %v4121
        %v4125 = vmul.f32 %v3311, %v4121
        %v4126 = vadd.f32 %v4116, %v4122
        %v4127 = vadd.f32 %v4117, %v4123
        %v4128 = vadd.f32 %v4118, %v4124
        %v4129 = vadd.f32 %v4119, %v4125
        %s4130 = sld [smem:[#allocation6 + $0x195]]
        %v4131 = vstv %s4130
        %v4132 = vmul.f32 %v3414, %v4131
        %v4133 = vmul.f32 %v3415, %v4131
        %v4134 = vmul.f32 %v3416, %v4131
        %v4135 = vmul.f32 %v3417, %v4131
        %v4136 = vadd.f32 %v4126, %v4132
        %v4137 = vadd.f32 %v4127, %v4133
        %v4138 = vadd.f32 %v4128, %v4134
        %v4139 = vadd.f32 %v4129, %v4135
        %s4140 = sld [smem:[#allocation6 + $0x19f]]
        %v4141 = vstv %s4140
        %v4142 = vmul.f32 %v3520, %v4141
        %v4143 = vmul.f32 %v3521, %v4141
        %v4144 = vmul.f32 %v3522, %v4141
        %v4145 = vmul.f32 %v3523, %v4141
        %v4146 = vadd.f32 %v4136, %v4142
        %v4147 = vadd.f32 %v4137, %v4143
        %v4148 = vadd.f32 %v4138, %v4144
        %v4149 = vadd.f32 %v4139, %v4145
        %s4150 = sld [smem:[#allocation6 + $0x22b]]
        %v4151 = vstv %s4150
        %v4152 = vadd.f32 %v4146, %v4151
        %v4153 = vadd.f32 %v4147, %v4151
        %v4154 = vadd.f32 %v4148, %v4151
        %v4155 = vadd.f32 %v4149, %v4151
        %v4156 = vtanh.pop %v4152
        %v4157 = vtanh.pop %v4153
        %v4158 = vtanh.pop %v4154
        %v4159 = vtanh.pop %v4155
        %s4160 = sld [smem:[#allocation6 + $0x146]]
        %v4161 = vstv %s4160
        %v4162 = vmul.f32 %v2566, %v4161
        %v4163 = vmul.f32 %v2567, %v4161
        %v4164 = vmul.f32 %v2568, %v4161
        %v4165 = vmul.f32 %v2569, %v4161
        %s4166 = sld [smem:[#allocation6 + $0x150]]
        %v4167 = vstv %s4166
        %v4168 = vmul.f32 %v2672, %v4167
        %v4169 = vmul.f32 %v2673, %v4167
        %v4170 = vmul.f32 %v2674, %v4167
        %v4171 = vmul.f32 %v2675, %v4167
        %v4172 = vadd.f32 %v4162, %v4168
        %v4173 = vadd.f32 %v4163, %v4169
        %v4174 = vadd.f32 %v4164, %v4170
        %v4175 = vadd.f32 %v4165, %v4171
        %s4176 = sld [smem:[#allocation6 + $0x15a]]
        %v4177 = vstv %s4176
        %v4178 = vmul.f32 %v2778, %v4177
        %v4179 = vmul.f32 %v2779, %v4177
        %v4180 = vmul.f32 %v2780, %v4177
        %v4181 = vmul.f32 %v2781, %v4177
        %v4182 = vadd.f32 %v4172, %v4178
        %v4183 = vadd.f32 %v4173, %v4179
        %v4184 = vadd.f32 %v4174, %v4180
        %v4185 = vadd.f32 %v4175, %v4181
        %s4186 = sld [smem:[#allocation6 + $0x164]]
        %v4187 = vstv %s4186
        %v4188 = vmul.f32 %v2884, %v4187
        %v4189 = vmul.f32 %v2885, %v4187
        %v4190 = vmul.f32 %v2886, %v4187
        %v4191 = vmul.f32 %v2887, %v4187
        %v4192 = vadd.f32 %v4182, %v4188
        %v4193 = vadd.f32 %v4183, %v4189
        %v4194 = vadd.f32 %v4184, %v4190
        %v4195 = vadd.f32 %v4185, %v4191
        %s4196 = sld [smem:[#allocation6 + $0x16e]]
        %v4197 = vstv %s4196
        %v4198 = vmul.f32 %v2990, %v4197
        %v4199 = vmul.f32 %v2991, %v4197
        %v4200 = vmul.f32 %v2992, %v4197
        %v4201 = vmul.f32 %v2993, %v4197
        %v4202 = vadd.f32 %v4192, %v4198
        %v4203 = vadd.f32 %v4193, %v4199
        %v4204 = vadd.f32 %v4194, %v4200
        %v4205 = vadd.f32 %v4195, %v4201
        %s4206 = sld [smem:[#allocation6 + $0x178]]
        %v4207 = vstv %s4206
        %v4208 = vmul.f32 %v3096, %v4207
        %v4209 = vmul.f32 %v3097, %v4207
        %v4210 = vmul.f32 %v3098, %v4207
        %v4211 = vmul.f32 %v3099, %v4207
        %v4212 = vadd.f32 %v4202, %v4208
        %v4213 = vadd.f32 %v4203, %v4209
        %v4214 = vadd.f32 %v4204, %v4210
        %v4215 = vadd.f32 %v4205, %v4211
        %s4216 = sld [smem:[#allocation6 + $0x182]]
        %v4217 = vstv %s4216
        %v4218 = vmul.f32 %v3202, %v4217
        %v4219 = vmul.f32 %v3203, %v4217
        %v4220 = vmul.f32 %v3204, %v4217
        %v4221 = vmul.f32 %v3205, %v4217
        %v4222 = vadd.f32 %v4212, %v4218
        %v4223 = vadd.f32 %v4213, %v4219
        %v4224 = vadd.f32 %v4214, %v4220
        %v4225 = vadd.f32 %v4215, %v4221
        %s4226 = sld [smem:[#allocation6 + $0x18c]]
        %v4227 = vstv %s4226
        %v4228 = vmul.f32 %v3308, %v4227
        %v4229 = vmul.f32 %v3309, %v4227
        %v4230 = vmul.f32 %v3310, %v4227
        %v4231 = vmul.f32 %v3311, %v4227
        %v4232 = vadd.f32 %v4222, %v4228
        %v4233 = vadd.f32 %v4223, %v4229
        %v4234 = vadd.f32 %v4224, %v4230
        %v4235 = vadd.f32 %v4225, %v4231
        %s4236 = sld [smem:[#allocation6 + $0x196]]
        %v4237 = vstv %s4236
        %v4238 = vmul.f32 %v3414, %v4237
        %v4239 = vmul.f32 %v3415, %v4237
        %v4240 = vmul.f32 %v3416, %v4237
        %v4241 = vmul.f32 %v3417, %v4237
        %v4242 = vadd.f32 %v4232, %v4238
        %v4243 = vadd.f32 %v4233, %v4239
        %v4244 = vadd.f32 %v4234, %v4240
        %v4245 = vadd.f32 %v4235, %v4241
        %s4246 = sld [smem:[#allocation6 + $0x1a0]]
        %v4247 = vstv %s4246
        %v4248 = vmul.f32 %v3520, %v4247
        %v4249 = vmul.f32 %v3521, %v4247
        %v4250 = vmul.f32 %v3522, %v4247
        %v4251 = vmul.f32 %v3523, %v4247
        %v4252 = vadd.f32 %v4242, %v4248
        %v4253 = vadd.f32 %v4243, %v4249
        %v4254 = vadd.f32 %v4244, %v4250
        %v4255 = vadd.f32 %v4245, %v4251
        %s4256 = sld [smem:[#allocation6 + $0x22c]]
        %v4257 = vstv %s4256
        %v4258 = vadd.f32 %v4252, %v4257
        %v4259 = vadd.f32 %v4253, %v4257
        %v4260 = vadd.f32 %v4254, %v4257
        %v4261 = vadd.f32 %v4255, %v4257
        %v4262 = vtanh.pop %v4258
        %v4263 = vtanh.pop %v4259
        %v4264 = vtanh.pop %v4260
        %v4265 = vtanh.pop %v4261
        %s4266 = sld [smem:[#allocation6 + $0x147]]
        %v4267 = vstv %s4266
        %v4268 = vmul.f32 %v2566, %v4267
        %v4269 = vmul.f32 %v2567, %v4267
        %v4270 = vmul.f32 %v2568, %v4267
        %v4271 = vmul.f32 %v2569, %v4267
        %s4272 = sld [smem:[#allocation6 + $0x151]]
        %v4273 = vstv %s4272
        %v4274 = vmul.f32 %v2672, %v4273
        %v4275 = vmul.f32 %v2673, %v4273
        %v4276 = vmul.f32 %v2674, %v4273
        %v4277 = vmul.f32 %v2675, %v4273
        %v4278 = vadd.f32 %v4268, %v4274
        %v4279 = vadd.f32 %v4269, %v4275
        %v4280 = vadd.f32 %v4270, %v4276
        %v4281 = vadd.f32 %v4271, %v4277
        %s4282 = sld [smem:[#allocation6 + $0x15b]]
        %v4283 = vstv %s4282
        %v4284 = vmul.f32 %v2778, %v4283
        %v4285 = vmul.f32 %v2779, %v4283
        %v4286 = vmul.f32 %v2780, %v4283
        %v4287 = vmul.f32 %v2781, %v4283
        %v4288 = vadd.f32 %v4278, %v4284
        %v4289 = vadd.f32 %v4279, %v4285
        %v4290 = vadd.f32 %v4280, %v4286
        %v4291 = vadd.f32 %v4281, %v4287
        %s4292 = sld [smem:[#allocation6 + $0x165]]
        %v4293 = vstv %s4292
        %v4294 = vmul.f32 %v2884, %v4293
        %v4295 = vmul.f32 %v2885, %v4293
        %v4296 = vmul.f32 %v2886, %v4293
        %v4297 = vmul.f32 %v2887, %v4293
        %v4298 = vadd.f32 %v4288, %v4294
        %v4299 = vadd.f32 %v4289, %v4295
        %v4300 = vadd.f32 %v4290, %v4296
        %v4301 = vadd.f32 %v4291, %v4297
        %s4302 = sld [smem:[#allocation6 + $0x16f]]
        %v4303 = vstv %s4302
        %v4304 = vmul.f32 %v2990, %v4303
        %v4305 = vmul.f32 %v2991, %v4303
        %v4306 = vmul.f32 %v2992, %v4303
        %v4307 = vmul.f32 %v2993, %v4303
        %v4308 = vadd.f32 %v4298, %v4304
        %v4309 = vadd.f32 %v4299, %v4305
        %v4310 = vadd.f32 %v4300, %v4306
        %v4311 = vadd.f32 %v4301, %v4307
        %s4312 = sld [smem:[#allocation6 + $0x179]]
        %v4313 = vstv %s4312
        %v4314 = vmul.f32 %v3096, %v4313
        %v4315 = vmul.f32 %v3097, %v4313
        %v4316 = vmul.f32 %v3098, %v4313
        %v4317 = vmul.f32 %v3099, %v4313
        %v4318 = vadd.f32 %v4308, %v4314
        %v4319 = vadd.f32 %v4309, %v4315
        %v4320 = vadd.f32 %v4310, %v4316
        %v4321 = vadd.f32 %v4311, %v4317
        %s4322 = sld [smem:[#allocation6 + $0x183]]
        %v4323 = vstv %s4322
        %v4324 = vmul.f32 %v3202, %v4323
        %v4325 = vmul.f32 %v3203, %v4323
        %v4326 = vmul.f32 %v3204, %v4323
        %v4327 = vmul.f32 %v3205, %v4323
        %v4328 = vadd.f32 %v4318, %v4324
        %v4329 = vadd.f32 %v4319, %v4325
        %v4330 = vadd.f32 %v4320, %v4326
        %v4331 = vadd.f32 %v4321, %v4327
        %s4332 = sld [smem:[#allocation6 + $0x18d]]
        %v4333 = vstv %s4332
        %v4334 = vmul.f32 %v3308, %v4333
        %v4335 = vmul.f32 %v3309, %v4333
        %v4336 = vmul.f32 %v3310, %v4333
        %v4337 = vmul.f32 %v3311, %v4333
        %v4338 = vadd.f32 %v4328, %v4334
        %v4339 = vadd.f32 %v4329, %v4335
        %v4340 = vadd.f32 %v4330, %v4336
        %v4341 = vadd.f32 %v4331, %v4337
        %s4342 = sld [smem:[#allocation6 + $0x197]]
        %v4343 = vstv %s4342
        %v4344 = vmul.f32 %v3414, %v4343
        %v4345 = vmul.f32 %v3415, %v4343
        %v4346 = vmul.f32 %v3416, %v4343
        %v4347 = vmul.f32 %v3417, %v4343
        %v4348 = vadd.f32 %v4338, %v4344
        %v4349 = vadd.f32 %v4339, %v4345
        %v4350 = vadd.f32 %v4340, %v4346
        %v4351 = vadd.f32 %v4341, %v4347
        %s4352 = sld [smem:[#allocation6 + $0x1a1]]
        %v4353 = vstv %s4352
        %v4354 = vmul.f32 %v3520, %v4353
        %v4355 = vmul.f32 %v3521, %v4353
        %v4356 = vmul.f32 %v3522, %v4353
        %v4357 = vmul.f32 %v3523, %v4353
        %v4358 = vadd.f32 %v4348, %v4354
        %v4359 = vadd.f32 %v4349, %v4355
        %v4360 = vadd.f32 %v4350, %v4356
        %v4361 = vadd.f32 %v4351, %v4357
        %s4362 = sld [smem:[#allocation6 + $0x22d]]
        %v4363 = vstv %s4362
        %v4364 = vadd.f32 %v4358, %v4363
        %v4365 = vadd.f32 %v4359, %v4363
        %v4366 = vadd.f32 %v4360, %v4363
        %v4367 = vadd.f32 %v4361, %v4363
        %v4368 = vtanh.pop %v4364
        %v4369 = vtanh.pop %v4365
        %v4370 = vtanh.pop %v4366
        %v4371 = vtanh.pop %v4367
        %s4372 = sld [smem:[#allocation6 + $0x148]]
        %v4373 = vstv %s4372
        %v4374 = vmul.f32 %v2566, %v4373
        %v4375 = vmul.f32 %v2567, %v4373
        %v4376 = vmul.f32 %v2568, %v4373
        %v4377 = vmul.f32 %v2569, %v4373
        %s4378 = sld [smem:[#allocation6 + $0x152]]
        %v4379 = vstv %s4378
        %v4380 = vmul.f32 %v2672, %v4379
        %v4381 = vmul.f32 %v2673, %v4379
        %v4382 = vmul.f32 %v2674, %v4379
        %v4383 = vmul.f32 %v2675, %v4379
        %v4384 = vadd.f32 %v4374, %v4380
        %v4385 = vadd.f32 %v4375, %v4381
        %v4386 = vadd.f32 %v4376, %v4382
        %v4387 = vadd.f32 %v4377, %v4383
        %s4388 = sld [smem:[#allocation6 + $0x15c]]
        %v4389 = vstv %s4388
        %v4390 = vmul.f32 %v2778, %v4389
        %v4391 = vmul.f32 %v2779, %v4389
        %v4392 = vmul.f32 %v2780, %v4389
        %v4393 = vmul.f32 %v2781, %v4389
        %v4394 = vadd.f32 %v4384, %v4390
        %v4395 = vadd.f32 %v4385, %v4391
        %v4396 = vadd.f32 %v4386, %v4392
        %v4397 = vadd.f32 %v4387, %v4393
        %s4398 = sld [smem:[#allocation6 + $0x166]]
        %v4399 = vstv %s4398
        %v4400 = vmul.f32 %v2884, %v4399
        %v4401 = vmul.f32 %v2885, %v4399
        %v4402 = vmul.f32 %v2886, %v4399
        %v4403 = vmul.f32 %v2887, %v4399
        %v4404 = vadd.f32 %v4394, %v4400
        %v4405 = vadd.f32 %v4395, %v4401
        %v4406 = vadd.f32 %v4396, %v4402
        %v4407 = vadd.f32 %v4397, %v4403
        %s4408 = sld [smem:[#allocation6 + $0x170]]
        %v4409 = vstv %s4408
        %v4410 = vmul.f32 %v2990, %v4409
        %v4411 = vmul.f32 %v2991, %v4409
        %v4412 = vmul.f32 %v2992, %v4409
        %v4413 = vmul.f32 %v2993, %v4409
        %v4414 = vadd.f32 %v4404, %v4410
        %v4415 = vadd.f32 %v4405, %v4411
        %v4416 = vadd.f32 %v4406, %v4412
        %v4417 = vadd.f32 %v4407, %v4413
        %s4418 = sld [smem:[#allocation6 + $0x17a]]
        %v4419 = vstv %s4418
        %v4420 = vmul.f32 %v3096, %v4419
        %v4421 = vmul.f32 %v3097, %v4419
        %v4422 = vmul.f32 %v3098, %v4419
        %v4423 = vmul.f32 %v3099, %v4419
        %v4424 = vadd.f32 %v4414, %v4420
        %v4425 = vadd.f32 %v4415, %v4421
        %v4426 = vadd.f32 %v4416, %v4422
        %v4427 = vadd.f32 %v4417, %v4423
        %s4428 = sld [smem:[#allocation6 + $0x184]]
        %v4429 = vstv %s4428
        %v4430 = vmul.f32 %v3202, %v4429
        %v4431 = vmul.f32 %v3203, %v4429
        %v4432 = vmul.f32 %v3204, %v4429
        %v4433 = vmul.f32 %v3205, %v4429
        %v4434 = vadd.f32 %v4424, %v4430
        %v4435 = vadd.f32 %v4425, %v4431
        %v4436 = vadd.f32 %v4426, %v4432
        %v4437 = vadd.f32 %v4427, %v4433
        %s4438 = sld [smem:[#allocation6 + $0x18e]]
        %v4439 = vstv %s4438
        %v4440 = vmul.f32 %v3308, %v4439
        %v4441 = vmul.f32 %v3309, %v4439
        %v4442 = vmul.f32 %v3310, %v4439
        %v4443 = vmul.f32 %v3311, %v4439
        %v4444 = vadd.f32 %v4434, %v4440
        %v4445 = vadd.f32 %v4435, %v4441
        %v4446 = vadd.f32 %v4436, %v4442
        %v4447 = vadd.f32 %v4437, %v4443
        %s4448 = sld [smem:[#allocation6 + $0x198]]
        %v4449 = vstv %s4448
        %v4450 = vmul.f32 %v3414, %v4449
        %v4451 = vmul.f32 %v3415, %v4449
        %v4452 = vmul.f32 %v3416, %v4449
        %v4453 = vmul.f32 %v3417, %v4449
        %v4454 = vadd.f32 %v4444, %v4450
        %v4455 = vadd.f32 %v4445, %v4451
        %v4456 = vadd.f32 %v4446, %v4452
        %v4457 = vadd.f32 %v4447, %v4453
        %s4458 = sld [smem:[#allocation6 + $0x1a2]]
        %v4459 = vstv %s4458
        %v4460 = vmul.f32 %v3520, %v4459
        %v4461 = vmul.f32 %v3521, %v4459
        %v4462 = vmul.f32 %v3522, %v4459
        %v4463 = vmul.f32 %v3523, %v4459
        %v4464 = vadd.f32 %v4454, %v4460
        %v4465 = vadd.f32 %v4455, %v4461
        %v4466 = vadd.f32 %v4456, %v4462
        %v4467 = vadd.f32 %v4457, %v4463
        %s4468 = sld [smem:[#allocation6 + $0x22e]]
        %v4469 = vstv %s4468
        %v4470 = vadd.f32 %v4464, %v4469
        %v4471 = vadd.f32 %v4465, %v4469
        %v4472 = vadd.f32 %v4466, %v4469
        %v4473 = vadd.f32 %v4467, %v4469
        %v4474 = vtanh.pop %v4470
        %v4475 = vtanh.pop %v4471
        %v4476 = vtanh.pop %v4472
        %v4477 = vtanh.pop %v4473
        %s4478 = sld [smem:[#allocation6 + $0x149]]
        %v4479 = vstv %s4478
        %v4480 = vmul.f32 %v2566, %v4479
        %v4481 = vmul.f32 %v2567, %v4479
        %v4482 = vmul.f32 %v2568, %v4479
        %v4483 = vmul.f32 %v2569, %v4479
        %s4484 = sld [smem:[#allocation6 + $0x153]]
        %v4485 = vstv %s4484
        %v4486 = vmul.f32 %v2672, %v4485
        %v4487 = vmul.f32 %v2673, %v4485
        %v4488 = vmul.f32 %v2674, %v4485
        %v4489 = vmul.f32 %v2675, %v4485
        %v4490 = vadd.f32 %v4480, %v4486
        %v4491 = vadd.f32 %v4481, %v4487
        %v4492 = vadd.f32 %v4482, %v4488
        %v4493 = vadd.f32 %v4483, %v4489
        %s4494 = sld [smem:[#allocation6 + $0x15d]]
        %v4495 = vstv %s4494
        %v4496 = vmul.f32 %v2778, %v4495
        %v4497 = vmul.f32 %v2779, %v4495
        %v4498 = vmul.f32 %v2780, %v4495
        %v4499 = vmul.f32 %v2781, %v4495
        %v4500 = vadd.f32 %v4490, %v4496
        %v4501 = vadd.f32 %v4491, %v4497
        %v4502 = vadd.f32 %v4492, %v4498
        %v4503 = vadd.f32 %v4493, %v4499
        %s4504 = sld [smem:[#allocation6 + $0x167]]
        %v4505 = vstv %s4504
        %v4506 = vmul.f32 %v2884, %v4505
        %v4507 = vmul.f32 %v2885, %v4505
        %v4508 = vmul.f32 %v2886, %v4505
        %v4509 = vmul.f32 %v2887, %v4505
        %v4510 = vadd.f32 %v4500, %v4506
        %v4511 = vadd.f32 %v4501, %v4507
        %v4512 = vadd.f32 %v4502, %v4508
        %v4513 = vadd.f32 %v4503, %v4509
        %s4514 = sld [smem:[#allocation6 + $0x171]]
        %v4515 = vstv %s4514
        %v4516 = vmul.f32 %v2990, %v4515
        %v4517 = vmul.f32 %v2991, %v4515
        %v4518 = vmul.f32 %v2992, %v4515
        %v4519 = vmul.f32 %v2993, %v4515
        %v4520 = vadd.f32 %v4510, %v4516
        %v4521 = vadd.f32 %v4511, %v4517
        %v4522 = vadd.f32 %v4512, %v4518
        %v4523 = vadd.f32 %v4513, %v4519
        %s4524 = sld [smem:[#allocation6 + $0x17b]]
        %v4525 = vstv %s4524
        %v4526 = vmul.f32 %v3096, %v4525
        %v4527 = vmul.f32 %v3097, %v4525
        %v4528 = vmul.f32 %v3098, %v4525
        %v4529 = vmul.f32 %v3099, %v4525
        %v4530 = vadd.f32 %v4520, %v4526
        %v4531 = vadd.f32 %v4521, %v4527
        %v4532 = vadd.f32 %v4522, %v4528
        %v4533 = vadd.f32 %v4523, %v4529
        %s4534 = sld [smem:[#allocation6 + $0x185]]
        %v4535 = vstv %s4534
        %v4536 = vmul.f32 %v3202, %v4535
        %v4537 = vmul.f32 %v3203, %v4535
        %v4538 = vmul.f32 %v3204, %v4535
        %v4539 = vmul.f32 %v3205, %v4535
        %v4540 = vadd.f32 %v4530, %v4536
        %v4541 = vadd.f32 %v4531, %v4537
        %v4542 = vadd.f32 %v4532, %v4538
        %v4543 = vadd.f32 %v4533, %v4539
        %s4544 = sld [smem:[#allocation6 + $0x18f]]
        %v4545 = vstv %s4544
        %v4546 = vmul.f32 %v3308, %v4545
        %v4547 = vmul.f32 %v3309, %v4545
        %v4548 = vmul.f32 %v3310, %v4545
        %v4549 = vmul.f32 %v3311, %v4545
        %v4550 = vadd.f32 %v4540, %v4546
        %v4551 = vadd.f32 %v4541, %v4547
        %v4552 = vadd.f32 %v4542, %v4548
        %v4553 = vadd.f32 %v4543, %v4549
        %s4554 = sld [smem:[#allocation6 + $0x199]]
        %v4555 = vstv %s4554
        %v4556 = vmul.f32 %v3414, %v4555
        %v4557 = vmul.f32 %v3415, %v4555
        %v4558 = vmul.f32 %v3416, %v4555
        %v4559 = vmul.f32 %v3417, %v4555
        %v4560 = vadd.f32 %v4550, %v4556
        %v4561 = vadd.f32 %v4551, %v4557
        %v4562 = vadd.f32 %v4552, %v4558
        %v4563 = vadd.f32 %v4553, %v4559
        %s4564 = sld [smem:[#allocation6 + $0x1a3]]
        %v4565 = vstv %s4564
        %v4566 = vmul.f32 %v3520, %v4565
        %v4567 = vmul.f32 %v3521, %v4565
        %v4568 = vmul.f32 %v3522, %v4565
        %v4569 = vmul.f32 %v3523, %v4565
        %v4570 = vadd.f32 %v4560, %v4566
        %v4571 = vadd.f32 %v4561, %v4567
        %v4572 = vadd.f32 %v4562, %v4568
        %v4573 = vadd.f32 %v4563, %v4569
        %s4574 = sld [smem:[#allocation6 + $0x22f]]
        %v4575 = vstv %s4574
        %v4576 = vadd.f32 %v4570, %v4575
        %v4577 = vadd.f32 %v4571, %v4575
        %v4578 = vadd.f32 %v4572, %v4575
        %v4579 = vadd.f32 %v4573, %v4575
        %v4580 = vtanh.pop %v4576
        %v4581 = vtanh.pop %v4577
        %v4582 = vtanh.pop %v4578
        %v4583 = vtanh.pop %v4579
        %s4584 = sld [smem:[#allocation6 + $0x1a4]]
        %v4585 = vstv %s4584
        %v4586 = vmul.f32 %v3626, %v4585
        %v4587 = vmul.f32 %v3627, %v4585
        %v4588 = vmul.f32 %v3628, %v4585
        %v4589 = vmul.f32 %v3629, %v4585
        %s4590 = sld [smem:[#allocation6 + $0x1ae]]
        %v4591 = vstv %s4590
        %v4592 = vmul.f32 %v3732, %v4591
        %v4593 = vmul.f32 %v3733, %v4591
        %v4594 = vmul.f32 %v3734, %v4591
        %v4595 = vmul.f32 %v3735, %v4591
        %v4596 = vadd.f32 %v4586, %v4592
        %v4597 = vadd.f32 %v4587, %v4593
        %v4598 = vadd.f32 %v4588, %v4594
        %v4599 = vadd.f32 %v4589, %v4595
        %s4600 = sld [smem:[#allocation6 + $0x1b8]]
        %v4601 = vstv %s4600
        %v4602 = vmul.f32 %v3838, %v4601
        %v4603 = vmul.f32 %v3839, %v4601
        %v4604 = vmul.f32 %v3840, %v4601
        %v4605 = vmul.f32 %v3841, %v4601
        %v4606 = vadd.f32 %v4596, %v4602
        %v4607 = vadd.f32 %v4597, %v4603
        %v4608 = vadd.f32 %v4598, %v4604
        %v4609 = vadd.f32 %v4599, %v4605
        %s4610 = sld [smem:[#allocation6 + $0x1c2]]
        %v4611 = vstv %s4610
        %v4612 = vmul.f32 %v3944, %v4611
        %v4613 = vmul.f32 %v3945, %v4611
        %v4614 = vmul.f32 %v3946, %v4611
        %v4615 = vmul.f32 %v3947, %v4611
        %v4616 = vadd.f32 %v4606, %v4612
        %v4617 = vadd.f32 %v4607, %v4613
        %v4618 = vadd.f32 %v4608, %v4614
        %v4619 = vadd.f32 %v4609, %v4615
        %s4620 = sld [smem:[#allocation6 + $0x1cc]]
        %v4621 = vstv %s4620
        %v4622 = vmul.f32 %v4050, %v4621
        %v4623 = vmul.f32 %v4051, %v4621
        %v4624 = vmul.f32 %v4052, %v4621
        %v4625 = vmul.f32 %v4053, %v4621
        %v4626 = vadd.f32 %v4616, %v4622
        %v4627 = vadd.f32 %v4617, %v4623
        %v4628 = vadd.f32 %v4618, %v4624
        %v4629 = vadd.f32 %v4619, %v4625
        %s4630 = sld [smem:[#allocation6 + $0x1d6]]
        %v4631 = vstv %s4630
        %v4632 = vmul.f32 %v4156, %v4631
        %v4633 = vmul.f32 %v4157, %v4631
        %v4634 = vmul.f32 %v4158, %v4631
        %v4635 = vmul.f32 %v4159, %v4631
        %v4636 = vadd.f32 %v4626, %v4632
        %v4637 = vadd.f32 %v4627, %v4633
        %v4638 = vadd.f32 %v4628, %v4634
        %v4639 = vadd.f32 %v4629, %v4635
        %s4640 = sld [smem:[#allocation6 + $0x1e0]]
        %v4641 = vstv %s4640
        %v4642 = vmul.f32 %v4262, %v4641
        %v4643 = vmul.f32 %v4263, %v4641
        %v4644 = vmul.f32 %v4264, %v4641
        %v4645 = vmul.f32 %v4265, %v4641
        %v4646 = vadd.f32 %v4636, %v4642
        %v4647 = vadd.f32 %v4637, %v4643
        %v4648 = vadd.f32 %v4638, %v4644
        %v4649 = vadd.f32 %v4639, %v4645
        %s4650 = sld [smem:[#allocation6 + $0x1ea]]
        %v4651 = vstv %s4650
        %v4652 = vmul.f32 %v4368, %v4651
        %v4653 = vmul.f32 %v4369, %v4651
        %v4654 = vmul.f32 %v4370, %v4651
        %v4655 = vmul.f32 %v4371, %v4651
        %v4656 = vadd.f32 %v4646, %v4652
        %v4657 = vadd.f32 %v4647, %v4653
        %v4658 = vadd.f32 %v4648, %v4654
        %v4659 = vadd.f32 %v4649, %v4655
        %s4660 = sld [smem:[#allocation6 + $0x1f4]]
        %v4661 = vstv %s4660
        %v4662 = vmul.f32 %v4474, %v4661
        %v4663 = vmul.f32 %v4475, %v4661
        %v4664 = vmul.f32 %v4476, %v4661
        %v4665 = vmul.f32 %v4477, %v4661
        %v4666 = vadd.f32 %v4656, %v4662
        %v4667 = vadd.f32 %v4657, %v4663
        %v4668 = vadd.f32 %v4658, %v4664
        %v4669 = vadd.f32 %v4659, %v4665
        %s4670 = sld [smem:[#allocation6 + $0x1fe]]
        %v4671 = vstv %s4670
        %v4672 = vmul.f32 %v4580, %v4671
        %v4673 = vmul.f32 %v4581, %v4671
        %v4674 = vmul.f32 %v4582, %v4671
        %v4675 = vmul.f32 %v4583, %v4671
        %v4676 = vadd.f32 %v4666, %v4672
        %v4677 = vadd.f32 %v4667, %v4673
        %v4678 = vadd.f32 %v4668, %v4674
        %v4679 = vadd.f32 %v4669, %v4675
        %s4680 = sld [smem:[#allocation6 + $0x230]]
        %v4681 = vstv %s4680
        %v4682 = vadd.f32 %v4676, %v4681
        %v4683 = vadd.f32 %v4677, %v4681
        %v4684 = vadd.f32 %v4678, %v4681
        %v4685 = vadd.f32 %v4679, %v4681
        %v4686 = vtanh.pop %v4682
        %v4687 = vtanh.pop %v4683
        %v4688 = vtanh.pop %v4684
        %v4689 = vtanh.pop %v4685
        %s4690 = sld [smem:[#allocation6 + $0x1a5]]
        %v4691 = vstv %s4690
        %v4692 = vmul.f32 %v3626, %v4691
        %v4693 = vmul.f32 %v3627, %v4691
        %v4694 = vmul.f32 %v3628, %v4691
        %v4695 = vmul.f32 %v3629, %v4691
        %s4696 = sld [smem:[#allocation6 + $0x1af]]
        %v4697 = vstv %s4696
        %v4698 = vmul.f32 %v3732, %v4697
        %v4699 = vmul.f32 %v3733, %v4697
        %v4700 = vmul.f32 %v3734, %v4697
        %v4701 = vmul.f32 %v3735, %v4697
        %v4702 = vadd.f32 %v4692, %v4698
        %v4703 = vadd.f32 %v4693, %v4699
        %v4704 = vadd.f32 %v4694, %v4700
        %v4705 = vadd.f32 %v4695, %v4701
        %s4706 = sld [smem:[#allocation6 + $0x1b9]]
        %v4707 = vstv %s4706
        %v4708 = vmul.f32 %v3838, %v4707
        %v4709 = vmul.f32 %v3839, %v4707
        %v4710 = vmul.f32 %v3840, %v4707
        %v4711 = vmul.f32 %v3841, %v4707
        %v4712 = vadd.f32 %v4702, %v4708
        %v4713 = vadd.f32 %v4703, %v4709
        %v4714 = vadd.f32 %v4704, %v4710
        %v4715 = vadd.f32 %v4705, %v4711
        %s4716 = sld [smem:[#allocation6 + $0x1c3]]
        %v4717 = vstv %s4716
        %v4718 = vmul.f32 %v3944, %v4717
        %v4719 = vmul.f32 %v3945, %v4717
        %v4720 = vmul.f32 %v3946, %v4717
        %v4721 = vmul.f32 %v3947, %v4717
        %v4722 = vadd.f32 %v4712, %v4718
        %v4723 = vadd.f32 %v4713, %v4719
        %v4724 = vadd.f32 %v4714, %v4720
        %v4725 = vadd.f32 %v4715, %v4721
        %s4726 = sld [smem:[#allocation6 + $0x1cd]]
        %v4727 = vstv %s4726
        %v4728 = vmul.f32 %v4050, %v4727
        %v4729 = vmul.f32 %v4051, %v4727
        %v4730 = vmul.f32 %v4052, %v4727
        %v4731 = vmul.f32 %v4053, %v4727
        %v4732 = vadd.f32 %v4722, %v4728
        %v4733 = vadd.f32 %v4723, %v4729
        %v4734 = vadd.f32 %v4724, %v4730
        %v4735 = vadd.f32 %v4725, %v4731
        %s4736 = sld [smem:[#allocation6 + $0x1d7]]
        %v4737 = vstv %s4736
        %v4738 = vmul.f32 %v4156, %v4737
        %v4739 = vmul.f32 %v4157, %v4737
        %v4740 = vmul.f32 %v4158, %v4737
        %v4741 = vmul.f32 %v4159, %v4737
        %v4742 = vadd.f32 %v4732, %v4738
        %v4743 = vadd.f32 %v4733, %v4739
        %v4744 = vadd.f32 %v4734, %v4740
        %v4745 = vadd.f32 %v4735, %v4741
        %s4746 = sld [smem:[#allocation6 + $0x1e1]]
        %v4747 = vstv %s4746
        %v4748 = vmul.f32 %v4262, %v4747
        %v4749 = vmul.f32 %v4263, %v4747
        %v4750 = vmul.f32 %v4264, %v4747
        %v4751 = vmul.f32 %v4265, %v4747
        %v4752 = vadd.f32 %v4742, %v4748
        %v4753 = vadd.f32 %v4743, %v4749
        %v4754 = vadd.f32 %v4744, %v4750
        %v4755 = vadd.f32 %v4745, %v4751
        %s4756 = sld [smem:[#allocation6 + $0x1eb]]
        %v4757 = vstv %s4756
        %v4758 = vmul.f32 %v4368, %v4757
        %v4759 = vmul.f32 %v4369, %v4757
        %v4760 = vmul.f32 %v4370, %v4757
        %v4761 = vmul.f32 %v4371, %v4757
        %v4762 = vadd.f32 %v4752, %v4758
        %v4763 = vadd.f32 %v4753, %v4759
        %v4764 = vadd.f32 %v4754, %v4760
        %v4765 = vadd.f32 %v4755, %v4761
        %s4766 = sld [smem:[#allocation6 + $0x1f5]]
        %v4767 = vstv %s4766
        %v4768 = vmul.f32 %v4474, %v4767
        %v4769 = vmul.f32 %v4475, %v4767
        %v4770 = vmul.f32 %v4476, %v4767
        %v4771 = vmul.f32 %v4477, %v4767
        %v4772 = vadd.f32 %v4762, %v4768
        %v4773 = vadd.f32 %v4763, %v4769
        %v4774 = vadd.f32 %v4764, %v4770
        %v4775 = vadd.f32 %v4765, %v4771
        %s4776 = sld [smem:[#allocation6 + $0x1ff]]
        %v4777 = vstv %s4776
        %v4778 = vmul.f32 %v4580, %v4777
        %v4779 = vmul.f32 %v4581, %v4777
        %v4780 = vmul.f32 %v4582, %v4777
        %v4781 = vmul.f32 %v4583, %v4777
        %v4782 = vadd.f32 %v4772, %v4778
        %v4783 = vadd.f32 %v4773, %v4779
        %v4784 = vadd.f32 %v4774, %v4780
        %v4785 = vadd.f32 %v4775, %v4781
        %s4786 = sld [smem:[#allocation6 + $0x231]]
        %v4787 = vstv %s4786
        %v4788 = vadd.f32 %v4782, %v4787
        %v4789 = vadd.f32 %v4783, %v4787
        %v4790 = vadd.f32 %v4784, %v4787
        %v4791 = vadd.f32 %v4785, %v4787
        %v4792 = vtanh.pop %v4788
        %v4793 = vtanh.pop %v4789
        %v4794 = vtanh.pop %v4790
        %v4795 = vtanh.pop %v4791
        %s4796 = sld [smem:[#allocation6 + $0x1a6]]
        %v4797 = vstv %s4796
        %v4798 = vmul.f32 %v3626, %v4797
        %v4799 = vmul.f32 %v3627, %v4797
        %v4800 = vmul.f32 %v3628, %v4797
        %v4801 = vmul.f32 %v3629, %v4797
        %s4802 = sld [smem:[#allocation6 + $0x1b0]]
        %v4803 = vstv %s4802
        %v4804 = vmul.f32 %v3732, %v4803
        %v4805 = vmul.f32 %v3733, %v4803
        %v4806 = vmul.f32 %v3734, %v4803
        %v4807 = vmul.f32 %v3735, %v4803
        %v4808 = vadd.f32 %v4798, %v4804
        %v4809 = vadd.f32 %v4799, %v4805
        %v4810 = vadd.f32 %v4800, %v4806
        %v4811 = vadd.f32 %v4801, %v4807
        %s4812 = sld [smem:[#allocation6 + $0x1ba]]
        %v4813 = vstv %s4812
        %v4814 = vmul.f32 %v3838, %v4813
        %v4815 = vmul.f32 %v3839, %v4813
        %v4816 = vmul.f32 %v3840, %v4813
        %v4817 = vmul.f32 %v3841, %v4813
        %v4818 = vadd.f32 %v4808, %v4814
        %v4819 = vadd.f32 %v4809, %v4815
        %v4820 = vadd.f32 %v4810, %v4816
        %v4821 = vadd.f32 %v4811, %v4817
        %s4822 = sld [smem:[#allocation6 + $0x1c4]]
        %v4823 = vstv %s4822
        %v4824 = vmul.f32 %v3944, %v4823
        %v4825 = vmul.f32 %v3945, %v4823
        %v4826 = vmul.f32 %v3946, %v4823
        %v4827 = vmul.f32 %v3947, %v4823
        %v4828 = vadd.f32 %v4818, %v4824
        %v4829 = vadd.f32 %v4819, %v4825
        %v4830 = vadd.f32 %v4820, %v4826
        %v4831 = vadd.f32 %v4821, %v4827
        %s4832 = sld [smem:[#allocation6 + $0x1ce]]
        %v4833 = vstv %s4832
        %v4834 = vmul.f32 %v4050, %v4833
        %v4835 = vmul.f32 %v4051, %v4833
        %v4836 = vmul.f32 %v4052, %v4833
        %v4837 = vmul.f32 %v4053, %v4833
        %v4838 = vadd.f32 %v4828, %v4834
        %v4839 = vadd.f32 %v4829, %v4835
        %v4840 = vadd.f32 %v4830, %v4836
        %v4841 = vadd.f32 %v4831, %v4837
        %s4842 = sld [smem:[#allocation6 + $0x1d8]]
        %v4843 = vstv %s4842
        %v4844 = vmul.f32 %v4156, %v4843
        %v4845 = vmul.f32 %v4157, %v4843
        %v4846 = vmul.f32 %v4158, %v4843
        %v4847 = vmul.f32 %v4159, %v4843
        %v4848 = vadd.f32 %v4838, %v4844
        %v4849 = vadd.f32 %v4839, %v4845
        %v4850 = vadd.f32 %v4840, %v4846
        %v4851 = vadd.f32 %v4841, %v4847
        %s4852 = sld [smem:[#allocation6 + $0x1e2]]
        %v4853 = vstv %s4852
        %v4854 = vmul.f32 %v4262, %v4853
        %v4855 = vmul.f32 %v4263, %v4853
        %v4856 = vmul.f32 %v4264, %v4853
        %v4857 = vmul.f32 %v4265, %v4853
        %v4858 = vadd.f32 %v4848, %v4854
        %v4859 = vadd.f32 %v4849, %v4855
        %v4860 = vadd.f32 %v4850, %v4856
        %v4861 = vadd.f32 %v4851, %v4857
        %s4862 = sld [smem:[#allocation6 + $0x1ec]]
        %v4863 = vstv %s4862
        %v4864 = vmul.f32 %v4368, %v4863
        %v4865 = vmul.f32 %v4369, %v4863
        %v4866 = vmul.f32 %v4370, %v4863
        %v4867 = vmul.f32 %v4371, %v4863
        %v4868 = vadd.f32 %v4858, %v4864
        %v4869 = vadd.f32 %v4859, %v4865
        %v4870 = vadd.f32 %v4860, %v4866
        %v4871 = vadd.f32 %v4861, %v4867
        %s4872 = sld [smem:[#allocation6 + $0x1f6]]
        %v4873 = vstv %s4872
        %v4874 = vmul.f32 %v4474, %v4873
        %v4875 = vmul.f32 %v4475, %v4873
        %v4876 = vmul.f32 %v4476, %v4873
        %v4877 = vmul.f32 %v4477, %v4873
        %v4878 = vadd.f32 %v4868, %v4874
        %v4879 = vadd.f32 %v4869, %v4875
        %v4880 = vadd.f32 %v4870, %v4876
        %v4881 = vadd.f32 %v4871, %v4877
        %s4882 = sld [smem:[#allocation6 + $0x200]]
        %v4883 = vstv %s4882
        %v4884 = vmul.f32 %v4580, %v4883
        %v4885 = vmul.f32 %v4581, %v4883
        %v4886 = vmul.f32 %v4582, %v4883
        %v4887 = vmul.f32 %v4583, %v4883
        %v4888 = vadd.f32 %v4878, %v4884
        %v4889 = vadd.f32 %v4879, %v4885
        %v4890 = vadd.f32 %v4880, %v4886
        %v4891 = vadd.f32 %v4881, %v4887
        %s4892 = sld [smem:[#allocation6 + $0x232]]
        %v4893 = vstv %s4892
        %v4894 = vadd.f32 %v4888, %v4893
        %v4895 = vadd.f32 %v4889, %v4893
        %v4896 = vadd.f32 %v4890, %v4893
        %v4897 = vadd.f32 %v4891, %v4893
        %v4898 = vtanh.pop %v4894
        %v4899 = vtanh.pop %v4895
        %v4900 = vtanh.pop %v4896
        %v4901 = vtanh.pop %v4897
        %s4902 = sld [smem:[#allocation6 + $0x1a7]]
        %v4903 = vstv %s4902
        %v4904 = vmul.f32 %v3626, %v4903
        %v4905 = vmul.f32 %v3627, %v4903
        %v4906 = vmul.f32 %v3628, %v4903
        %v4907 = vmul.f32 %v3629, %v4903
        %s4908 = sld [smem:[#allocation6 + $0x1b1]]
        %v4909 = vstv %s4908
        %v4910 = vmul.f32 %v3732, %v4909
        %v4911 = vmul.f32 %v3733, %v4909
        %v4912 = vmul.f32 %v3734, %v4909
        %v4913 = vmul.f32 %v3735, %v4909
        %v4914 = vadd.f32 %v4904, %v4910
        %v4915 = vadd.f32 %v4905, %v4911
        %v4916 = vadd.f32 %v4906, %v4912
        %v4917 = vadd.f32 %v4907, %v4913
        %s4918 = sld [smem:[#allocation6 + $0x1bb]]
        %v4919 = vstv %s4918
        %v4920 = vmul.f32 %v3838, %v4919
        %v4921 = vmul.f32 %v3839, %v4919
        %v4922 = vmul.f32 %v3840, %v4919
        %v4923 = vmul.f32 %v3841, %v4919
        %v4924 = vadd.f32 %v4914, %v4920
        %v4925 = vadd.f32 %v4915, %v4921
        %v4926 = vadd.f32 %v4916, %v4922
        %v4927 = vadd.f32 %v4917, %v4923
        %s4928 = sld [smem:[#allocation6 + $0x1c5]]
        %v4929 = vstv %s4928
        %v4930 = vmul.f32 %v3944, %v4929
        %v4931 = vmul.f32 %v3945, %v4929
        %v4932 = vmul.f32 %v3946, %v4929
        %v4933 = vmul.f32 %v3947, %v4929
        %v4934 = vadd.f32 %v4924, %v4930
        %v4935 = vadd.f32 %v4925, %v4931
        %v4936 = vadd.f32 %v4926, %v4932
        %v4937 = vadd.f32 %v4927, %v4933
        %s4938 = sld [smem:[#allocation6 + $0x1cf]]
        %v4939 = vstv %s4938
        %v4940 = vmul.f32 %v4050, %v4939
        %v4941 = vmul.f32 %v4051, %v4939
        %v4942 = vmul.f32 %v4052, %v4939
        %v4943 = vmul.f32 %v4053, %v4939
        %v4944 = vadd.f32 %v4934, %v4940
        %v4945 = vadd.f32 %v4935, %v4941
        %v4946 = vadd.f32 %v4936, %v4942
        %v4947 = vadd.f32 %v4937, %v4943
        %s4948 = sld [smem:[#allocation6 + $0x1d9]]
        %v4949 = vstv %s4948
        %v4950 = vmul.f32 %v4156, %v4949
        %v4951 = vmul.f32 %v4157, %v4949
        %v4952 = vmul.f32 %v4158, %v4949
        %v4953 = vmul.f32 %v4159, %v4949
        %v4954 = vadd.f32 %v4944, %v4950
        %v4955 = vadd.f32 %v4945, %v4951
        %v4956 = vadd.f32 %v4946, %v4952
        %v4957 = vadd.f32 %v4947, %v4953
        %s4958 = sld [smem:[#allocation6 + $0x1e3]]
        %v4959 = vstv %s4958
        %v4960 = vmul.f32 %v4262, %v4959
        %v4961 = vmul.f32 %v4263, %v4959
        %v4962 = vmul.f32 %v4264, %v4959
        %v4963 = vmul.f32 %v4265, %v4959
        %v4964 = vadd.f32 %v4954, %v4960
        %v4965 = vadd.f32 %v4955, %v4961
        %v4966 = vadd.f32 %v4956, %v4962
        %v4967 = vadd.f32 %v4957, %v4963
        %s4968 = sld [smem:[#allocation6 + $0x1ed]]
        %v4969 = vstv %s4968
        %v4970 = vmul.f32 %v4368, %v4969
        %v4971 = vmul.f32 %v4369, %v4969
        %v4972 = vmul.f32 %v4370, %v4969
        %v4973 = vmul.f32 %v4371, %v4969
        %v4974 = vadd.f32 %v4964, %v4970
        %v4975 = vadd.f32 %v4965, %v4971
        %v4976 = vadd.f32 %v4966, %v4972
        %v4977 = vadd.f32 %v4967, %v4973
        %s4978 = sld [smem:[#allocation6 + $0x1f7]]
        %v4979 = vstv %s4978
        %v4980 = vmul.f32 %v4474, %v4979
        %v4981 = vmul.f32 %v4475, %v4979
        %v4982 = vmul.f32 %v4476, %v4979
        %v4983 = vmul.f32 %v4477, %v4979
        %v4984 = vadd.f32 %v4974, %v4980
        %v4985 = vadd.f32 %v4975, %v4981
        %v4986 = vadd.f32 %v4976, %v4982
        %v4987 = vadd.f32 %v4977, %v4983
        %s4988 = sld [smem:[#allocation6 + $0x201]]
        %v4989 = vstv %s4988
        %v4990 = vmul.f32 %v4580, %v4989
        %v4991 = vmul.f32 %v4581, %v4989
        %v4992 = vmul.f32 %v4582, %v4989
        %v4993 = vmul.f32 %v4583, %v4989
        %v4994 = vadd.f32 %v4984, %v4990
        %v4995 = vadd.f32 %v4985, %v4991
        %v4996 = vadd.f32 %v4986, %v4992
        %v4997 = vadd.f32 %v4987, %v4993
        %s4998 = sld [smem:[#allocation6 + $0x233]]
        %v4999 = vstv %s4998
        %v5000 = vadd.f32 %v4994, %v4999
        %v5001 = vadd.f32 %v4995, %v4999
        %v5002 = vadd.f32 %v4996, %v4999
        %v5003 = vadd.f32 %v4997, %v4999
        %v5004 = vtanh.pop %v5000
        %v5005 = vtanh.pop %v5001
        %v5006 = vtanh.pop %v5002
        %v5007 = vtanh.pop %v5003
        %s5008 = sld [smem:[#allocation6 + $0x1a8]]
        %v5009 = vstv %s5008
        %v5010 = vmul.f32 %v3626, %v5009
        %v5011 = vmul.f32 %v3627, %v5009
        %v5012 = vmul.f32 %v3628, %v5009
        %v5013 = vmul.f32 %v3629, %v5009
        %s5014 = sld [smem:[#allocation6 + $0x1b2]]
        %v5015 = vstv %s5014
        %v5016 = vmul.f32 %v3732, %v5015
        %v5017 = vmul.f32 %v3733, %v5015
        %v5018 = vmul.f32 %v3734, %v5015
        %v5019 = vmul.f32 %v3735, %v5015
        %v5020 = vadd.f32 %v5010, %v5016
        %v5021 = vadd.f32 %v5011, %v5017
        %v5022 = vadd.f32 %v5012, %v5018
        %v5023 = vadd.f32 %v5013, %v5019
        %s5024 = sld [smem:[#allocation6 + $0x1bc]]
        %v5025 = vstv %s5024
        %v5026 = vmul.f32 %v3838, %v5025
        %v5027 = vmul.f32 %v3839, %v5025
        %v5028 = vmul.f32 %v3840, %v5025
        %v5029 = vmul.f32 %v3841, %v5025
        %v5030 = vadd.f32 %v5020, %v5026
        %v5031 = vadd.f32 %v5021, %v5027
        %v5032 = vadd.f32 %v5022, %v5028
        %v5033 = vadd.f32 %v5023, %v5029
        %s5034 = sld [smem:[#allocation6 + $0x1c6]]
        %v5035 = vstv %s5034
        %v5036 = vmul.f32 %v3944, %v5035
        %v5037 = vmul.f32 %v3945, %v5035
        %v5038 = vmul.f32 %v3946, %v5035
        %v5039 = vmul.f32 %v3947, %v5035
        %v5040 = vadd.f32 %v5030, %v5036
        %v5041 = vadd.f32 %v5031, %v5037
        %v5042 = vadd.f32 %v5032, %v5038
        %v5043 = vadd.f32 %v5033, %v5039
        %s5044 = sld [smem:[#allocation6 + $0x1d0]]
        %v5045 = vstv %s5044
        %v5046 = vmul.f32 %v4050, %v5045
        %v5047 = vmul.f32 %v4051, %v5045
        %v5048 = vmul.f32 %v4052, %v5045
        %v5049 = vmul.f32 %v4053, %v5045
        %v5050 = vadd.f32 %v5040, %v5046
        %v5051 = vadd.f32 %v5041, %v5047
        %v5052 = vadd.f32 %v5042, %v5048
        %v5053 = vadd.f32 %v5043, %v5049
        %s5054 = sld [smem:[#allocation6 + $0x1da]]
        %v5055 = vstv %s5054
        %v5056 = vmul.f32 %v4156, %v5055
        %v5057 = vmul.f32 %v4157, %v5055
        %v5058 = vmul.f32 %v4158, %v5055
        %v5059 = vmul.f32 %v4159, %v5055
        %v5060 = vadd.f32 %v5050, %v5056
        %v5061 = vadd.f32 %v5051, %v5057
        %v5062 = vadd.f32 %v5052, %v5058
        %v5063 = vadd.f32 %v5053, %v5059
        %s5064 = sld [smem:[#allocation6 + $0x1e4]]
        %v5065 = vstv %s5064
        %v5066 = vmul.f32 %v4262, %v5065
        %v5067 = vmul.f32 %v4263, %v5065
        %v5068 = vmul.f32 %v4264, %v5065
        %v5069 = vmul.f32 %v4265, %v5065
        %v5070 = vadd.f32 %v5060, %v5066
        %v5071 = vadd.f32 %v5061, %v5067
        %v5072 = vadd.f32 %v5062, %v5068
        %v5073 = vadd.f32 %v5063, %v5069
        %s5074 = sld [smem:[#allocation6 + $0x1ee]]
        %v5075 = vstv %s5074
        %v5076 = vmul.f32 %v4368, %v5075
        %v5077 = vmul.f32 %v4369, %v5075
        %v5078 = vmul.f32 %v4370, %v5075
        %v5079 = vmul.f32 %v4371, %v5075
        %v5080 = vadd.f32 %v5070, %v5076
        %v5081 = vadd.f32 %v5071, %v5077
        %v5082 = vadd.f32 %v5072, %v5078
        %v5083 = vadd.f32 %v5073, %v5079
        %s5084 = sld [smem:[#allocation6 + $0x1f8]]
        %v5085 = vstv %s5084
        %v5086 = vmul.f32 %v4474, %v5085
        %v5087 = vmul.f32 %v4475, %v5085
        %v5088 = vmul.f32 %v4476, %v5085
        %v5089 = vmul.f32 %v4477, %v5085
        %v5090 = vadd.f32 %v5080, %v5086
        %v5091 = vadd.f32 %v5081, %v5087
        %v5092 = vadd.f32 %v5082, %v5088
        %v5093 = vadd.f32 %v5083, %v5089
        %s5094 = sld [smem:[#allocation6 + $0x202]]
        %v5095 = vstv %s5094
        %v5096 = vmul.f32 %v4580, %v5095
        %v5097 = vmul.f32 %v4581, %v5095
        %v5098 = vmul.f32 %v4582, %v5095
        %v5099 = vmul.f32 %v4583, %v5095
        %v5100 = vadd.f32 %v5090, %v5096
        %v5101 = vadd.f32 %v5091, %v5097
        %v5102 = vadd.f32 %v5092, %v5098
        %v5103 = vadd.f32 %v5093, %v5099
        %s5104 = sld [smem:[#allocation6 + $0x234]]
        %v5105 = vstv %s5104
        %v5106 = vadd.f32 %v5100, %v5105
        %v5107 = vadd.f32 %v5101, %v5105
        %v5108 = vadd.f32 %v5102, %v5105
        %v5109 = vadd.f32 %v5103, %v5105
        %v5110 = vtanh.pop %v5106
        %v5111 = vtanh.pop %v5107
        %v5112 = vtanh.pop %v5108
        %v5113 = vtanh.pop %v5109
        %s5114 = sld [smem:[#allocation6 + $0x1a9]]
        %v5115 = vstv %s5114
        %v5116 = vmul.f32 %v3626, %v5115
        %v5117 = vmul.f32 %v3627, %v5115
        %v5118 = vmul.f32 %v3628, %v5115
        %v5119 = vmul.f32 %v3629, %v5115
        %s5120 = sld [smem:[#allocation6 + $0x1b3]]
        %v5121 = vstv %s5120
        %v5122 = vmul.f32 %v3732, %v5121
        %v5123 = vmul.f32 %v3733, %v5121
        %v5124 = vmul.f32 %v3734, %v5121
        %v5125 = vmul.f32 %v3735, %v5121
        %v5126 = vadd.f32 %v5116, %v5122
        %v5127 = vadd.f32 %v5117, %v5123
        %v5128 = vadd.f32 %v5118, %v5124
        %v5129 = vadd.f32 %v5119, %v5125
        %s5130 = sld [smem:[#allocation6 + $0x1bd]]
        %v5131 = vstv %s5130
        %v5132 = vmul.f32 %v3838, %v5131
        %v5133 = vmul.f32 %v3839, %v5131
        %v5134 = vmul.f32 %v3840, %v5131
        %v5135 = vmul.f32 %v3841, %v5131
        %v5136 = vadd.f32 %v5126, %v5132
        %v5137 = vadd.f32 %v5127, %v5133
        %v5138 = vadd.f32 %v5128, %v5134
        %v5139 = vadd.f32 %v5129, %v5135
        %s5140 = sld [smem:[#allocation6 + $0x1c7]]
        %v5141 = vstv %s5140
        %v5142 = vmul.f32 %v3944, %v5141
        %v5143 = vmul.f32 %v3945, %v5141
        %v5144 = vmul.f32 %v3946, %v5141
        %v5145 = vmul.f32 %v3947, %v5141
        %v5146 = vadd.f32 %v5136, %v5142
        %v5147 = vadd.f32 %v5137, %v5143
        %v5148 = vadd.f32 %v5138, %v5144
        %v5149 = vadd.f32 %v5139, %v5145
        %s5150 = sld [smem:[#allocation6 + $0x1d1]]
        %v5151 = vstv %s5150
        %v5152 = vmul.f32 %v4050, %v5151
        %v5153 = vmul.f32 %v4051, %v5151
        %v5154 = vmul.f32 %v4052, %v5151
        %v5155 = vmul.f32 %v4053, %v5151
        %v5156 = vadd.f32 %v5146, %v5152
        %v5157 = vadd.f32 %v5147, %v5153
        %v5158 = vadd.f32 %v5148, %v5154
        %v5159 = vadd.f32 %v5149, %v5155
        %s5160 = sld [smem:[#allocation6 + $0x1db]]
        %v5161 = vstv %s5160
        %v5162 = vmul.f32 %v4156, %v5161
        %v5163 = vmul.f32 %v4157, %v5161
        %v5164 = vmul.f32 %v4158, %v5161
        %v5165 = vmul.f32 %v4159, %v5161
        %v5166 = vadd.f32 %v5156, %v5162
        %v5167 = vadd.f32 %v5157, %v5163
        %v5168 = vadd.f32 %v5158, %v5164
        %v5169 = vadd.f32 %v5159, %v5165
        %s5170 = sld [smem:[#allocation6 + $0x1e5]]
        %v5171 = vstv %s5170
        %v5172 = vmul.f32 %v4262, %v5171
        %v5173 = vmul.f32 %v4263, %v5171
        %v5174 = vmul.f32 %v4264, %v5171
        %v5175 = vmul.f32 %v4265, %v5171
        %v5176 = vadd.f32 %v5166, %v5172
        %v5177 = vadd.f32 %v5167, %v5173
        %v5178 = vadd.f32 %v5168, %v5174
        %v5179 = vadd.f32 %v5169, %v5175
        %s5180 = sld [smem:[#allocation6 + $0x1ef]]
        %v5181 = vstv %s5180
        %v5182 = vmul.f32 %v4368, %v5181
        %v5183 = vmul.f32 %v4369, %v5181
        %v5184 = vmul.f32 %v4370, %v5181
        %v5185 = vmul.f32 %v4371, %v5181
        %v5186 = vadd.f32 %v5176, %v5182
        %v5187 = vadd.f32 %v5177, %v5183
        %v5188 = vadd.f32 %v5178, %v5184
        %v5189 = vadd.f32 %v5179, %v5185
        %s5190 = sld [smem:[#allocation6 + $0x1f9]]
        %v5191 = vstv %s5190
        %v5192 = vmul.f32 %v4474, %v5191
        %v5193 = vmul.f32 %v4475, %v5191
        %v5194 = vmul.f32 %v4476, %v5191
        %v5195 = vmul.f32 %v4477, %v5191
        %v5196 = vadd.f32 %v5186, %v5192
        %v5197 = vadd.f32 %v5187, %v5193
        %v5198 = vadd.f32 %v5188, %v5194
        %v5199 = vadd.f32 %v5189, %v5195
        %s5200 = sld [smem:[#allocation6 + $0x203]]
        %v5201 = vstv %s5200
        %v5202 = vmul.f32 %v4580, %v5201
        %v5203 = vmul.f32 %v4581, %v5201
        %v5204 = vmul.f32 %v4582, %v5201
        %v5205 = vmul.f32 %v4583, %v5201
        %v5206 = vadd.f32 %v5196, %v5202
        %v5207 = vadd.f32 %v5197, %v5203
        %v5208 = vadd.f32 %v5198, %v5204
        %v5209 = vadd.f32 %v5199, %v5205
        %s5210 = sld [smem:[#allocation6 + $0x235]]
        %v5211 = vstv %s5210
        %v5212 = vadd.f32 %v5206, %v5211
        %v5213 = vadd.f32 %v5207, %v5211
        %v5214 = vadd.f32 %v5208, %v5211
        %v5215 = vadd.f32 %v5209, %v5211
        %v5216 = vtanh.pop %v5212
        %v5217 = vtanh.pop %v5213
        %v5218 = vtanh.pop %v5214
        %v5219 = vtanh.pop %v5215
        %s5220 = sld [smem:[#allocation6 + $0x1aa]]
        %v5221 = vstv %s5220
        %v5222 = vmul.f32 %v3626, %v5221
        %v5223 = vmul.f32 %v3627, %v5221
        %v5224 = vmul.f32 %v3628, %v5221
        %v5225 = vmul.f32 %v3629, %v5221
        %s5226 = sld [smem:[#allocation6 + $0x1b4]]
        %v5227 = vstv %s5226
        %v5228 = vmul.f32 %v3732, %v5227
        %v5229 = vmul.f32 %v3733, %v5227
        %v5230 = vmul.f32 %v3734, %v5227
        %v5231 = vmul.f32 %v3735, %v5227
        %v5232 = vadd.f32 %v5222, %v5228
        %v5233 = vadd.f32 %v5223, %v5229
        %v5234 = vadd.f32 %v5224, %v5230
        %v5235 = vadd.f32 %v5225, %v5231
        %s5236 = sld [smem:[#allocation6 + $0x1be]]
        %v5237 = vstv %s5236
        %v5238 = vmul.f32 %v3838, %v5237
        %v5239 = vmul.f32 %v3839, %v5237
        %v5240 = vmul.f32 %v3840, %v5237
        %v5241 = vmul.f32 %v3841, %v5237
        %v5242 = vadd.f32 %v5232, %v5238
        %v5243 = vadd.f32 %v5233, %v5239
        %v5244 = vadd.f32 %v5234, %v5240
        %v5245 = vadd.f32 %v5235, %v5241
        %s5246 = sld [smem:[#allocation6 + $0x1c8]]
        %v5247 = vstv %s5246
        %v5248 = vmul.f32 %v3944, %v5247
        %v5249 = vmul.f32 %v3945, %v5247
        %v5250 = vmul.f32 %v3946, %v5247
        %v5251 = vmul.f32 %v3947, %v5247
        %v5252 = vadd.f32 %v5242, %v5248
        %v5253 = vadd.f32 %v5243, %v5249
        %v5254 = vadd.f32 %v5244, %v5250
        %v5255 = vadd.f32 %v5245, %v5251
        %s5256 = sld [smem:[#allocation6 + $0x1d2]]
        %v5257 = vstv %s5256
        %v5258 = vmul.f32 %v4050, %v5257
        %v5259 = vmul.f32 %v4051, %v5257
        %v5260 = vmul.f32 %v4052, %v5257
        %v5261 = vmul.f32 %v4053, %v5257
        %v5262 = vadd.f32 %v5252, %v5258
        %v5263 = vadd.f32 %v5253, %v5259
        %v5264 = vadd.f32 %v5254, %v5260
        %v5265 = vadd.f32 %v5255, %v5261
        %s5266 = sld [smem:[#allocation6 + $0x1dc]]
        %v5267 = vstv %s5266
        %v5268 = vmul.f32 %v4156, %v5267
        %v5269 = vmul.f32 %v4157, %v5267
        %v5270 = vmul.f32 %v4158, %v5267
        %v5271 = vmul.f32 %v4159, %v5267
        %v5272 = vadd.f32 %v5262, %v5268
        %v5273 = vadd.f32 %v5263, %v5269
        %v5274 = vadd.f32 %v5264, %v5270
        %v5275 = vadd.f32 %v5265, %v5271
        %s5276 = sld [smem:[#allocation6 + $0x1e6]]
        %v5277 = vstv %s5276
        %v5278 = vmul.f32 %v4262, %v5277
        %v5279 = vmul.f32 %v4263, %v5277
        %v5280 = vmul.f32 %v4264, %v5277
        %v5281 = vmul.f32 %v4265, %v5277
        %v5282 = vadd.f32 %v5272, %v5278
        %v5283 = vadd.f32 %v5273, %v5279
        %v5284 = vadd.f32 %v5274, %v5280
        %v5285 = vadd.f32 %v5275, %v5281
        %s5286 = sld [smem:[#allocation6 + $0x1f0]]
        %v5287 = vstv %s5286
        %v5288 = vmul.f32 %v4368, %v5287
        %v5289 = vmul.f32 %v4369, %v5287
        %v5290 = vmul.f32 %v4370, %v5287
        %v5291 = vmul.f32 %v4371, %v5287
        %v5292 = vadd.f32 %v5282, %v5288
        %v5293 = vadd.f32 %v5283, %v5289
        %v5294 = vadd.f32 %v5284, %v5290
        %v5295 = vadd.f32 %v5285, %v5291
        %s5296 = sld [smem:[#allocation6 + $0x1fa]]
        %v5297 = vstv %s5296
        %v5298 = vmul.f32 %v4474, %v5297
        %v5299 = vmul.f32 %v4475, %v5297
        %v5300 = vmul.f32 %v4476, %v5297
        %v5301 = vmul.f32 %v4477, %v5297
        %v5302 = vadd.f32 %v5292, %v5298
        %v5303 = vadd.f32 %v5293, %v5299
        %v5304 = vadd.f32 %v5294, %v5300
        %v5305 = vadd.f32 %v5295, %v5301
        %s5306 = sld [smem:[#allocation6 + $0x204]]
        %v5307 = vstv %s5306
        %v5308 = vmul.f32 %v4580, %v5307
        %v5309 = vmul.f32 %v4581, %v5307
        %v5310 = vmul.f32 %v4582, %v5307
        %v5311 = vmul.f32 %v4583, %v5307
        %v5312 = vadd.f32 %v5302, %v5308
        %v5313 = vadd.f32 %v5303, %v5309
        %v5314 = vadd.f32 %v5304, %v5310
        %v5315 = vadd.f32 %v5305, %v5311
        %s5316 = sld [smem:[#allocation6 + $0x236]]
        %v5317 = vstv %s5316
        %v5318 = vadd.f32 %v5312, %v5317
        %v5319 = vadd.f32 %v5313, %v5317
        %v5320 = vadd.f32 %v5314, %v5317
        %v5321 = vadd.f32 %v5315, %v5317
        %v5322 = vtanh.pop %v5318
        %v5323 = vtanh.pop %v5319
        %v5324 = vtanh.pop %v5320
        %v5325 = vtanh.pop %v5321
        %s5326 = sld [smem:[#allocation6 + $0x1ab]]
        %v5327 = vstv %s5326
        %v5328 = vmul.f32 %v3626, %v5327
        %v5329 = vmul.f32 %v3627, %v5327
        %v5330 = vmul.f32 %v3628, %v5327
        %v5331 = vmul.f32 %v3629, %v5327
        %s5332 = sld [smem:[#allocation6 + $0x1b5]]
        %v5333 = vstv %s5332
        %v5334 = vmul.f32 %v3732, %v5333
        %v5335 = vmul.f32 %v3733, %v5333
        %v5336 = vmul.f32 %v3734, %v5333
        %v5337 = vmul.f32 %v3735, %v5333
        %v5338 = vadd.f32 %v5328, %v5334
        %v5339 = vadd.f32 %v5329, %v5335
        %v5340 = vadd.f32 %v5330, %v5336
        %v5341 = vadd.f32 %v5331, %v5337
        %s5342 = sld [smem:[#allocation6 + $0x1bf]]
        %v5343 = vstv %s5342
        %v5344 = vmul.f32 %v3838, %v5343
        %v5345 = vmul.f32 %v3839, %v5343
        %v5346 = vmul.f32 %v3840, %v5343
        %v5347 = vmul.f32 %v3841, %v5343
        %v5348 = vadd.f32 %v5338, %v5344
        %v5349 = vadd.f32 %v5339, %v5345
        %v5350 = vadd.f32 %v5340, %v5346
        %v5351 = vadd.f32 %v5341, %v5347
        %s5352 = sld [smem:[#allocation6 + $0x1c9]]
        %v5353 = vstv %s5352
        %v5354 = vmul.f32 %v3944, %v5353
        %v5355 = vmul.f32 %v3945, %v5353
        %v5356 = vmul.f32 %v3946, %v5353
        %v5357 = vmul.f32 %v3947, %v5353
        %v5358 = vadd.f32 %v5348, %v5354
        %v5359 = vadd.f32 %v5349, %v5355
        %v5360 = vadd.f32 %v5350, %v5356
        %v5361 = vadd.f32 %v5351, %v5357
        %s5362 = sld [smem:[#allocation6 + $0x1d3]]
        %v5363 = vstv %s5362
        %v5364 = vmul.f32 %v4050, %v5363
        %v5365 = vmul.f32 %v4051, %v5363
        %v5366 = vmul.f32 %v4052, %v5363
        %v5367 = vmul.f32 %v4053, %v5363
        %v5368 = vadd.f32 %v5358, %v5364
        %v5369 = vadd.f32 %v5359, %v5365
        %v5370 = vadd.f32 %v5360, %v5366
        %v5371 = vadd.f32 %v5361, %v5367
        %s5372 = sld [smem:[#allocation6 + $0x1dd]]
        %v5373 = vstv %s5372
        %v5374 = vmul.f32 %v4156, %v5373
        %v5375 = vmul.f32 %v4157, %v5373
        %v5376 = vmul.f32 %v4158, %v5373
        %v5377 = vmul.f32 %v4159, %v5373
        %v5378 = vadd.f32 %v5368, %v5374
        %v5379 = vadd.f32 %v5369, %v5375
        %v5380 = vadd.f32 %v5370, %v5376
        %v5381 = vadd.f32 %v5371, %v5377
        %s5382 = sld [smem:[#allocation6 + $0x1e7]]
        %v5383 = vstv %s5382
        %v5384 = vmul.f32 %v4262, %v5383
        %v5385 = vmul.f32 %v4263, %v5383
        %v5386 = vmul.f32 %v4264, %v5383
        %v5387 = vmul.f32 %v4265, %v5383
        %v5388 = vadd.f32 %v5378, %v5384
        %v5389 = vadd.f32 %v5379, %v5385
        %v5390 = vadd.f32 %v5380, %v5386
        %v5391 = vadd.f32 %v5381, %v5387
        %s5392 = sld [smem:[#allocation6 + $0x1f1]]
        %v5393 = vstv %s5392
        %v5394 = vmul.f32 %v4368, %v5393
        %v5395 = vmul.f32 %v4369, %v5393
        %v5396 = vmul.f32 %v4370, %v5393
        %v5397 = vmul.f32 %v4371, %v5393
        %v5398 = vadd.f32 %v5388, %v5394
        %v5399 = vadd.f32 %v5389, %v5395
        %v5400 = vadd.f32 %v5390, %v5396
        %v5401 = vadd.f32 %v5391, %v5397
        %s5402 = sld [smem:[#allocation6 + $0x1fb]]
        %v5403 = vstv %s5402
        %v5404 = vmul.f32 %v4474, %v5403
        %v5405 = vmul.f32 %v4475, %v5403
        %v5406 = vmul.f32 %v4476, %v5403
        %v5407 = vmul.f32 %v4477, %v5403
        %v5408 = vadd.f32 %v5398, %v5404
        %v5409 = vadd.f32 %v5399, %v5405
        %v5410 = vadd.f32 %v5400, %v5406
        %v5411 = vadd.f32 %v5401, %v5407
        %s5412 = sld [smem:[#allocation6 + $0x205]]
        %v5413 = vstv %s5412
        %v5414 = vmul.f32 %v4580, %v5413
        %v5415 = vmul.f32 %v4581, %v5413
        %v5416 = vmul.f32 %v4582, %v5413
        %v5417 = vmul.f32 %v4583, %v5413
        %v5418 = vadd.f32 %v5408, %v5414
        %v5419 = vadd.f32 %v5409, %v5415
        %v5420 = vadd.f32 %v5410, %v5416
        %v5421 = vadd.f32 %v5411, %v5417
        %s5422 = sld [smem:[#allocation6 + $0x237]]
        %v5423 = vstv %s5422
        %v5424 = vadd.f32 %v5418, %v5423
        %v5425 = vadd.f32 %v5419, %v5423
        %v5426 = vadd.f32 %v5420, %v5423
        %v5427 = vadd.f32 %v5421, %v5423
        %v5428 = vtanh.pop %v5424
        %v5429 = vtanh.pop %v5425
        %v5430 = vtanh.pop %v5426
        %v5431 = vtanh.pop %v5427
        %s5432 = sld [smem:[#allocation6 + $0x1ac]]
        %v5433 = vstv %s5432
        %v5434 = vmul.f32 %v3626, %v5433
        %v5435 = vmul.f32 %v3627, %v5433
        %v5436 = vmul.f32 %v3628, %v5433
        %v5437 = vmul.f32 %v3629, %v5433
        %s5438 = sld [smem:[#allocation6 + $0x1b6]]
        %v5439 = vstv %s5438
        %v5440 = vmul.f32 %v3732, %v5439
        %v5441 = vmul.f32 %v3733, %v5439
        %v5442 = vmul.f32 %v3734, %v5439
        %v5443 = vmul.f32 %v3735, %v5439
        %v5444 = vadd.f32 %v5434, %v5440
        %v5445 = vadd.f32 %v5435, %v5441
        %v5446 = vadd.f32 %v5436, %v5442
        %v5447 = vadd.f32 %v5437, %v5443
        %s5448 = sld [smem:[#allocation6 + $0x1c0]]
        %v5449 = vstv %s5448
        %v5450 = vmul.f32 %v3838, %v5449
        %v5451 = vmul.f32 %v3839, %v5449
        %v5452 = vmul.f32 %v3840, %v5449
        %v5453 = vmul.f32 %v3841, %v5449
        %v5454 = vadd.f32 %v5444, %v5450
        %v5455 = vadd.f32 %v5445, %v5451
        %v5456 = vadd.f32 %v5446, %v5452
        %v5457 = vadd.f32 %v5447, %v5453
        %s5458 = sld [smem:[#allocation6 + $0x1ca]]
        %v5459 = vstv %s5458
        %v5460 = vmul.f32 %v3944, %v5459
        %v5461 = vmul.f32 %v3945, %v5459
        %v5462 = vmul.f32 %v3946, %v5459
        %v5463 = vmul.f32 %v3947, %v5459
        %v5464 = vadd.f32 %v5454, %v5460
        %v5465 = vadd.f32 %v5455, %v5461
        %v5466 = vadd.f32 %v5456, %v5462
        %v5467 = vadd.f32 %v5457, %v5463
        %s5468 = sld [smem:[#allocation6 + $0x1d4]]
        %v5469 = vstv %s5468
        %v5470 = vmul.f32 %v4050, %v5469
        %v5471 = vmul.f32 %v4051, %v5469
        %v5472 = vmul.f32 %v4052, %v5469
        %v5473 = vmul.f32 %v4053, %v5469
        %v5474 = vadd.f32 %v5464, %v5470
        %v5475 = vadd.f32 %v5465, %v5471
        %v5476 = vadd.f32 %v5466, %v5472
        %v5477 = vadd.f32 %v5467, %v5473
        %s5478 = sld [smem:[#allocation6 + $0x1de]]
        %v5479 = vstv %s5478
        %v5480 = vmul.f32 %v4156, %v5479
        %v5481 = vmul.f32 %v4157, %v5479
        %v5482 = vmul.f32 %v4158, %v5479
        %v5483 = vmul.f32 %v4159, %v5479
        %v5484 = vadd.f32 %v5474, %v5480
        %v5485 = vadd.f32 %v5475, %v5481
        %v5486 = vadd.f32 %v5476, %v5482
        %v5487 = vadd.f32 %v5477, %v5483
        %s5488 = sld [smem:[#allocation6 + $0x1e8]]
        %v5489 = vstv %s5488
        %v5490 = vmul.f32 %v4262, %v5489
        %v5491 = vmul.f32 %v4263, %v5489
        %v5492 = vmul.f32 %v4264, %v5489
        %v5493 = vmul.f32 %v4265, %v5489
        %v5494 = vadd.f32 %v5484, %v5490
        %v5495 = vadd.f32 %v5485, %v5491
        %v5496 = vadd.f32 %v5486, %v5492
        %v5497 = vadd.f32 %v5487, %v5493
        %s5498 = sld [smem:[#allocation6 + $0x1f2]]
        %v5499 = vstv %s5498
        %v5500 = vmul.f32 %v4368, %v5499
        %v5501 = vmul.f32 %v4369, %v5499
        %v5502 = vmul.f32 %v4370, %v5499
        %v5503 = vmul.f32 %v4371, %v5499
        %v5504 = vadd.f32 %v5494, %v5500
        %v5505 = vadd.f32 %v5495, %v5501
        %v5506 = vadd.f32 %v5496, %v5502
        %v5507 = vadd.f32 %v5497, %v5503
        %s5508 = sld [smem:[#allocation6 + $0x1fc]]
        %v5509 = vstv %s5508
        %v5510 = vmul.f32 %v4474, %v5509
        %v5511 = vmul.f32 %v4475, %v5509
        %v5512 = vmul.f32 %v4476, %v5509
        %v5513 = vmul.f32 %v4477, %v5509
        %v5514 = vadd.f32 %v5504, %v5510
        %v5515 = vadd.f32 %v5505, %v5511
        %v5516 = vadd.f32 %v5506, %v5512
        %v5517 = vadd.f32 %v5507, %v5513
        %s5518 = sld [smem:[#allocation6 + $0x206]]
        %v5519 = vstv %s5518
        %v5520 = vmul.f32 %v4580, %v5519
        %v5521 = vmul.f32 %v4581, %v5519
        %v5522 = vmul.f32 %v4582, %v5519
        %v5523 = vmul.f32 %v4583, %v5519
        %v5524 = vadd.f32 %v5514, %v5520
        %v5525 = vadd.f32 %v5515, %v5521
        %v5526 = vadd.f32 %v5516, %v5522
        %v5527 = vadd.f32 %v5517, %v5523
        %s5528 = sld [smem:[#allocation6 + $0x238]]
        %v5529 = vstv %s5528
        %v5530 = vadd.f32 %v5524, %v5529
        %v5531 = vadd.f32 %v5525, %v5529
        %v5532 = vadd.f32 %v5526, %v5529
        %v5533 = vadd.f32 %v5527, %v5529
        %v5534 = vtanh.pop %v5530
        %v5535 = vtanh.pop %v5531
        %v5536 = vtanh.pop %v5532
        %v5537 = vtanh.pop %v5533
        %s5538 = sld [smem:[#allocation6 + $0x1ad]]
        %v5539 = vstv %s5538
        %v5540 = vmul.f32 %v3626, %v5539
        %v5541 = vmul.f32 %v3627, %v5539
        %v5542 = vmul.f32 %v3628, %v5539
        %v5543 = vmul.f32 %v3629, %v5539
        %s5544 = sld [smem:[#allocation6 + $0x1b7]]
        %v5545 = vstv %s5544
        %v5546 = vmul.f32 %v3732, %v5545
        %v5547 = vmul.f32 %v3733, %v5545
        %v5548 = vmul.f32 %v3734, %v5545
        %v5549 = vmul.f32 %v3735, %v5545
        %v5550 = vadd.f32 %v5540, %v5546
        %v5551 = vadd.f32 %v5541, %v5547
        %v5552 = vadd.f32 %v5542, %v5548
        %v5553 = vadd.f32 %v5543, %v5549
        %s5554 = sld [smem:[#allocation6 + $0x1c1]]
        %v5555 = vstv %s5554
        %v5556 = vmul.f32 %v3838, %v5555
        %v5557 = vmul.f32 %v3839, %v5555
        %v5558 = vmul.f32 %v3840, %v5555
        %v5559 = vmul.f32 %v3841, %v5555
        %v5560 = vadd.f32 %v5550, %v5556
        %v5561 = vadd.f32 %v5551, %v5557
        %v5562 = vadd.f32 %v5552, %v5558
        %v5563 = vadd.f32 %v5553, %v5559
        %s5564 = sld [smem:[#allocation6 + $0x1cb]]
        %v5565 = vstv %s5564
        %v5566 = vmul.f32 %v3944, %v5565
        %v5567 = vmul.f32 %v3945, %v5565
        %v5568 = vmul.f32 %v3946, %v5565
        %v5569 = vmul.f32 %v3947, %v5565
        %v5570 = vadd.f32 %v5560, %v5566
        %v5571 = vadd.f32 %v5561, %v5567
        %v5572 = vadd.f32 %v5562, %v5568
        %v5573 = vadd.f32 %v5563, %v5569
        %s5574 = sld [smem:[#allocation6 + $0x1d5]]
        %v5575 = vstv %s5574
        %v5576 = vmul.f32 %v4050, %v5575
        %v5577 = vmul.f32 %v4051, %v5575
        %v5578 = vmul.f32 %v4052, %v5575
        %v5579 = vmul.f32 %v4053, %v5575
        %v5580 = vadd.f32 %v5570, %v5576
        %v5581 = vadd.f32 %v5571, %v5577
        %v5582 = vadd.f32 %v5572, %v5578
        %v5583 = vadd.f32 %v5573, %v5579
        %s5584 = sld [smem:[#allocation6 + $0x1df]]
        %v5585 = vstv %s5584
        %v5586 = vmul.f32 %v4156, %v5585
        %v5587 = vmul.f32 %v4157, %v5585
        %v5588 = vmul.f32 %v4158, %v5585
        %v5589 = vmul.f32 %v4159, %v5585
        %v5590 = vadd.f32 %v5580, %v5586
        %v5591 = vadd.f32 %v5581, %v5587
        %v5592 = vadd.f32 %v5582, %v5588
        %v5593 = vadd.f32 %v5583, %v5589
        %s5594 = sld [smem:[#allocation6 + $0x1e9]]
        %v5595 = vstv %s5594
        %v5596 = vmul.f32 %v4262, %v5595
        %v5597 = vmul.f32 %v4263, %v5595
        %v5598 = vmul.f32 %v4264, %v5595
        %v5599 = vmul.f32 %v4265, %v5595
        %v5600 = vadd.f32 %v5590, %v5596
        %v5601 = vadd.f32 %v5591, %v5597
        %v5602 = vadd.f32 %v5592, %v5598
        %v5603 = vadd.f32 %v5593, %v5599
        %s5604 = sld [smem:[#allocation6 + $0x1f3]]
        %v5605 = vstv %s5604
        %v5606 = vmul.f32 %v4368, %v5605
        %v5607 = vmul.f32 %v4369, %v5605
        %v5608 = vmul.f32 %v4370, %v5605
        %v5609 = vmul.f32 %v4371, %v5605
        %v5610 = vadd.f32 %v5600, %v5606
        %v5611 = vadd.f32 %v5601, %v5607
        %v5612 = vadd.f32 %v5602, %v5608
        %v5613 = vadd.f32 %v5603, %v5609
        %s5614 = sld [smem:[#allocation6 + $0x1fd]]
        %v5615 = vstv %s5614
        %v5616 = vmul.f32 %v4474, %v5615
        %v5617 = vmul.f32 %v4475, %v5615
        %v5618 = vmul.f32 %v4476, %v5615
        %v5619 = vmul.f32 %v4477, %v5615
        %v5620 = vadd.f32 %v5610, %v5616
        %v5621 = vadd.f32 %v5611, %v5617
        %v5622 = vadd.f32 %v5612, %v5618
        %v5623 = vadd.f32 %v5613, %v5619
        %s5624 = sld [smem:[#allocation6 + $0x207]]
        %v5625 = vstv %s5624
        %v5626 = vmul.f32 %v4580, %v5625
        %v5627 = vmul.f32 %v4581, %v5625
        %v5628 = vmul.f32 %v4582, %v5625
        %v5629 = vmul.f32 %v4583, %v5625
        %v5630 = vadd.f32 %v5620, %v5626
        %v5631 = vadd.f32 %v5621, %v5627
        %v5632 = vadd.f32 %v5622, %v5628
        %v5633 = vadd.f32 %v5623, %v5629
        %s5634 = sld [smem:[#allocation6 + $0x239]]
        %v5635 = vstv %s5634
        %v5636 = vadd.f32 %v5630, %v5635
        %v5637 = vadd.f32 %v5631, %v5635
        %v5638 = vadd.f32 %v5632, %v5635
        %v5639 = vadd.f32 %v5633, %v5635
        %v5640 = vtanh.pop %v5636
        %v5641 = vtanh.pop %v5637
        %v5642 = vtanh.pop %v5638
        %v5643 = vtanh.pop %v5639
        %s5644 = sld [smem:[#allocation6 + $0x23a]]
        %v5645 = vstv %s5644
        %v5646 = vmul.f32 %v4686, %v5645
        %v5647 = vmul.f32 %v4687, %v5645
        %v5648 = vmul.f32 %v4688, %v5645
        %v5649 = vmul.f32 %v4689, %v5645
        %s5650 = sld [smem:[#allocation6 + $0x23b]]
        %v5651 = vstv %s5650
        %v5652 = vmul.f32 %v4792, %v5651
        %v5653 = vmul.f32 %v4793, %v5651
        %v5654 = vmul.f32 %v4794, %v5651
        %v5655 = vmul.f32 %v4795, %v5651
        %v5656 = vadd.f32 %v5646, %v5652
        %v5657 = vadd.f32 %v5647, %v5653
        %v5658 = vadd.f32 %v5648, %v5654
        %v5659 = vadd.f32 %v5649, %v5655
        %s5660 = sld [smem:[#allocation6 + $0x23c]]
        %v5661 = vstv %s5660
        %v5662 = vmul.f32 %v4898, %v5661
        %v5663 = vmul.f32 %v4899, %v5661
        %v5664 = vmul.f32 %v4900, %v5661
        %v5665 = vmul.f32 %v4901, %v5661
        %v5666 = vadd.f32 %v5656, %v5662
        %v5667 = vadd.f32 %v5657, %v5663
        %v5668 = vadd.f32 %v5658, %v5664
        %v5669 = vadd.f32 %v5659, %v5665
        %s5670 = sld [smem:[#allocation6 + $0x23d]]
        %v5671 = vstv %s5670
        %v5672 = vmul.f32 %v5004, %v5671
        %v5673 = vmul.f32 %v5005, %v5671
        %v5674 = vmul.f32 %v5006, %v5671
        %v5675 = vmul.f32 %v5007, %v5671
        %v5676 = vadd.f32 %v5666, %v5672
        %v5677 = vadd.f32 %v5667, %v5673
        %v5678 = vadd.f32 %v5668, %v5674
        %v5679 = vadd.f32 %v5669, %v5675
        %s5680 = sld [smem:[#allocation6 + $0x23e]]
        %v5681 = vstv %s5680
        %v5682 = vmul.f32 %v5110, %v5681
        %v5683 = vmul.f32 %v5111, %v5681
        %v5684 = vmul.f32 %v5112, %v5681
        %v5685 = vmul.f32 %v5113, %v5681
        %v5686 = vadd.f32 %v5676, %v5682
        %v5687 = vadd.f32 %v5677, %v5683
        %v5688 = vadd.f32 %v5678, %v5684
        %v5689 = vadd.f32 %v5679, %v5685
        %s5690 = sld [smem:[#allocation6 + $0x23f]]
        %v5691 = vstv %s5690
        %v5692 = vmul.f32 %v5216, %v5691
        %v5693 = vmul.f32 %v5217, %v5691
        %v5694 = vmul.f32 %v5218, %v5691
        %v5695 = vmul.f32 %v5219, %v5691
        %v5696 = vadd.f32 %v5686, %v5692
        %v5697 = vadd.f32 %v5687, %v5693
        %v5698 = vadd.f32 %v5688, %v5694
        %v5699 = vadd.f32 %v5689, %v5695
        %s5700 = sld [smem:[#allocation6 + $0x240]]
        %v5701 = vstv %s5700
        %v5702 = vmul.f32 %v5322, %v5701
        %v5703 = vmul.f32 %v5323, %v5701
        %v5704 = vmul.f32 %v5324, %v5701
        %v5705 = vmul.f32 %v5325, %v5701
        %v5706 = vadd.f32 %v5696, %v5702
        %v5707 = vadd.f32 %v5697, %v5703
        %v5708 = vadd.f32 %v5698, %v5704
        %v5709 = vadd.f32 %v5699, %v5705
        %s5710 = sld [smem:[#allocation6 + $0x241]]
        %v5711 = vstv %s5710
        %v5712 = vmul.f32 %v5428, %v5711
        %v5713 = vmul.f32 %v5429, %v5711
        %v5714 = vmul.f32 %v5430, %v5711
        %v5715 = vmul.f32 %v5431, %v5711
        %v5716 = vadd.f32 %v5706, %v5712
        %v5717 = vadd.f32 %v5707, %v5713
        %v5718 = vadd.f32 %v5708, %v5714
        %v5719 = vadd.f32 %v5709, %v5715
        %s5720 = sld [smem:[#allocation6 + $0x242]]
        %v5721 = vstv %s5720
        %v5722 = vmul.f32 %v5534, %v5721
        %v5723 = vmul.f32 %v5535, %v5721
        %v5724 = vmul.f32 %v5536, %v5721
        %v5725 = vmul.f32 %v5537, %v5721
        %v5726 = vadd.f32 %v5716, %v5722
        %v5727 = vadd.f32 %v5717, %v5723
        %v5728 = vadd.f32 %v5718, %v5724
        %v5729 = vadd.f32 %v5719, %v5725
        %s5730 = sld [smem:[#allocation6 + $0x243]]
        %v5731 = vstv %s5730
        %v5732 = vmul.f32 %v5640, %v5731
        %v5733 = vmul.f32 %v5641, %v5731
        %v5734 = vmul.f32 %v5642, %v5731
        %v5735 = vmul.f32 %v5643, %v5731
        %v5736 = vadd.f32 %v5726, %v5732
        %v5737 = vadd.f32 %v5727, %v5733
        %v5738 = vadd.f32 %v5728, %v5734
        %v5739 = vadd.f32 %v5729, %v5735
        %s5740 = sld [smem:[#allocation6 + $0x244]]
        %v5741 = vstv %s5740
        %v5742 = vadd.f32 %v5736, %v5741
        %v5743 = vadd.f32 %v5737, %v5741
        %v5744 = vadd.f32 %v5738, %v5741
        %v5745 = vadd.f32 %v5739, %v5741
        %5746 = vst [vmem:[%s177] sm:$0xff] %v5742
        %5747 = vst [vmem:[%s177 + $0x8] sm:$0xff] %v5743
        %5748 = vst [vmem:[%s177 + $0x10] sm:$0xff] %v5744
        %5749 = vst [vmem:[%s177 + $0x18] sm:$0xff] %v5745
        %s5750 = sand.u32 %s75, 1
        %s5751 = scalar_lea.sflag [#allocation4], %s5750
        %s5752 = sand.u32 %s75, 1
        %s5753 = smul.addr %s5752, 32
        %s5754 = scalar_lea.vmem [#allocation7], %s5753
        // Predicated region
        $region37: #{tpu_custom_call.1} parent=27 // pred_check
          %p5755 = pneg %p85
        $region38: #{tpu_custom_call.1} parent=27 // pred_check_branch
          %5757 = sbr.rel (%p5755) target = $region40
        $region39: #{tpu_custom_call.1} parent=27 // pred_region
          %s5758 = smul.u32 4, %s20
          %5760 = vsyncadd %s5751, 0
          %s5761 = smul.addr %s5758, 8
          %s5762 = scalar_lea.hbm %s2, %s5761
          %s5763 = sshll.u32 %s5754, 4
          %s5764 = int_to_ptr.vmem [resolvable:$true] %s5763
          %s5765 = sshll.u32 %s5762, 4
          %s5766 = int_to_ptr.hbm [resolvable:$true] %s5765
          %5771 = dma.vmem_to_hbm [thread:$0]  %s5764, 512, %s5766, %s5751, 128, 128, 8
        $region40: #{tpu_custom_call.1} parent=27 // pred_fallthru
          _
      $region28: #{tpu_custom_call.1} parent=5 // pred_fallthru
        _
      %p5772 = scmp.le.s32.totalorder 2, %s15
      // Predicated region
      $region41: #{tpu_custom_call.1} parent=5 // pred_check
        %p5773 = pneg %p5772
      $region42: #{tpu_custom_call.1} parent=5 // pred_check_branch
        %5775 = sbr.rel (%p5773) target = $region44
      $region43: #{tpu_custom_call.1} parent=5 // pred_region
        %s5776 = ssub.s32 %s15, 2
        // Predicated region
        $region45: #{tpu_custom_call.1} parent=43 // pred_check
          %p5777 = pneg %p91
        $region46: #{tpu_custom_call.1} parent=43 // pred_check_branch
          %5779 = sbr.rel (%p5777) target = $region48
        $region47: #{tpu_custom_call.1} parent=43 // pred_region
          %s5780 = sand.u32 %s76, 1
          %s5781 = scalar_lea.sflag [#allocation4], %s5780
          %s5782 = sand.u32 %s76, 1
          %s5783 = smul.addr %s5782, 32
          %s5784 = scalar_lea.vmem [#allocation7], %s5783
          %5786 = dma.done %s5781, 512
        $region48: #{tpu_custom_call.1} parent=43 // pred_fallthru
          _
      $region44: #{tpu_custom_call.1} parent=5 // pred_fallthru
        _
    $region6: #{tpu_custom_call.1} parent=1 // loop_footer
      %s19 = sadd.s32 1, %s15
    $region7: #{tpu_custom_call.1} parent=1 // loop_footer_branch
      %14 = sbr.rel target = $region3
    $region8: #{tpu_custom_call.1} parent=1 // loop_exit
      _
    %5787 = vsyncpa [#allocation3], 1
    %s5788 = scalar_lea.sflag [#allocation3], 1
    %5789 = vsyncpa %s5788, 1
    %5790 = vsyncpa [#allocation4], 1
    %s5791 = scalar_lea.sflag [#allocation4], 1
    %5792 = vsyncpa %s5791, 1
    %5793 = vsyncpa [#allocation5], 1
    %s5794 = scalar_lea.sflag [#allocation5], 1
    %5795 = vsyncpa %s5794, 1

</llo_original>
